<compile_context>
chip_gen: v7x
topology: tpu7x:2x2x1
jax: 0.10.0
libtpu: 0.0.40
codegen_flags: <defaults>
</compile_context>

<pallas_src>
import math

import jax
import jax.numpy as jnp
from jax import lax
from jax.experimental import pallas as pl
from jax.experimental.pallas import tpu as pltpu

HIDDEN = 32
HEADS = 2
D_HEAD = HIDDEN // HEADS
OUT_CHANNELS = 4
NUM_LAYERS = 2

NODE_TYPES = ("paper", "author", "institution")
TYPE_IDX = {t: i for i, t in enumerate(NODE_TYPES)}
NODE_COUNTS = {"paper": 24, "author": 20, "institution": 8}
IN_FEATS = {"paper": 24, "author": 16, "institution": 12}

EDGE_TYPES = (
    ("author", "writes", "paper"),
    ("paper", "rev_writes", "author"),
    ("paper", "cites", "paper"),
    ("author", "affiliated_with", "institution"),
)

NT = len(NODE_TYPES)
NE = len(EDGE_TYPES)
NPAD = 32                 # node-count padding (>= max node count, multiple of 8)
FPAD = 32                 # per-type padded input width (== HIDDEN, required by packing)
HP = NT * HIDDEN          # 96: lane-packed hidden width, type t -> lanes [32t, 32t+32)
FOUT_PAD = 128            # lane-dense padded output width (real width = OUT_CHANNELS)

NW_PER_LAYER = 16         # [Wk, Wq, Wv, Wout] block-diag + 4 A96 + 8 M96
NB_PER_LAYER = 5          # [b_k, b_q, b_v, b_out, res]
NW = 1 + NUM_LAYERS * NW_PER_LAYER
NB = 1 + NUM_LAYERS * NB_PER_LAYER


# ----------------------------- in-kernel math --------------------------------

def _erf(x):
    # TODO(synk): Mosaic has no native erf; Abramowitz–Stegun 7.1.26 rational
    # approximation (|err| < 1.5e-7, exact at f32 precision) using only exp.
    p = 0.3275911
    a1, a2, a3, a4, a5 = 0.254829592, -0.284496736, 1.421413741, -1.453152027, 1.061405429
    ax = jnp.abs(x)
    t = 1.0 / (1.0 + p * ax)
    poly = ((((a5 * t + a4) * t + a3) * t + a2) * t + a1) * t
    y = 1.0 - poly * jnp.exp(-(ax * ax))
    return jnp.where(x >= 0.0, y, -y)


def _gelu(x):
    # exact (erf-based) GELU, matching F.gelu default
    return 0.5 * x * (1.0 + _erf(x * (1.0 / math.sqrt(2.0))))


# ----------------------------- fused Pallas kernel ---------------------------

def _hgt_fused_kernel(x_ref, mask_ref, w_ref, b_ref, wfin_ref, bfin_ref, o_ref):
    f32 = jnp.float32

    # Per-head lane masks over the packed 96-wide hidden dim (built once, reused).
    col = lax.broadcasted_iota(jnp.int32, (NPAD, HP), 1)
    hm0 = jnp.where((col % HIDDEN) < D_HEAD, f32(1.0), f32(0.0))
    hm1 = 1.0 - hm0

    # Input projection + ReLU: one block-diagonal (96, 96) matmul covers all 3 types.
    h = jnp.maximum(
        jnp.dot(x_ref[...], w_ref[0], preferred_element_type=f32) + b_ref[0], 0.0)

    for l in range(NUM_LAYERS):
        wb = 1 + l * NW_PER_LAYER
        bb = 1 + l * NB_PER_LAYER

        # k / q / v projections: 3 block-diagonal matmuls (was 9 per-type ones).
        kp = jnp.dot(h, w_ref[wb + 0], preferred_element_type=f32) + b_ref[bb + 0]
        qp = jnp.dot(h, w_ref[wb + 1], preferred_element_type=f32) + b_ref[bb + 1]
        vp = jnp.dot(h, w_ref[wb + 2], preferred_element_type=f32) + b_ref[bb + 2]
        q_head = (qp * hm0, qp * hm1)          # per-head lane-masked q (2 VPU muls)

        agg = jnp.zeros((NPAD, HP), f32)
        for e in range(NE):
            mask = mask_ref[e]                  # (NPAD, NPAD) dst x src, {0, 1}
            bias = (mask - 1.0) * 1e30          # additive mask bias (replaces where)
            # Both heads' k @ a_rel in ONE matmul: A96 places head h's 16x16 block at
            # rows [32*src+16h, +16) x cols [32*dst+16h, +16); p_rel/sqrt(D) pre-folded.
            kA = jnp.dot(kp, w_ref[wb + 4 + e], preferred_element_type=f32)   # (N, 96)
            alphas, msgs = [], []
            for hh in range(HEADS):
                # score_h[i, j] = q_dst_h[i] . (k_src_h[j] @ a_rel_h); all other lanes
                # of kA / q_head are zero, so the full-width contraction is exact.
                s = lax.dot_general(q_head[hh], kA, (((1,), (1,)), ((), ())),
                                    preferred_element_type=f32) + bias
                mx = jnp.max(s, axis=-1, keepdims=True)
                p = jnp.exp(s - mx) * mask      # rows with no edges -> exactly zero
                den = jnp.sum(p, axis=-1, keepdims=True)
                alphas.append(p / jnp.where(den > 0.0, den, 1.0))   # exact divide
                # v @ m_rel lands directly in the dst-type head-h lanes of packed agg.
                msgs.append(jnp.dot(vp, w_ref[wb + 8 + 2 * e + hh],
                                    preferred_element_type=f32))    # (N, 96)
            # merged per-relation message matmul: (N, 2N) @ (2N, 96)
            alpha_both = jnp.concatenate(alphas, axis=-1)
            vm_stack = jnp.concatenate(msgs, axis=0)
            agg = agg + jnp.dot(alpha_both, vm_stack, preferred_element_type=f32)

        # Output projection (sigmoid-skip gate folded into w/b) + residual, all packed.
        g = _gelu(agg)
        h = (jnp.dot(g, w_ref[wb + 3], preferred_element_type=f32) + b_ref[bb + 3]
             + h * b_ref[bb + 4])

    # Final linear on 'paper' ('paper'-lane selection folded into w_fin); lane-dense out.
    o_ref[...] = jnp.dot(h, wfin_ref[...], preferred_element_type=f32) + bfin_ref[...]


@jax.jit
def hgt_forward(packed, x_pack, mask_pack):
    vmem = pltpu.MemorySpace.VMEM
    out_pad = pl.pallas_call(
        _hgt_fused_kernel,
        out_shape=jax.ShapeDtypeStruct((NPAD, FOUT_PAD), jnp.float32),
        in_specs=[pl.BlockSpec(memory_space=vmem) for _ in range(6)],
        out_specs=pl.BlockSpec(memory_space=vmem),
    )(x_pack, mask_pack, packed["w_pack"], packed["b_pack"],
      packed["w_fin"], packed["b_fin"])
    return out_pad[:NODE_COUNTS["paper"], :OUT_CHANNELS]


# ----------------------------- parameters ------------------------------------

def init_params(key):
    keys = iter(jax.random.split(key, 512))

    def dense(fan_in, fan_out):
        w = jax.random.normal(next(keys), (fan_in, fan_out), jnp.float32)
        w = w * (1.0 / jnp.sqrt(jnp.float32(fan_in)))
        return {"w": w, "b": jnp.zeros((fan_out,), jnp.float32)}

    params = {
        "lin_dict": {t: dense(IN_FEATS[t], HIDDEN) for t in NODE_TYPES},
        "convs": [],
        "lin": dense(HIDDEN, OUT_CHANNELS),
    }
    for _ in range(NUM_LAYERS):
        layer = {
            "k_lin": {t: dense(HIDDEN, HIDDEN) for t in NODE_TYPES},
            "q_lin": {t: dense(HIDDEN, HIDDEN) for t in NODE_TYPES},
            "v_lin": {t: dense(HIDDEN, HIDDEN) for t in NODE_TYPES},
            "a_lin": {t: dense(HIDDEN, HIDDEN) for t in NODE_TYPES},
            "skip": {t: jnp.float32(1.0) for t in NODE_TYPES},   # init 1, as in PyG
            "a_rel": {}, "m_rel": {}, "p_rel": {},
        }
        for et in EDGE_TYPES:
            layer["a_rel"][et] = jax.random.normal(
                next(keys), (HEADS, D_HEAD, D_HEAD), jnp.float32) * (1.0 / (D_HEAD ** 0.5))
            layer["m_rel"][et] = jax.random.normal(
                next(keys), (HEADS, D_HEAD, D_HEAD), jnp.float32) * (1.0 / (D_HEAD ** 0.5))
            layer["p_rel"][et] = jnp.ones((HEADS,), jnp.float32)
        params["convs"].append(layer)
    return params


def pack_params(params):
    """One-time repacking into 4 flat buffers (weight-only transforms, no per-call cost)."""
    assert FPAD == HIDDEN
    w_pack = jnp.zeros((NW, HP, HP), jnp.float32)
    b_pack = jnp.zeros((NB, 1, HP), jnp.float32)

    # input projection -> block-diagonal slot 0
    for t, name in enumerate(NODE_TYPES):
        w = params["lin_dict"][name]["w"]
        r0 = t * FPAD
        c0 = t * HIDDEN
        w_pack = w_pack.at[0, r0:r0 + w.shape[0], c0:c0 + HIDDEN].set(w)
        b_pack = b_pack.at[0, 0, c0:c0 + HIDDEN].set(params["lin_dict"][name]["b"])

    inv_sqrt_d = 1.0 / math.sqrt(D_HEAD)
    for l, layer in enumerate(params["convs"]):
        wb = 1 + l * NW_PER_LAYER
        bb = 1 + l * NB_PER_LAYER
        for t, name in enumerate(NODE_TYPES):
            sl = slice(t * HIDDEN, (t + 1) * HIDDEN)
            w_pack = w_pack.at[wb + 0, sl, sl].set(layer["k_lin"][name]["w"])
            w_pack = w_pack.at[wb + 1, sl, sl].set(layer["q_lin"][name]["w"])
            w_pack = w_pack.at[wb + 2, sl, sl].set(layer["v_lin"][name]["w"])
            b_pack = b_pack.at[bb + 0, 0, sl].set(layer["k_lin"][name]["b"])
            b_pack = b_pack.at[bb + 1, 0, sl].set(layer["q_lin"][name]["b"])
            b_pack = b_pack.at[bb + 2, 0, sl].set(layer["v_lin"][name]["b"])
            gate = jax.nn.sigmoid(layer["skip"][name])          # folded into a_lin
            w_pack = w_pack.at[wb + 3, sl, sl].set(gate * layer["a_lin"][name]["w"])
            b_pack = b_pack.at[bb + 3, 0, sl].set(gate * layer["a_lin"][name]["b"])
            b_pack = b_pack.at[bb + 4, 0, sl].set(jnp.broadcast_to(1.0 - gate, (HIDDEN,)))
        for e, et in enumerate(EDGE_TYPES):
            src_t, _, dst_t = et
            si, di = TYPE_IDX[src_t], TYPE_IDX[dst_t]
            for hh in range(HEADS):
                rs = slice(si * HIDDEN + hh * D_HEAD, si * HIDDEN + (hh + 1) * D_HEAD)
                cs = slice(di * HIDDEN + hh * D_HEAD, di * HIDDEN + (hh + 1) * D_HEAD)
                a_blk = layer["a_rel"][et][hh] * (layer["p_rel"][et][hh] * inv_sqrt_d)
                w_pack = w_pack.at[wb + 4 + e, rs, cs].set(a_blk)            # both heads
                w_pack = w_pack.at[wb + 8 + 2 * e + hh, rs, cs].set(layer["m_rel"][et][hh])

    pr = TYPE_IDX["paper"] * HIDDEN
    w_fin = jnp.zeros((HP, FOUT_PAD), jnp.float32)
    w_fin = w_fin.at[pr:pr + HIDDEN, :OUT_CHANNELS].set(params["lin"]["w"])
    b_fin = jnp.zeros((1, FOUT_PAD), jnp.float32).at[0, :OUT_CHANNELS].set(params["lin"]["b"])
    return dict(w_pack=w_pack, b_pack=b_pack, w_fin=w_fin, b_fin=b_fin)


def pack_inputs(x_dict, masks):
    """Lane-pack node features and stack adjacency masks for the kernel."""
    x_pack = jnp.zeros((NPAD, NT * FPAD), jnp.float32)
    for t, name in enumerate(NODE_TYPES):
        n, f = x_dict[name].shape
        x_pack = x_pack.at[:n, t * FPAD:t * FPAD + f].set(x_dict[name])
    mask_pack = jnp.zeros((NE, NPAD, NPAD), jnp.float32)
    for e, et in enumerate(EDGE_TYPES):
        nd, ns = masks[et].shape
        mask_pack = mask_pack.at[e, :nd, :ns].set(masks[et])
    return x_pack, mask_pack


# -------------------------------- main ----------------------------------------

if __name__ == "__main__":
    root = jax.random.PRNGKey(0)
    kx, ke, kp = jax.random.split(root, 3)

    xkeys = jax.random.split(kx, len(NODE_TYPES))
    x_dict = {t: jax.random.normal(xkeys[i], (NODE_COUNTS[t], IN_FEATS[t]), jnp.float32)
              for i, t in enumerate(NODE_TYPES)}

    # Random edge_index per edge type (PyG convention: row 0 = source, row 1 = target).
    num_edges = {
        ("author", "writes", "paper"): 48,
        ("paper", "rev_writes", "author"): 48,
        ("paper", "cites", "paper"): 40,
        ("author", "affiliated_with", "institution"): 24,
    }
    ekeys = jax.random.split(ke, len(EDGE_TYPES))
    edge_index_dict = {}
    masks = {}
    for i, et in enumerate(EDGE_TYPES):
        src_t, _, dst_t = et
        ks_, kd_ = jax.random.split(ekeys[i])
        src = jax.random.randint(ks_, (num_edges[et],), 0, NODE_COUNTS[src_t])
        dst = jax.random.randint(kd_, (num_edges[et],), 0, NODE_COUNTS[dst_t])
        edge_index_dict[et] = jnp.stack([src, dst])
        # Dense adjacency mask [N_dst, N_src]; assumes coalesced (deduplicated) edges.
        m = jnp.zeros((NODE_COUNTS[dst_t], NODE_COUNTS[src_t]), jnp.float32)
        masks[et] = m.at[dst, src].set(1.0)

    params = init_params(kp)
    packed = pack_params(params)
    x_pack, mask_pack = pack_inputs(x_dict, masks)

    out = hgt_forward(packed, x_pack, mask_pack)
    out = jax.block_until_ready(out)
    assert out.shape == (NODE_COUNTS["paper"], OUT_CHANNELS)
    assert bool(jnp.all(jnp.isfinite(out)))
    print("KERNEL_OK")
</pallas_src>

<mosaic_0001>
module attributes {stable_mosaic.version = 11 : i64} {
  func.func @_hgt_fused_kernel(%arg0: memref<32x96xf32, #tpu.memory_space<vmem>>, %arg1: memref<4x32x32xf32, #tpu.memory_space<vmem>>, %arg2: memref<33x96x96xf32, #tpu.memory_space<vmem>>, %arg3: memref<11x1x96xf32, #tpu.memory_space<vmem>>, %arg4: memref<96x128xf32, #tpu.memory_space<vmem>>, %arg5: memref<1x128xf32, #tpu.memory_space<vmem>>, %arg6: memref<32x128xf32, #tpu.memory_space<vmem>>) attributes {dimension_semantics = [], scalar_prefetch = 0 : i64, scratch_operands = 0 : i64, tpu.core_type = #tpu.core_type<tc>} {
    %0 = tpu.iota {dimensions = array<i32: 1>} : vector<32x96xi32>
    %c32_i32 = arith.constant 32 : i32
    %c0_i32 = arith.constant 0 : i32
    %1 = arith.cmpi eq, %c32_i32, %c0_i32 : i32
    %c1_i32 = arith.constant 1 : i32
    %2 = arith.select %1, %c1_i32, %c32_i32 : i32
    %3 = vector.broadcast %2 : i32 to vector<32x96xi32>
    %4 = arith.remsi %0, %3 : vector<32x96xi32>
    %c0_i32_0 = arith.constant 0 : i32
    %5 = vector.broadcast %c0_i32_0 : i32 to vector<32x96xi32>
    %6 = arith.cmpi ne, %4, %5 : vector<32x96xi32>
    %c0_i32_1 = arith.constant 0 : i32
    %7 = vector.broadcast %c0_i32_1 : i32 to vector<32x96xi32>
    %8 = arith.cmpi slt, %4, %7 : vector<32x96xi32>
    %c0_i32_2 = arith.constant 0 : i32
    %9 = arith.cmpi slt, %2, %c0_i32_2 : i32
    %10 = vector.broadcast %9 : i1 to vector<32x96xi1>
    %11 = vector.broadcast %10 : vector<32x96xi1> to vector<32x96xi1>
    %12 = arith.xori %8, %11 : vector<32x96xi1>
    %13 = arith.andi %12, %6 : vector<32x96xi1>
    %14 = vector.broadcast %2 : i32 to vector<32x96xi32>
    %15 = arith.addi %4, %14 : vector<32x96xi32>
    %16 = arith.select %13, %15, %4 : vector<32x96xi1>, vector<32x96xi32>
    %c16_i32 = arith.constant 16 : i32
    %17 = vector.broadcast %c16_i32 : i32 to vector<32x96xi32>
    %18 = arith.cmpi slt, %16, %17 : vector<32x96xi32>
    %cst = arith.constant 1.000000e+00 : f32
    %cst_3 = arith.constant 0.000000e+00 : f32
    %19 = vector.broadcast %cst : f32 to vector<32x96xf32>
    %20 = vector.broadcast %cst_3 : f32 to vector<32x96xf32>
    %21 = arith.select %18, %19, %20 : vector<32x96xi1>, vector<32x96xf32>
    %cst_4 = arith.constant 1.000000e+00 : f32
    %22 = vector.broadcast %cst_4 : f32 to vector<32x96xf32>
    %23 = arith.subf %22, %21 : vector<32x96xf32>
    %c0 = arith.constant 0 : index
    %c0_5 = arith.constant 0 : index
    %24 = vector.load %arg0[%c0, %c0_5] : memref<32x96xf32, #tpu.memory_space<vmem>>, vector<32x96xf32>
    %c0_6 = arith.constant 0 : index
    %c0_7 = arith.constant 0 : index
    %c0_8 = arith.constant 0 : index
    %25 = vector.load %arg2[%c0_6, %c0_7, %c0_8] : memref<33x96x96xf32, #tpu.memory_space<vmem>>, vector<1x96x96xf32>
    %26 = vector.shape_cast %25 : vector<1x96x96xf32> to vector<96x96xf32>
    %cst_9 = arith.constant dense<0.000000e+00> : vector<32x96xf32>
    %27 = tpu.matmul %24, %26, %cst_9 {dimension_numbers = #tpu.dot_dimension_numbers<[1], [0], [0], [1], [0, 0, 1, 1], [], []>} : vector<32x96xf32>, vector<96x96xf32>, vector<32x96xf32> -> vector<32x96xf32>
    %c0_10 = arith.constant 0 : index
    %c0_11 = arith.constant 0 : index
    %c0_12 = arith.constant 0 : index
    %28 = vector.load %arg3[%c0_10, %c0_11, %c0_12] : memref<11x1x96xf32, #tpu.memory_space<vmem>>, vector<1x1x96xf32>
    %29 = vector.shape_cast %28 : vector<1x1x96xf32> to vector<1x96xf32>
    %30 = vector.broadcast %29 : vector<1x96xf32> to vector<32x96xf32>
    %31 = arith.addf %27, %30 : vector<32x96xf32>
    %cst_13 = arith.constant 0.000000e+00 : f32
    %32 = vector.broadcast %cst_13 : f32 to vector<32x96xf32>
    %33 = arith.maximumf %31, %32 : vector<32x96xf32>
    %c1 = arith.constant 1 : index
    %c0_14 = arith.constant 0 : index
    %c0_15 = arith.constant 0 : index
    %34 = vector.load %arg2[%c1, %c0_14, %c0_15] : memref<33x96x96xf32, #tpu.memory_space<vmem>>, vector<1x96x96xf32>
    %35 = vector.shape_cast %34 : vector<1x96x96xf32> to vector<96x96xf32>
    %cst_16 = arith.constant dense<0.000000e+00> : vector<32x96xf32>
    %36 = tpu.matmul %33, %35, %cst_16 {dimension_numbers = #tpu.dot_dimension_numbers<[1], [0], [0], [1], [0, 0, 1, 1], [], []>} : vector<32x96xf32>, vector<96x96xf32>, vector<32x96xf32> -> vector<32x96xf32>
    %c1_17 = arith.constant 1 : index
    %c0_18 = arith.constant 0 : index
    %c0_19 = arith.constant 0 : index
    %37 = vector.load %arg3[%c1_17, %c0_18, %c0_19] : memref<11x1x96xf32, #tpu.memory_space<vmem>>, vector<1x1x96xf32>
    %38 = vector.shape_cast %37 : vector<1x1x96xf32> to vector<1x96xf32>
    %39 = vector.broadcast %38 : vector<1x96xf32> to vector<32x96xf32>
    %40 = arith.addf %36, %39 : vector<32x96xf32>
    %c2 = arith.constant 2 : index
    %c0_20 = arith.constant 0 : index
    %c0_21 = arith.constant 0 : index
    %41 = vector.load %arg2[%c2, %c0_20, %c0_21] : memref<33x96x96xf32, #tpu.memory_space<vmem>>, vector<1x96x96xf32>
    %42 = vector.shape_cast %41 : vector<1x96x96xf32> to vector<96x96xf32>
    %cst_22 = arith.constant dense<0.000000e+00> : vector<32x96xf32>
    %43 = tpu.matmul %33, %42, %cst_22 {dimension_numbers = #tpu.dot_dimension_numbers<[1], [0], [0], [1], [0, 0, 1, 1], [], []>} : vector<32x96xf32>, vector<96x96xf32>, vector<32x96xf32> -> vector<32x96xf32>
    %c2_23 = arith.constant 2 : index
    %c0_24 = arith.constant 0 : index
    %c0_25 = arith.constant 0 : index
    %44 = vector.load %arg3[%c2_23, %c0_24, %c0_25] : memref<11x1x96xf32, #tpu.memory_space<vmem>>, vector<1x1x96xf32>
    %45 = vector.shape_cast %44 : vector<1x1x96xf32> to vector<1x96xf32>
    %46 = vector.broadcast %45 : vector<1x96xf32> to vector<32x96xf32>
    %47 = arith.addf %43, %46 : vector<32x96xf32>
    %c3 = arith.constant 3 : index
    %c0_26 = arith.constant 0 : index
    %c0_27 = arith.constant 0 : index
    %48 = vector.load %arg2[%c3, %c0_26, %c0_27] : memref<33x96x96xf32, #tpu.memory_space<vmem>>, vector<1x96x96xf32>
    %49 = vector.shape_cast %48 : vector<1x96x96xf32> to vector<96x96xf32>
    %cst_28 = arith.constant dense<0.000000e+00> : vector<32x96xf32>
    %50 = tpu.matmul %33, %49, %cst_28 {dimension_numbers = #tpu.dot_dimension_numbers<[1], [0], [0], [1], [0, 0, 1, 1], [], []>} : vector<32x96xf32>, vector<96x96xf32>, vector<32x96xf32> -> vector<32x96xf32>
    %c3_29 = arith.constant 3 : index
    %c0_30 = arith.constant 0 : index
    %c0_31 = arith.constant 0 : index
    %51 = vector.load %arg3[%c3_29, %c0_30, %c0_31] : memref<11x1x96xf32, #tpu.memory_space<vmem>>, vector<1x1x96xf32>
    %52 = vector.shape_cast %51 : vector<1x1x96xf32> to vector<1x96xf32>
    %53 = vector.broadcast %52 : vector<1x96xf32> to vector<32x96xf32>
    %54 = arith.addf %50, %53 : vector<32x96xf32>
    %55 = arith.mulf %47, %21 : vector<32x96xf32>
    %56 = arith.mulf %47, %23 : vector<32x96xf32>
    %cst_32 = arith.constant 0.000000e+00 : f32
    %57 = vector.broadcast %cst_32 : f32 to vector<32x96xf32>
    %c0_33 = arith.constant 0 : index
    %c0_34 = arith.constant 0 : index
    %c0_35 = arith.constant 0 : index
    %58 = vector.load %arg1[%c0_33, %c0_34, %c0_35] : memref<4x32x32xf32, #tpu.memory_space<vmem>>, vector<1x32x32xf32>
    %59 = vector.shape_cast %58 : vector<1x32x32xf32> to vector<32x32xf32>
    %cst_36 = arith.constant 1.000000e+00 : f32
    %60 = vector.broadcast %cst_36 : f32 to vector<32x32xf32>
    %61 = arith.subf %59, %60 : vector<32x32xf32>
    %cst_37 = arith.constant 1.000000e+30 : f32
    %62 = vector.broadcast %cst_37 : f32 to vector<32x32xf32>
    %63 = arith.mulf %61, %62 : vector<32x32xf32>
    %c5 = arith.constant 5 : index
    %c0_38 = arith.constant 0 : index
    %c0_39 = arith.constant 0 : index
    %64 = vector.load %arg2[%c5, %c0_38, %c0_39] : memref<33x96x96xf32, #tpu.memory_space<vmem>>, vector<1x96x96xf32>
    %65 = vector.shape_cast %64 : vector<1x96x96xf32> to vector<96x96xf32>
    %cst_40 = arith.constant dense<0.000000e+00> : vector<32x96xf32>
    %66 = tpu.matmul %40, %65, %cst_40 {dimension_numbers = #tpu.dot_dimension_numbers<[1], [0], [0], [1], [0, 0, 1, 1], [], []>} : vector<32x96xf32>, vector<96x96xf32>, vector<32x96xf32> -> vector<32x96xf32>
    %cst_41 = arith.constant dense<0.000000e+00> : vector<32x32xf32>
    %67 = tpu.matmul %55, %66, %cst_41 {dimension_numbers = #tpu.dot_dimension_numbers<[1], [1], [0], [0], [0, 0, 1, 0], [], []>} : vector<32x96xf32>, vector<32x96xf32>, vector<32x32xf32> -> vector<32x32xf32>
    %68 = arith.addf %67, %63 : vector<32x32xf32>
    %cst_42 = arith.constant dense<0xFF800000> : vector<32xf32>
    %69 = vector.multi_reduction <maximumf>, %68, %cst_42 [1] : vector<32x32xf32> to vector<32xf32>
    %70 = vector.shape_cast %69 : vector<32xf32> to vector<32x1xf32>
    %71 = vector.broadcast %70 : vector<32x1xf32> to vector<32x32xf32>
    %72 = arith.subf %68, %71 : vector<32x32xf32>
    %73 = math.exp %72 : vector<32x32xf32>
    %74 = arith.mulf %73, %59 : vector<32x32xf32>
    %cst_43 = arith.constant dense<0.000000e+00> : vector<32xf32>
    %75 = vector.multi_reduction <add>, %74, %cst_43 [1] : vector<32x32xf32> to vector<32xf32>
    %76 = vector.shape_cast %75 : vector<32xf32> to vector<32x1xf32>
    %cst_44 = arith.constant 0.000000e+00 : f32
    %77 = vector.broadcast %cst_44 : f32 to vector<32x1xf32>
    %78 = arith.cmpf ogt, %76, %77 : vector<32x1xf32>
    %cst_45 = arith.constant 1.000000e+00 : f32
    %79 = vector.broadcast %cst_45 : f32 to vector<32x1xf32>
    %80 = arith.select %78, %76, %79 : vector<32x1xi1>, vector<32x1xf32>
    %81 = vector.broadcast %80 : vector<32x1xf32> to vector<32x32xf32>
    %82 = arith.divf %74, %81 : vector<32x32xf32>
    %c9 = arith.constant 9 : index
    %c0_46 = arith.constant 0 : index
    %c0_47 = arith.constant 0 : index
    %83 = vector.load %arg2[%c9, %c0_46, %c0_47] : memref<33x96x96xf32, #tpu.memory_space<vmem>>, vector<1x96x96xf32>
    %84 = vector.shape_cast %83 : vector<1x96x96xf32> to vector<96x96xf32>
    %cst_48 = arith.constant dense<0.000000e+00> : vector<32x96xf32>
    %85 = tpu.matmul %54, %84, %cst_48 {dimension_numbers = #tpu.dot_dimension_numbers<[1], [0], [0], [1], [0, 0, 1, 1], [], []>} : vector<32x96xf32>, vector<96x96xf32>, vector<32x96xf32> -> vector<32x96xf32>
    %cst_49 = arith.constant dense<0.000000e+00> : vector<32x32xf32>
    %86 = tpu.matmul %56, %66, %cst_49 {dimension_numbers = #tpu.dot_dimension_numbers<[1], [1], [0], [0], [0, 0, 1, 0], [], []>} : vector<32x96xf32>, vector<32x96xf32>, vector<32x32xf32> -> vector<32x32xf32>
    %87 = arith.addf %86, %63 : vector<32x32xf32>
    %cst_50 = arith.constant dense<0xFF800000> : vector<32xf32>
    %88 = vector.multi_reduction <maximumf>, %87, %cst_50 [1] : vector<32x32xf32> to vector<32xf32>
    %89 = vector.shape_cast %88 : vector<32xf32> to vector<32x1xf32>
    %90 = vector.broadcast %89 : vector<32x1xf32> to vector<32x32xf32>
    %91 = arith.subf %87, %90 : vector<32x32xf32>
    %92 = math.exp %91 : vector<32x32xf32>
    %93 = arith.mulf %92, %59 : vector<32x32xf32>
    %cst_51 = arith.constant dense<0.000000e+00> : vector<32xf32>
    %94 = vector.multi_reduction <add>, %93, %cst_51 [1] : vector<32x32xf32> to vector<32xf32>
    %95 = vector.shape_cast %94 : vector<32xf32> to vector<32x1xf32>
    %cst_52 = arith.constant 0.000000e+00 : f32
    %96 = vector.broadcast %cst_52 : f32 to vector<32x1xf32>
    %97 = arith.cmpf ogt, %95, %96 : vector<32x1xf32>
    %cst_53 = arith.constant 1.000000e+00 : f32
    %98 = vector.broadcast %cst_53 : f32 to vector<32x1xf32>
    %99 = arith.select %97, %95, %98 : vector<32x1xi1>, vector<32x1xf32>
    %100 = vector.broadcast %99 : vector<32x1xf32> to vector<32x32xf32>
    %101 = arith.divf %93, %100 : vector<32x32xf32>
    %c10 = arith.constant 10 : index
    %c0_54 = arith.constant 0 : index
    %c0_55 = arith.constant 0 : index
    %102 = vector.load %arg2[%c10, %c0_54, %c0_55] : memref<33x96x96xf32, #tpu.memory_space<vmem>>, vector<1x96x96xf32>
    %103 = vector.shape_cast %102 : vector<1x96x96xf32> to vector<96x96xf32>
    %cst_56 = arith.constant dense<0.000000e+00> : vector<32x96xf32>
    %104 = tpu.matmul %54, %103, %cst_56 {dimension_numbers = #tpu.dot_dimension_numbers<[1], [0], [0], [1], [0, 0, 1, 1], [], []>} : vector<32x96xf32>, vector<96x96xf32>, vector<32x96xf32> -> vector<32x96xf32>
    %105 = tpu.concatenate %82, %101 in 1 : vector<32x32xf32>, vector<32x32xf32> -> vector<32x64xf32>
    %106 = tpu.concatenate %85, %104 in 0 : vector<32x96xf32>, vector<32x96xf32> -> vector<64x96xf32>
    %cst_57 = arith.constant dense<0.000000e+00> : vector<32x96xf32>
    %107 = tpu.matmul %105, %106, %cst_57 {dimension_numbers = #tpu.dot_dimension_numbers<[1], [0], [0], [1], [0, 0, 1, 1], [], []>} : vector<32x64xf32>, vector<64x96xf32>, vector<32x96xf32> -> vector<32x96xf32>
    %108 = arith.addf %57, %107 : vector<32x96xf32>
    %c1_58 = arith.constant 1 : index
    %c0_59 = arith.constant 0 : index
    %c0_60 = arith.constant 0 : index
    %109 = vector.load %arg1[%c1_58, %c0_59, %c0_60] : memref<4x32x32xf32, #tpu.memory_space<vmem>>, vector<1x32x32xf32>
    %110 = vector.shape_cast %109 : vector<1x32x32xf32> to vector<32x32xf32>
    %cst_61 = arith.constant 1.000000e+00 : f32
    %111 = vector.broadcast %cst_61 : f32 to vector<32x32xf32>
    %112 = arith.subf %110, %111 : vector<32x32xf32>
    %cst_62 = arith.constant 1.000000e+30 : f32
    %113 = vector.broadcast %cst_62 : f32 to vector<32x32xf32>
    %114 = arith.mulf %112, %113 : vector<32x32xf32>
    %c6 = arith.constant 6 : index
    %c0_63 = arith.constant 0 : index
    %c0_64 = arith.constant 0 : index
    %115 = vector.load %arg2[%c6, %c0_63, %c0_64] : memref<33x96x96xf32, #tpu.memory_space<vmem>>, vector<1x96x96xf32>
    %116 = vector.shape_cast %115 : vector<1x96x96xf32> to vector<96x96xf32>
    %cst_65 = arith.constant dense<0.000000e+00> : vector<32x96xf32>
    %117 = tpu.matmul %40, %116, %cst_65 {dimension_numbers = #tpu.dot_dimension_numbers<[1], [0], [0], [1], [0, 0, 1, 1], [], []>} : vector<32x96xf32>, vector<96x96xf32>, vector<32x96xf32> -> vector<32x96xf32>
    %cst_66 = arith.constant dense<0.000000e+00> : vector<32x32xf32>
    %118 = tpu.matmul %55, %117, %cst_66 {dimension_numbers = #tpu.dot_dimension_numbers<[1], [1], [0], [0], [0, 0, 1, 0], [], []>} : vector<32x96xf32>, vector<32x96xf32>, vector<32x32xf32> -> vector<32x32xf32>
    %119 = arith.addf %118, %114 : vector<32x32xf32>
    %cst_67 = arith.constant dense<0xFF800000> : vector<32xf32>
    %120 = vector.multi_reduction <maximumf>, %119, %cst_67 [1] : vector<32x32xf32> to vector<32xf32>
    %121 = vector.shape_cast %120 : vector<32xf32> to vector<32x1xf32>
    %122 = vector.broadcast %121 : vector<32x1xf32> to vector<32x32xf32>
    %123 = arith.subf %119, %122 : vector<32x32xf32>
    %124 = math.exp %123 : vector<32x32xf32>
    %125 = arith.mulf %124, %110 : vector<32x32xf32>
    %cst_68 = arith.constant dense<0.000000e+00> : vector<32xf32>
    %126 = vector.multi_reduction <add>, %125, %cst_68 [1] : vector<32x32xf32> to vector<32xf32>
    %127 = vector.shape_cast %126 : vector<32xf32> to vector<32x1xf32>
    %cst_69 = arith.constant 0.000000e+00 : f32
    %128 = vector.broadcast %cst_69 : f32 to vector<32x1xf32>
    %129 = arith.cmpf ogt, %127, %128 : vector<32x1xf32>
    %cst_70 = arith.constant 1.000000e+00 : f32
    %130 = vector.broadcast %cst_70 : f32 to vector<32x1xf32>
    %131 = arith.select %129, %127, %130 : vector<32x1xi1>, vector<32x1xf32>
    %132 = vector.broadcast %131 : vector<32x1xf32> to vector<32x32xf32>
    %133 = arith.divf %125, %132 : vector<32x32xf32>
    %c11 = arith.constant 11 : index
    %c0_71 = arith.constant 0 : index
    %c0_72 = arith.constant 0 : index
    %134 = vector.load %arg2[%c11, %c0_71, %c0_72] : memref<33x96x96xf32, #tpu.memory_space<vmem>>, vector<1x96x96xf32>
    %135 = vector.shape_cast %134 : vector<1x96x96xf32> to vector<96x96xf32>
    %cst_73 = arith.constant dense<0.000000e+00> : vector<32x96xf32>
    %136 = tpu.matmul %54, %135, %cst_73 {dimension_numbers = #tpu.dot_dimension_numbers<[1], [0], [0], [1], [0, 0, 1, 1], [], []>} : vector<32x96xf32>, vector<96x96xf32>, vector<32x96xf32> -> vector<32x96xf32>
    %cst_74 = arith.constant dense<0.000000e+00> : vector<32x32xf32>
    %137 = tpu.matmul %56, %117, %cst_74 {dimension_numbers = #tpu.dot_dimension_numbers<[1], [1], [0], [0], [0, 0, 1, 0], [], []>} : vector<32x96xf32>, vector<32x96xf32>, vector<32x32xf32> -> vector<32x32xf32>
    %138 = arith.addf %137, %114 : vector<32x32xf32>
    %cst_75 = arith.constant dense<0xFF800000> : vector<32xf32>
    %139 = vector.multi_reduction <maximumf>, %138, %cst_75 [1] : vector<32x32xf32> to vector<32xf32>
    %140 = vector.shape_cast %139 : vector<32xf32> to vector<32x1xf32>
    %141 = vector.broadcast %140 : vector<32x1xf32> to vector<32x32xf32>
    %142 = arith.subf %138, %141 : vector<32x32xf32>
    %143 = math.exp %142 : vector<32x32xf32>
    %144 = arith.mulf %143, %110 : vector<32x32xf32>
    %cst_76 = arith.constant dense<0.000000e+00> : vector<32xf32>
    %145 = vector.multi_reduction <add>, %144, %cst_76 [1] : vector<32x32xf32> to vector<32xf32>
    %146 = vector.shape_cast %145 : vector<32xf32> to vector<32x1xf32>
    %cst_77 = arith.constant 0.000000e+00 : f32
    %147 = vector.broadcast %cst_77 : f32 to vector<32x1xf32>
    %148 = arith.cmpf ogt, %146, %147 : vector<32x1xf32>
    %cst_78 = arith.constant 1.000000e+00 : f32
    %149 = vector.broadcast %cst_78 : f32 to vector<32x1xf32>
    %150 = arith.select %148, %146, %149 : vector<32x1xi1>, vector<32x1xf32>
    %151 = vector.broadcast %150 : vector<32x1xf32> to vector<32x32xf32>
    %152 = arith.divf %144, %151 : vector<32x32xf32>
    %c12 = arith.constant 12 : index
    %c0_79 = arith.constant 0 : index
    %c0_80 = arith.constant 0 : index
    %153 = vector.load %arg2[%c12, %c0_79, %c0_80] : memref<33x96x96xf32, #tpu.memory_space<vmem>>, vector<1x96x96xf32>
    %154 = vector.shape_cast %153 : vector<1x96x96xf32> to vector<96x96xf32>
    %cst_81 = arith.constant dense<0.000000e+00> : vector<32x96xf32>
    %155 = tpu.matmul %54, %154, %cst_81 {dimension_numbers = #tpu.dot_dimension_numbers<[1], [0], [0], [1], [0, 0, 1, 1], [], []>} : vector<32x96xf32>, vector<96x96xf32>, vector<32x96xf32> -> vector<32x96xf32>
    %156 = tpu.concatenate %133, %152 in 1 : vector<32x32xf32>, vector<32x32xf32> -> vector<32x64xf32>
    %157 = tpu.concatenate %136, %155 in 0 : vector<32x96xf32>, vector<32x96xf32> -> vector<64x96xf32>
    %cst_82 = arith.constant dense<0.000000e+00> : vector<32x96xf32>
    %158 = tpu.matmul %156, %157, %cst_82 {dimension_numbers = #tpu.dot_dimension_numbers<[1], [0], [0], [1], [0, 0, 1, 1], [], []>} : vector<32x64xf32>, vector<64x96xf32>, vector<32x96xf32> -> vector<32x96xf32>
    %159 = arith.addf %108, %158 : vector<32x96xf32>
    %c2_83 = arith.constant 2 : index
    %c0_84 = arith.constant 0 : index
    %c0_85 = arith.constant 0 : index
    %160 = vector.load %arg1[%c2_83, %c0_84, %c0_85] : memref<4x32x32xf32, #tpu.memory_space<vmem>>, vector<1x32x32xf32>
    %161 = vector.shape_cast %160 : vector<1x32x32xf32> to vector<32x32xf32>
    %cst_86 = arith.constant 1.000000e+00 : f32
    %162 = vector.broadcast %cst_86 : f32 to vector<32x32xf32>
    %163 = arith.subf %161, %162 : vector<32x32xf32>
    %cst_87 = arith.constant 1.000000e+30 : f32
    %164 = vector.broadcast %cst_87 : f32 to vector<32x32xf32>
    %165 = arith.mulf %163, %164 : vector<32x32xf32>
    %c7 = arith.constant 7 : index
    %c0_88 = arith.constant 0 : index
    %c0_89 = arith.constant 0 : index
    %166 = vector.load %arg2[%c7, %c0_88, %c0_89] : memref<33x96x96xf32, #tpu.memory_space<vmem>>, vector<1x96x96xf32>
    %167 = vector.shape_cast %166 : vector<1x96x96xf32> to vector<96x96xf32>
    %cst_90 = arith.constant dense<0.000000e+00> : vector<32x96xf32>
    %168 = tpu.matmul %40, %167, %cst_90 {dimension_numbers = #tpu.dot_dimension_numbers<[1], [0], [0], [1], [0, 0, 1, 1], [], []>} : vector<32x96xf32>, vector<96x96xf32>, vector<32x96xf32> -> vector<32x96xf32>
    %cst_91 = arith.constant dense<0.000000e+00> : vector<32x32xf32>
    %169 = tpu.matmul %55, %168, %cst_91 {dimension_numbers = #tpu.dot_dimension_numbers<[1], [1], [0], [0], [0, 0, 1, 0], [], []>} : vector<32x96xf32>, vector<32x96xf32>, vector<32x32xf32> -> vector<32x32xf32>
    %170 = arith.addf %169, %165 : vector<32x32xf32>
    %cst_92 = arith.constant dense<0xFF800000> : vector<32xf32>
    %171 = vector.multi_reduction <maximumf>, %170, %cst_92 [1] : vector<32x32xf32> to vector<32xf32>
    %172 = vector.shape_cast %171 : vector<32xf32> to vector<32x1xf32>
    %173 = vector.broadcast %172 : vector<32x1xf32> to vector<32x32xf32>
    %174 = arith.subf %170, %173 : vector<32x32xf32>
    %175 = math.exp %174 : vector<32x32xf32>
    %176 = arith.mulf %175, %161 : vector<32x32xf32>
    %cst_93 = arith.constant dense<0.000000e+00> : vector<32xf32>
    %177 = vector.multi_reduction <add>, %176, %cst_93 [1] : vector<32x32xf32> to vector<32xf32>
    %178 = vector.shape_cast %177 : vector<32xf32> to vector<32x1xf32>
    %cst_94 = arith.constant 0.000000e+00 : f32
    %179 = vector.broadcast %cst_94 : f32 to vector<32x1xf32>
    %180 = arith.cmpf ogt, %178, %179 : vector<32x1xf32>
    %cst_95 = arith.constant 1.000000e+00 : f32
    %181 = vector.broadcast %cst_95 : f32 to vector<32x1xf32>
    %182 = arith.select %180, %178, %181 : vector<32x1xi1>, vector<32x1xf32>
    %183 = vector.broadcast %182 : vector<32x1xf32> to vector<32x32xf32>
    %184 = arith.divf %176, %183 : vector<32x32xf32>
    %c13 = arith.constant 13 : index
    %c0_96 = arith.constant 0 : index
    %c0_97 = arith.constant 0 : index
    %185 = vector.load %arg2[%c13, %c0_96, %c0_97] : memref<33x96x96xf32, #tpu.memory_space<vmem>>, vector<1x96x96xf32>
    %186 = vector.shape_cast %185 : vector<1x96x96xf32> to vector<96x96xf32>
    %cst_98 = arith.constant dense<0.000000e+00> : vector<32x96xf32>
    %187 = tpu.matmul %54, %186, %cst_98 {dimension_numbers = #tpu.dot_dimension_numbers<[1], [0], [0], [1], [0, 0, 1, 1], [], []>} : vector<32x96xf32>, vector<96x96xf32>, vector<32x96xf32> -> vector<32x96xf32>
    %cst_99 = arith.constant dense<0.000000e+00> : vector<32x32xf32>
    %188 = tpu.matmul %56, %168, %cst_99 {dimension_numbers = #tpu.dot_dimension_numbers<[1], [1], [0], [0], [0, 0, 1, 0], [], []>} : vector<32x96xf32>, vector<32x96xf32>, vector<32x32xf32> -> vector<32x32xf32>
    %189 = arith.addf %188, %165 : vector<32x32xf32>
    %cst_100 = arith.constant dense<0xFF800000> : vector<32xf32>
    %190 = vector.multi_reduction <maximumf>, %189, %cst_100 [1] : vector<32x32xf32> to vector<32xf32>
    %191 = vector.shape_cast %190 : vector<32xf32> to vector<32x1xf32>
    %192 = vector.broadcast %191 : vector<32x1xf32> to vector<32x32xf32>
    %193 = arith.subf %189, %192 : vector<32x32xf32>
    %194 = math.exp %193 : vector<32x32xf32>
    %195 = arith.mulf %194, %161 : vector<32x32xf32>
    %cst_101 = arith.constant dense<0.000000e+00> : vector<32xf32>
    %196 = vector.multi_reduction <add>, %195, %cst_101 [1] : vector<32x32xf32> to vector<32xf32>
    %197 = vector.shape_cast %196 : vector<32xf32> to vector<32x1xf32>
    %cst_102 = arith.constant 0.000000e+00 : f32
    %198 = vector.broadcast %cst_102 : f32 to vector<32x1xf32>
    %199 = arith.cmpf ogt, %197, %198 : vector<32x1xf32>
    %cst_103 = arith.constant 1.000000e+00 : f32
    %200 = vector.broadcast %cst_103 : f32 to vector<32x1xf32>
    %201 = arith.select %199, %197, %200 : vector<32x1xi1>, vector<32x1xf32>
    %202 = vector.broadcast %201 : vector<32x1xf32> to vector<32x32xf32>
    %203 = arith.divf %195, %202 : vector<32x32xf32>
    %c14 = arith.constant 14 : index
    %c0_104 = arith.constant 0 : index
    %c0_105 = arith.constant 0 : index
    %204 = vector.load %arg2[%c14, %c0_104, %c0_105] : memref<33x96x96xf32, #tpu.memory_space<vmem>>, vector<1x96x96xf32>
    %205 = vector.shape_cast %204 : vector<1x96x96xf32> to vector<96x96xf32>
    %cst_106 = arith.constant dense<0.000000e+00> : vector<32x96xf32>
    %206 = tpu.matmul %54, %205, %cst_106 {dimension_numbers = #tpu.dot_dimension_numbers<[1], [0], [0], [1], [0, 0, 1, 1], [], []>} : vector<32x96xf32>, vector<96x96xf32>, vector<32x96xf32> -> vector<32x96xf32>
    %207 = tpu.concatenate %184, %203 in 1 : vector<32x32xf32>, vector<32x32xf32> -> vector<32x64xf32>
    %208 = tpu.concatenate %187, %206 in 0 : vector<32x96xf32>, vector<32x96xf32> -> vector<64x96xf32>
    %cst_107 = arith.constant dense<0.000000e+00> : vector<32x96xf32>
    %209 = tpu.matmul %207, %208, %cst_107 {dimension_numbers = #tpu.dot_dimension_numbers<[1], [0], [0], [1], [0, 0, 1, 1], [], []>} : vector<32x64xf32>, vector<64x96xf32>, vector<32x96xf32> -> vector<32x96xf32>
    %210 = arith.addf %159, %209 : vector<32x96xf32>
    %c3_108 = arith.constant 3 : index
    %c0_109 = arith.constant 0 : index
    %c0_110 = arith.constant 0 : index
    %211 = vector.load %arg1[%c3_108, %c0_109, %c0_110] : memref<4x32x32xf32, #tpu.memory_space<vmem>>, vector<1x32x32xf32>
    %212 = vector.shape_cast %211 : vector<1x32x32xf32> to vector<32x32xf32>
    %cst_111 = arith.constant 1.000000e+00 : f32
    %213 = vector.broadcast %cst_111 : f32 to vector<32x32xf32>
    %214 = arith.subf %212, %213 : vector<32x32xf32>
    %cst_112 = arith.constant 1.000000e+30 : f32
    %215 = vector.broadcast %cst_112 : f32 to vector<32x32xf32>
    %216 = arith.mulf %214, %215 : vector<32x32xf32>
    %c8 = arith.constant 8 : index
    %c0_113 = arith.constant 0 : index
    %c0_114 = arith.constant 0 : index
    %217 = vector.load %arg2[%c8, %c0_113, %c0_114] : memref<33x96x96xf32, #tpu.memory_space<vmem>>, vector<1x96x96xf32>
    %218 = vector.shape_cast %217 : vector<1x96x96xf32> to vector<96x96xf32>
    %cst_115 = arith.constant dense<0.000000e+00> : vector<32x96xf32>
    %219 = tpu.matmul %40, %218, %cst_115 {dimension_numbers = #tpu.dot_dimension_numbers<[1], [0], [0], [1], [0, 0, 1, 1], [], []>} : vector<32x96xf32>, vector<96x96xf32>, vector<32x96xf32> -> vector<32x96xf32>
    %cst_116 = arith.constant dense<0.000000e+00> : vector<32x32xf32>
    %220 = tpu.matmul %55, %219, %cst_116 {dimension_numbers = #tpu.dot_dimension_numbers<[1], [1], [0], [0], [0, 0, 1, 0], [], []>} : vector<32x96xf32>, vector<32x96xf32>, vector<32x32xf32> -> vector<32x32xf32>
    %221 = arith.addf %220, %216 : vector<32x32xf32>
    %cst_117 = arith.constant dense<0xFF800000> : vector<32xf32>
    %222 = vector.multi_reduction <maximumf>, %221, %cst_117 [1] : vector<32x32xf32> to vector<32xf32>
    %223 = vector.shape_cast %222 : vector<32xf32> to vector<32x1xf32>
    %224 = vector.broadcast %223 : vector<32x1xf32> to vector<32x32xf32>
    %225 = arith.subf %221, %224 : vector<32x32xf32>
    %226 = math.exp %225 : vector<32x32xf32>
    %227 = arith.mulf %226, %212 : vector<32x32xf32>
    %cst_118 = arith.constant dense<0.000000e+00> : vector<32xf32>
    %228 = vector.multi_reduction <add>, %227, %cst_118 [1] : vector<32x32xf32> to vector<32xf32>
    %229 = vector.shape_cast %228 : vector<32xf32> to vector<32x1xf32>
    %cst_119 = arith.constant 0.000000e+00 : f32
    %230 = vector.broadcast %cst_119 : f32 to vector<32x1xf32>
    %231 = arith.cmpf ogt, %229, %230 : vector<32x1xf32>
    %cst_120 = arith.constant 1.000000e+00 : f32
    %232 = vector.broadcast %cst_120 : f32 to vector<32x1xf32>
    %233 = arith.select %231, %229, %232 : vector<32x1xi1>, vector<32x1xf32>
    %234 = vector.broadcast %233 : vector<32x1xf32> to vector<32x32xf32>
    %235 = arith.divf %227, %234 : vector<32x32xf32>
    %c15 = arith.constant 15 : index
    %c0_121 = arith.constant 0 : index
    %c0_122 = arith.constant 0 : index
    %236 = vector.load %arg2[%c15, %c0_121, %c0_122] : memref<33x96x96xf32, #tpu.memory_space<vmem>>, vector<1x96x96xf32>
    %237 = vector.shape_cast %236 : vector<1x96x96xf32> to vector<96x96xf32>
    %cst_123 = arith.constant dense<0.000000e+00> : vector<32x96xf32>
    %238 = tpu.matmul %54, %237, %cst_123 {dimension_numbers = #tpu.dot_dimension_numbers<[1], [0], [0], [1], [0, 0, 1, 1], [], []>} : vector<32x96xf32>, vector<96x96xf32>, vector<32x96xf32> -> vector<32x96xf32>
    %cst_124 = arith.constant dense<0.000000e+00> : vector<32x32xf32>
    %239 = tpu.matmul %56, %219, %cst_124 {dimension_numbers = #tpu.dot_dimension_numbers<[1], [1], [0], [0], [0, 0, 1, 0], [], []>} : vector<32x96xf32>, vector<32x96xf32>, vector<32x32xf32> -> vector<32x32xf32>
    %240 = arith.addf %239, %216 : vector<32x32xf32>
    %cst_125 = arith.constant dense<0xFF800000> : vector<32xf32>
    %241 = vector.multi_reduction <maximumf>, %240, %cst_125 [1] : vector<32x32xf32> to vector<32xf32>
    %242 = vector.shape_cast %241 : vector<32xf32> to vector<32x1xf32>
    %243 = vector.broadcast %242 : vector<32x1xf32> to vector<32x32xf32>
    %244 = arith.subf %240, %243 : vector<32x32xf32>
    %245 = math.exp %244 : vector<32x32xf32>
    %246 = arith.mulf %245, %212 : vector<32x32xf32>
    %cst_126 = arith.constant dense<0.000000e+00> : vector<32xf32>
    %247 = vector.multi_reduction <add>, %246, %cst_126 [1] : vector<32x32xf32> to vector<32xf32>
    %248 = vector.shape_cast %247 : vector<32xf32> to vector<32x1xf32>
    %cst_127 = arith.constant 0.000000e+00 : f32
    %249 = vector.broadcast %cst_127 : f32 to vector<32x1xf32>
    %250 = arith.cmpf ogt, %248, %249 : vector<32x1xf32>
    %cst_128 = arith.constant 1.000000e+00 : f32
    %251 = vector.broadcast %cst_128 : f32 to vector<32x1xf32>
    %252 = arith.select %250, %248, %251 : vector<32x1xi1>, vector<32x1xf32>
    %253 = vector.broadcast %252 : vector<32x1xf32> to vector<32x32xf32>
    %254 = arith.divf %246, %253 : vector<32x32xf32>
    %c16 = arith.constant 16 : index
    %c0_129 = arith.constant 0 : index
    %c0_130 = arith.constant 0 : index
    %255 = vector.load %arg2[%c16, %c0_129, %c0_130] : memref<33x96x96xf32, #tpu.memory_space<vmem>>, vector<1x96x96xf32>
    %256 = vector.shape_cast %255 : vector<1x96x96xf32> to vector<96x96xf32>
    %cst_131 = arith.constant dense<0.000000e+00> : vector<32x96xf32>
    %257 = tpu.matmul %54, %256, %cst_131 {dimension_numbers = #tpu.dot_dimension_numbers<[1], [0], [0], [1], [0, 0, 1, 1], [], []>} : vector<32x96xf32>, vector<96x96xf32>, vector<32x96xf32> -> vector<32x96xf32>
    %258 = tpu.concatenate %235, %254 in 1 : vector<32x32xf32>, vector<32x32xf32> -> vector<32x64xf32>
    %259 = tpu.concatenate %238, %257 in 0 : vector<32x96xf32>, vector<32x96xf32> -> vector<64x96xf32>
    %cst_132 = arith.constant dense<0.000000e+00> : vector<32x96xf32>
    %260 = tpu.matmul %258, %259, %cst_132 {dimension_numbers = #tpu.dot_dimension_numbers<[1], [0], [0], [1], [0, 0, 1, 1], [], []>} : vector<32x64xf32>, vector<64x96xf32>, vector<32x96xf32> -> vector<32x96xf32>
    %261 = arith.addf %210, %260 : vector<32x96xf32>
    %cst_133 = arith.constant 5.000000e-01 : f32
    %262 = vector.broadcast %cst_133 : f32 to vector<32x96xf32>
    %263 = arith.mulf %262, %261 : vector<32x96xf32>
    %cst_134 = arith.constant 0.707106769 : f32
    %264 = vector.broadcast %cst_134 : f32 to vector<32x96xf32>
    %265 = arith.mulf %261, %264 : vector<32x96xf32>
    %266 = math.absf %265 : vector<32x96xf32>
    %cst_135 = arith.constant 0.327591091 : f32
    %267 = vector.broadcast %cst_135 : f32 to vector<32x96xf32>
    %268 = arith.mulf %267, %266 : vector<32x96xf32>
    %cst_136 = arith.constant 1.000000e+00 : f32
    %269 = vector.broadcast %cst_136 : f32 to vector<32x96xf32>
    %270 = arith.addf %269, %268 : vector<32x96xf32>
    %cst_137 = arith.constant 1.000000e+00 : f32
    %271 = vector.broadcast %cst_137 : f32 to vector<32x96xf32>
    %272 = arith.divf %271, %270 : vector<32x96xf32>
    %cst_138 = arith.constant 1.06140542 : f32
    %273 = vector.broadcast %cst_138 : f32 to vector<32x96xf32>
    %274 = arith.mulf %273, %272 : vector<32x96xf32>
    %cst_139 = arith.constant -1.45315206 : f32
    %275 = vector.broadcast %cst_139 : f32 to vector<32x96xf32>
    %276 = arith.addf %274, %275 : vector<32x96xf32>
    %277 = arith.mulf %276, %272 : vector<32x96xf32>
    %cst_140 = arith.constant 1.42141378 : f32
    %278 = vector.broadcast %cst_140 : f32 to vector<32x96xf32>
    %279 = arith.addf %277, %278 : vector<32x96xf32>
    %280 = arith.mulf %279, %272 : vector<32x96xf32>
    %cst_141 = arith.constant -0.284496725 : f32
    %281 = vector.broadcast %cst_141 : f32 to vector<32x96xf32>
    %282 = arith.addf %280, %281 : vector<32x96xf32>
    %283 = arith.mulf %282, %272 : vector<32x96xf32>
    %cst_142 = arith.constant 0.254829586 : f32
    %284 = vector.broadcast %cst_142 : f32 to vector<32x96xf32>
    %285 = arith.addf %283, %284 : vector<32x96xf32>
    %286 = arith.mulf %285, %272 : vector<32x96xf32>
    %287 = arith.mulf %266, %266 : vector<32x96xf32>
    %cst_143 = arith.constant 0.000000e+00 : f32
    %288 = vector.broadcast %cst_143 : f32 to vector<32x96xf32>
    %289 = arith.subf %288, %287 : vector<32x96xf32>
    %290 = math.exp %289 : vector<32x96xf32>
    %291 = arith.mulf %286, %290 : vector<32x96xf32>
    %cst_144 = arith.constant 1.000000e+00 : f32
    %292 = vector.broadcast %cst_144 : f32 to vector<32x96xf32>
    %293 = arith.subf %292, %291 : vector<32x96xf32>
    %cst_145 = arith.constant 0.000000e+00 : f32
    %294 = vector.broadcast %cst_145 : f32 to vector<32x96xf32>
    %295 = arith.cmpf oge, %265, %294 : vector<32x96xf32>
    %cst_146 = arith.constant 0.000000e+00 : f32
    %296 = vector.broadcast %cst_146 : f32 to vector<32x96xf32>
    %297 = arith.subf %296, %293 : vector<32x96xf32>
    %298 = arith.select %295, %293, %297 : vector<32x96xi1>, vector<32x96xf32>
    %cst_147 = arith.constant 1.000000e+00 : f32
    %299 = vector.broadcast %cst_147 : f32 to vector<32x96xf32>
    %300 = arith.addf %299, %298 : vector<32x96xf32>
    %301 = arith.mulf %263, %300 : vector<32x96xf32>
    %c4 = arith.constant 4 : index
    %c0_148 = arith.constant 0 : index
    %c0_149 = arith.constant 0 : index
    %302 = vector.load %arg2[%c4, %c0_148, %c0_149] : memref<33x96x96xf32, #tpu.memory_space<vmem>>, vector<1x96x96xf32>
    %303 = vector.shape_cast %302 : vector<1x96x96xf32> to vector<96x96xf32>
    %cst_150 = arith.constant dense<0.000000e+00> : vector<32x96xf32>
    %304 = tpu.matmul %301, %303, %cst_150 {dimension_numbers = #tpu.dot_dimension_numbers<[1], [0], [0], [1], [0, 0, 1, 1], [], []>} : vector<32x96xf32>, vector<96x96xf32>, vector<32x96xf32> -> vector<32x96xf32>
    %c4_151 = arith.constant 4 : index
    %c0_152 = arith.constant 0 : index
    %c0_153 = arith.constant 0 : index
    %305 = vector.load %arg3[%c4_151, %c0_152, %c0_153] : memref<11x1x96xf32, #tpu.memory_space<vmem>>, vector<1x1x96xf32>
    %306 = vector.shape_cast %305 : vector<1x1x96xf32> to vector<1x96xf32>
    %307 = vector.broadcast %306 : vector<1x96xf32> to vector<32x96xf32>
    %308 = arith.addf %304, %307 : vector<32x96xf32>
    %c5_154 = arith.constant 5 : index
    %c0_155 = arith.constant 0 : index
    %c0_156 = arith.constant 0 : index
    %309 = vector.load %arg3[%c5_154, %c0_155, %c0_156] : memref<11x1x96xf32, #tpu.memory_space<vmem>>, vector<1x1x96xf32>
    %310 = vector.shape_cast %309 : vector<1x1x96xf32> to vector<1x96xf32>
    %311 = vector.broadcast %310 : vector<1x96xf32> to vector<32x96xf32>
    %312 = arith.mulf %33, %311 : vector<32x96xf32>
    %313 = arith.addf %308, %312 : vector<32x96xf32>
    %c17 = arith.constant 17 : index
    %c0_157 = arith.constant 0 : index
    %c0_158 = arith.constant 0 : index
    %314 = vector.load %arg2[%c17, %c0_157, %c0_158] : memref<33x96x96xf32, #tpu.memory_space<vmem>>, vector<1x96x96xf32>
    %315 = vector.shape_cast %314 : vector<1x96x96xf32> to vector<96x96xf32>
    %cst_159 = arith.constant dense<0.000000e+00> : vector<32x96xf32>
    %316 = tpu.matmul %313, %315, %cst_159 {dimension_numbers = #tpu.dot_dimension_numbers<[1], [0], [0], [1], [0, 0, 1, 1], [], []>} : vector<32x96xf32>, vector<96x96xf32>, vector<32x96xf32> -> vector<32x96xf32>
    %c6_160 = arith.constant 6 : index
    %c0_161 = arith.constant 0 : index
    %c0_162 = arith.constant 0 : index
    %317 = vector.load %arg3[%c6_160, %c0_161, %c0_162] : memref<11x1x96xf32, #tpu.memory_space<vmem>>, vector<1x1x96xf32>
    %318 = vector.shape_cast %317 : vector<1x1x96xf32> to vector<1x96xf32>
    %319 = vector.broadcast %318 : vector<1x96xf32> to vector<32x96xf32>
    %320 = arith.addf %316, %319 : vector<32x96xf32>
    %c18 = arith.constant 18 : index
    %c0_163 = arith.constant 0 : index
    %c0_164 = arith.constant 0 : index
    %321 = vector.load %arg2[%c18, %c0_163, %c0_164] : memref<33x96x96xf32, #tpu.memory_space<vmem>>, vector<1x96x96xf32>
    %322 = vector.shape_cast %321 : vector<1x96x96xf32> to vector<96x96xf32>
    %cst_165 = arith.constant dense<0.000000e+00> : vector<32x96xf32>
    %323 = tpu.matmul %313, %322, %cst_165 {dimension_numbers = #tpu.dot_dimension_numbers<[1], [0], [0], [1], [0, 0, 1, 1], [], []>} : vector<32x96xf32>, vector<96x96xf32>, vector<32x96xf32> -> vector<32x96xf32>
    %c7_166 = arith.constant 7 : index
    %c0_167 = arith.constant 0 : index
    %c0_168 = arith.constant 0 : index
    %324 = vector.load %arg3[%c7_166, %c0_167, %c0_168] : memref<11x1x96xf32, #tpu.memory_space<vmem>>, vector<1x1x96xf32>
    %325 = vector.shape_cast %324 : vector<1x1x96xf32> to vector<1x96xf32>
    %326 = vector.broadcast %325 : vector<1x96xf32> to vector<32x96xf32>
    %327 = arith.addf %323, %326 : vector<32x96xf32>
    %c19 = arith.constant 19 : index
    %c0_169 = arith.constant 0 : index
    %c0_170 = arith.constant 0 : index
    %328 = vector.load %arg2[%c19, %c0_169, %c0_170] : memref<33x96x96xf32, #tpu.memory_space<vmem>>, vector<1x96x96xf32>
    %329 = vector.shape_cast %328 : vector<1x96x96xf32> to vector<96x96xf32>
    %cst_171 = arith.constant dense<0.000000e+00> : vector<32x96xf32>
    %330 = tpu.matmul %313, %329, %cst_171 {dimension_numbers = #tpu.dot_dimension_numbers<[1], [0], [0], [1], [0, 0, 1, 1], [], []>} : vector<32x96xf32>, vector<96x96xf32>, vector<32x96xf32> -> vector<32x96xf32>
    %c8_172 = arith.constant 8 : index
    %c0_173 = arith.constant 0 : index
    %c0_174 = arith.constant 0 : index
    %331 = vector.load %arg3[%c8_172, %c0_173, %c0_174] : memref<11x1x96xf32, #tpu.memory_space<vmem>>, vector<1x1x96xf32>
    %332 = vector.shape_cast %331 : vector<1x1x96xf32> to vector<1x96xf32>
    %333 = vector.broadcast %332 : vector<1x96xf32> to vector<32x96xf32>
    %334 = arith.addf %330, %333 : vector<32x96xf32>
    %335 = arith.mulf %327, %21 : vector<32x96xf32>
    %336 = arith.mulf %327, %23 : vector<32x96xf32>
    %cst_175 = arith.constant 0.000000e+00 : f32
    %337 = vector.broadcast %cst_175 : f32 to vector<32x96xf32>
    %c0_176 = arith.constant 0 : index
    %c0_177 = arith.constant 0 : index
    %c0_178 = arith.constant 0 : index
    %338 = vector.load %arg1[%c0_176, %c0_177, %c0_178] : memref<4x32x32xf32, #tpu.memory_space<vmem>>, vector<1x32x32xf32>
    %339 = vector.shape_cast %338 : vector<1x32x32xf32> to vector<32x32xf32>
    %cst_179 = arith.constant 1.000000e+00 : f32
    %340 = vector.broadcast %cst_179 : f32 to vector<32x32xf32>
    %341 = arith.subf %339, %340 : vector<32x32xf32>
    %cst_180 = arith.constant 1.000000e+30 : f32
    %342 = vector.broadcast %cst_180 : f32 to vector<32x32xf32>
    %343 = arith.mulf %341, %342 : vector<32x32xf32>
    %c21 = arith.constant 21 : index
    %c0_181 = arith.constant 0 : index
    %c0_182 = arith.constant 0 : index
    %344 = vector.load %arg2[%c21, %c0_181, %c0_182] : memref<33x96x96xf32, #tpu.memory_space<vmem>>, vector<1x96x96xf32>
    %345 = vector.shape_cast %344 : vector<1x96x96xf32> to vector<96x96xf32>
    %cst_183 = arith.constant dense<0.000000e+00> : vector<32x96xf32>
    %346 = tpu.matmul %320, %345, %cst_183 {dimension_numbers = #tpu.dot_dimension_numbers<[1], [0], [0], [1], [0, 0, 1, 1], [], []>} : vector<32x96xf32>, vector<96x96xf32>, vector<32x96xf32> -> vector<32x96xf32>
    %cst_184 = arith.constant dense<0.000000e+00> : vector<32x32xf32>
    %347 = tpu.matmul %335, %346, %cst_184 {dimension_numbers = #tpu.dot_dimension_numbers<[1], [1], [0], [0], [0, 0, 1, 0], [], []>} : vector<32x96xf32>, vector<32x96xf32>, vector<32x32xf32> -> vector<32x32xf32>
    %348 = arith.addf %347, %343 : vector<32x32xf32>
    %cst_185 = arith.constant dense<0xFF800000> : vector<32xf32>
    %349 = vector.multi_reduction <maximumf>, %348, %cst_185 [1] : vector<32x32xf32> to vector<32xf32>
    %350 = vector.shape_cast %349 : vector<32xf32> to vector<32x1xf32>
    %351 = vector.broadcast %350 : vector<32x1xf32> to vector<32x32xf32>
    %352 = arith.subf %348, %351 : vector<32x32xf32>
    %353 = math.exp %352 : vector<32x32xf32>
    %354 = arith.mulf %353, %339 : vector<32x32xf32>
    %cst_186 = arith.constant dense<0.000000e+00> : vector<32xf32>
    %355 = vector.multi_reduction <add>, %354, %cst_186 [1] : vector<32x32xf32> to vector<32xf32>
    %356 = vector.shape_cast %355 : vector<32xf32> to vector<32x1xf32>
    %cst_187 = arith.constant 0.000000e+00 : f32
    %357 = vector.broadcast %cst_187 : f32 to vector<32x1xf32>
    %358 = arith.cmpf ogt, %356, %357 : vector<32x1xf32>
    %cst_188 = arith.constant 1.000000e+00 : f32
    %359 = vector.broadcast %cst_188 : f32 to vector<32x1xf32>
    %360 = arith.select %358, %356, %359 : vector<32x1xi1>, vector<32x1xf32>
    %361 = vector.broadcast %360 : vector<32x1xf32> to vector<32x32xf32>
    %362 = arith.divf %354, %361 : vector<32x32xf32>
    %c25 = arith.constant 25 : index
    %c0_189 = arith.constant 0 : index
    %c0_190 = arith.constant 0 : index
    %363 = vector.load %arg2[%c25, %c0_189, %c0_190] : memref<33x96x96xf32, #tpu.memory_space<vmem>>, vector<1x96x96xf32>
    %364 = vector.shape_cast %363 : vector<1x96x96xf32> to vector<96x96xf32>
    %cst_191 = arith.constant dense<0.000000e+00> : vector<32x96xf32>
    %365 = tpu.matmul %334, %364, %cst_191 {dimension_numbers = #tpu.dot_dimension_numbers<[1], [0], [0], [1], [0, 0, 1, 1], [], []>} : vector<32x96xf32>, vector<96x96xf32>, vector<32x96xf32> -> vector<32x96xf32>
    %cst_192 = arith.constant dense<0.000000e+00> : vector<32x32xf32>
    %366 = tpu.matmul %336, %346, %cst_192 {dimension_numbers = #tpu.dot_dimension_numbers<[1], [1], [0], [0], [0, 0, 1, 0], [], []>} : vector<32x96xf32>, vector<32x96xf32>, vector<32x32xf32> -> vector<32x32xf32>
    %367 = arith.addf %366, %343 : vector<32x32xf32>
    %cst_193 = arith.constant dense<0xFF800000> : vector<32xf32>
    %368 = vector.multi_reduction <maximumf>, %367, %cst_193 [1] : vector<32x32xf32> to vector<32xf32>
    %369 = vector.shape_cast %368 : vector<32xf32> to vector<32x1xf32>
    %370 = vector.broadcast %369 : vector<32x1xf32> to vector<32x32xf32>
    %371 = arith.subf %367, %370 : vector<32x32xf32>
    %372 = math.exp %371 : vector<32x32xf32>
    %373 = arith.mulf %372, %339 : vector<32x32xf32>
    %cst_194 = arith.constant dense<0.000000e+00> : vector<32xf32>
    %374 = vector.multi_reduction <add>, %373, %cst_194 [1] : vector<32x32xf32> to vector<32xf32>
    %375 = vector.shape_cast %374 : vector<32xf32> to vector<32x1xf32>
    %cst_195 = arith.constant 0.000000e+00 : f32
    %376 = vector.broadcast %cst_195 : f32 to vector<32x1xf32>
    %377 = arith.cmpf ogt, %375, %376 : vector<32x1xf32>
    %cst_196 = arith.constant 1.000000e+00 : f32
    %378 = vector.broadcast %cst_196 : f32 to vector<32x1xf32>
    %379 = arith.select %377, %375, %378 : vector<32x1xi1>, vector<32x1xf32>
    %380 = vector.broadcast %379 : vector<32x1xf32> to vector<32x32xf32>
    %381 = arith.divf %373, %380 : vector<32x32xf32>
    %c26 = arith.constant 26 : index
    %c0_197 = arith.constant 0 : index
    %c0_198 = arith.constant 0 : index
    %382 = vector.load %arg2[%c26, %c0_197, %c0_198] : memref<33x96x96xf32, #tpu.memory_space<vmem>>, vector<1x96x96xf32>
    %383 = vector.shape_cast %382 : vector<1x96x96xf32> to vector<96x96xf32>
    %cst_199 = arith.constant dense<0.000000e+00> : vector<32x96xf32>
    %384 = tpu.matmul %334, %383, %cst_199 {dimension_numbers = #tpu.dot_dimension_numbers<[1], [0], [0], [1], [0, 0, 1, 1], [], []>} : vector<32x96xf32>, vector<96x96xf32>, vector<32x96xf32> -> vector<32x96xf32>
    %385 = tpu.concatenate %362, %381 in 1 : vector<32x32xf32>, vector<32x32xf32> -> vector<32x64xf32>
    %386 = tpu.concatenate %365, %384 in 0 : vector<32x96xf32>, vector<32x96xf32> -> vector<64x96xf32>
    %cst_200 = arith.constant dense<0.000000e+00> : vector<32x96xf32>
    %387 = tpu.matmul %385, %386, %cst_200 {dimension_numbers = #tpu.dot_dimension_numbers<[1], [0], [0], [1], [0, 0, 1, 1], [], []>} : vector<32x64xf32>, vector<64x96xf32>, vector<32x96xf32> -> vector<32x96xf32>
    %388 = arith.addf %337, %387 : vector<32x96xf32>
    %c1_201 = arith.constant 1 : index
    %c0_202 = arith.constant 0 : index
    %c0_203 = arith.constant 0 : index
    %389 = vector.load %arg1[%c1_201, %c0_202, %c0_203] : memref<4x32x32xf32, #tpu.memory_space<vmem>>, vector<1x32x32xf32>
    %390 = vector.shape_cast %389 : vector<1x32x32xf32> to vector<32x32xf32>
    %cst_204 = arith.constant 1.000000e+00 : f32
    %391 = vector.broadcast %cst_204 : f32 to vector<32x32xf32>
    %392 = arith.subf %390, %391 : vector<32x32xf32>
    %cst_205 = arith.constant 1.000000e+30 : f32
    %393 = vector.broadcast %cst_205 : f32 to vector<32x32xf32>
    %394 = arith.mulf %392, %393 : vector<32x32xf32>
    %c22 = arith.constant 22 : index
    %c0_206 = arith.constant 0 : index
    %c0_207 = arith.constant 0 : index
    %395 = vector.load %arg2[%c22, %c0_206, %c0_207] : memref<33x96x96xf32, #tpu.memory_space<vmem>>, vector<1x96x96xf32>
    %396 = vector.shape_cast %395 : vector<1x96x96xf32> to vector<96x96xf32>
    %cst_208 = arith.constant dense<0.000000e+00> : vector<32x96xf32>
    %397 = tpu.matmul %320, %396, %cst_208 {dimension_numbers = #tpu.dot_dimension_numbers<[1], [0], [0], [1], [0, 0, 1, 1], [], []>} : vector<32x96xf32>, vector<96x96xf32>, vector<32x96xf32> -> vector<32x96xf32>
    %cst_209 = arith.constant dense<0.000000e+00> : vector<32x32xf32>
    %398 = tpu.matmul %335, %397, %cst_209 {dimension_numbers = #tpu.dot_dimension_numbers<[1], [1], [0], [0], [0, 0, 1, 0], [], []>} : vector<32x96xf32>, vector<32x96xf32>, vector<32x32xf32> -> vector<32x32xf32>
    %399 = arith.addf %398, %394 : vector<32x32xf32>
    %cst_210 = arith.constant dense<0xFF800000> : vector<32xf32>
    %400 = vector.multi_reduction <maximumf>, %399, %cst_210 [1] : vector<32x32xf32> to vector<32xf32>
    %401 = vector.shape_cast %400 : vector<32xf32> to vector<32x1xf32>
    %402 = vector.broadcast %401 : vector<32x1xf32> to vector<32x32xf32>
    %403 = arith.subf %399, %402 : vector<32x32xf32>
    %404 = math.exp %403 : vector<32x32xf32>
    %405 = arith.mulf %404, %390 : vector<32x32xf32>
    %cst_211 = arith.constant dense<0.000000e+00> : vector<32xf32>
    %406 = vector.multi_reduction <add>, %405, %cst_211 [1] : vector<32x32xf32> to vector<32xf32>
    %407 = vector.shape_cast %406 : vector<32xf32> to vector<32x1xf32>
    %cst_212 = arith.constant 0.000000e+00 : f32
    %408 = vector.broadcast %cst_212 : f32 to vector<32x1xf32>
    %409 = arith.cmpf ogt, %407, %408 : vector<32x1xf32>
    %cst_213 = arith.constant 1.000000e+00 : f32
    %410 = vector.broadcast %cst_213 : f32 to vector<32x1xf32>
    %411 = arith.select %409, %407, %410 : vector<32x1xi1>, vector<32x1xf32>
    %412 = vector.broadcast %411 : vector<32x1xf32> to vector<32x32xf32>
    %413 = arith.divf %405, %412 : vector<32x32xf32>
    %c27 = arith.constant 27 : index
    %c0_214 = arith.constant 0 : index
    %c0_215 = arith.constant 0 : index
    %414 = vector.load %arg2[%c27, %c0_214, %c0_215] : memref<33x96x96xf32, #tpu.memory_space<vmem>>, vector<1x96x96xf32>
    %415 = vector.shape_cast %414 : vector<1x96x96xf32> to vector<96x96xf32>
    %cst_216 = arith.constant dense<0.000000e+00> : vector<32x96xf32>
    %416 = tpu.matmul %334, %415, %cst_216 {dimension_numbers = #tpu.dot_dimension_numbers<[1], [0], [0], [1], [0, 0, 1, 1], [], []>} : vector<32x96xf32>, vector<96x96xf32>, vector<32x96xf32> -> vector<32x96xf32>
    %cst_217 = arith.constant dense<0.000000e+00> : vector<32x32xf32>
    %417 = tpu.matmul %336, %397, %cst_217 {dimension_numbers = #tpu.dot_dimension_numbers<[1], [1], [0], [0], [0, 0, 1, 0], [], []>} : vector<32x96xf32>, vector<32x96xf32>, vector<32x32xf32> -> vector<32x32xf32>
    %418 = arith.addf %417, %394 : vector<32x32xf32>
    %cst_218 = arith.constant dense<0xFF800000> : vector<32xf32>
    %419 = vector.multi_reduction <maximumf>, %418, %cst_218 [1] : vector<32x32xf32> to vector<32xf32>
    %420 = vector.shape_cast %419 : vector<32xf32> to vector<32x1xf32>
    %421 = vector.broadcast %420 : vector<32x1xf32> to vector<32x32xf32>
    %422 = arith.subf %418, %421 : vector<32x32xf32>
    %423 = math.exp %422 : vector<32x32xf32>
    %424 = arith.mulf %423, %390 : vector<32x32xf32>
    %cst_219 = arith.constant dense<0.000000e+00> : vector<32xf32>
    %425 = vector.multi_reduction <add>, %424, %cst_219 [1] : vector<32x32xf32> to vector<32xf32>
    %426 = vector.shape_cast %425 : vector<32xf32> to vector<32x1xf32>
    %cst_220 = arith.constant 0.000000e+00 : f32
    %427 = vector.broadcast %cst_220 : f32 to vector<32x1xf32>
    %428 = arith.cmpf ogt, %426, %427 : vector<32x1xf32>
    %cst_221 = arith.constant 1.000000e+00 : f32
    %429 = vector.broadcast %cst_221 : f32 to vector<32x1xf32>
    %430 = arith.select %428, %426, %429 : vector<32x1xi1>, vector<32x1xf32>
    %431 = vector.broadcast %430 : vector<32x1xf32> to vector<32x32xf32>
    %432 = arith.divf %424, %431 : vector<32x32xf32>
    %c28 = arith.constant 28 : index
    %c0_222 = arith.constant 0 : index
    %c0_223 = arith.constant 0 : index
    %433 = vector.load %arg2[%c28, %c0_222, %c0_223] : memref<33x96x96xf32, #tpu.memory_space<vmem>>, vector<1x96x96xf32>
    %434 = vector.shape_cast %433 : vector<1x96x96xf32> to vector<96x96xf32>
    %cst_224 = arith.constant dense<0.000000e+00> : vector<32x96xf32>
    %435 = tpu.matmul %334, %434, %cst_224 {dimension_numbers = #tpu.dot_dimension_numbers<[1], [0], [0], [1], [0, 0, 1, 1], [], []>} : vector<32x96xf32>, vector<96x96xf32>, vector<32x96xf32> -> vector<32x96xf32>
    %436 = tpu.concatenate %413, %432 in 1 : vector<32x32xf32>, vector<32x32xf32> -> vector<32x64xf32>
    %437 = tpu.concatenate %416, %435 in 0 : vector<32x96xf32>, vector<32x96xf32> -> vector<64x96xf32>
    %cst_225 = arith.constant dense<0.000000e+00> : vector<32x96xf32>
    %438 = tpu.matmul %436, %437, %cst_225 {dimension_numbers = #tpu.dot_dimension_numbers<[1], [0], [0], [1], [0, 0, 1, 1], [], []>} : vector<32x64xf32>, vector<64x96xf32>, vector<32x96xf32> -> vector<32x96xf32>
    %439 = arith.addf %388, %438 : vector<32x96xf32>
    %c2_226 = arith.constant 2 : index
    %c0_227 = arith.constant 0 : index
    %c0_228 = arith.constant 0 : index
    %440 = vector.load %arg1[%c2_226, %c0_227, %c0_228] : memref<4x32x32xf32, #tpu.memory_space<vmem>>, vector<1x32x32xf32>
    %441 = vector.shape_cast %440 : vector<1x32x32xf32> to vector<32x32xf32>
    %cst_229 = arith.constant 1.000000e+00 : f32
    %442 = vector.broadcast %cst_229 : f32 to vector<32x32xf32>
    %443 = arith.subf %441, %442 : vector<32x32xf32>
    %cst_230 = arith.constant 1.000000e+30 : f32
    %444 = vector.broadcast %cst_230 : f32 to vector<32x32xf32>
    %445 = arith.mulf %443, %444 : vector<32x32xf32>
    %c23 = arith.constant 23 : index
    %c0_231 = arith.constant 0 : index
    %c0_232 = arith.constant 0 : index
    %446 = vector.load %arg2[%c23, %c0_231, %c0_232] : memref<33x96x96xf32, #tpu.memory_space<vmem>>, vector<1x96x96xf32>
    %447 = vector.shape_cast %446 : vector<1x96x96xf32> to vector<96x96xf32>
    %cst_233 = arith.constant dense<0.000000e+00> : vector<32x96xf32>
    %448 = tpu.matmul %320, %447, %cst_233 {dimension_numbers = #tpu.dot_dimension_numbers<[1], [0], [0], [1], [0, 0, 1, 1], [], []>} : vector<32x96xf32>, vector<96x96xf32>, vector<32x96xf32> -> vector<32x96xf32>
    %cst_234 = arith.constant dense<0.000000e+00> : vector<32x32xf32>
    %449 = tpu.matmul %335, %448, %cst_234 {dimension_numbers = #tpu.dot_dimension_numbers<[1], [1], [0], [0], [0, 0, 1, 0], [], []>} : vector<32x96xf32>, vector<32x96xf32>, vector<32x32xf32> -> vector<32x32xf32>
    %450 = arith.addf %449, %445 : vector<32x32xf32>
    %cst_235 = arith.constant dense<0xFF800000> : vector<32xf32>
    %451 = vector.multi_reduction <maximumf>, %450, %cst_235 [1] : vector<32x32xf32> to vector<32xf32>
    %452 = vector.shape_cast %451 : vector<32xf32> to vector<32x1xf32>
    %453 = vector.broadcast %452 : vector<32x1xf32> to vector<32x32xf32>
    %454 = arith.subf %450, %453 : vector<32x32xf32>
    %455 = math.exp %454 : vector<32x32xf32>
    %456 = arith.mulf %455, %441 : vector<32x32xf32>
    %cst_236 = arith.constant dense<0.000000e+00> : vector<32xf32>
    %457 = vector.multi_reduction <add>, %456, %cst_236 [1] : vector<32x32xf32> to vector<32xf32>
    %458 = vector.shape_cast %457 : vector<32xf32> to vector<32x1xf32>
    %cst_237 = arith.constant 0.000000e+00 : f32
    %459 = vector.broadcast %cst_237 : f32 to vector<32x1xf32>
    %460 = arith.cmpf ogt, %458, %459 : vector<32x1xf32>
    %cst_238 = arith.constant 1.000000e+00 : f32
    %461 = vector.broadcast %cst_238 : f32 to vector<32x1xf32>
    %462 = arith.select %460, %458, %461 : vector<32x1xi1>, vector<32x1xf32>
    %463 = vector.broadcast %462 : vector<32x1xf32> to vector<32x32xf32>
    %464 = arith.divf %456, %463 : vector<32x32xf32>
    %c29 = arith.constant 29 : index
    %c0_239 = arith.constant 0 : index
    %c0_240 = arith.constant 0 : index
    %465 = vector.load %arg2[%c29, %c0_239, %c0_240] : memref<33x96x96xf32, #tpu.memory_space<vmem>>, vector<1x96x96xf32>
    %466 = vector.shape_cast %465 : vector<1x96x96xf32> to vector<96x96xf32>
    %cst_241 = arith.constant dense<0.000000e+00> : vector<32x96xf32>
    %467 = tpu.matmul %334, %466, %cst_241 {dimension_numbers = #tpu.dot_dimension_numbers<[1], [0], [0], [1], [0, 0, 1, 1], [], []>} : vector<32x96xf32>, vector<96x96xf32>, vector<32x96xf32> -> vector<32x96xf32>
    %cst_242 = arith.constant dense<0.000000e+00> : vector<32x32xf32>
    %468 = tpu.matmul %336, %448, %cst_242 {dimension_numbers = #tpu.dot_dimension_numbers<[1], [1], [0], [0], [0, 0, 1, 0], [], []>} : vector<32x96xf32>, vector<32x96xf32>, vector<32x32xf32> -> vector<32x32xf32>
    %469 = arith.addf %468, %445 : vector<32x32xf32>
    %cst_243 = arith.constant dense<0xFF800000> : vector<32xf32>
    %470 = vector.multi_reduction <maximumf>, %469, %cst_243 [1] : vector<32x32xf32> to vector<32xf32>
    %471 = vector.shape_cast %470 : vector<32xf32> to vector<32x1xf32>
    %472 = vector.broadcast %471 : vector<32x1xf32> to vector<32x32xf32>
    %473 = arith.subf %469, %472 : vector<32x32xf32>
    %474 = math.exp %473 : vector<32x32xf32>
    %475 = arith.mulf %474, %441 : vector<32x32xf32>
    %cst_244 = arith.constant dense<0.000000e+00> : vector<32xf32>
    %476 = vector.multi_reduction <add>, %475, %cst_244 [1] : vector<32x32xf32> to vector<32xf32>
    %477 = vector.shape_cast %476 : vector<32xf32> to vector<32x1xf32>
    %cst_245 = arith.constant 0.000000e+00 : f32
    %478 = vector.broadcast %cst_245 : f32 to vector<32x1xf32>
    %479 = arith.cmpf ogt, %477, %478 : vector<32x1xf32>
    %cst_246 = arith.constant 1.000000e+00 : f32
    %480 = vector.broadcast %cst_246 : f32 to vector<32x1xf32>
    %481 = arith.select %479, %477, %480 : vector<32x1xi1>, vector<32x1xf32>
    %482 = vector.broadcast %481 : vector<32x1xf32> to vector<32x32xf32>
    %483 = arith.divf %475, %482 : vector<32x32xf32>
    %c30 = arith.constant 30 : index
    %c0_247 = arith.constant 0 : index
    %c0_248 = arith.constant 0 : index
    %484 = vector.load %arg2[%c30, %c0_247, %c0_248] : memref<33x96x96xf32, #tpu.memory_space<vmem>>, vector<1x96x96xf32>
    %485 = vector.shape_cast %484 : vector<1x96x96xf32> to vector<96x96xf32>
    %cst_249 = arith.constant dense<0.000000e+00> : vector<32x96xf32>
    %486 = tpu.matmul %334, %485, %cst_249 {dimension_numbers = #tpu.dot_dimension_numbers<[1], [0], [0], [1], [0, 0, 1, 1], [], []>} : vector<32x96xf32>, vector<96x96xf32>, vector<32x96xf32> -> vector<32x96xf32>
    %487 = tpu.concatenate %464, %483 in 1 : vector<32x32xf32>, vector<32x32xf32> -> vector<32x64xf32>
    %488 = tpu.concatenate %467, %486 in 0 : vector<32x96xf32>, vector<32x96xf32> -> vector<64x96xf32>
    %cst_250 = arith.constant dense<0.000000e+00> : vector<32x96xf32>
    %489 = tpu.matmul %487, %488, %cst_250 {dimension_numbers = #tpu.dot_dimension_numbers<[1], [0], [0], [1], [0, 0, 1, 1], [], []>} : vector<32x64xf32>, vector<64x96xf32>, vector<32x96xf32> -> vector<32x96xf32>
    %490 = arith.addf %439, %489 : vector<32x96xf32>
    %c3_251 = arith.constant 3 : index
    %c0_252 = arith.constant 0 : index
    %c0_253 = arith.constant 0 : index
    %491 = vector.load %arg1[%c3_251, %c0_252, %c0_253] : memref<4x32x32xf32, #tpu.memory_space<vmem>>, vector<1x32x32xf32>
    %492 = vector.shape_cast %491 : vector<1x32x32xf32> to vector<32x32xf32>
    %cst_254 = arith.constant 1.000000e+00 : f32
    %493 = vector.broadcast %cst_254 : f32 to vector<32x32xf32>
    %494 = arith.subf %492, %493 : vector<32x32xf32>
    %cst_255 = arith.constant 1.000000e+30 : f32
    %495 = vector.broadcast %cst_255 : f32 to vector<32x32xf32>
    %496 = arith.mulf %494, %495 : vector<32x32xf32>
    %c24 = arith.constant 24 : index
    %c0_256 = arith.constant 0 : index
    %c0_257 = arith.constant 0 : index
    %497 = vector.load %arg2[%c24, %c0_256, %c0_257] : memref<33x96x96xf32, #tpu.memory_space<vmem>>, vector<1x96x96xf32>
    %498 = vector.shape_cast %497 : vector<1x96x96xf32> to vector<96x96xf32>
    %cst_258 = arith.constant dense<0.000000e+00> : vector<32x96xf32>
    %499 = tpu.matmul %320, %498, %cst_258 {dimension_numbers = #tpu.dot_dimension_numbers<[1], [0], [0], [1], [0, 0, 1, 1], [], []>} : vector<32x96xf32>, vector<96x96xf32>, vector<32x96xf32> -> vector<32x96xf32>
    %cst_259 = arith.constant dense<0.000000e+00> : vector<32x32xf32>
    %500 = tpu.matmul %335, %499, %cst_259 {dimension_numbers = #tpu.dot_dimension_numbers<[1], [1], [0], [0], [0, 0, 1, 0], [], []>} : vector<32x96xf32>, vector<32x96xf32>, vector<32x32xf32> -> vector<32x32xf32>
    %501 = arith.addf %500, %496 : vector<32x32xf32>
    %cst_260 = arith.constant dense<0xFF800000> : vector<32xf32>
    %502 = vector.multi_reduction <maximumf>, %501, %cst_260 [1] : vector<32x32xf32> to vector<32xf32>
    %503 = vector.shape_cast %502 : vector<32xf32> to vector<32x1xf32>
    %504 = vector.broadcast %503 : vector<32x1xf32> to vector<32x32xf32>
    %505 = arith.subf %501, %504 : vector<32x32xf32>
    %506 = math.exp %505 : vector<32x32xf32>
    %507 = arith.mulf %506, %492 : vector<32x32xf32>
    %cst_261 = arith.constant dense<0.000000e+00> : vector<32xf32>
    %508 = vector.multi_reduction <add>, %507, %cst_261 [1] : vector<32x32xf32> to vector<32xf32>
    %509 = vector.shape_cast %508 : vector<32xf32> to vector<32x1xf32>
    %cst_262 = arith.constant 0.000000e+00 : f32
    %510 = vector.broadcast %cst_262 : f32 to vector<32x1xf32>
    %511 = arith.cmpf ogt, %509, %510 : vector<32x1xf32>
    %cst_263 = arith.constant 1.000000e+00 : f32
    %512 = vector.broadcast %cst_263 : f32 to vector<32x1xf32>
    %513 = arith.select %511, %509, %512 : vector<32x1xi1>, vector<32x1xf32>
    %514 = vector.broadcast %513 : vector<32x1xf32> to vector<32x32xf32>
    %515 = arith.divf %507, %514 : vector<32x32xf32>
    %c31 = arith.constant 31 : index
    %c0_264 = arith.constant 0 : index
    %c0_265 = arith.constant 0 : index
    %516 = vector.load %arg2[%c31, %c0_264, %c0_265] : memref<33x96x96xf32, #tpu.memory_space<vmem>>, vector<1x96x96xf32>
    %517 = vector.shape_cast %516 : vector<1x96x96xf32> to vector<96x96xf32>
    %cst_266 = arith.constant dense<0.000000e+00> : vector<32x96xf32>
    %518 = tpu.matmul %334, %517, %cst_266 {dimension_numbers = #tpu.dot_dimension_numbers<[1], [0], [0], [1], [0, 0, 1, 1], [], []>} : vector<32x96xf32>, vector<96x96xf32>, vector<32x96xf32> -> vector<32x96xf32>
    %cst_267 = arith.constant dense<0.000000e+00> : vector<32x32xf32>
    %519 = tpu.matmul %336, %499, %cst_267 {dimension_numbers = #tpu.dot_dimension_numbers<[1], [1], [0], [0], [0, 0, 1, 0], [], []>} : vector<32x96xf32>, vector<32x96xf32>, vector<32x32xf32> -> vector<32x32xf32>
    %520 = arith.addf %519, %496 : vector<32x32xf32>
    %cst_268 = arith.constant dense<0xFF800000> : vector<32xf32>
    %521 = vector.multi_reduction <maximumf>, %520, %cst_268 [1] : vector<32x32xf32> to vector<32xf32>
    %522 = vector.shape_cast %521 : vector<32xf32> to vector<32x1xf32>
    %523 = vector.broadcast %522 : vector<32x1xf32> to vector<32x32xf32>
    %524 = arith.subf %520, %523 : vector<32x32xf32>
    %525 = math.exp %524 : vector<32x32xf32>
    %526 = arith.mulf %525, %492 : vector<32x32xf32>
    %cst_269 = arith.constant dense<0.000000e+00> : vector<32xf32>
    %527 = vector.multi_reduction <add>, %526, %cst_269 [1] : vector<32x32xf32> to vector<32xf32>
    %528 = vector.shape_cast %527 : vector<32xf32> to vector<32x1xf32>
    %cst_270 = arith.constant 0.000000e+00 : f32
    %529 = vector.broadcast %cst_270 : f32 to vector<32x1xf32>
    %530 = arith.cmpf ogt, %528, %529 : vector<32x1xf32>
    %cst_271 = arith.constant 1.000000e+00 : f32
    %531 = vector.broadcast %cst_271 : f32 to vector<32x1xf32>
    %532 = arith.select %530, %528, %531 : vector<32x1xi1>, vector<32x1xf32>
    %533 = vector.broadcast %532 : vector<32x1xf32> to vector<32x32xf32>
    %534 = arith.divf %526, %533 : vector<32x32xf32>
    %c32 = arith.constant 32 : index
    %c0_272 = arith.constant 0 : index
    %c0_273 = arith.constant 0 : index
    %535 = vector.load %arg2[%c32, %c0_272, %c0_273] : memref<33x96x96xf32, #tpu.memory_space<vmem>>, vector<1x96x96xf32>
    %536 = vector.shape_cast %535 : vector<1x96x96xf32> to vector<96x96xf32>
    %cst_274 = arith.constant dense<0.000000e+00> : vector<32x96xf32>
    %537 = tpu.matmul %334, %536, %cst_274 {dimension_numbers = #tpu.dot_dimension_numbers<[1], [0], [0], [1], [0, 0, 1, 1], [], []>} : vector<32x96xf32>, vector<96x96xf32>, vector<32x96xf32> -> vector<32x96xf32>
    %538 = tpu.concatenate %515, %534 in 1 : vector<32x32xf32>, vector<32x32xf32> -> vector<32x64xf32>
    %539 = tpu.concatenate %518, %537 in 0 : vector<32x96xf32>, vector<32x96xf32> -> vector<64x96xf32>
    %cst_275 = arith.constant dense<0.000000e+00> : vector<32x96xf32>
    %540 = tpu.matmul %538, %539, %cst_275 {dimension_numbers = #tpu.dot_dimension_numbers<[1], [0], [0], [1], [0, 0, 1, 1], [], []>} : vector<32x64xf32>, vector<64x96xf32>, vector<32x96xf32> -> vector<32x96xf32>
    %541 = arith.addf %490, %540 : vector<32x96xf32>
    %cst_276 = arith.constant 5.000000e-01 : f32
    %542 = vector.broadcast %cst_276 : f32 to vector<32x96xf32>
    %543 = arith.mulf %542, %541 : vector<32x96xf32>
    %cst_277 = arith.constant 0.707106769 : f32
    %544 = vector.broadcast %cst_277 : f32 to vector<32x96xf32>
    %545 = arith.mulf %541, %544 : vector<32x96xf32>
    %546 = math.absf %545 : vector<32x96xf32>
    %cst_278 = arith.constant 0.327591091 : f32
    %547 = vector.broadcast %cst_278 : f32 to vector<32x96xf32>
    %548 = arith.mulf %547, %546 : vector<32x96xf32>
    %cst_279 = arith.constant 1.000000e+00 : f32
    %549 = vector.broadcast %cst_279 : f32 to vector<32x96xf32>
    %550 = arith.addf %549, %548 : vector<32x96xf32>
    %cst_280 = arith.constant 1.000000e+00 : f32
    %551 = vector.broadcast %cst_280 : f32 to vector<32x96xf32>
    %552 = arith.divf %551, %550 : vector<32x96xf32>
    %cst_281 = arith.constant 1.06140542 : f32
    %553 = vector.broadcast %cst_281 : f32 to vector<32x96xf32>
    %554 = arith.mulf %553, %552 : vector<32x96xf32>
    %cst_282 = arith.constant -1.45315206 : f32
    %555 = vector.broadcast %cst_282 : f32 to vector<32x96xf32>
    %556 = arith.addf %554, %555 : vector<32x96xf32>
    %557 = arith.mulf %556, %552 : vector<32x96xf32>
    %cst_283 = arith.constant 1.42141378 : f32
    %558 = vector.broadcast %cst_283 : f32 to vector<32x96xf32>
    %559 = arith.addf %557, %558 : vector<32x96xf32>
    %560 = arith.mulf %559, %552 : vector<32x96xf32>
    %cst_284 = arith.constant -0.284496725 : f32
    %561 = vector.broadcast %cst_284 : f32 to vector<32x96xf32>
    %562 = arith.addf %560, %561 : vector<32x96xf32>
    %563 = arith.mulf %562, %552 : vector<32x96xf32>
    %cst_285 = arith.constant 0.254829586 : f32
    %564 = vector.broadcast %cst_285 : f32 to vector<32x96xf32>
    %565 = arith.addf %563, %564 : vector<32x96xf32>
    %566 = arith.mulf %565, %552 : vector<32x96xf32>
    %567 = arith.mulf %546, %546 : vector<32x96xf32>
    %cst_286 = arith.constant 0.000000e+00 : f32
    %568 = vector.broadcast %cst_286 : f32 to vector<32x96xf32>
    %569 = arith.subf %568, %567 : vector<32x96xf32>
    %570 = math.exp %569 : vector<32x96xf32>
    %571 = arith.mulf %566, %570 : vector<32x96xf32>
    %cst_287 = arith.constant 1.000000e+00 : f32
    %572 = vector.broadcast %cst_287 : f32 to vector<32x96xf32>
    %573 = arith.subf %572, %571 : vector<32x96xf32>
    %cst_288 = arith.constant 0.000000e+00 : f32
    %574 = vector.broadcast %cst_288 : f32 to vector<32x96xf32>
    %575 = arith.cmpf oge, %545, %574 : vector<32x96xf32>
    %cst_289 = arith.constant 0.000000e+00 : f32
    %576 = vector.broadcast %cst_289 : f32 to vector<32x96xf32>
    %577 = arith.subf %576, %573 : vector<32x96xf32>
    %578 = arith.select %575, %573, %577 : vector<32x96xi1>, vector<32x96xf32>
    %cst_290 = arith.constant 1.000000e+00 : f32
    %579 = vector.broadcast %cst_290 : f32 to vector<32x96xf32>
    %580 = arith.addf %579, %578 : vector<32x96xf32>
    %581 = arith.mulf %543, %580 : vector<32x96xf32>
    %c20 = arith.constant 20 : index
    %c0_291 = arith.constant 0 : index
    %c0_292 = arith.constant 0 : index
    %582 = vector.load %arg2[%c20, %c0_291, %c0_292] : memref<33x96x96xf32, #tpu.memory_space<vmem>>, vector<1x96x96xf32>
    %583 = vector.shape_cast %582 : vector<1x96x96xf32> to vector<96x96xf32>
    %cst_293 = arith.constant dense<0.000000e+00> : vector<32x96xf32>
    %584 = tpu.matmul %581, %583, %cst_293 {dimension_numbers = #tpu.dot_dimension_numbers<[1], [0], [0], [1], [0, 0, 1, 1], [], []>} : vector<32x96xf32>, vector<96x96xf32>, vector<32x96xf32> -> vector<32x96xf32>
    %c9_294 = arith.constant 9 : index
    %c0_295 = arith.constant 0 : index
    %c0_296 = arith.constant 0 : index
    %585 = vector.load %arg3[%c9_294, %c0_295, %c0_296] : memref<11x1x96xf32, #tpu.memory_space<vmem>>, vector<1x1x96xf32>
    %586 = vector.shape_cast %585 : vector<1x1x96xf32> to vector<1x96xf32>
    %587 = vector.broadcast %586 : vector<1x96xf32> to vector<32x96xf32>
    %588 = arith.addf %584, %587 : vector<32x96xf32>
    %c10_297 = arith.constant 10 : index
    %c0_298 = arith.constant 0 : index
    %c0_299 = arith.constant 0 : index
    %589 = vector.load %arg3[%c10_297, %c0_298, %c0_299] : memref<11x1x96xf32, #tpu.memory_space<vmem>>, vector<1x1x96xf32>
    %590 = vector.shape_cast %589 : vector<1x1x96xf32> to vector<1x96xf32>
    %591 = vector.broadcast %590 : vector<1x96xf32> to vector<32x96xf32>
    %592 = arith.mulf %313, %591 : vector<32x96xf32>
    %593 = arith.addf %588, %592 : vector<32x96xf32>
    %c0_300 = arith.constant 0 : index
    %c0_301 = arith.constant 0 : index
    %594 = vector.load %arg4[%c0_300, %c0_301] : memref<96x128xf32, #tpu.memory_space<vmem>>, vector<96x128xf32>
    %cst_302 = arith.constant dense<0.000000e+00> : vector<32x128xf32>
    %595 = tpu.matmul %593, %594, %cst_302 {dimension_numbers = #tpu.dot_dimension_numbers<[1], [0], [0], [1], [0, 0, 1, 1], [], []>} : vector<32x96xf32>, vector<96x128xf32>, vector<32x128xf32> -> vector<32x128xf32>
    %c0_303 = arith.constant 0 : index
    %c0_304 = arith.constant 0 : index
    %596 = vector.load %arg5[%c0_303, %c0_304] : memref<1x128xf32, #tpu.memory_space<vmem>>, vector<1x128xf32>
    %597 = vector.broadcast %596 : vector<1x128xf32> to vector<32x128xf32>
    %598 = arith.addf %595, %597 : vector<32x128xf32>
    %c0_305 = arith.constant 0 : index
    %c0_306 = arith.constant 0 : index
    %599 = vector.load %arg6[%c0_305, %c0_306] : memref<32x128xf32, #tpu.memory_space<vmem>>, vector<32x128xf32>
    tpu.vector_store %arg6[%c0_305, %c0_306], %598 {strides = array<i32>} : memref<32x128xf32, #tpu.memory_space<vmem>>, vector<32x128xf32>,
    return
  }
}

</mosaic_0001>

<llo_original>
// kernel: hgt_forward.1
$region0: #{hgt_forward.1}
  #allocation0 [shape = 'u32[]', space=smem, size = 0x4, offset = 0x4, fixed_abs, tag = 'smem constant byte address 0x4 - core index']
  #allocation1 [shape = 'u32[144,128]{1,0:T(1,128)}', space=vmem, size = 0x12000, scoped, tag = 'internal scratch']
  %s0 = inlined_call_operand.hbm [shape: f32[32,96], index: 0, kind: input, shape index: {}]
  %s1 = inlined_call_operand.hbm [shape: f32[4,32,32], index: 1, kind: input, shape index: {}]
  %s2 = inlined_call_operand.hbm [shape: f32[33,96,96], index: 2, kind: input, shape index: {}]
  %s3 = inlined_call_operand.hbm [shape: f32[11,1,96], index: 3, kind: input, shape index: {}]
  %s4 = inlined_call_operand.hbm [shape: f32[96,128], index: 4, kind: input, shape index: {}]
  %s5 = inlined_call_operand.hbm [shape: f32[1,128], index: 5, kind: input, shape index: {}]
  %s6 = inlined_call_operand.vmem [shape: f32[32,128], index: 6, kind: output, shape index: {}]
  %s7 = sld [smem:[#allocation0]]
  $region58: #{hgt_forward.1} parent=0
    _
  %s9 = ssub.s32 1, %s7
  %s10 = scalar_select 0, %s9, %s7
  $region1: #{hgt_forward.1} parent=0
    #allocation2 [shape = 'u8[16384]{0}', space=vmem, size = 0x4000, scoped, tag = 'input window, operand 0, single buffered']
    #allocation3 [shape = 's32[1]{0}', space=sflag, size = 0x4, scoped, tag = 'scoped memory for hgt_forward.1']
    #allocation4 [shape = 'u8[65536]{0}', space=vmem, size = 0x10000, scoped, tag = 'input window, operand 1, single buffered']
    #allocation5 [shape = 's32[1]{0}', space=sflag, size = 0x4, scoped, tag = 'scoped memory for hgt_forward.1']
    #allocation6 [shape = 'u8[1622016]{0}', space=vmem, size = 0x18c000, scoped, tag = 'input window, operand 2, single buffered']
    #allocation7 [shape = 'u8[5632]{0}', space=vmem, size = 0x1800, scoped, tag = 'input window, operand 3, single buffered']
    #allocation8 [shape = 's32[1]{0}', space=sflag, size = 0x4, scoped, tag = 'scoped memory for hgt_forward.1']
    #allocation9 [shape = 'u8[49152]{0}', space=vmem, size = 0xc000, scoped, tag = 'input window, operand 4, single buffered']
    #allocation10 [shape = 'u8[512]{0}', space=vmem, size = 0x400, scoped, tag = 'input window, operand 5, single buffered']
    #allocation11 [shape = 's32[1]{0}', space=sflag, size = 0x4, scoped, tag = 'scoped memory for hgt_forward.1']
    %11 = vsyncpa [#allocation3], 0
    %12 = vsyncpa [#allocation5], 0
    %13 = vsyncpa [#allocation8], 0
    %14 = vsyncpa [#allocation11], 0
    // Predicated region
    $region2: #{hgt_forward.1} parent=1 // pred_check
      _
    $region3: #{hgt_forward.1} parent=1 // pred_check_branch
      %16 = sbr.rel (0) target = $region5
    $region4: #{hgt_forward.1} parent=1 // pred_region
      %s18 = ssub.s32 512, 512
      %19 = vsyncadd [#allocation3], %s18
      %s20 = sshll.u32 [#allocation2], 4
      %s21 = int_to_ptr.vmem [resolvable:$true] %s20
      %26 = dma.hbm_to_vmem [thread:$0]  %s0, 512, %s21, [#allocation3], 128, 128, 8
    $region5: #{hgt_forward.1} parent=1 // pred_fallthru
      _
    // Predicated region
    $region6: #{hgt_forward.1} parent=1 // pred_check
      _
    $region7: #{hgt_forward.1} parent=1 // pred_check_branch
      %28 = sbr.rel (0) target = $region9
    $region8: #{hgt_forward.1} parent=1 // pred_region
      %s30 = ssub.s32 2048, 2048
      %31 = vsyncadd [#allocation5], %s30
      %s32 = sshll.u32 [#allocation4], 4
      %s33 = int_to_ptr.vmem [resolvable:$true] %s32
      %38 = dma.hbm_to_vmem [thread:$0]  %s1, 2048, %s33, [#allocation5], 128, 128, 8
    $region9: #{hgt_forward.1} parent=1 // pred_fallthru
      _
    // Predicated region
    $region10: #{hgt_forward.1} parent=1 // pred_check
      _
    $region11: #{hgt_forward.1} parent=1 // pred_check_branch
      %40 = sbr.rel (0) target = $region13
    $region12: #{hgt_forward.1} parent=1 // pred_region
      %s42 = ssub.s32 50688, 50688
      %43 = vsyncadd [#allocation5], %s42
      %s44 = sshll.u32 [#allocation6], 4
      %s45 = int_to_ptr.vmem [resolvable:$true] %s44
      %50 = dma.hbm_to_vmem [thread:$0]  %s2, 50688, %s45, [#allocation5], 128, 128, 8
    $region13: #{hgt_forward.1} parent=1 // pred_fallthru
      _
    // Predicated region
    $region14: #{hgt_forward.1} parent=1 // pred_check
      _
    $region15: #{hgt_forward.1} parent=1 // pred_check_branch
      %52 = sbr.rel (0) target = $region17
    $region16: #{hgt_forward.1} parent=1 // pred_region
      %s54 = ssub.s32 176, 176
      %55 = vsyncadd [#allocation8], %s54
      %s56 = sshll.u32 [#allocation7], 4
      %s57 = int_to_ptr.vmem [resolvable:$true] %s56
      %62 = dma.hbm_to_vmem [thread:$0]  %s3, 176, %s57, [#allocation8], 16, 16, 1
    $region17: #{hgt_forward.1} parent=1 // pred_fallthru
      _
    // Predicated region
    $region18: #{hgt_forward.1} parent=1 // pred_check
      _
    $region19: #{hgt_forward.1} parent=1 // pred_check_branch
      %64 = sbr.rel (0) target = $region21
    $region20: #{hgt_forward.1} parent=1 // pred_region
      %s66 = ssub.s32 1536, 1536
      %67 = vsyncadd [#allocation8], %s66
      %s68 = sshll.u32 [#allocation9], 4
      %s69 = int_to_ptr.vmem [resolvable:$true] %s68
      %74 = dma.hbm_to_vmem [thread:$0]  %s4, 1536, %s69, [#allocation8], 128, 128, 8
    $region21: #{hgt_forward.1} parent=1 // pred_fallthru
      _
    // Predicated region
    $region22: #{hgt_forward.1} parent=1 // pred_check
      _
    $region23: #{hgt_forward.1} parent=1 // pred_check_branch
      %76 = sbr.rel (0) target = $region25
    $region24: #{hgt_forward.1} parent=1 // pred_region
      %s78 = ssub.s32 16, 16
      %79 = vsyncadd [#allocation11], %s78
      %s81 = sshll.u32 [#allocation10], 4
      %s82 = int_to_ptr.vmem [resolvable:$true] %s81
      %84 = dma.hbm_to_vmem [thread:$0]  %s5, 16, %s82, [#allocation11]
    $region25: #{hgt_forward.1} parent=1 // pred_fallthru
      _
    // Predicated region
    $region26: #{hgt_forward.1} parent=1 // pred_check
      _
    $region27: #{hgt_forward.1} parent=1 // pred_check_branch
      %86 = sbr.rel (0) target = $region29
    $region28: #{hgt_forward.1} parent=1 // pred_region
      %87 = dma.done [#allocation3], 512
    $region29: #{hgt_forward.1} parent=1 // pred_fallthru
      _
    // Predicated region
    $region30: #{hgt_forward.1} parent=1 // pred_check
      _
    $region31: #{hgt_forward.1} parent=1 // pred_check_branch
      %89 = sbr.rel (0) target = $region33
    $region32: #{hgt_forward.1} parent=1 // pred_region
      %90 = dma.done [#allocation5], 2048
    $region33: #{hgt_forward.1} parent=1 // pred_fallthru
      _
    // Predicated region
    $region34: #{hgt_forward.1} parent=1 // pred_check
      _
    $region35: #{hgt_forward.1} parent=1 // pred_check_branch
      %92 = sbr.rel (0) target = $region37
    $region36: #{hgt_forward.1} parent=1 // pred_region
      %93 = dma.done [#allocation5], 50688
    $region37: #{hgt_forward.1} parent=1 // pred_fallthru
      _
    // Predicated region
    $region38: #{hgt_forward.1} parent=1 // pred_check
      _
    $region39: #{hgt_forward.1} parent=1 // pred_check_branch
      %95 = sbr.rel (0) target = $region41
    $region40: #{hgt_forward.1} parent=1 // pred_region
      %96 = dma.done [#allocation8], 176
    $region41: #{hgt_forward.1} parent=1 // pred_fallthru
      _
    // Predicated region
    $region42: #{hgt_forward.1} parent=1 // pred_check
      _
    $region43: #{hgt_forward.1} parent=1 // pred_check_branch
      %98 = sbr.rel (0) target = $region45
    $region44: #{hgt_forward.1} parent=1 // pred_region
      %99 = dma.done [#allocation8], 1536
    $region45: #{hgt_forward.1} parent=1 // pred_fallthru
      _
    // Predicated region
    $region46: #{hgt_forward.1} parent=1 // pred_check
      _
    $region47: #{hgt_forward.1} parent=1 // pred_check_branch
      %101 = sbr.rel (0) target = $region49
    $region48: #{hgt_forward.1} parent=1 // pred_region
      %102 = dma.done [#allocation11], 16
    $region49: #{hgt_forward.1} parent=1 // pred_fallthru
      _
    %v103 = vlaneseq
    %v104 = vand.u32 %v103, 127
    %vm105 = vcmp.lt.s32.totalorder %v104, 0
    %v106 = vsub.s32 0, %v104
    %v107 = vsel %vm105, %v106, %v104
    %v108 = vshrl.u32 %v107, 5
    %v109 = vand.u32 %v107, 31
    %v110 = vsub.s32 0, %v109
    %v111 = vsel %vm105, %v110, %v109
    %vm112 = vcmp.ne.s32.totalorder %v111, 0
    %vm113 = vcmp.lt.s32.totalorder %v111, 0
    %vm114 = vmand %vm113, %vm112
    %v115 = vadd.s32 %v111, 32
    %v116 = vsel %vm114, %v115, %v111
    %vm117 = vcmp.lt.s32.totalorder %v116, 16
    %v118 = vsel %vm117, 1.0, 0.0
    %v119 = vsub.f32 1.0, %v118
    %v120 = vld [vmem:[#allocation2] sm:$0xff]
    %v121 = vld [vmem:[#allocation2 + $0x8] sm:$0xff]
    %v122 = vld [vmem:[#allocation2 + $0x10] sm:$0xff]
    %v123 = vld [vmem:[#allocation2 + $0x18] sm:$0xff]
    %v124 = vld [vmem:[#allocation6] sm:$0xff]
    %v125 = vld [vmem:[#allocation6 + $0x8] sm:$0xff]
    %v126 = vld [vmem:[#allocation6 + $0x10] sm:$0xff]
    %v127 = vld [vmem:[#allocation6 + $0x18] sm:$0xff]
    %v128 = vld [vmem:[#allocation6 + $0x20] sm:$0xff]
    %v129 = vld [vmem:[#allocation6 + $0x28] sm:$0xff]
    %v130 = vld [vmem:[#allocation6 + $0x30] sm:$0xff]
    %v131 = vld [vmem:[#allocation6 + $0x38] sm:$0xff]
    %v132 = vld [vmem:[#allocation6 + $0x40] sm:$0xff]
    %v133 = vld [vmem:[#allocation6 + $0x48] sm:$0xff]
    %v134 = vld [vmem:[#allocation6 + $0x50] sm:$0xff]
    %v135 = vld [vmem:[#allocation6 + $0x58] sm:$0xff]
    %v136 = vld [vmem:[#allocation7] sm:$0x1]
    %v138 = vlaneseq
    %v139 = vshrl.u32 %v138, 7
    %v140 = vsub.s32 0, %v139
    %v141 = vrot.slane %v136, %v140
    %vm143 = vcmask 785408
    %v145 = vsel %vm143, %v120, 0
    %v148 = vsel %vm143, %v121, 0
    %v151 = vsel %vm143, %v122, 0
    %v154 = vsel %vm143, %v123, 0
    %156 = vmatprep.subr.mxu0 0.0
    %157 = vmatpush1.msra.mxu0 %v124
    %158 = vmatprep.subr.mxu0 0.0
    %159 = vmatpush1.msra.mxu0 %v125
    %160 = vmatprep.subr.mxu0 0.0
    %161 = vmatpush1.msra.mxu0 %v126
    %162 = vmatprep.subr.mxu0 0.0
    %163 = vmatpush1.msra.mxu0 %v127
    %164 = vmatprep.subr.mxu0 0.0
    %165 = vmatpush1.msra.mxu0 %v128
    %166 = vmatprep.subr.mxu0 0.0
    %167 = vmatpush1.msra.mxu0 %v129
    %168 = vmatprep.subr.mxu0 0.0
    %169 = vmatpush1.msra.mxu0 %v130
    %170 = vmatprep.subr.mxu0 0.0
    %171 = vmatpush1.msra.mxu0 %v131
    %172 = vmatprep.subr.mxu0 0.0
    %173 = vmatpush1.msra.mxu0 %v132
    %174 = vmatprep.subr.mxu0 0.0
    %175 = vmatpush1.msra.mxu0 %v133
    %176 = vmatprep.subr.mxu0 0.0
    %177 = vmatpush1.msra.mxu0 %v134
    %178 = vmatprep.subr.mxu0 0.0
    %179 = vmatpush1.msra.mxu0 %v135
    %180 = vmatprep.subr.mxu0 0.0
    %181 = vmatpush1.msra.mxu0 0.0
    %182 = vmatprep.subr.mxu0 0.0
    %183 = vmatpush1.msra.mxu0 0.0
    %184 = vmatprep.subr.mxu0 0.0
    %185 = vmatpush1.msra.mxu0 0.0
    %186 = vmatprep.subr.mxu0 0.0
    %187 = vmatpush1.msra.mxu0 0.0
    %188 = vmatprep.subr.mxu0 0.0
    %189 = vmatpush1.msra.mxu0 0.0
    %190 = vmatprep.subr.mxu0 0.0
    %191 = vmatpush1.msra.mxu0 0.0
    %192 = vmatprep.subr.mxu0 0.0
    %193 = vmatpush1.msra.mxu0 0.0
    %194 = vmatprep.subr.mxu0 0.0
    %195 = vmatpush1.msra.mxu0 0.0
    %196 = vmatprep.subr.mxu0 0.0
    %197 = vmatpush1.msra.mxu0 0.0
    %198 = vmatprep.subr.mxu0 0.0
    %199 = vmatpush1.msra.mxu0 0.0
    %200 = vmatprep.subr.mxu0 0.0
    %201 = vmatpush1.msra.mxu0 0.0
    %202 = vmatprep.subr.mxu0 0.0
    %203 = vmatpush1.msra.mxu0 0.0
    %204 = vmatprep.subr.mxu0 0.0
    %205 = vmatpush1.msra.mxu0 0.0
    %206 = vmatprep.subr.mxu0 0.0
    %207 = vmatpush1.msra.mxu0 0.0
    %208 = vmatprep.subr.mxu0 0.0
    %209 = vmatpush1.msra.mxu0 0.0
    %210 = vmatprep.subr.mxu0 0.0
    %211 = vmatpush1.msra.mxu0 0.0
    %212 = vmatprep.subr.mxu0 0.0
    %213 = vmatpush1.msra.mxu0 0.0
    %214 = vmatprep.subr.mxu0 0.0
    %215 = vmatpush1.msra.mxu0 0.0
    %216 = vmatprep.subr.mxu0 0.0
    %217 = vmatpush1.msra.mxu0 0.0
    %218 = vmatprep.subr.mxu0 0.0
    %219 = vmatpush1.msra.mxu0 0.0
    %220 = vmatprep.mubr.f32.mxu0 0.0
    %221 = vmatmul.mubr.f32.gmra.mrb[0].mxu0 %v145
    %v222 = vpop.f32.mrb[0].mxu0
    %v223 = vadd.f32 %v141, %v222
    %v224 = vpop.f32.mrb[0].mxu0
    %225 = vmatprep.mubr.f32.mxu0 0.0
    %226 = vmatmul.mubr.f32.gmra.mrb[0].mxu0 %v148
    %v227 = vpop.f32.mrb[0].mxu0
    %v228 = vadd.f32 %v141, %v227
    %v229 = vpop.f32.mrb[0].mxu0
    %230 = vmatprep.mubr.f32.mxu0 0.0
    %231 = vmatmul.mubr.f32.gmra.mrb[0].mxu0 %v151
    %v232 = vpop.f32.mrb[0].mxu0
    %v233 = vadd.f32 %v141, %v232
    %v234 = vpop.f32.mrb[0].mxu0
    %235 = vmatprep.mubr.f32.mxu0 0.0
    %236 = vmatmul.mubr.f32.gmra.mrb[0].mxu0 %v154
    %v237 = vpop.f32.mrb[0].mxu0
    %v238 = vadd.f32 %v141, %v237
    %v239 = vpop.f32.mrb[0].mxu0
    %240 = vdwg.mxu0
    %v241 = vmax.f32 %v223, 0.0
    %v242 = vmax.f32 %v228, 0.0
    %v243 = vmax.f32 %v233, 0.0
    %v244 = vmax.f32 %v238, 0.0
    %s245 = scalar_lea.vmem [#allocation6], 96
    %v246 = vld [vmem:[%s245] sm:$0xff]
    %v247 = vld [vmem:[%s245 + $0x8] sm:$0xff]
    %v248 = vld [vmem:[%s245 + $0x10] sm:$0xff]
    %v249 = vld [vmem:[%s245 + $0x18] sm:$0xff]
    %v250 = vld [vmem:[%s245 + $0x20] sm:$0xff]
    %v251 = vld [vmem:[%s245 + $0x28] sm:$0xff]
    %v252 = vld [vmem:[%s245 + $0x30] sm:$0xff]
    %v253 = vld [vmem:[%s245 + $0x38] sm:$0xff]
    %v254 = vld [vmem:[%s245 + $0x40] sm:$0xff]
    %v255 = vld [vmem:[%s245 + $0x48] sm:$0xff]
    %v256 = vld [vmem:[%s245 + $0x50] sm:$0xff]
    %v257 = vld [vmem:[%s245 + $0x58] sm:$0xff]
    %s258 = scalar_lea.vmem [#allocation7], 1
    %v259 = vld [vmem:[%s258] sm:$0x1]
    %v261 = vlaneseq
    %v262 = vshrl.u32 %v261, 7
    %v263 = vsub.s32 0, %v262
    %v264 = vrot.slane %v259, %v263
    %v267 = vsel %vm143, %v241, 0
    %v270 = vsel %vm143, %v242, 0
    %v273 = vsel %vm143, %v243, 0
    %v276 = vsel %vm143, %v244, 0
    %278 = vmatprep.subr.mxu0 0.0
    %279 = vmatpush1.msra.mxu0 %v246
    %280 = vmatprep.subr.mxu0 0.0
    %281 = vmatpush1.msra.mxu0 %v247
    %282 = vmatprep.subr.mxu0 0.0
    %283 = vmatpush1.msra.mxu0 %v248
    %284 = vmatprep.subr.mxu0 0.0
    %285 = vmatpush1.msra.mxu0 %v249
    %286 = vmatprep.subr.mxu0 0.0
    %287 = vmatpush1.msra.mxu0 %v250
    %288 = vmatprep.subr.mxu0 0.0
    %289 = vmatpush1.msra.mxu0 %v251
    %290 = vmatprep.subr.mxu0 0.0
    %291 = vmatpush1.msra.mxu0 %v252
    %292 = vmatprep.subr.mxu0 0.0
    %293 = vmatpush1.msra.mxu0 %v253
    %294 = vmatprep.subr.mxu0 0.0
    %295 = vmatpush1.msra.mxu0 %v254
    %296 = vmatprep.subr.mxu0 0.0
    %297 = vmatpush1.msra.mxu0 %v255
    %298 = vmatprep.subr.mxu0 0.0
    %299 = vmatpush1.msra.mxu0 %v256
    %300 = vmatprep.subr.mxu0 0.0
    %301 = vmatpush1.msra.mxu0 %v257
    %302 = vmatprep.subr.mxu0 0.0
    %303 = vmatpush1.msra.mxu0 0.0
    %304 = vmatprep.subr.mxu0 0.0
    %305 = vmatpush1.msra.mxu0 0.0
    %306 = vmatprep.subr.mxu0 0.0
    %307 = vmatpush1.msra.mxu0 0.0
    %308 = vmatprep.subr.mxu0 0.0
    %309 = vmatpush1.msra.mxu0 0.0
    %310 = vmatprep.subr.mxu0 0.0
    %311 = vmatpush1.msra.mxu0 0.0
    %312 = vmatprep.subr.mxu0 0.0
    %313 = vmatpush1.msra.mxu0 0.0
    %314 = vmatprep.subr.mxu0 0.0
    %315 = vmatpush1.msra.mxu0 0.0
    %316 = vmatprep.subr.mxu0 0.0
    %317 = vmatpush1.msra.mxu0 0.0
    %318 = vmatprep.subr.mxu0 0.0
    %319 = vmatpush1.msra.mxu0 0.0
    %320 = vmatprep.subr.mxu0 0.0
    %321 = vmatpush1.msra.mxu0 0.0
    %322 = vmatprep.subr.mxu0 0.0
    %323 = vmatpush1.msra.mxu0 0.0
    %324 = vmatprep.subr.mxu0 0.0
    %325 = vmatpush1.msra.mxu0 0.0
    %326 = vmatprep.subr.mxu0 0.0
    %327 = vmatpush1.msra.mxu0 0.0
    %328 = vmatprep.subr.mxu0 0.0
    %329 = vmatpush1.msra.mxu0 0.0
    %330 = vmatprep.subr.mxu0 0.0
    %331 = vmatpush1.msra.mxu0 0.0
    %332 = vmatprep.subr.mxu0 0.0
    %333 = vmatpush1.msra.mxu0 0.0
    %334 = vmatprep.subr.mxu0 0.0
    %335 = vmatpush1.msra.mxu0 0.0
    %336 = vmatprep.subr.mxu0 0.0
    %337 = vmatpush1.msra.mxu0 0.0
    %338 = vmatprep.subr.mxu0 0.0
    %339 = vmatpush1.msra.mxu0 0.0
    %340 = vmatprep.subr.mxu0 0.0
    %341 = vmatpush1.msra.mxu0 0.0
    %342 = vmatprep.mubr.f32.mxu0 0.0
    %343 = vmatmul.mubr.f32.gmra.mrb[0].mxu0 %v267
    %v344 = vpop.f32.mrb[0].mxu0
    %v345 = vadd.f32 %v264, %v344
    %v346 = vpop.f32.mrb[0].mxu0
    %347 = vmatprep.mubr.f32.mxu0 0.0
    %348 = vmatmul.mubr.f32.gmra.mrb[0].mxu0 %v270
    %v349 = vpop.f32.mrb[0].mxu0
    %v350 = vadd.f32 %v264, %v349
    %v351 = vpop.f32.mrb[0].mxu0
    %352 = vmatprep.mubr.f32.mxu0 0.0
    %353 = vmatmul.mubr.f32.gmra.mrb[0].mxu0 %v273
    %v354 = vpop.f32.mrb[0].mxu0
    %v355 = vadd.f32 %v264, %v354
    %v356 = vpop.f32.mrb[0].mxu0
    %357 = vmatprep.mubr.f32.mxu0 0.0
    %358 = vmatmul.mubr.f32.gmra.mrb[0].mxu0 %v276
    %v359 = vpop.f32.mrb[0].mxu0
    %v360 = vadd.f32 %v264, %v359
    %v361 = vpop.f32.mrb[0].mxu0
    %362 = vdwg.mxu0
    %s363 = scalar_lea.vmem [#allocation6], 192
    %v364 = vld [vmem:[%s363] sm:$0xff]
    %v365 = vld [vmem:[%s363 + $0x8] sm:$0xff]
    %v366 = vld [vmem:[%s363 + $0x10] sm:$0xff]
    %v367 = vld [vmem:[%s363 + $0x18] sm:$0xff]
    %v368 = vld [vmem:[%s363 + $0x20] sm:$0xff]
    %v369 = vld [vmem:[%s363 + $0x28] sm:$0xff]
    %v370 = vld [vmem:[%s363 + $0x30] sm:$0xff]
    %v371 = vld [vmem:[%s363 + $0x38] sm:$0xff]
    %v372 = vld [vmem:[%s363 + $0x40] sm:$0xff]
    %v373 = vld [vmem:[%s363 + $0x48] sm:$0xff]
    %v374 = vld [vmem:[%s363 + $0x50] sm:$0xff]
    %v375 = vld [vmem:[%s363 + $0x58] sm:$0xff]
    %s376 = scalar_lea.vmem [#allocation7], 2
    %v377 = vld [vmem:[%s376] sm:$0x1]
    %v379 = vlaneseq
    %v380 = vshrl.u32 %v379, 7
    %v381 = vsub.s32 0, %v380
    %v382 = vrot.slane %v377, %v381
    %384 = vmatprep.subr.mxu0 0.0
    %385 = vmatpush1.msra.mxu0 %v364
    %386 = vmatprep.subr.mxu0 0.0
    %387 = vmatpush1.msra.mxu0 %v365
    %388 = vmatprep.subr.mxu0 0.0
    %389 = vmatpush1.msra.mxu0 %v366
    %390 = vmatprep.subr.mxu0 0.0
    %391 = vmatpush1.msra.mxu0 %v367
    %392 = vmatprep.subr.mxu0 0.0
    %393 = vmatpush1.msra.mxu0 %v368
    %394 = vmatprep.subr.mxu0 0.0
    %395 = vmatpush1.msra.mxu0 %v369
    %396 = vmatprep.subr.mxu0 0.0
    %397 = vmatpush1.msra.mxu0 %v370
    %398 = vmatprep.subr.mxu0 0.0
    %399 = vmatpush1.msra.mxu0 %v371
    %400 = vmatprep.subr.mxu0 0.0
    %401 = vmatpush1.msra.mxu0 %v372
    %402 = vmatprep.subr.mxu0 0.0
    %403 = vmatpush1.msra.mxu0 %v373
    %404 = vmatprep.subr.mxu0 0.0
    %405 = vmatpush1.msra.mxu0 %v374
    %406 = vmatprep.subr.mxu0 0.0
    %407 = vmatpush1.msra.mxu0 %v375
    %408 = vmatprep.subr.mxu0 0.0
    %409 = vmatpush1.msra.mxu0 0.0
    %410 = vmatprep.subr.mxu0 0.0
    %411 = vmatpush1.msra.mxu0 0.0
    %412 = vmatprep.subr.mxu0 0.0
    %413 = vmatpush1.msra.mxu0 0.0
    %414 = vmatprep.subr.mxu0 0.0
    %415 = vmatpush1.msra.mxu0 0.0
    %416 = vmatprep.subr.mxu0 0.0
    %417 = vmatpush1.msra.mxu0 0.0
    %418 = vmatprep.subr.mxu0 0.0
    %419 = vmatpush1.msra.mxu0 0.0
    %420 = vmatprep.subr.mxu0 0.0
    %421 = vmatpush1.msra.mxu0 0.0
    %422 = vmatprep.subr.mxu0 0.0
    %423 = vmatpush1.msra.mxu0 0.0
    %424 = vmatprep.subr.mxu0 0.0
    %425 = vmatpush1.msra.mxu0 0.0
    %426 = vmatprep.subr.mxu0 0.0
    %427 = vmatpush1.msra.mxu0 0.0
    %428 = vmatprep.subr.mxu0 0.0
    %429 = vmatpush1.msra.mxu0 0.0
    %430 = vmatprep.subr.mxu0 0.0
    %431 = vmatpush1.msra.mxu0 0.0
    %432 = vmatprep.subr.mxu0 0.0
    %433 = vmatpush1.msra.mxu0 0.0
    %434 = vmatprep.subr.mxu0 0.0
    %435 = vmatpush1.msra.mxu0 0.0
    %436 = vmatprep.subr.mxu0 0.0
    %437 = vmatpush1.msra.mxu0 0.0
    %438 = vmatprep.subr.mxu0 0.0
    %439 = vmatpush1.msra.mxu0 0.0
    %440 = vmatprep.subr.mxu0 0.0
    %441 = vmatpush1.msra.mxu0 0.0
    %442 = vmatprep.subr.mxu0 0.0
    %443 = vmatpush1.msra.mxu0 0.0
    %444 = vmatprep.subr.mxu0 0.0
    %445 = vmatpush1.msra.mxu0 0.0
    %446 = vmatprep.subr.mxu0 0.0
    %447 = vmatpush1.msra.mxu0 0.0
    %448 = vmatprep.mubr.f32.mxu0 0.0
    %449 = vmatmul.mubr.f32.gmra.mrb[0].mxu0 %v267
    %v450 = vpop.f32.mrb[0].mxu0
    %v451 = vadd.f32 %v382, %v450
    %v452 = vpop.f32.mrb[0].mxu0
    %453 = vmatprep.mubr.f32.mxu0 0.0
    %454 = vmatmul.mubr.f32.gmra.mrb[0].mxu0 %v270
    %v455 = vpop.f32.mrb[0].mxu0
    %v456 = vadd.f32 %v382, %v455
    %v457 = vpop.f32.mrb[0].mxu0
    %458 = vmatprep.mubr.f32.mxu0 0.0
    %459 = vmatmul.mubr.f32.gmra.mrb[0].mxu0 %v273
    %v460 = vpop.f32.mrb[0].mxu0
    %v461 = vadd.f32 %v382, %v460
    %v462 = vpop.f32.mrb[0].mxu0
    %463 = vmatprep.mubr.f32.mxu0 0.0
    %464 = vmatmul.mubr.f32.gmra.mrb[0].mxu0 %v276
    %v465 = vpop.f32.mrb[0].mxu0
    %v466 = vadd.f32 %v382, %v465
    %v467 = vpop.f32.mrb[0].mxu0
    %468 = vdwg.mxu0
    %s469 = scalar_lea.vmem [#allocation6], 288
    %v470 = vld [vmem:[%s469] sm:$0xff]
    %v471 = vld [vmem:[%s469 + $0x8] sm:$0xff]
    %v472 = vld [vmem:[%s469 + $0x10] sm:$0xff]
    %v473 = vld [vmem:[%s469 + $0x18] sm:$0xff]
    %v474 = vld [vmem:[%s469 + $0x20] sm:$0xff]
    %v475 = vld [vmem:[%s469 + $0x28] sm:$0xff]
    %v476 = vld [vmem:[%s469 + $0x30] sm:$0xff]
    %v477 = vld [vmem:[%s469 + $0x38] sm:$0xff]
    %v478 = vld [vmem:[%s469 + $0x40] sm:$0xff]
    %v479 = vld [vmem:[%s469 + $0x48] sm:$0xff]
    %v480 = vld [vmem:[%s469 + $0x50] sm:$0xff]
    %v481 = vld [vmem:[%s469 + $0x58] sm:$0xff]
    %s482 = scalar_lea.vmem [#allocation7], 3
    %v483 = vld [vmem:[%s482] sm:$0x1]
    %v485 = vlaneseq
    %v486 = vshrl.u32 %v485, 7
    %v487 = vsub.s32 0, %v486
    %v488 = vrot.slane %v483, %v487
    %490 = vmatprep.subr.mxu0 0.0
    %491 = vmatpush1.msra.mxu0 %v470
    %492 = vmatprep.subr.mxu0 0.0
    %493 = vmatpush1.msra.mxu0 %v471
    %494 = vmatprep.subr.mxu0 0.0
    %495 = vmatpush1.msra.mxu0 %v472
    %496 = vmatprep.subr.mxu0 0.0
    %497 = vmatpush1.msra.mxu0 %v473
    %498 = vmatprep.subr.mxu0 0.0
    %499 = vmatpush1.msra.mxu0 %v474
    %500 = vmatprep.subr.mxu0 0.0
    %501 = vmatpush1.msra.mxu0 %v475
    %502 = vmatprep.subr.mxu0 0.0
    %503 = vmatpush1.msra.mxu0 %v476
    %504 = vmatprep.subr.mxu0 0.0
    %505 = vmatpush1.msra.mxu0 %v477
    %506 = vmatprep.subr.mxu0 0.0
    %507 = vmatpush1.msra.mxu0 %v478
    %508 = vmatprep.subr.mxu0 0.0
    %509 = vmatpush1.msra.mxu0 %v479
    %510 = vmatprep.subr.mxu0 0.0
    %511 = vmatpush1.msra.mxu0 %v480
    %512 = vmatprep.subr.mxu0 0.0
    %513 = vmatpush1.msra.mxu0 %v481
    %514 = vmatprep.subr.mxu0 0.0
    %515 = vmatpush1.msra.mxu0 0.0
    %516 = vmatprep.subr.mxu0 0.0
    %517 = vmatpush1.msra.mxu0 0.0
    %518 = vmatprep.subr.mxu0 0.0
    %519 = vmatpush1.msra.mxu0 0.0
    %520 = vmatprep.subr.mxu0 0.0
    %521 = vmatpush1.msra.mxu0 0.0
    %522 = vmatprep.subr.mxu0 0.0
    %523 = vmatpush1.msra.mxu0 0.0
    %524 = vmatprep.subr.mxu0 0.0
    %525 = vmatpush1.msra.mxu0 0.0
    %526 = vmatprep.subr.mxu0 0.0
    %527 = vmatpush1.msra.mxu0 0.0
    %528 = vmatprep.subr.mxu0 0.0
    %529 = vmatpush1.msra.mxu0 0.0
    %530 = vmatprep.subr.mxu0 0.0
    %531 = vmatpush1.msra.mxu0 0.0
    %532 = vmatprep.subr.mxu0 0.0
    %533 = vmatpush1.msra.mxu0 0.0
    %534 = vmatprep.subr.mxu0 0.0
    %535 = vmatpush1.msra.mxu0 0.0
    %536 = vmatprep.subr.mxu0 0.0
    %537 = vmatpush1.msra.mxu0 0.0
    %538 = vmatprep.subr.mxu0 0.0
    %539 = vmatpush1.msra.mxu0 0.0
    %540 = vmatprep.subr.mxu0 0.0
    %541 = vmatpush1.msra.mxu0 0.0
    %542 = vmatprep.subr.mxu0 0.0
    %543 = vmatpush1.msra.mxu0 0.0
    %544 = vmatprep.subr.mxu0 0.0
    %545 = vmatpush1.msra.mxu0 0.0
    %546 = vmatprep.subr.mxu0 0.0
    %547 = vmatpush1.msra.mxu0 0.0
    %548 = vmatprep.subr.mxu0 0.0
    %549 = vmatpush1.msra.mxu0 0.0
    %550 = vmatprep.subr.mxu0 0.0
    %551 = vmatpush1.msra.mxu0 0.0
    %552 = vmatprep.subr.mxu0 0.0
    %553 = vmatpush1.msra.mxu0 0.0
    %554 = vmatprep.mubr.f32.mxu0 0.0
    %555 = vmatmul.mubr.f32.gmra.mrb[0].mxu0 %v267
    %v556 = vpop.f32.mrb[0].mxu0
    %v557 = vadd.f32 %v488, %v556
    %v558 = vpop.f32.mrb[0].mxu0
    %559 = vmatprep.mubr.f32.mxu0 0.0
    %560 = vmatmul.mubr.f32.gmra.mrb[0].mxu0 %v270
    %v561 = vpop.f32.mrb[0].mxu0
    %v562 = vadd.f32 %v488, %v561
    %v563 = vpop.f32.mrb[0].mxu0
    %564 = vmatprep.mubr.f32.mxu0 0.0
    %565 = vmatmul.mubr.f32.gmra.mrb[0].mxu0 %v273
    %v566 = vpop.f32.mrb[0].mxu0
    %v567 = vadd.f32 %v488, %v566
    %v568 = vpop.f32.mrb[0].mxu0
    %569 = vmatprep.mubr.f32.mxu0 0.0
    %570 = vmatmul.mubr.f32.gmra.mrb[0].mxu0 %v276
    %v571 = vpop.f32.mrb[0].mxu0
    %v572 = vadd.f32 %v488, %v571
    %v573 = vpop.f32.mrb[0].mxu0
    %574 = vdwg.mxu0
    %v575 = vmul.f32 %v451, %v118
    %v576 = vmul.f32 %v456, %v118
    %v577 = vmul.f32 %v461, %v118
    %v578 = vmul.f32 %v466, %v118
    %v579 = vmul.f32 %v451, %v119
    %v580 = vmul.f32 %v456, %v119
    %v581 = vmul.f32 %v461, %v119
    %v582 = vmul.f32 %v466, %v119
    %v583 = vld [vmem:[#allocation4] sm:$0xff]
    %v584 = vld [vmem:[#allocation4 + $0x8] sm:$0xff]
    %v585 = vld [vmem:[#allocation4 + $0x10] sm:$0xff]
    %v586 = vld [vmem:[#allocation4 + $0x18] sm:$0xff]
    %v587 = vsub.f32 %v583, 1.0
    %v588 = vsub.f32 %v584, 1.0
    %v589 = vsub.f32 %v585, 1.0
    %v590 = vsub.f32 %v586, 1.0
    %v591 = vmul.f32 %v587, 1e+30
    %v592 = vmul.f32 %v588, 1e+30
    %v593 = vmul.f32 %v589, 1e+30
    %v594 = vmul.f32 %v590, 1e+30
    %s595 = scalar_lea.vmem [#allocation6], 480
    %v596 = vld [vmem:[%s595] sm:$0xff]
    %v597 = vld [vmem:[%s595 + $0x8] sm:$0xff]
    %v598 = vld [vmem:[%s595 + $0x10] sm:$0xff]
    %v599 = vld [vmem:[%s595 + $0x18] sm:$0xff]
    %v600 = vld [vmem:[%s595 + $0x20] sm:$0xff]
    %v601 = vld [vmem:[%s595 + $0x28] sm:$0xff]
    %v602 = vld [vmem:[%s595 + $0x30] sm:$0xff]
    %v603 = vld [vmem:[%s595 + $0x38] sm:$0xff]
    %v604 = vld [vmem:[%s595 + $0x40] sm:$0xff]
    %v605 = vld [vmem:[%s595 + $0x48] sm:$0xff]
    %v606 = vld [vmem:[%s595 + $0x50] sm:$0xff]
    %v607 = vld [vmem:[%s595 + $0x58] sm:$0xff]
    %v609 = vsel %vm143, %v345, 0
    %v612 = vsel %vm143, %v350, 0
    %v615 = vsel %vm143, %v355, 0
    %v618 = vsel %vm143, %v360, 0
    %620 = vmatprep.subr.mxu0 0.0
    %621 = vmatpush1.msra.mxu0 %v596
    %622 = vmatprep.subr.mxu0 0.0
    %623 = vmatpush1.msra.mxu0 %v597
    %624 = vmatprep.subr.mxu0 0.0
    %625 = vmatpush1.msra.mxu0 %v598
    %626 = vmatprep.subr.mxu0 0.0
    %627 = vmatpush1.msra.mxu0 %v599
    %628 = vmatprep.subr.mxu0 0.0
    %629 = vmatpush1.msra.mxu0 %v600
    %630 = vmatprep.subr.mxu0 0.0
    %631 = vmatpush1.msra.mxu0 %v601
    %632 = vmatprep.subr.mxu0 0.0
    %633 = vmatpush1.msra.mxu0 %v602
    %634 = vmatprep.subr.mxu0 0.0
    %635 = vmatpush1.msra.mxu0 %v603
    %636 = vmatprep.subr.mxu0 0.0
    %637 = vmatpush1.msra.mxu0 %v604
    %638 = vmatprep.subr.mxu0 0.0
    %639 = vmatpush1.msra.mxu0 %v605
    %640 = vmatprep.subr.mxu0 0.0
    %641 = vmatpush1.msra.mxu0 %v606
    %642 = vmatprep.subr.mxu0 0.0
    %643 = vmatpush1.msra.mxu0 %v607
    %644 = vmatprep.subr.mxu0 0.0
    %645 = vmatpush1.msra.mxu0 0.0
    %646 = vmatprep.subr.mxu0 0.0
    %647 = vmatpush1.msra.mxu0 0.0
    %648 = vmatprep.subr.mxu0 0.0
    %649 = vmatpush1.msra.mxu0 0.0
    %650 = vmatprep.subr.mxu0 0.0
    %651 = vmatpush1.msra.mxu0 0.0
    %652 = vmatprep.subr.mxu0 0.0
    %653 = vmatpush1.msra.mxu0 0.0
    %654 = vmatprep.subr.mxu0 0.0
    %655 = vmatpush1.msra.mxu0 0.0
    %656 = vmatprep.subr.mxu0 0.0
    %657 = vmatpush1.msra.mxu0 0.0
    %658 = vmatprep.subr.mxu0 0.0
    %659 = vmatpush1.msra.mxu0 0.0
    %660 = vmatprep.subr.mxu0 0.0
    %661 = vmatpush1.msra.mxu0 0.0
    %662 = vmatprep.subr.mxu0 0.0
    %663 = vmatpush1.msra.mxu0 0.0
    %664 = vmatprep.subr.mxu0 0.0
    %665 = vmatpush1.msra.mxu0 0.0
    %666 = vmatprep.subr.mxu0 0.0
    %667 = vmatpush1.msra.mxu0 0.0
    %668 = vmatprep.subr.mxu0 0.0
    %669 = vmatpush1.msra.mxu0 0.0
    %670 = vmatprep.subr.mxu0 0.0
    %671 = vmatpush1.msra.mxu0 0.0
    %672 = vmatprep.subr.mxu0 0.0
    %673 = vmatpush1.msra.mxu0 0.0
    %674 = vmatprep.subr.mxu0 0.0
    %675 = vmatpush1.msra.mxu0 0.0
    %676 = vmatprep.subr.mxu0 0.0
    %677 = vmatpush1.msra.mxu0 0.0
    %678 = vmatprep.subr.mxu0 0.0
    %679 = vmatpush1.msra.mxu0 0.0
    %680 = vmatprep.subr.mxu0 0.0
    %681 = vmatpush1.msra.mxu0 0.0
    %682 = vmatprep.subr.mxu0 0.0
    %683 = vmatpush1.msra.mxu0 0.0
    %684 = vmatprep.mubr.f32.mxu0 0.0
    %685 = vmatmul.mubr.f32.gmra.mrb[0].mxu0 %v609
    %v686 = vpop.f32.mrb[0].mxu0
    %v687 = vadd.f32 0.0, %v686
    %v688 = vpop.f32.mrb[0].mxu0
    %689 = vmatprep.mubr.f32.mxu0 0.0
    %690 = vmatmul.mubr.f32.gmra.mrb[0].mxu0 %v612
    %v691 = vpop.f32.mrb[0].mxu0
    %v692 = vadd.f32 0.0, %v691
    %v693 = vpop.f32.mrb[0].mxu0
    %694 = vmatprep.mubr.f32.mxu0 0.0
    %695 = vmatmul.mubr.f32.gmra.mrb[0].mxu0 %v615
    %v696 = vpop.f32.mrb[0].mxu0
    %v697 = vadd.f32 0.0, %v696
    %v698 = vpop.f32.mrb[0].mxu0
    %699 = vmatprep.mubr.f32.mxu0 0.0
    %700 = vmatmul.mubr.f32.gmra.mrb[0].mxu0 %v618
    %v701 = vpop.f32.mrb[0].mxu0
    %v702 = vadd.f32 0.0, %v701
    %v703 = vpop.f32.mrb[0].mxu0
    %704 = vdwg.mxu0
    %v706 = vsel %vm143, %v575, 0
    %v709 = vsel %vm143, %v576, 0
    %v712 = vsel %vm143, %v577, 0
    %v715 = vsel %vm143, %v578, 0
    %v718 = vsel %vm143, %v687, 0
    %v721 = vsel %vm143, %v692, 0
    %v724 = vsel %vm143, %v697, 0
    %v727 = vsel %vm143, %v702, 0
    %729 = vmatprep.subr.mxu0 0.0
    %730 = vmatpush1.xpose.msra.mxu0 %v718
    %731 = vmatprep.subr.mxu0 0.0
    %732 = vmatpush1.xpose.msra.mxu0 %v721
    %733 = vmatprep.subr.mxu0 0.0
    %734 = vmatpush1.xpose.msra.mxu0 %v724
    %735 = vmatprep.subr.mxu0 0.0
    %736 = vmatpush1.xpose.msra.mxu0 %v727
    %737 = vmatprep.subr.mxu0 0.0
    %738 = vmatpush1.xpose.msra.mxu0 0.0
    %739 = vmatprep.subr.mxu0 0.0
    %740 = vmatpush1.xpose.msra.mxu0 0.0
    %741 = vmatprep.subr.mxu0 0.0
    %742 = vmatpush1.xpose.msra.mxu0 0.0
    %743 = vmatprep.subr.mxu0 0.0
    %744 = vmatpush1.xpose.msra.mxu0 0.0
    %745 = vmatprep.subr.mxu0 0.0
    %746 = vmatpush1.xpose.msra.mxu0 0.0
    %747 = vmatprep.subr.mxu0 0.0
    %748 = vmatpush1.xpose.msra.mxu0 0.0
    %749 = vmatprep.subr.mxu0 0.0
    %750 = vmatpush1.xpose.msra.mxu0 0.0
    %751 = vmatprep.subr.mxu0 0.0
    %752 = vmatpush1.xpose.msra.mxu0 0.0
    %753 = vmatprep.subr.mxu0 0.0
    %754 = vmatpush1.xpose.msra.mxu0 0.0
    %755 = vmatprep.subr.mxu0 0.0
    %756 = vmatpush1.xpose.msra.mxu0 0.0
    %757 = vmatprep.subr.mxu0 0.0
    %758 = vmatpush1.xpose.msra.mxu0 0.0
    %759 = vmatprep.subr.mxu0 0.0
    %760 = vmatpush1.xpose.msra.mxu0 0.0
    %761 = vmatprep.subr.mxu0 0.0
    %762 = vmatpush1.xpose.msra.mxu0 0.0
    %763 = vmatprep.subr.mxu0 0.0
    %764 = vmatpush1.xpose.msra.mxu0 0.0
    %765 = vmatprep.subr.mxu0 0.0
    %766 = vmatpush1.xpose.msra.mxu0 0.0
    %767 = vmatprep.subr.mxu0 0.0
    %768 = vmatpush1.xpose.msra.mxu0 0.0
    %769 = vmatprep.subr.mxu0 0.0
    %770 = vmatpush1.xpose.msra.mxu0 0.0
    %771 = vmatprep.subr.mxu0 0.0
    %772 = vmatpush1.xpose.msra.mxu0 0.0
    %773 = vmatprep.subr.mxu0 0.0
    %774 = vmatpush1.xpose.msra.mxu0 0.0
    %775 = vmatprep.subr.mxu0 0.0
    %776 = vmatpush1.xpose.msra.mxu0 0.0
    %777 = vmatprep.subr.mxu0 0.0
    %778 = vmatpush1.xpose.msra.mxu0 0.0
    %779 = vmatprep.subr.mxu0 0.0
    %780 = vmatpush1.xpose.msra.mxu0 0.0
    %781 = vmatprep.subr.mxu0 0.0
    %782 = vmatpush1.xpose.msra.mxu0 0.0
    %783 = vmatprep.subr.mxu0 0.0
    %784 = vmatpush1.xpose.msra.mxu0 0.0
    %785 = vmatprep.subr.mxu0 0.0
    %786 = vmatpush1.xpose.msra.mxu0 0.0
    %787 = vmatprep.subr.mxu0 0.0
    %788 = vmatpush1.xpose.msra.mxu0 0.0
    %789 = vmatprep.subr.mxu0 0.0
    %790 = vmatpush1.xpose.msra.mxu0 0.0
    %791 = vmatprep.subr.mxu0 0.0
    %792 = vmatpush1.xpose.msra.mxu0 0.0
    %793 = vmatprep.mubr.f32.mxu0 0.0
    %794 = vmatmul.mubr.f32.gmra.mrb[0].mxu0 %v706
    %v795 = vpop.f32.mrb[0].mxu0
    %v796 = vadd.f32 %v591, %v795
    %v797 = vpop.f32.mrb[0].mxu0
    %798 = vmatprep.mubr.f32.mxu0 0.0
    %799 = vmatmul.mubr.f32.gmra.mrb[0].mxu0 %v709
    %v800 = vpop.f32.mrb[0].mxu0
    %v801 = vadd.f32 %v592, %v800
    %v802 = vpop.f32.mrb[0].mxu0
    %803 = vmatprep.mubr.f32.mxu0 0.0
    %804 = vmatmul.mubr.f32.gmra.mrb[0].mxu0 %v712
    %v805 = vpop.f32.mrb[0].mxu0
    %v806 = vadd.f32 %v593, %v805
    %v807 = vpop.f32.mrb[0].mxu0
    %808 = vmatprep.mubr.f32.mxu0 0.0
    %809 = vmatmul.mubr.f32.gmra.mrb[0].mxu0 %v715
    %v810 = vpop.f32.mrb[0].mxu0
    %v811 = vadd.f32 %v594, %v810
    %v812 = vpop.f32.mrb[0].mxu0
    %813 = vdwg.mxu0
    %vm814 = vcmask 261120
    %v815 = vsel %vm814, %v796, -inf
    %816 = vmax.xlane.f32.xlu0 %v815
    %v817 = vpop.xlane.xlu0 %816
    %v818 = vsel %vm814, %v801, -inf
    %819 = vmax.xlane.f32.xlu0 %v818
    %v820 = vpop.xlane.xlu0 %819
    %v821 = vsel %vm814, %v806, -inf
    %822 = vmax.xlane.f32.xlu0 %v821
    %v823 = vpop.xlane.xlu0 %822
    %v824 = vsel %vm814, %v811, -inf
    %825 = vmax.xlane.f32.xlu0 %v824
    %v826 = vpop.xlane.xlu0 %825
    %v827 = vsub.f32 %v796, %v817
    %v828 = vsub.f32 %v801, %v820
    %v829 = vsub.f32 %v806, %v823
    %v830 = vsub.f32 %v811, %v826
    %v831 = vmul.f32 %v827, 1.442695
    %v832 = vpow.pop %v831
    %v833 = vmul.f32 %v828, 1.442695
    %v834 = vpow.pop %v833
    %v835 = vmul.f32 %v829, 1.442695
    %v836 = vpow.pop %v835
    %v837 = vmul.f32 %v830, 1.442695
    %v838 = vpow.pop %v837
    %v839 = vmul.f32 %v832, %v583
    %v840 = vmul.f32 %v834, %v584
    %v841 = vmul.f32 %v836, %v585
    %v842 = vmul.f32 %v838, %v586
    %v843 = vsel %vm814, %v839, 0.0
    %844 = vadd.xlane.f32.xlu0 %v843
    %v845 = vpop.xlane.xlu0 %844
    %v846 = vsel %vm814, %v840, 0.0
    %847 = vadd.xlane.f32.xlu0 %v846
    %v848 = vpop.xlane.xlu0 %847
    %v849 = vsel %vm814, %v841, 0.0
    %850 = vadd.xlane.f32.xlu0 %v849
    %v851 = vpop.xlane.xlu0 %850
    %v852 = vsel %vm814, %v842, 0.0
    %853 = vadd.xlane.f32.xlu0 %v852
    %v854 = vpop.xlane.xlu0 %853
    %vm855 = vcmp.gt.f32.partialorder %v845, 0.0
    %vm856 = vcmp.gt.f32.partialorder %v848, 0.0
    %vm857 = vcmp.gt.f32.partialorder %v851, 0.0
    %vm858 = vcmp.gt.f32.partialorder %v854, 0.0
    %v859 = vsel %vm855, %v845, 1.0
    %v860 = vsel %vm856, %v848, 1.0
    %v861 = vsel %vm857, %v851, 1.0
    %v862 = vsel %vm858, %v854, 1.0
    %v863 = vrcp.pop %v859
    %v864 = vmul.f32 %v839, %v863
    %v865 = vrcp.pop %v860
    %v866 = vmul.f32 %v840, %v865
    %v867 = vrcp.pop %v861
    %v868 = vmul.f32 %v841, %v867
    %v869 = vrcp.pop %v862
    %v870 = vmul.f32 %v842, %v869
    %s871 = scalar_lea.vmem [#allocation6], 864
    %v872 = vld [vmem:[%s871] sm:$0xff]
    %v873 = vld [vmem:[%s871 + $0x8] sm:$0xff]
    %v874 = vld [vmem:[%s871 + $0x10] sm:$0xff]
    %v875 = vld [vmem:[%s871 + $0x18] sm:$0xff]
    %v876 = vld [vmem:[%s871 + $0x20] sm:$0xff]
    %v877 = vld [vmem:[%s871 + $0x28] sm:$0xff]
    %v878 = vld [vmem:[%s871 + $0x30] sm:$0xff]
    %v879 = vld [vmem:[%s871 + $0x38] sm:$0xff]
    %v880 = vld [vmem:[%s871 + $0x40] sm:$0xff]
    %v881 = vld [vmem:[%s871 + $0x48] sm:$0xff]
    %v882 = vld [vmem:[%s871 + $0x50] sm:$0xff]
    %v883 = vld [vmem:[%s871 + $0x58] sm:$0xff]
    %v885 = vsel %vm143, %v557, 0
    %v888 = vsel %vm143, %v562, 0
    %v891 = vsel %vm143, %v567, 0
    %v894 = vsel %vm143, %v572, 0
    %896 = vmatprep.subr.mxu0 0.0
    %897 = vmatpush1.msra.mxu0 %v872
    %898 = vmatprep.subr.mxu0 0.0
    %899 = vmatpush1.msra.mxu0 %v873
    %900 = vmatprep.subr.mxu0 0.0
    %901 = vmatpush1.msra.mxu0 %v874
    %902 = vmatprep.subr.mxu0 0.0
    %903 = vmatpush1.msra.mxu0 %v875
    %904 = vmatprep.subr.mxu0 0.0
    %905 = vmatpush1.msra.mxu0 %v876
    %906 = vmatprep.subr.mxu0 0.0
    %907 = vmatpush1.msra.mxu0 %v877
    %908 = vmatprep.subr.mxu0 0.0
    %909 = vmatpush1.msra.mxu0 %v878
    %910 = vmatprep.subr.mxu0 0.0
    %911 = vmatpush1.msra.mxu0 %v879
    %912 = vmatprep.subr.mxu0 0.0
    %913 = vmatpush1.msra.mxu0 %v880
    %914 = vmatprep.subr.mxu0 0.0
    %915 = vmatpush1.msra.mxu0 %v881
    %916 = vmatprep.subr.mxu0 0.0
    %917 = vmatpush1.msra.mxu0 %v882
    %918 = vmatprep.subr.mxu0 0.0
    %919 = vmatpush1.msra.mxu0 %v883
    %920 = vmatprep.subr.mxu0 0.0
    %921 = vmatpush1.msra.mxu0 0.0
    %922 = vmatprep.subr.mxu0 0.0
    %923 = vmatpush1.msra.mxu0 0.0
    %924 = vmatprep.subr.mxu0 0.0
    %925 = vmatpush1.msra.mxu0 0.0
    %926 = vmatprep.subr.mxu0 0.0
    %927 = vmatpush1.msra.mxu0 0.0
    %928 = vmatprep.subr.mxu0 0.0
    %929 = vmatpush1.msra.mxu0 0.0
    %930 = vmatprep.subr.mxu0 0.0
    %931 = vmatpush1.msra.mxu0 0.0
    %932 = vmatprep.subr.mxu0 0.0
    %933 = vmatpush1.msra.mxu0 0.0
    %934 = vmatprep.subr.mxu0 0.0
    %935 = vmatpush1.msra.mxu0 0.0
    %936 = vmatprep.subr.mxu0 0.0
    %937 = vmatpush1.msra.mxu0 0.0
    %938 = vmatprep.subr.mxu0 0.0
    %939 = vmatpush1.msra.mxu0 0.0
    %940 = vmatprep.subr.mxu0 0.0
    %941 = vmatpush1.msra.mxu0 0.0
    %942 = vmatprep.subr.mxu0 0.0
    %943 = vmatpush1.msra.mxu0 0.0
    %944 = vmatprep.subr.mxu0 0.0
    %945 = vmatpush1.msra.mxu0 0.0
    %946 = vmatprep.subr.mxu0 0.0
    %947 = vmatpush1.msra.mxu0 0.0
    %948 = vmatprep.subr.mxu0 0.0
    %949 = vmatpush1.msra.mxu0 0.0
    %950 = vmatprep.subr.mxu0 0.0
    %951 = vmatpush1.msra.mxu0 0.0
    %952 = vmatprep.subr.mxu0 0.0
    %953 = vmatpush1.msra.mxu0 0.0
    %954 = vmatprep.subr.mxu0 0.0
    %955 = vmatpush1.msra.mxu0 0.0
    %956 = vmatprep.subr.mxu0 0.0
    %957 = vmatpush1.msra.mxu0 0.0
    %958 = vmatprep.subr.mxu0 0.0
    %959 = vmatpush1.msra.mxu0 0.0
    %960 = vmatprep.mubr.f32.mxu0 0.0
    %961 = vmatmul.mubr.f32.gmra.mrb[0].mxu0 %v885
    %v962 = vpop.f32.mrb[0].mxu0
    %v963 = vadd.f32 0.0, %v962
    %v964 = vpop.f32.mrb[0].mxu0
    %965 = vmatprep.mubr.f32.mxu0 0.0
    %966 = vmatmul.mubr.f32.gmra.mrb[0].mxu0 %v888
    %v967 = vpop.f32.mrb[0].mxu0
    %v968 = vadd.f32 0.0, %v967
    %v969 = vpop.f32.mrb[0].mxu0
    %970 = vmatprep.mubr.f32.mxu0 0.0
    %971 = vmatmul.mubr.f32.gmra.mrb[0].mxu0 %v891
    %v972 = vpop.f32.mrb[0].mxu0
    %v973 = vadd.f32 0.0, %v972
    %v974 = vpop.f32.mrb[0].mxu0
    %975 = vmatprep.mubr.f32.mxu0 0.0
    %976 = vmatmul.mubr.f32.gmra.mrb[0].mxu0 %v894
    %v977 = vpop.f32.mrb[0].mxu0
    %v978 = vadd.f32 0.0, %v977
    %v979 = vpop.f32.mrb[0].mxu0
    %980 = vdwg.mxu0
    %v982 = vsel %vm143, %v579, 0
    %v985 = vsel %vm143, %v580, 0
    %v988 = vsel %vm143, %v581, 0
    %v991 = vsel %vm143, %v582, 0
    %993 = vmatprep.subr.mxu0 0.0
    %994 = vmatpush1.xpose.msra.mxu0 %v718
    %995 = vmatprep.subr.mxu0 0.0
    %996 = vmatpush1.xpose.msra.mxu0 %v721
    %997 = vmatprep.subr.mxu0 0.0
    %998 = vmatpush1.xpose.msra.mxu0 %v724
    %999 = vmatprep.subr.mxu0 0.0
    %1000 = vmatpush1.xpose.msra.mxu0 %v727
    %1001 = vmatprep.subr.mxu0 0.0
    %1002 = vmatpush1.xpose.msra.mxu0 0.0
    %1003 = vmatprep.subr.mxu0 0.0
    %1004 = vmatpush1.xpose.msra.mxu0 0.0
    %1005 = vmatprep.subr.mxu0 0.0
    %1006 = vmatpush1.xpose.msra.mxu0 0.0
    %1007 = vmatprep.subr.mxu0 0.0
    %1008 = vmatpush1.xpose.msra.mxu0 0.0
    %1009 = vmatprep.subr.mxu0 0.0
    %1010 = vmatpush1.xpose.msra.mxu0 0.0
    %1011 = vmatprep.subr.mxu0 0.0
    %1012 = vmatpush1.xpose.msra.mxu0 0.0
    %1013 = vmatprep.subr.mxu0 0.0
    %1014 = vmatpush1.xpose.msra.mxu0 0.0
    %1015 = vmatprep.subr.mxu0 0.0
    %1016 = vmatpush1.xpose.msra.mxu0 0.0
    %1017 = vmatprep.subr.mxu0 0.0
    %1018 = vmatpush1.xpose.msra.mxu0 0.0
    %1019 = vmatprep.subr.mxu0 0.0
    %1020 = vmatpush1.xpose.msra.mxu0 0.0
    %1021 = vmatprep.subr.mxu0 0.0
    %1022 = vmatpush1.xpose.msra.mxu0 0.0
    %1023 = vmatprep.subr.mxu0 0.0
    %1024 = vmatpush1.xpose.msra.mxu0 0.0
    %1025 = vmatprep.subr.mxu0 0.0
    %1026 = vmatpush1.xpose.msra.mxu0 0.0
    %1027 = vmatprep.subr.mxu0 0.0
    %1028 = vmatpush1.xpose.msra.mxu0 0.0
    %1029 = vmatprep.subr.mxu0 0.0
    %1030 = vmatpush1.xpose.msra.mxu0 0.0
    %1031 = vmatprep.subr.mxu0 0.0
    %1032 = vmatpush1.xpose.msra.mxu0 0.0
    %1033 = vmatprep.subr.mxu0 0.0
    %1034 = vmatpush1.xpose.msra.mxu0 0.0
    %1035 = vmatprep.subr.mxu0 0.0
    %1036 = vmatpush1.xpose.msra.mxu0 0.0
    %1037 = vmatprep.subr.mxu0 0.0
    %1038 = vmatpush1.xpose.msra.mxu0 0.0
    %1039 = vmatprep.subr.mxu0 0.0
    %1040 = vmatpush1.xpose.msra.mxu0 0.0
    %1041 = vmatprep.subr.mxu0 0.0
    %1042 = vmatpush1.xpose.msra.mxu0 0.0
    %1043 = vmatprep.subr.mxu0 0.0
    %1044 = vmatpush1.xpose.msra.mxu0 0.0
    %1045 = vmatprep.subr.mxu0 0.0
    %1046 = vmatpush1.xpose.msra.mxu0 0.0
    %1047 = vmatprep.subr.mxu0 0.0
    %1048 = vmatpush1.xpose.msra.mxu0 0.0
    %1049 = vmatprep.subr.mxu0 0.0
    %1050 = vmatpush1.xpose.msra.mxu0 0.0
    %1051 = vmatprep.subr.mxu0 0.0
    %1052 = vmatpush1.xpose.msra.mxu0 0.0
    %1053 = vmatprep.subr.mxu0 0.0
    %1054 = vmatpush1.xpose.msra.mxu0 0.0
    %1055 = vmatprep.subr.mxu0 0.0
    %1056 = vmatpush1.xpose.msra.mxu0 0.0
    %1057 = vmatprep.mubr.f32.mxu0 0.0
    %1058 = vmatmul.mubr.f32.gmra.mrb[0].mxu0 %v982
    %v1059 = vpop.f32.mrb[0].mxu0
    %v1060 = vadd.f32 %v591, %v1059
    %v1061 = vpop.f32.mrb[0].mxu0
    %1062 = vmatprep.mubr.f32.mxu0 0.0
    %1063 = vmatmul.mubr.f32.gmra.mrb[0].mxu0 %v985
    %v1064 = vpop.f32.mrb[0].mxu0
    %v1065 = vadd.f32 %v592, %v1064
    %v1066 = vpop.f32.mrb[0].mxu0
    %1067 = vmatprep.mubr.f32.mxu0 0.0
    %1068 = vmatmul.mubr.f32.gmra.mrb[0].mxu0 %v988
    %v1069 = vpop.f32.mrb[0].mxu0
    %v1070 = vadd.f32 %v593, %v1069
    %v1071 = vpop.f32.mrb[0].mxu0
    %1072 = vmatprep.mubr.f32.mxu0 0.0
    %1073 = vmatmul.mubr.f32.gmra.mrb[0].mxu0 %v991
    %v1074 = vpop.f32.mrb[0].mxu0
    %v1075 = vadd.f32 %v594, %v1074
    %v1076 = vpop.f32.mrb[0].mxu0
    %1077 = vdwg.mxu0
    %v1078 = vsel %vm814, %v1060, -inf
    %1079 = vmax.xlane.f32.xlu0 %v1078
    %v1080 = vpop.xlane.xlu0 %1079
    %v1081 = vsel %vm814, %v1065, -inf
    %1082 = vmax.xlane.f32.xlu0 %v1081
    %v1083 = vpop.xlane.xlu0 %1082
    %v1084 = vsel %vm814, %v1070, -inf
    %1085 = vmax.xlane.f32.xlu0 %v1084
    %v1086 = vpop.xlane.xlu0 %1085
    %v1087 = vsel %vm814, %v1075, -inf
    %1088 = vmax.xlane.f32.xlu0 %v1087
    %v1089 = vpop.xlane.xlu0 %1088
    %v1090 = vsub.f32 %v1060, %v1080
    %v1091 = vsub.f32 %v1065, %v1083
    %v1092 = vsub.f32 %v1070, %v1086
    %v1093 = vsub.f32 %v1075, %v1089
    %v1094 = vmul.f32 %v1090, 1.442695
    %v1095 = vpow.pop %v1094
    %v1096 = vmul.f32 %v1091, 1.442695
    %v1097 = vpow.pop %v1096
    %v1098 = vmul.f32 %v1092, 1.442695
    %v1099 = vpow.pop %v1098
    %v1100 = vmul.f32 %v1093, 1.442695
    %v1101 = vpow.pop %v1100
    %v1102 = vmul.f32 %v1095, %v583
    %v1103 = vmul.f32 %v1097, %v584
    %v1104 = vmul.f32 %v1099, %v585
    %v1105 = vmul.f32 %v1101, %v586
    %v1106 = vsel %vm814, %v1102, 0.0
    %1107 = vadd.xlane.f32.xlu0 %v1106
    %v1108 = vpop.xlane.xlu0 %1107
    %v1109 = vsel %vm814, %v1103, 0.0
    %1110 = vadd.xlane.f32.xlu0 %v1109
    %v1111 = vpop.xlane.xlu0 %1110
    %v1112 = vsel %vm814, %v1104, 0.0
    %1113 = vadd.xlane.f32.xlu0 %v1112
    %v1114 = vpop.xlane.xlu0 %1113
    %v1115 = vsel %vm814, %v1105, 0.0
    %1116 = vadd.xlane.f32.xlu0 %v1115
    %v1117 = vpop.xlane.xlu0 %1116
    %vm1118 = vcmp.gt.f32.partialorder %v1108, 0.0
    %vm1119 = vcmp.gt.f32.partialorder %v1111, 0.0
    %vm1120 = vcmp.gt.f32.partialorder %v1114, 0.0
    %vm1121 = vcmp.gt.f32.partialorder %v1117, 0.0
    %v1122 = vsel %vm1118, %v1108, 1.0
    %v1123 = vsel %vm1119, %v1111, 1.0
    %v1124 = vsel %vm1120, %v1114, 1.0
    %v1125 = vsel %vm1121, %v1117, 1.0
    %v1126 = vrcp.pop %v1122
    %v1127 = vmul.f32 %v1102, %v1126
    %v1128 = vrcp.pop %v1123
    %v1129 = vmul.f32 %v1103, %v1128
    %v1130 = vrcp.pop %v1124
    %v1131 = vmul.f32 %v1104, %v1130
    %v1132 = vrcp.pop %v1125
    %v1133 = vmul.f32 %v1105, %v1132
    %s1134 = scalar_lea.vmem [#allocation6], 960
    %v1135 = vld [vmem:[%s1134] sm:$0xff]
    %v1136 = vld [vmem:[%s1134 + $0x8] sm:$0xff]
    %v1137 = vld [vmem:[%s1134 + $0x10] sm:$0xff]
    %v1138 = vld [vmem:[%s1134 + $0x18] sm:$0xff]
    %v1139 = vld [vmem:[%s1134 + $0x20] sm:$0xff]
    %v1140 = vld [vmem:[%s1134 + $0x28] sm:$0xff]
    %v1141 = vld [vmem:[%s1134 + $0x30] sm:$0xff]
    %v1142 = vld [vmem:[%s1134 + $0x38] sm:$0xff]
    %v1143 = vld [vmem:[%s1134 + $0x40] sm:$0xff]
    %v1144 = vld [vmem:[%s1134 + $0x48] sm:$0xff]
    %v1145 = vld [vmem:[%s1134 + $0x50] sm:$0xff]
    %v1146 = vld [vmem:[%s1134 + $0x58] sm:$0xff]
    %1147 = vmatprep.subr.mxu0 0.0
    %1148 = vmatpush1.msra.mxu0 %v1135
    %1149 = vmatprep.subr.mxu0 0.0
    %1150 = vmatpush1.msra.mxu0 %v1136
    %1151 = vmatprep.subr.mxu0 0.0
    %1152 = vmatpush1.msra.mxu0 %v1137
    %1153 = vmatprep.subr.mxu0 0.0
    %1154 = vmatpush1.msra.mxu0 %v1138
    %1155 = vmatprep.subr.mxu0 0.0
    %1156 = vmatpush1.msra.mxu0 %v1139
    %1157 = vmatprep.subr.mxu0 0.0
    %1158 = vmatpush1.msra.mxu0 %v1140
    %1159 = vmatprep.subr.mxu0 0.0
    %1160 = vmatpush1.msra.mxu0 %v1141
    %1161 = vmatprep.subr.mxu0 0.0
    %1162 = vmatpush1.msra.mxu0 %v1142
    %1163 = vmatprep.subr.mxu0 0.0
    %1164 = vmatpush1.msra.mxu0 %v1143
    %1165 = vmatprep.subr.mxu0 0.0
    %1166 = vmatpush1.msra.mxu0 %v1144
    %1167 = vmatprep.subr.mxu0 0.0
    %1168 = vmatpush1.msra.mxu0 %v1145
    %1169 = vmatprep.subr.mxu0 0.0
    %1170 = vmatpush1.msra.mxu0 %v1146
    %1171 = vmatprep.subr.mxu0 0.0
    %1172 = vmatpush1.msra.mxu0 0.0
    %1173 = vmatprep.subr.mxu0 0.0
    %1174 = vmatpush1.msra.mxu0 0.0
    %1175 = vmatprep.subr.mxu0 0.0
    %1176 = vmatpush1.msra.mxu0 0.0
    %1177 = vmatprep.subr.mxu0 0.0
    %1178 = vmatpush1.msra.mxu0 0.0
    %1179 = vmatprep.subr.mxu0 0.0
    %1180 = vmatpush1.msra.mxu0 0.0
    %1181 = vmatprep.subr.mxu0 0.0
    %1182 = vmatpush1.msra.mxu0 0.0
    %1183 = vmatprep.subr.mxu0 0.0
    %1184 = vmatpush1.msra.mxu0 0.0
    %1185 = vmatprep.subr.mxu0 0.0
    %1186 = vmatpush1.msra.mxu0 0.0
    %1187 = vmatprep.subr.mxu0 0.0
    %1188 = vmatpush1.msra.mxu0 0.0
    %1189 = vmatprep.subr.mxu0 0.0
    %1190 = vmatpush1.msra.mxu0 0.0
    %1191 = vmatprep.subr.mxu0 0.0
    %1192 = vmatpush1.msra.mxu0 0.0
    %1193 = vmatprep.subr.mxu0 0.0
    %1194 = vmatpush1.msra.mxu0 0.0
    %1195 = vmatprep.subr.mxu0 0.0
    %1196 = vmatpush1.msra.mxu0 0.0
    %1197 = vmatprep.subr.mxu0 0.0
    %1198 = vmatpush1.msra.mxu0 0.0
    %1199 = vmatprep.subr.mxu0 0.0
    %1200 = vmatpush1.msra.mxu0 0.0
    %1201 = vmatprep.subr.mxu0 0.0
    %1202 = vmatpush1.msra.mxu0 0.0
    %1203 = vmatprep.subr.mxu0 0.0
    %1204 = vmatpush1.msra.mxu0 0.0
    %1205 = vmatprep.subr.mxu0 0.0
    %1206 = vmatpush1.msra.mxu0 0.0
    %1207 = vmatprep.subr.mxu0 0.0
    %1208 = vmatpush1.msra.mxu0 0.0
    %1209 = vmatprep.subr.mxu0 0.0
    %1210 = vmatpush1.msra.mxu0 0.0
    %1211 = vmatprep.mubr.f32.mxu0 0.0
    %1212 = vmatmul.mubr.f32.gmra.mrb[0].mxu0 %v885
    %v1213 = vpop.f32.mrb[0].mxu0
    %v1214 = vadd.f32 0.0, %v1213
    %v1215 = vpop.f32.mrb[0].mxu0
    %1216 = vmatprep.mubr.f32.mxu0 0.0
    %1217 = vmatmul.mubr.f32.gmra.mrb[0].mxu0 %v888
    %v1218 = vpop.f32.mrb[0].mxu0
    %v1219 = vadd.f32 0.0, %v1218
    %v1220 = vpop.f32.mrb[0].mxu0
    %1221 = vmatprep.mubr.f32.mxu0 0.0
    %1222 = vmatmul.mubr.f32.gmra.mrb[0].mxu0 %v891
    %v1223 = vpop.f32.mrb[0].mxu0
    %v1224 = vadd.f32 0.0, %v1223
    %v1225 = vpop.f32.mrb[0].mxu0
    %1226 = vmatprep.mubr.f32.mxu0 0.0
    %1227 = vmatmul.mubr.f32.gmra.mrb[0].mxu0 %v894
    %v1228 = vpop.f32.mrb[0].mxu0
    %v1229 = vadd.f32 0.0, %v1228
    %v1230 = vpop.f32.mrb[0].mxu0
    %1231 = vdwg.mxu0
    %1236 = vrot.lane.b32.xlu0 %v1127, 32
    %v1237 = vpop.permute.xlu0 %1236
    %1238 = vrot.lane.b32.xlu0 %v1129, 32
    %v1239 = vpop.permute.xlu0 %1238
    %1240 = vrot.lane.b32.xlu0 %v1131, 32
    %v1241 = vpop.permute.xlu0 %1240
    %1242 = vrot.lane.b32.xlu0 %v1133, 32
    %v1243 = vpop.permute.xlu0 %1242
    %v1248 = vsel %vm814, %v864, %v1237
    %v1249 = vsel %vm814, %v866, %v1239
    %v1250 = vsel %vm814, %v868, %v1241
    %v1251 = vsel %vm814, %v870, %v1243
    %s1252 = scalar_lea.vmem [#allocation4], 32
    %v1253 = vld [vmem:[%s1252] sm:$0xff]
    %v1254 = vld [vmem:[%s1252 + $0x8] sm:$0xff]
    %v1255 = vld [vmem:[%s1252 + $0x10] sm:$0xff]
    %v1256 = vld [vmem:[%s1252 + $0x18] sm:$0xff]
    %v1257 = vsub.f32 %v1253, 1.0
    %v1258 = vsub.f32 %v1254, 1.0
    %v1259 = vsub.f32 %v1255, 1.0
    %v1260 = vsub.f32 %v1256, 1.0
    %v1261 = vmul.f32 %v1257, 1e+30
    %v1262 = vmul.f32 %v1258, 1e+30
    %v1263 = vmul.f32 %v1259, 1e+30
    %v1264 = vmul.f32 %v1260, 1e+30
    %s1265 = scalar_lea.vmem [#allocation6], 576
    %v1266 = vld [vmem:[%s1265] sm:$0xff]
    %v1267 = vld [vmem:[%s1265 + $0x8] sm:$0xff]
    %v1268 = vld [vmem:[%s1265 + $0x10] sm:$0xff]
    %v1269 = vld [vmem:[%s1265 + $0x18] sm:$0xff]
    %v1270 = vld [vmem:[%s1265 + $0x20] sm:$0xff]
    %v1271 = vld [vmem:[%s1265 + $0x28] sm:$0xff]
    %v1272 = vld [vmem:[%s1265 + $0x30] sm:$0xff]
    %v1273 = vld [vmem:[%s1265 + $0x38] sm:$0xff]
    %v1274 = vld [vmem:[%s1265 + $0x40] sm:$0xff]
    %v1275 = vld [vmem:[%s1265 + $0x48] sm:$0xff]
    %v1276 = vld [vmem:[%s1265 + $0x50] sm:$0xff]
    %v1277 = vld [vmem:[%s1265 + $0x58] sm:$0xff]
    %1278 = vmatprep.subr.mxu0 0.0
    %1279 = vmatpush1.msra.mxu0 %v1266
    %1280 = vmatprep.subr.mxu0 0.0
    %1281 = vmatpush1.msra.mxu0 %v1267
    %1282 = vmatprep.subr.mxu0 0.0
    %1283 = vmatpush1.msra.mxu0 %v1268
    %1284 = vmatprep.subr.mxu0 0.0
    %1285 = vmatpush1.msra.mxu0 %v1269
    %1286 = vmatprep.subr.mxu0 0.0
    %1287 = vmatpush1.msra.mxu0 %v1270
    %1288 = vmatprep.subr.mxu0 0.0
    %1289 = vmatpush1.msra.mxu0 %v1271
    %1290 = vmatprep.subr.mxu0 0.0
    %1291 = vmatpush1.msra.mxu0 %v1272
    %1292 = vmatprep.subr.mxu0 0.0
    %1293 = vmatpush1.msra.mxu0 %v1273
    %1294 = vmatprep.subr.mxu0 0.0
    %1295 = vmatpush1.msra.mxu0 %v1274
    %1296 = vmatprep.subr.mxu0 0.0
    %1297 = vmatpush1.msra.mxu0 %v1275
    %1298 = vmatprep.subr.mxu0 0.0
    %1299 = vmatpush1.msra.mxu0 %v1276
    %1300 = vmatprep.subr.mxu0 0.0
    %1301 = vmatpush1.msra.mxu0 %v1277
    %1302 = vmatprep.subr.mxu0 0.0
    %1303 = vmatpush1.msra.mxu0 0.0
    %1304 = vmatprep.subr.mxu0 0.0
    %1305 = vmatpush1.msra.mxu0 0.0
    %1306 = vmatprep.subr.mxu0 0.0
    %1307 = vmatpush1.msra.mxu0 0.0
    %1308 = vmatprep.subr.mxu0 0.0
    %1309 = vmatpush1.msra.mxu0 0.0
    %1310 = vmatprep.subr.mxu0 0.0
    %1311 = vmatpush1.msra.mxu0 0.0
    %1312 = vmatprep.subr.mxu0 0.0
    %1313 = vmatpush1.msra.mxu0 0.0
    %1314 = vmatprep.subr.mxu0 0.0
    %1315 = vmatpush1.msra.mxu0 0.0
    %1316 = vmatprep.subr.mxu0 0.0
    %1317 = vmatpush1.msra.mxu0 0.0
    %1318 = vmatprep.subr.mxu0 0.0
    %1319 = vmatpush1.msra.mxu0 0.0
    %1320 = vmatprep.subr.mxu0 0.0
    %1321 = vmatpush1.msra.mxu0 0.0
    %1322 = vmatprep.subr.mxu0 0.0
    %1323 = vmatpush1.msra.mxu0 0.0
    %1324 = vmatprep.subr.mxu0 0.0
    %1325 = vmatpush1.msra.mxu0 0.0
    %1326 = vmatprep.subr.mxu0 0.0
    %1327 = vmatpush1.msra.mxu0 0.0
    %1328 = vmatprep.subr.mxu0 0.0
    %1329 = vmatpush1.msra.mxu0 0.0
    %1330 = vmatprep.subr.mxu0 0.0
    %1331 = vmatpush1.msra.mxu0 0.0
    %1332 = vmatprep.subr.mxu0 0.0
    %1333 = vmatpush1.msra.mxu0 0.0
    %1334 = vmatprep.subr.mxu0 0.0
    %1335 = vmatpush1.msra.mxu0 0.0
    %1336 = vmatprep.subr.mxu0 0.0
    %1337 = vmatpush1.msra.mxu0 0.0
    %1338 = vmatprep.subr.mxu0 0.0
    %1339 = vmatpush1.msra.mxu0 0.0
    %1340 = vmatprep.subr.mxu0 0.0
    %1341 = vmatpush1.msra.mxu0 0.0
    %1342 = vmatprep.mubr.f32.mxu0 0.0
    %1343 = vmatmul.mubr.f32.gmra.mrb[0].mxu0 %v609
    %v1344 = vpop.f32.mrb[0].mxu0
    %v1345 = vadd.f32 0.0, %v1344
    %v1346 = vpop.f32.mrb[0].mxu0
    %1347 = vmatprep.mubr.f32.mxu0 0.0
    %1348 = vmatmul.mubr.f32.gmra.mrb[0].mxu0 %v612
    %v1349 = vpop.f32.mrb[0].mxu0
    %v1350 = vadd.f32 0.0, %v1349
    %v1351 = vpop.f32.mrb[0].mxu0
    %1352 = vmatprep.mubr.f32.mxu0 0.0
    %1353 = vmatmul.mubr.f32.gmra.mrb[0].mxu0 %v615
    %v1354 = vpop.f32.mrb[0].mxu0
    %v1355 = vadd.f32 0.0, %v1354
    %v1356 = vpop.f32.mrb[0].mxu0
    %1357 = vmatprep.mubr.f32.mxu0 0.0
    %1358 = vmatmul.mubr.f32.gmra.mrb[0].mxu0 %v618
    %v1359 = vpop.f32.mrb[0].mxu0
    %v1360 = vadd.f32 0.0, %v1359
    %v1361 = vpop.f32.mrb[0].mxu0
    %1362 = vdwg.mxu0
    %v1364 = vsel %vm143, %v1345, 0
    %v1367 = vsel %vm143, %v1350, 0
    %v1370 = vsel %vm143, %v1355, 0
    %v1373 = vsel %vm143, %v1360, 0
    %1375 = vmatprep.subr.mxu0 0.0
    %1376 = vmatpush1.xpose.msra.mxu0 %v1364
    %1377 = vmatprep.subr.mxu0 0.0
    %1378 = vmatpush1.xpose.msra.mxu0 %v1367
    %1379 = vmatprep.subr.mxu0 0.0
    %1380 = vmatpush1.xpose.msra.mxu0 %v1370
    %1381 = vmatprep.subr.mxu0 0.0
    %1382 = vmatpush1.xpose.msra.mxu0 %v1373
    %1383 = vmatprep.subr.mxu0 0.0
    %1384 = vmatpush1.xpose.msra.mxu0 0.0
    %1385 = vmatprep.subr.mxu0 0.0
    %1386 = vmatpush1.xpose.msra.mxu0 0.0
    %1387 = vmatprep.subr.mxu0 0.0
    %1388 = vmatpush1.xpose.msra.mxu0 0.0
    %1389 = vmatprep.subr.mxu0 0.0
    %1390 = vmatpush1.xpose.msra.mxu0 0.0
    %1391 = vmatprep.subr.mxu0 0.0
    %1392 = vmatpush1.xpose.msra.mxu0 0.0
    %1393 = vmatprep.subr.mxu0 0.0
    %1394 = vmatpush1.xpose.msra.mxu0 0.0
    %1395 = vmatprep.subr.mxu0 0.0
    %1396 = vmatpush1.xpose.msra.mxu0 0.0
    %1397 = vmatprep.subr.mxu0 0.0
    %1398 = vmatpush1.xpose.msra.mxu0 0.0
    %1399 = vmatprep.subr.mxu0 0.0
    %1400 = vmatpush1.xpose.msra.mxu0 0.0
    %1401 = vmatprep.subr.mxu0 0.0
    %1402 = vmatpush1.xpose.msra.mxu0 0.0
    %1403 = vmatprep.subr.mxu0 0.0
    %1404 = vmatpush1.xpose.msra.mxu0 0.0
    %1405 = vmatprep.subr.mxu0 0.0
    %1406 = vmatpush1.xpose.msra.mxu0 0.0
    %1407 = vmatprep.subr.mxu0 0.0
    %1408 = vmatpush1.xpose.msra.mxu0 0.0
    %1409 = vmatprep.subr.mxu0 0.0
    %1410 = vmatpush1.xpose.msra.mxu0 0.0
    %1411 = vmatprep.subr.mxu0 0.0
    %1412 = vmatpush1.xpose.msra.mxu0 0.0
    %1413 = vmatprep.subr.mxu0 0.0
    %1414 = vmatpush1.xpose.msra.mxu0 0.0
    %1415 = vmatprep.subr.mxu0 0.0
    %1416 = vmatpush1.xpose.msra.mxu0 0.0
    %1417 = vmatprep.subr.mxu0 0.0
    %1418 = vmatpush1.xpose.msra.mxu0 0.0
    %1419 = vmatprep.subr.mxu0 0.0
    %1420 = vmatpush1.xpose.msra.mxu0 0.0
    %1421 = vmatprep.subr.mxu0 0.0
    %1422 = vmatpush1.xpose.msra.mxu0 0.0
    %1423 = vmatprep.subr.mxu0 0.0
    %1424 = vmatpush1.xpose.msra.mxu0 0.0
    %1425 = vmatprep.subr.mxu0 0.0
    %1426 = vmatpush1.xpose.msra.mxu0 0.0
    %1427 = vmatprep.subr.mxu0 0.0
    %1428 = vmatpush1.xpose.msra.mxu0 0.0
    %1429 = vmatprep.subr.mxu0 0.0
    %1430 = vmatpush1.xpose.msra.mxu0 0.0
    %1431 = vmatprep.subr.mxu0 0.0
    %1432 = vmatpush1.xpose.msra.mxu0 0.0
    %1433 = vmatprep.subr.mxu0 0.0
    %1434 = vmatpush1.xpose.msra.mxu0 0.0
    %1435 = vmatprep.subr.mxu0 0.0
    %1436 = vmatpush1.xpose.msra.mxu0 0.0
    %1437 = vmatprep.subr.mxu0 0.0
    %1438 = vmatpush1.xpose.msra.mxu0 0.0
    %1439 = vmatprep.mubr.f32.mxu0 0.0
    %1440 = vmatmul.mubr.f32.gmra.mrb[0].mxu0 %v706
    %v1441 = vpop.f32.mrb[0].mxu0
    %v1442 = vadd.f32 %v1261, %v1441
    %v1443 = vpop.f32.mrb[0].mxu0
    %1444 = vmatprep.mubr.f32.mxu0 0.0
    %1445 = vmatmul.mubr.f32.gmra.mrb[0].mxu0 %v709
    %v1446 = vpop.f32.mrb[0].mxu0
    %v1447 = vadd.f32 %v1262, %v1446
    %v1448 = vpop.f32.mrb[0].mxu0
    %1449 = vmatprep.mubr.f32.mxu0 0.0
    %1450 = vmatmul.mubr.f32.gmra.mrb[0].mxu0 %v712
    %v1451 = vpop.f32.mrb[0].mxu0
    %v1452 = vadd.f32 %v1263, %v1451
    %v1453 = vpop.f32.mrb[0].mxu0
    %1454 = vmatprep.mubr.f32.mxu0 0.0
    %1455 = vmatmul.mubr.f32.gmra.mrb[0].mxu0 %v715
    %v1456 = vpop.f32.mrb[0].mxu0
    %v1457 = vadd.f32 %v1264, %v1456
    %v1458 = vpop.f32.mrb[0].mxu0
    %1459 = vdwg.mxu0
    %v1460 = vsel %vm814, %v1442, -inf
    %1461 = vmax.xlane.f32.xlu0 %v1460
    %v1462 = vpop.xlane.xlu0 %1461
    %v1463 = vsel %vm814, %v1447, -inf
    %1464 = vmax.xlane.f32.xlu0 %v1463
    %v1465 = vpop.xlane.xlu0 %1464
    %v1466 = vsel %vm814, %v1452, -inf
    %1467 = vmax.xlane.f32.xlu0 %v1466
    %v1468 = vpop.xlane.xlu0 %1467
    %v1469 = vsel %vm814, %v1457, -inf
    %1470 = vmax.xlane.f32.xlu0 %v1469
    %v1471 = vpop.xlane.xlu0 %1470
    %v1472 = vsub.f32 %v1442, %v1462
    %v1473 = vsub.f32 %v1447, %v1465
    %v1474 = vsub.f32 %v1452, %v1468
    %v1475 = vsub.f32 %v1457, %v1471
    %v1476 = vmul.f32 %v1472, 1.442695
    %v1477 = vpow.pop %v1476
    %v1478 = vmul.f32 %v1473, 1.442695
    %v1479 = vpow.pop %v1478
    %v1480 = vmul.f32 %v1474, 1.442695
    %v1481 = vpow.pop %v1480
    %v1482 = vmul.f32 %v1475, 1.442695
    %v1483 = vpow.pop %v1482
    %v1484 = vmul.f32 %v1477, %v1253
    %v1485 = vmul.f32 %v1479, %v1254
    %v1486 = vmul.f32 %v1481, %v1255
    %v1487 = vmul.f32 %v1483, %v1256
    %v1488 = vsel %vm814, %v1484, 0.0
    %1489 = vadd.xlane.f32.xlu0 %v1488
    %v1490 = vpop.xlane.xlu0 %1489
    %v1491 = vsel %vm814, %v1485, 0.0
    %1492 = vadd.xlane.f32.xlu0 %v1491
    %v1493 = vpop.xlane.xlu0 %1492
    %v1494 = vsel %vm814, %v1486, 0.0
    %1495 = vadd.xlane.f32.xlu0 %v1494
    %v1496 = vpop.xlane.xlu0 %1495
    %v1497 = vsel %vm814, %v1487, 0.0
    %1498 = vadd.xlane.f32.xlu0 %v1497
    %v1499 = vpop.xlane.xlu0 %1498
    %vm1500 = vcmp.gt.f32.partialorder %v1490, 0.0
    %vm1501 = vcmp.gt.f32.partialorder %v1493, 0.0
    %vm1502 = vcmp.gt.f32.partialorder %v1496, 0.0
    %vm1503 = vcmp.gt.f32.partialorder %v1499, 0.0
    %v1504 = vsel %vm1500, %v1490, 1.0
    %v1505 = vsel %vm1501, %v1493, 1.0
    %v1506 = vsel %vm1502, %v1496, 1.0
    %v1507 = vsel %vm1503, %v1499, 1.0
    %v1508 = vrcp.pop %v1504
    %v1509 = vmul.f32 %v1484, %v1508
    %v1510 = vrcp.pop %v1505
    %v1511 = vmul.f32 %v1485, %v1510
    %v1512 = vrcp.pop %v1506
    %v1513 = vmul.f32 %v1486, %v1512
    %v1514 = vrcp.pop %v1507
    %v1515 = vmul.f32 %v1487, %v1514
    %s1516 = scalar_lea.vmem [#allocation6], 1056
    %v1517 = vld [vmem:[%s1516] sm:$0xff]
    %v1518 = vld [vmem:[%s1516 + $0x8] sm:$0xff]
    %v1519 = vld [vmem:[%s1516 + $0x10] sm:$0xff]
    %v1520 = vld [vmem:[%s1516 + $0x18] sm:$0xff]
    %v1521 = vld [vmem:[%s1516 + $0x20] sm:$0xff]
    %v1522 = vld [vmem:[%s1516 + $0x28] sm:$0xff]
    %v1523 = vld [vmem:[%s1516 + $0x30] sm:$0xff]
    %v1524 = vld [vmem:[%s1516 + $0x38] sm:$0xff]
    %v1525 = vld [vmem:[%s1516 + $0x40] sm:$0xff]
    %v1526 = vld [vmem:[%s1516 + $0x48] sm:$0xff]
    %v1527 = vld [vmem:[%s1516 + $0x50] sm:$0xff]
    %v1528 = vld [vmem:[%s1516 + $0x58] sm:$0xff]
    %1529 = vmatprep.subr.mxu0 0.0
    %1530 = vmatpush1.msra.mxu0 %v1517
    %1531 = vmatprep.subr.mxu0 0.0
    %1532 = vmatpush1.msra.mxu0 %v1518
    %1533 = vmatprep.subr.mxu0 0.0
    %1534 = vmatpush1.msra.mxu0 %v1519
    %1535 = vmatprep.subr.mxu0 0.0
    %1536 = vmatpush1.msra.mxu0 %v1520
    %1537 = vmatprep.subr.mxu0 0.0
    %1538 = vmatpush1.msra.mxu0 %v1521
    %1539 = vmatprep.subr.mxu0 0.0
    %1540 = vmatpush1.msra.mxu0 %v1522
    %1541 = vmatprep.subr.mxu0 0.0
    %1542 = vmatpush1.msra.mxu0 %v1523
    %1543 = vmatprep.subr.mxu0 0.0
    %1544 = vmatpush1.msra.mxu0 %v1524
    %1545 = vmatprep.subr.mxu0 0.0
    %1546 = vmatpush1.msra.mxu0 %v1525
    %1547 = vmatprep.subr.mxu0 0.0
    %1548 = vmatpush1.msra.mxu0 %v1526
    %1549 = vmatprep.subr.mxu0 0.0
    %1550 = vmatpush1.msra.mxu0 %v1527
    %1551 = vmatprep.subr.mxu0 0.0
    %1552 = vmatpush1.msra.mxu0 %v1528
    %1553 = vmatprep.subr.mxu0 0.0
    %1554 = vmatpush1.msra.mxu0 0.0
    %1555 = vmatprep.subr.mxu0 0.0
    %1556 = vmatpush1.msra.mxu0 0.0
    %1557 = vmatprep.subr.mxu0 0.0
    %1558 = vmatpush1.msra.mxu0 0.0
    %1559 = vmatprep.subr.mxu0 0.0
    %1560 = vmatpush1.msra.mxu0 0.0
    %1561 = vmatprep.subr.mxu0 0.0
    %1562 = vmatpush1.msra.mxu0 0.0
    %1563 = vmatprep.subr.mxu0 0.0
    %1564 = vmatpush1.msra.mxu0 0.0
    %1565 = vmatprep.subr.mxu0 0.0
    %1566 = vmatpush1.msra.mxu0 0.0
    %1567 = vmatprep.subr.mxu0 0.0
    %1568 = vmatpush1.msra.mxu0 0.0
    %1569 = vmatprep.subr.mxu0 0.0
    %1570 = vmatpush1.msra.mxu0 0.0
    %1571 = vmatprep.subr.mxu0 0.0
    %1572 = vmatpush1.msra.mxu0 0.0
    %1573 = vmatprep.subr.mxu0 0.0
    %1574 = vmatpush1.msra.mxu0 0.0
    %1575 = vmatprep.subr.mxu0 0.0
    %1576 = vmatpush1.msra.mxu0 0.0
    %1577 = vmatprep.subr.mxu0 0.0
    %1578 = vmatpush1.msra.mxu0 0.0
    %1579 = vmatprep.subr.mxu0 0.0
    %1580 = vmatpush1.msra.mxu0 0.0
    %1581 = vmatprep.subr.mxu0 0.0
    %1582 = vmatpush1.msra.mxu0 0.0
    %1583 = vmatprep.subr.mxu0 0.0
    %1584 = vmatpush1.msra.mxu0 0.0
    %1585 = vmatprep.subr.mxu0 0.0
    %1586 = vmatpush1.msra.mxu0 0.0
    %1587 = vmatprep.subr.mxu0 0.0
    %1588 = vmatpush1.msra.mxu0 0.0
    %1589 = vmatprep.subr.mxu0 0.0
    %1590 = vmatpush1.msra.mxu0 0.0
    %1591 = vmatprep.subr.mxu0 0.0
    %1592 = vmatpush1.msra.mxu0 0.0
    %1593 = vmatprep.mubr.f32.mxu0 0.0
    %1594 = vmatmul.mubr.f32.gmra.mrb[0].mxu0 %v885
    %v1595 = vpop.f32.mrb[0].mxu0
    %v1596 = vadd.f32 0.0, %v1595
    %v1597 = vpop.f32.mrb[0].mxu0
    %1598 = vmatprep.mubr.f32.mxu0 0.0
    %1599 = vmatmul.mubr.f32.gmra.mrb[0].mxu0 %v888
    %v1600 = vpop.f32.mrb[0].mxu0
    %v1601 = vadd.f32 0.0, %v1600
    %v1602 = vpop.f32.mrb[0].mxu0
    %1603 = vmatprep.mubr.f32.mxu0 0.0
    %1604 = vmatmul.mubr.f32.gmra.mrb[0].mxu0 %v891
    %v1605 = vpop.f32.mrb[0].mxu0
    %v1606 = vadd.f32 0.0, %v1605
    %v1607 = vpop.f32.mrb[0].mxu0
    %1608 = vmatprep.mubr.f32.mxu0 0.0
    %1609 = vmatmul.mubr.f32.gmra.mrb[0].mxu0 %v894
    %v1610 = vpop.f32.mrb[0].mxu0
    %v1611 = vadd.f32 0.0, %v1610
    %v1612 = vpop.f32.mrb[0].mxu0
    %1613 = vdwg.mxu0
    %1614 = vmatprep.subr.mxu0 0.0
    %1615 = vmatpush1.xpose.msra.mxu0 %v1364
    %1616 = vmatprep.subr.mxu0 0.0
    %1617 = vmatpush1.xpose.msra.mxu0 %v1367
    %1618 = vmatprep.subr.mxu0 0.0
    %1619 = vmatpush1.xpose.msra.mxu0 %v1370
    %1620 = vmatprep.subr.mxu0 0.0
    %1621 = vmatpush1.xpose.msra.mxu0 %v1373
    %1622 = vmatprep.subr.mxu0 0.0
    %1623 = vmatpush1.xpose.msra.mxu0 0.0
    %1624 = vmatprep.subr.mxu0 0.0
    %1625 = vmatpush1.xpose.msra.mxu0 0.0
    %1626 = vmatprep.subr.mxu0 0.0
    %1627 = vmatpush1.xpose.msra.mxu0 0.0
    %1628 = vmatprep.subr.mxu0 0.0
    %1629 = vmatpush1.xpose.msra.mxu0 0.0
    %1630 = vmatprep.subr.mxu0 0.0
    %1631 = vmatpush1.xpose.msra.mxu0 0.0
    %1632 = vmatprep.subr.mxu0 0.0
    %1633 = vmatpush1.xpose.msra.mxu0 0.0
    %1634 = vmatprep.subr.mxu0 0.0
    %1635 = vmatpush1.xpose.msra.mxu0 0.0
    %1636 = vmatprep.subr.mxu0 0.0
    %1637 = vmatpush1.xpose.msra.mxu0 0.0
    %1638 = vmatprep.subr.mxu0 0.0
    %1639 = vmatpush1.xpose.msra.mxu0 0.0
    %1640 = vmatprep.subr.mxu0 0.0
    %1641 = vmatpush1.xpose.msra.mxu0 0.0
    %1642 = vmatprep.subr.mxu0 0.0
    %1643 = vmatpush1.xpose.msra.mxu0 0.0
    %1644 = vmatprep.subr.mxu0 0.0
    %1645 = vmatpush1.xpose.msra.mxu0 0.0
    %1646 = vmatprep.subr.mxu0 0.0
    %1647 = vmatpush1.xpose.msra.mxu0 0.0
    %1648 = vmatprep.subr.mxu0 0.0
    %1649 = vmatpush1.xpose.msra.mxu0 0.0
    %1650 = vmatprep.subr.mxu0 0.0
    %1651 = vmatpush1.xpose.msra.mxu0 0.0
    %1652 = vmatprep.subr.mxu0 0.0
    %1653 = vmatpush1.xpose.msra.mxu0 0.0
    %1654 = vmatprep.subr.mxu0 0.0
    %1655 = vmatpush1.xpose.msra.mxu0 0.0
    %1656 = vmatprep.subr.mxu0 0.0
    %1657 = vmatpush1.xpose.msra.mxu0 0.0
    %1658 = vmatprep.subr.mxu0 0.0
    %1659 = vmatpush1.xpose.msra.mxu0 0.0
    %1660 = vmatprep.subr.mxu0 0.0
    %1661 = vmatpush1.xpose.msra.mxu0 0.0
    %1662 = vmatprep.subr.mxu0 0.0
    %1663 = vmatpush1.xpose.msra.mxu0 0.0
    %1664 = vmatprep.subr.mxu0 0.0
    %1665 = vmatpush1.xpose.msra.mxu0 0.0
    %1666 = vmatprep.subr.mxu0 0.0
    %1667 = vmatpush1.xpose.msra.mxu0 0.0
    %1668 = vmatprep.subr.mxu0 0.0
    %1669 = vmatpush1.xpose.msra.mxu0 0.0
    %1670 = vmatprep.subr.mxu0 0.0
    %1671 = vmatpush1.xpose.msra.mxu0 0.0
    %1672 = vmatprep.subr.mxu0 0.0
    %1673 = vmatpush1.xpose.msra.mxu0 0.0
    %1674 = vmatprep.subr.mxu0 0.0
    %1675 = vmatpush1.xpose.msra.mxu0 0.0
    %1676 = vmatprep.subr.mxu0 0.0
    %1677 = vmatpush1.xpose.msra.mxu0 0.0
    %1678 = vmatprep.mubr.f32.mxu0 0.0
    %1679 = vmatmul.mubr.f32.gmra.mrb[0].mxu0 %v982
    %v1680 = vpop.f32.mrb[0].mxu0
    %v1681 = vadd.f32 %v1261, %v1680
    %v1682 = vpop.f32.mrb[0].mxu0
    %1683 = vmatprep.mubr.f32.mxu0 0.0
    %1684 = vmatmul.mubr.f32.gmra.mrb[0].mxu0 %v985
    %v1685 = vpop.f32.mrb[0].mxu0
    %v1686 = vadd.f32 %v1262, %v1685
    %v1687 = vpop.f32.mrb[0].mxu0
    %1688 = vmatprep.mubr.f32.mxu0 0.0
    %1689 = vmatmul.mubr.f32.gmra.mrb[0].mxu0 %v988
    %v1690 = vpop.f32.mrb[0].mxu0
    %v1691 = vadd.f32 %v1263, %v1690
    %v1692 = vpop.f32.mrb[0].mxu0
    %1693 = vmatprep.mubr.f32.mxu0 0.0
    %1694 = vmatmul.mubr.f32.gmra.mrb[0].mxu0 %v991
    %v1695 = vpop.f32.mrb[0].mxu0
    %v1696 = vadd.f32 %v1264, %v1695
    %v1697 = vpop.f32.mrb[0].mxu0
    %1698 = vdwg.mxu0
    %v1699 = vsel %vm814, %v1681, -inf
    %1700 = vmax.xlane.f32.xlu0 %v1699
    %v1701 = vpop.xlane.xlu0 %1700
    %v1702 = vsel %vm814, %v1686, -inf
    %1703 = vmax.xlane.f32.xlu0 %v1702
    %v1704 = vpop.xlane.xlu0 %1703
    %v1705 = vsel %vm814, %v1691, -inf
    %1706 = vmax.xlane.f32.xlu0 %v1705
    %v1707 = vpop.xlane.xlu0 %1706
    %v1708 = vsel %vm814, %v1696, -inf
    %1709 = vmax.xlane.f32.xlu0 %v1708
    %v1710 = vpop.xlane.xlu0 %1709
    %v1711 = vsub.f32 %v1681, %v1701
    %v1712 = vsub.f32 %v1686, %v1704
    %v1713 = vsub.f32 %v1691, %v1707
    %v1714 = vsub.f32 %v1696, %v1710
    %v1715 = vmul.f32 %v1711, 1.442695
    %v1716 = vpow.pop %v1715
    %v1717 = vmul.f32 %v1712, 1.442695
    %v1718 = vpow.pop %v1717
    %v1719 = vmul.f32 %v1713, 1.442695
    %v1720 = vpow.pop %v1719
    %v1721 = vmul.f32 %v1714, 1.442695
    %v1722 = vpow.pop %v1721
    %v1723 = vmul.f32 %v1716, %v1253
    %v1724 = vmul.f32 %v1718, %v1254
    %v1725 = vmul.f32 %v1720, %v1255
    %v1726 = vmul.f32 %v1722, %v1256
    %v1727 = vsel %vm814, %v1723, 0.0
    %1728 = vadd.xlane.f32.xlu0 %v1727
    %v1729 = vpop.xlane.xlu0 %1728
    %v1730 = vsel %vm814, %v1724, 0.0
    %1731 = vadd.xlane.f32.xlu0 %v1730
    %v1732 = vpop.xlane.xlu0 %1731
    %v1733 = vsel %vm814, %v1725, 0.0
    %1734 = vadd.xlane.f32.xlu0 %v1733
    %v1735 = vpop.xlane.xlu0 %1734
    %v1736 = vsel %vm814, %v1726, 0.0
    %1737 = vadd.xlane.f32.xlu0 %v1736
    %v1738 = vpop.xlane.xlu0 %1737
    %vm1739 = vcmp.gt.f32.partialorder %v1729, 0.0
    %vm1740 = vcmp.gt.f32.partialorder %v1732, 0.0
    %vm1741 = vcmp.gt.f32.partialorder %v1735, 0.0
    %vm1742 = vcmp.gt.f32.partialorder %v1738, 0.0
    %v1743 = vsel %vm1739, %v1729, 1.0
    %v1744 = vsel %vm1740, %v1732, 1.0
    %v1745 = vsel %vm1741, %v1735, 1.0
    %v1746 = vsel %vm1742, %v1738, 1.0
    %v1747 = vrcp.pop %v1743
    %v1748 = vmul.f32 %v1723, %v1747
    %v1749 = vrcp.pop %v1744
    %v1750 = vmul.f32 %v1724, %v1749
    %v1751 = vrcp.pop %v1745
    %v1752 = vmul.f32 %v1725, %v1751
    %v1753 = vrcp.pop %v1746
    %v1754 = vmul.f32 %v1726, %v1753
    %s1755 = scalar_lea.vmem [#allocation6], 1152
    %v1756 = vld [vmem:[%s1755] sm:$0xff]
    %v1757 = vld [vmem:[%s1755 + $0x8] sm:$0xff]
    %v1758 = vld [vmem:[%s1755 + $0x10] sm:$0xff]
    %v1759 = vld [vmem:[%s1755 + $0x18] sm:$0xff]
    %v1760 = vld [vmem:[%s1755 + $0x20] sm:$0xff]
    %v1761 = vld [vmem:[%s1755 + $0x28] sm:$0xff]
    %v1762 = vld [vmem:[%s1755 + $0x30] sm:$0xff]
    %v1763 = vld [vmem:[%s1755 + $0x38] sm:$0xff]
    %v1764 = vld [vmem:[%s1755 + $0x40] sm:$0xff]
    %v1765 = vld [vmem:[%s1755 + $0x48] sm:$0xff]
    %v1766 = vld [vmem:[%s1755 + $0x50] sm:$0xff]
    %v1767 = vld [vmem:[%s1755 + $0x58] sm:$0xff]
    %1768 = vmatprep.subr.mxu0 0.0
    %1769 = vmatpush1.msra.mxu0 %v1756
    %1770 = vmatprep.subr.mxu0 0.0
    %1771 = vmatpush1.msra.mxu0 %v1757
    %1772 = vmatprep.subr.mxu0 0.0
    %1773 = vmatpush1.msra.mxu0 %v1758
    %1774 = vmatprep.subr.mxu0 0.0
    %1775 = vmatpush1.msra.mxu0 %v1759
    %1776 = vmatprep.subr.mxu0 0.0
    %1777 = vmatpush1.msra.mxu0 %v1760
    %1778 = vmatprep.subr.mxu0 0.0
    %1779 = vmatpush1.msra.mxu0 %v1761
    %1780 = vmatprep.subr.mxu0 0.0
    %1781 = vmatpush1.msra.mxu0 %v1762
    %1782 = vmatprep.subr.mxu0 0.0
    %1783 = vmatpush1.msra.mxu0 %v1763
    %1784 = vmatprep.subr.mxu0 0.0
    %1785 = vmatpush1.msra.mxu0 %v1764
    %1786 = vmatprep.subr.mxu0 0.0
    %1787 = vmatpush1.msra.mxu0 %v1765
    %1788 = vmatprep.subr.mxu0 0.0
    %1789 = vmatpush1.msra.mxu0 %v1766
    %1790 = vmatprep.subr.mxu0 0.0
    %1791 = vmatpush1.msra.mxu0 %v1767
    %1792 = vmatprep.subr.mxu0 0.0
    %1793 = vmatpush1.msra.mxu0 0.0
    %1794 = vmatprep.subr.mxu0 0.0
    %1795 = vmatpush1.msra.mxu0 0.0
    %1796 = vmatprep.subr.mxu0 0.0
    %1797 = vmatpush1.msra.mxu0 0.0
    %1798 = vmatprep.subr.mxu0 0.0
    %1799 = vmatpush1.msra.mxu0 0.0
    %1800 = vmatprep.subr.mxu0 0.0
    %1801 = vmatpush1.msra.mxu0 0.0
    %1802 = vmatprep.subr.mxu0 0.0
    %1803 = vmatpush1.msra.mxu0 0.0
    %1804 = vmatprep.subr.mxu0 0.0
    %1805 = vmatpush1.msra.mxu0 0.0
    %1806 = vmatprep.subr.mxu0 0.0
    %1807 = vmatpush1.msra.mxu0 0.0
    %1808 = vmatprep.subr.mxu0 0.0
    %1809 = vmatpush1.msra.mxu0 0.0
    %1810 = vmatprep.subr.mxu0 0.0
    %1811 = vmatpush1.msra.mxu0 0.0
    %1812 = vmatprep.subr.mxu0 0.0
    %1813 = vmatpush1.msra.mxu0 0.0
    %1814 = vmatprep.subr.mxu0 0.0
    %1815 = vmatpush1.msra.mxu0 0.0
    %1816 = vmatprep.subr.mxu0 0.0
    %1817 = vmatpush1.msra.mxu0 0.0
    %1818 = vmatprep.subr.mxu0 0.0
    %1819 = vmatpush1.msra.mxu0 0.0
    %1820 = vmatprep.subr.mxu0 0.0
    %1821 = vmatpush1.msra.mxu0 0.0
    %1822 = vmatprep.subr.mxu0 0.0
    %1823 = vmatpush1.msra.mxu0 0.0
    %1824 = vmatprep.subr.mxu0 0.0
    %1825 = vmatpush1.msra.mxu0 0.0
    %1826 = vmatprep.subr.mxu0 0.0
    %1827 = vmatpush1.msra.mxu0 0.0
    %1828 = vmatprep.subr.mxu0 0.0
    %1829 = vmatpush1.msra.mxu0 0.0
    %1830 = vmatprep.subr.mxu0 0.0
    %1831 = vmatpush1.msra.mxu0 0.0
    %1832 = vmatprep.mubr.f32.mxu0 0.0
    %1833 = vmatmul.mubr.f32.gmra.mrb[0].mxu0 %v885
    %v1834 = vpop.f32.mrb[0].mxu0
    %v1835 = vadd.f32 0.0, %v1834
    %v1836 = vpop.f32.mrb[0].mxu0
    %1837 = vmatprep.mubr.f32.mxu0 0.0
    %1838 = vmatmul.mubr.f32.gmra.mrb[0].mxu0 %v888
    %v1839 = vpop.f32.mrb[0].mxu0
    %v1840 = vadd.f32 0.0, %v1839
    %v1841 = vpop.f32.mrb[0].mxu0
    %1842 = vmatprep.mubr.f32.mxu0 0.0
    %1843 = vmatmul.mubr.f32.gmra.mrb[0].mxu0 %v891
    %v1844 = vpop.f32.mrb[0].mxu0
    %v1845 = vadd.f32 0.0, %v1844
    %v1846 = vpop.f32.mrb[0].mxu0
    %1847 = vmatprep.mubr.f32.mxu0 0.0
    %1848 = vmatmul.mubr.f32.gmra.mrb[0].mxu0 %v894
    %v1849 = vpop.f32.mrb[0].mxu0
    %v1850 = vadd.f32 0.0, %v1849
    %v1851 = vpop.f32.mrb[0].mxu0
    %1852 = vdwg.mxu0
    %1857 = vrot.lane.b32.xlu0 %v1748, 32
    %v1858 = vpop.permute.xlu0 %1857
    %1859 = vrot.lane.b32.xlu0 %v1750, 32
    %v1860 = vpop.permute.xlu0 %1859
    %1861 = vrot.lane.b32.xlu0 %v1752, 32
    %v1862 = vpop.permute.xlu0 %1861
    %1863 = vrot.lane.b32.xlu0 %v1754, 32
    %v1864 = vpop.permute.xlu0 %1863
    %v1869 = vsel %vm814, %v1509, %v1858
    %v1870 = vsel %vm814, %v1511, %v1860
    %v1871 = vsel %vm814, %v1513, %v1862
    %v1872 = vsel %vm814, %v1515, %v1864
    %vm1873 = vcmask 523264
    %v1875 = vsel %vm1873, %v1869, 0
    %v1878 = vsel %vm1873, %v1870, 0
    %v1881 = vsel %vm1873, %v1871, 0
    %v1884 = vsel %vm1873, %v1872, 0
    %1886 = vmatprep.subr.mxu0 0.0
    %1887 = vmatpush1.msra.mxu0 %v1596
    %1888 = vmatprep.subr.mxu0 0.0
    %1889 = vmatpush1.msra.mxu0 %v1601
    %1890 = vmatprep.subr.mxu0 0.0
    %1891 = vmatpush1.msra.mxu0 %v1606
    %1892 = vmatprep.subr.mxu0 0.0
    %1893 = vmatpush1.msra.mxu0 %v1611
    %1894 = vmatprep.subr.mxu0 0.0
    %1895 = vmatpush1.msra.mxu0 %v1835
    %1896 = vmatprep.subr.mxu0 0.0
    %1897 = vmatpush1.msra.mxu0 %v1840
    %1898 = vmatprep.subr.mxu0 0.0
    %1899 = vmatpush1.msra.mxu0 %v1845
    %1900 = vmatprep.subr.mxu0 0.0
    %1901 = vmatpush1.msra.mxu0 %v1850
    %1902 = vmatprep.subr.mxu0 0.0
    %1903 = vmatpush1.msra.mxu0 0.0
    %1904 = vmatprep.subr.mxu0 0.0
    %1905 = vmatpush1.msra.mxu0 0.0
    %1906 = vmatprep.subr.mxu0 0.0
    %1907 = vmatpush1.msra.mxu0 0.0
    %1908 = vmatprep.subr.mxu0 0.0
    %1909 = vmatpush1.msra.mxu0 0.0
    %1910 = vmatprep.subr.mxu0 0.0
    %1911 = vmatpush1.msra.mxu0 0.0
    %1912 = vmatprep.subr.mxu0 0.0
    %1913 = vmatpush1.msra.mxu0 0.0
    %1914 = vmatprep.subr.mxu0 0.0
    %1915 = vmatpush1.msra.mxu0 0.0
    %1916 = vmatprep.subr.mxu0 0.0
    %1917 = vmatpush1.msra.mxu0 0.0
    %1918 = vmatprep.subr.mxu0 0.0
    %1919 = vmatpush1.msra.mxu0 0.0
    %1920 = vmatprep.subr.mxu0 0.0
    %1921 = vmatpush1.msra.mxu0 0.0
    %1922 = vmatprep.subr.mxu0 0.0
    %1923 = vmatpush1.msra.mxu0 0.0
    %1924 = vmatprep.subr.mxu0 0.0
    %1925 = vmatpush1.msra.mxu0 0.0
    %1926 = vmatprep.subr.mxu0 0.0
    %1927 = vmatpush1.msra.mxu0 0.0
    %1928 = vmatprep.subr.mxu0 0.0
    %1929 = vmatpush1.msra.mxu0 0.0
    %1930 = vmatprep.subr.mxu0 0.0
    %1931 = vmatpush1.msra.mxu0 0.0
    %1932 = vmatprep.subr.mxu0 0.0
    %1933 = vmatpush1.msra.mxu0 0.0
    %1934 = vmatprep.subr.mxu0 0.0
    %1935 = vmatpush1.msra.mxu0 0.0
    %1936 = vmatprep.subr.mxu0 0.0
    %1937 = vmatpush1.msra.mxu0 0.0
    %1938 = vmatprep.subr.mxu0 0.0
    %1939 = vmatpush1.msra.mxu0 0.0
    %1940 = vmatprep.subr.mxu0 0.0
    %1941 = vmatpush1.msra.mxu0 0.0
    %1942 = vmatprep.subr.mxu0 0.0
    %1943 = vmatpush1.msra.mxu0 0.0
    %1944 = vmatprep.subr.mxu0 0.0
    %1945 = vmatpush1.msra.mxu0 0.0
    %1946 = vmatprep.subr.mxu0 0.0
    %1947 = vmatpush1.msra.mxu0 0.0
    %1948 = vmatprep.subr.mxu0 0.0
    %1949 = vmatpush1.msra.mxu0 0.0
    %1950 = vmatprep.mubr.f32.mxu0 0.0
    %1951 = vmatmul.mubr.f32.gmra.mrb[0].mxu0 %v1875
    %v1952 = vpop.f32.mrb[0].mxu0
    %v1953 = vadd.f32 0.0, %v1952
    %v1954 = vpop.f32.mrb[0].mxu0
    %1955 = vmatprep.mubr.f32.mxu0 0.0
    %1956 = vmatmul.mubr.f32.gmra.mrb[0].mxu0 %v1878
    %v1957 = vpop.f32.mrb[0].mxu0
    %v1958 = vadd.f32 0.0, %v1957
    %v1959 = vpop.f32.mrb[0].mxu0
    %1960 = vmatprep.mubr.f32.mxu0 0.0
    %1961 = vmatmul.mubr.f32.gmra.mrb[0].mxu0 %v1881
    %v1962 = vpop.f32.mrb[0].mxu0
    %v1963 = vadd.f32 0.0, %v1962
    %v1964 = vpop.f32.mrb[0].mxu0
    %1965 = vmatprep.mubr.f32.mxu0 0.0
    %1966 = vmatmul.mubr.f32.gmra.mrb[0].mxu0 %v1884
    %v1967 = vpop.f32.mrb[0].mxu0
    %v1968 = vadd.f32 0.0, %v1967
    %v1969 = vpop.f32.mrb[0].mxu0
    %1970 = vdwg.mxu0
    %v1972 = vsel %vm1873, %v1248, 0
    %v1975 = vsel %vm1873, %v1249, 0
    %v1978 = vsel %vm1873, %v1250, 0
    %v1981 = vsel %vm1873, %v1251, 0
    %1983 = vmatprep.subr.mxu0 0.0
    %1984 = vmatpush1.msra.mxu0 %v963
    %1985 = vmatprep.subr.mxu0 0.0
    %1986 = vmatpush1.msra.mxu0 %v968
    %1987 = vmatprep.subr.mxu0 0.0
    %1988 = vmatpush1.msra.mxu0 %v973
    %1989 = vmatprep.subr.mxu0 0.0
    %1990 = vmatpush1.msra.mxu0 %v978
    %1991 = vmatprep.subr.mxu0 0.0
    %1992 = vmatpush1.msra.mxu0 %v1214
    %1993 = vmatprep.subr.mxu0 0.0
    %1994 = vmatpush1.msra.mxu0 %v1219
    %1995 = vmatprep.subr.mxu0 0.0
    %1996 = vmatpush1.msra.mxu0 %v1224
    %1997 = vmatprep.subr.mxu0 0.0
    %1998 = vmatpush1.msra.mxu0 %v1229
    %1999 = vmatprep.subr.mxu0 0.0
    %2000 = vmatpush1.msra.mxu0 0.0
    %2001 = vmatprep.subr.mxu0 0.0
    %2002 = vmatpush1.msra.mxu0 0.0
    %2003 = vmatprep.subr.mxu0 0.0
    %2004 = vmatpush1.msra.mxu0 0.0
    %2005 = vmatprep.subr.mxu0 0.0
    %2006 = vmatpush1.msra.mxu0 0.0
    %2007 = vmatprep.subr.mxu0 0.0
    %2008 = vmatpush1.msra.mxu0 0.0
    %2009 = vmatprep.subr.mxu0 0.0
    %2010 = vmatpush1.msra.mxu0 0.0
    %2011 = vmatprep.subr.mxu0 0.0
    %2012 = vmatpush1.msra.mxu0 0.0
    %2013 = vmatprep.subr.mxu0 0.0
    %2014 = vmatpush1.msra.mxu0 0.0
    %2015 = vmatprep.subr.mxu0 0.0
    %2016 = vmatpush1.msra.mxu0 0.0
    %2017 = vmatprep.subr.mxu0 0.0
    %2018 = vmatpush1.msra.mxu0 0.0
    %2019 = vmatprep.subr.mxu0 0.0
    %2020 = vmatpush1.msra.mxu0 0.0
    %2021 = vmatprep.subr.mxu0 0.0
    %2022 = vmatpush1.msra.mxu0 0.0
    %2023 = vmatprep.subr.mxu0 0.0
    %2024 = vmatpush1.msra.mxu0 0.0
    %2025 = vmatprep.subr.mxu0 0.0
    %2026 = vmatpush1.msra.mxu0 0.0
    %2027 = vmatprep.subr.mxu0 0.0
    %2028 = vmatpush1.msra.mxu0 0.0
    %2029 = vmatprep.subr.mxu0 0.0
    %2030 = vmatpush1.msra.mxu0 0.0
    %2031 = vmatprep.subr.mxu0 0.0
    %2032 = vmatpush1.msra.mxu0 0.0
    %2033 = vmatprep.subr.mxu0 0.0
    %2034 = vmatpush1.msra.mxu0 0.0
    %2035 = vmatprep.subr.mxu0 0.0
    %2036 = vmatpush1.msra.mxu0 0.0
    %2037 = vmatprep.subr.mxu0 0.0
    %2038 = vmatpush1.msra.mxu0 0.0
    %2039 = vmatprep.subr.mxu0 0.0
    %2040 = vmatpush1.msra.mxu0 0.0
    %2041 = vmatprep.subr.mxu0 0.0
    %2042 = vmatpush1.msra.mxu0 0.0
    %2043 = vmatprep.subr.mxu0 0.0
    %2044 = vmatpush1.msra.mxu0 0.0
    %2045 = vmatprep.subr.mxu0 0.0
    %2046 = vmatpush1.msra.mxu0 0.0
    %2047 = vmatprep.mubr.f32.mxu0 0.0
    %2048 = vmatmul.mubr.f32.gmra.mrb[0].mxu0 %v1972
    %v2049 = vpop.f32.mrb[0].mxu0
    %v2050 = vadd.f32 %v1953, %v2049
    %v2051 = vpop.f32.mrb[0].mxu0
    %2052 = vmatprep.mubr.f32.mxu0 0.0
    %2053 = vmatmul.mubr.f32.gmra.mrb[0].mxu0 %v1975
    %v2054 = vpop.f32.mrb[0].mxu0
    %v2055 = vadd.f32 %v1958, %v2054
    %v2056 = vpop.f32.mrb[0].mxu0
    %2057 = vmatprep.mubr.f32.mxu0 0.0
    %2058 = vmatmul.mubr.f32.gmra.mrb[0].mxu0 %v1978
    %v2059 = vpop.f32.mrb[0].mxu0
    %v2060 = vadd.f32 %v1963, %v2059
    %v2061 = vpop.f32.mrb[0].mxu0
    %2062 = vmatprep.mubr.f32.mxu0 0.0
    %2063 = vmatmul.mubr.f32.gmra.mrb[0].mxu0 %v1981
    %v2064 = vpop.f32.mrb[0].mxu0
    %v2065 = vadd.f32 %v1968, %v2064
    %v2066 = vpop.f32.mrb[0].mxu0
    %2067 = vdwg.mxu0
    %s2068 = scalar_lea.vmem [#allocation4], 64
    %v2069 = vld [vmem:[%s2068] sm:$0xff]
    %v2070 = vld [vmem:[%s2068 + $0x8] sm:$0xff]
    %v2071 = vld [vmem:[%s2068 + $0x10] sm:$0xff]
    %v2072 = vld [vmem:[%s2068 + $0x18] sm:$0xff]
    %v2073 = vsub.f32 %v2069, 1.0
    %v2074 = vsub.f32 %v2070, 1.0
    %v2075 = vsub.f32 %v2071, 1.0
    %v2076 = vsub.f32 %v2072, 1.0
    %v2077 = vmul.f32 %v2073, 1e+30
    %v2078 = vmul.f32 %v2074, 1e+30
    %v2079 = vmul.f32 %v2075, 1e+30
    %v2080 = vmul.f32 %v2076, 1e+30
    %s2081 = scalar_lea.vmem [#allocation6], 672
    %v2082 = vld [vmem:[%s2081] sm:$0xff]
    %v2083 = vld [vmem:[%s2081 + $0x8] sm:$0xff]
    %v2084 = vld [vmem:[%s2081 + $0x10] sm:$0xff]
    %v2085 = vld [vmem:[%s2081 + $0x18] sm:$0xff]
    %v2086 = vld [vmem:[%s2081 + $0x20] sm:$0xff]
    %v2087 = vld [vmem:[%s2081 + $0x28] sm:$0xff]
    %v2088 = vld [vmem:[%s2081 + $0x30] sm:$0xff]
    %v2089 = vld [vmem:[%s2081 + $0x38] sm:$0xff]
    %v2090 = vld [vmem:[%s2081 + $0x40] sm:$0xff]
    %v2091 = vld [vmem:[%s2081 + $0x48] sm:$0xff]
    %v2092 = vld [vmem:[%s2081 + $0x50] sm:$0xff]
    %v2093 = vld [vmem:[%s2081 + $0x58] sm:$0xff]
    %2094 = vmatprep.subr.mxu0 0.0
    %2095 = vmatpush1.msra.mxu0 %v2082
    %2096 = vmatprep.subr.mxu0 0.0
    %2097 = vmatpush1.msra.mxu0 %v2083
    %2098 = vmatprep.subr.mxu0 0.0
    %2099 = vmatpush1.msra.mxu0 %v2084
    %2100 = vmatprep.subr.mxu0 0.0
    %2101 = vmatpush1.msra.mxu0 %v2085
    %2102 = vmatprep.subr.mxu0 0.0
    %2103 = vmatpush1.msra.mxu0 %v2086
    %2104 = vmatprep.subr.mxu0 0.0
    %2105 = vmatpush1.msra.mxu0 %v2087
    %2106 = vmatprep.subr.mxu0 0.0
    %2107 = vmatpush1.msra.mxu0 %v2088
    %2108 = vmatprep.subr.mxu0 0.0
    %2109 = vmatpush1.msra.mxu0 %v2089
    %2110 = vmatprep.subr.mxu0 0.0
    %2111 = vmatpush1.msra.mxu0 %v2090
    %2112 = vmatprep.subr.mxu0 0.0
    %2113 = vmatpush1.msra.mxu0 %v2091
    %2114 = vmatprep.subr.mxu0 0.0
    %2115 = vmatpush1.msra.mxu0 %v2092
    %2116 = vmatprep.subr.mxu0 0.0
    %2117 = vmatpush1.msra.mxu0 %v2093
    %2118 = vmatprep.subr.mxu0 0.0
    %2119 = vmatpush1.msra.mxu0 0.0
    %2120 = vmatprep.subr.mxu0 0.0
    %2121 = vmatpush1.msra.mxu0 0.0
    %2122 = vmatprep.subr.mxu0 0.0
    %2123 = vmatpush1.msra.mxu0 0.0
    %2124 = vmatprep.subr.mxu0 0.0
    %2125 = vmatpush1.msra.mxu0 0.0
    %2126 = vmatprep.subr.mxu0 0.0
    %2127 = vmatpush1.msra.mxu0 0.0
    %2128 = vmatprep.subr.mxu0 0.0
    %2129 = vmatpush1.msra.mxu0 0.0
    %2130 = vmatprep.subr.mxu0 0.0
    %2131 = vmatpush1.msra.mxu0 0.0
    %2132 = vmatprep.subr.mxu0 0.0
    %2133 = vmatpush1.msra.mxu0 0.0
    %2134 = vmatprep.subr.mxu0 0.0
    %2135 = vmatpush1.msra.mxu0 0.0
    %2136 = vmatprep.subr.mxu0 0.0
    %2137 = vmatpush1.msra.mxu0 0.0
    %2138 = vmatprep.subr.mxu0 0.0
    %2139 = vmatpush1.msra.mxu0 0.0
    %2140 = vmatprep.subr.mxu0 0.0
    %2141 = vmatpush1.msra.mxu0 0.0
    %2142 = vmatprep.subr.mxu0 0.0
    %2143 = vmatpush1.msra.mxu0 0.0
    %2144 = vmatprep.subr.mxu0 0.0
    %2145 = vmatpush1.msra.mxu0 0.0
    %2146 = vmatprep.subr.mxu0 0.0
    %2147 = vmatpush1.msra.mxu0 0.0
    %2148 = vmatprep.subr.mxu0 0.0
    %2149 = vmatpush1.msra.mxu0 0.0
    %2150 = vmatprep.subr.mxu0 0.0
    %2151 = vmatpush1.msra.mxu0 0.0
    %2152 = vmatprep.subr.mxu0 0.0
    %2153 = vmatpush1.msra.mxu0 0.0
    %2154 = vmatprep.subr.mxu0 0.0
    %2155 = vmatpush1.msra.mxu0 0.0
    %2156 = vmatprep.subr.mxu0 0.0
    %2157 = vmatpush1.msra.mxu0 0.0
    %2158 = vmatprep.mubr.f32.mxu0 0.0
    %2159 = vmatmul.mubr.f32.gmra.mrb[0].mxu0 %v609
    %v2160 = vpop.f32.mrb[0].mxu0
    %v2161 = vadd.f32 0.0, %v2160
    %v2162 = vpop.f32.mrb[0].mxu0
    %2163 = vmatprep.mubr.f32.mxu0 0.0
    %2164 = vmatmul.mubr.f32.gmra.mrb[0].mxu0 %v612
    %v2165 = vpop.f32.mrb[0].mxu0
    %v2166 = vadd.f32 0.0, %v2165
    %v2167 = vpop.f32.mrb[0].mxu0
    %2168 = vmatprep.mubr.f32.mxu0 0.0
    %2169 = vmatmul.mubr.f32.gmra.mrb[0].mxu0 %v615
    %v2170 = vpop.f32.mrb[0].mxu0
    %v2171 = vadd.f32 0.0, %v2170
    %v2172 = vpop.f32.mrb[0].mxu0
    %2173 = vmatprep.mubr.f32.mxu0 0.0
    %2174 = vmatmul.mubr.f32.gmra.mrb[0].mxu0 %v618
    %v2175 = vpop.f32.mrb[0].mxu0
    %v2176 = vadd.f32 0.0, %v2175
    %v2177 = vpop.f32.mrb[0].mxu0
    %2178 = vdwg.mxu0
    %v2180 = vsel %vm143, %v2161, 0
    %v2183 = vsel %vm143, %v2166, 0
    %v2186 = vsel %vm143, %v2171, 0
    %v2189 = vsel %vm143, %v2176, 0
    %2191 = vmatprep.subr.mxu0 0.0
    %2192 = vmatpush1.xpose.msra.mxu0 %v2180
    %2193 = vmatprep.subr.mxu0 0.0
    %2194 = vmatpush1.xpose.msra.mxu0 %v2183
    %2195 = vmatprep.subr.mxu0 0.0
    %2196 = vmatpush1.xpose.msra.mxu0 %v2186
    %2197 = vmatprep.subr.mxu0 0.0
    %2198 = vmatpush1.xpose.msra.mxu0 %v2189
    %2199 = vmatprep.subr.mxu0 0.0
    %2200 = vmatpush1.xpose.msra.mxu0 0.0
    %2201 = vmatprep.subr.mxu0 0.0
    %2202 = vmatpush1.xpose.msra.mxu0 0.0
    %2203 = vmatprep.subr.mxu0 0.0
    %2204 = vmatpush1.xpose.msra.mxu0 0.0
    %2205 = vmatprep.subr.mxu0 0.0
    %2206 = vmatpush1.xpose.msra.mxu0 0.0
    %2207 = vmatprep.subr.mxu0 0.0
    %2208 = vmatpush1.xpose.msra.mxu0 0.0
    %2209 = vmatprep.subr.mxu0 0.0
    %2210 = vmatpush1.xpose.msra.mxu0 0.0
    %2211 = vmatprep.subr.mxu0 0.0
    %2212 = vmatpush1.xpose.msra.mxu0 0.0
    %2213 = vmatprep.subr.mxu0 0.0
    %2214 = vmatpush1.xpose.msra.mxu0 0.0
    %2215 = vmatprep.subr.mxu0 0.0
    %2216 = vmatpush1.xpose.msra.mxu0 0.0
    %2217 = vmatprep.subr.mxu0 0.0
    %2218 = vmatpush1.xpose.msra.mxu0 0.0
    %2219 = vmatprep.subr.mxu0 0.0
    %2220 = vmatpush1.xpose.msra.mxu0 0.0
    %2221 = vmatprep.subr.mxu0 0.0
    %2222 = vmatpush1.xpose.msra.mxu0 0.0
    %2223 = vmatprep.subr.mxu0 0.0
    %2224 = vmatpush1.xpose.msra.mxu0 0.0
    %2225 = vmatprep.subr.mxu0 0.0
    %2226 = vmatpush1.xpose.msra.mxu0 0.0
    %2227 = vmatprep.subr.mxu0 0.0
    %2228 = vmatpush1.xpose.msra.mxu0 0.0
    %2229 = vmatprep.subr.mxu0 0.0
    %2230 = vmatpush1.xpose.msra.mxu0 0.0
    %2231 = vmatprep.subr.mxu0 0.0
    %2232 = vmatpush1.xpose.msra.mxu0 0.0
    %2233 = vmatprep.subr.mxu0 0.0
    %2234 = vmatpush1.xpose.msra.mxu0 0.0
    %2235 = vmatprep.subr.mxu0 0.0
    %2236 = vmatpush1.xpose.msra.mxu0 0.0
    %2237 = vmatprep.subr.mxu0 0.0
    %2238 = vmatpush1.xpose.msra.mxu0 0.0
    %2239 = vmatprep.subr.mxu0 0.0
    %2240 = vmatpush1.xpose.msra.mxu0 0.0
    %2241 = vmatprep.subr.mxu0 0.0
    %2242 = vmatpush1.xpose.msra.mxu0 0.0
    %2243 = vmatprep.subr.mxu0 0.0
    %2244 = vmatpush1.xpose.msra.mxu0 0.0
    %2245 = vmatprep.subr.mxu0 0.0
    %2246 = vmatpush1.xpose.msra.mxu0 0.0
    %2247 = vmatprep.subr.mxu0 0.0
    %2248 = vmatpush1.xpose.msra.mxu0 0.0
    %2249 = vmatprep.subr.mxu0 0.0
    %2250 = vmatpush1.xpose.msra.mxu0 0.0
    %2251 = vmatprep.subr.mxu0 0.0
    %2252 = vmatpush1.xpose.msra.mxu0 0.0
    %2253 = vmatprep.subr.mxu0 0.0
    %2254 = vmatpush1.xpose.msra.mxu0 0.0
    %2255 = vmatprep.mubr.f32.mxu0 0.0
    %2256 = vmatmul.mubr.f32.gmra.mrb[0].mxu0 %v706
    %v2257 = vpop.f32.mrb[0].mxu0
    %v2258 = vadd.f32 %v2077, %v2257
    %v2259 = vpop.f32.mrb[0].mxu0
    %2260 = vmatprep.mubr.f32.mxu0 0.0
    %2261 = vmatmul.mubr.f32.gmra.mrb[0].mxu0 %v709
    %v2262 = vpop.f32.mrb[0].mxu0
    %v2263 = vadd.f32 %v2078, %v2262
    %v2264 = vpop.f32.mrb[0].mxu0
    %2265 = vmatprep.mubr.f32.mxu0 0.0
    %2266 = vmatmul.mubr.f32.gmra.mrb[0].mxu0 %v712
    %v2267 = vpop.f32.mrb[0].mxu0
    %v2268 = vadd.f32 %v2079, %v2267
    %v2269 = vpop.f32.mrb[0].mxu0
    %2270 = vmatprep.mubr.f32.mxu0 0.0
    %2271 = vmatmul.mubr.f32.gmra.mrb[0].mxu0 %v715
    %v2272 = vpop.f32.mrb[0].mxu0
    %v2273 = vadd.f32 %v2080, %v2272
    %v2274 = vpop.f32.mrb[0].mxu0
    %2275 = vdwg.mxu0
    %v2276 = vsel %vm814, %v2258, -inf
    %2277 = vmax.xlane.f32.xlu0 %v2276
    %v2278 = vpop.xlane.xlu0 %2277
    %v2279 = vsel %vm814, %v2263, -inf
    %2280 = vmax.xlane.f32.xlu0 %v2279
    %v2281 = vpop.xlane.xlu0 %2280
    %v2282 = vsel %vm814, %v2268, -inf
    %2283 = vmax.xlane.f32.xlu0 %v2282
    %v2284 = vpop.xlane.xlu0 %2283
    %v2285 = vsel %vm814, %v2273, -inf
    %2286 = vmax.xlane.f32.xlu0 %v2285
    %v2287 = vpop.xlane.xlu0 %2286
    %v2288 = vsub.f32 %v2258, %v2278
    %v2289 = vsub.f32 %v2263, %v2281
    %v2290 = vsub.f32 %v2268, %v2284
    %v2291 = vsub.f32 %v2273, %v2287
    %v2292 = vmul.f32 %v2288, 1.442695
    %v2293 = vpow.pop %v2292
    %v2294 = vmul.f32 %v2289, 1.442695
    %v2295 = vpow.pop %v2294
    %v2296 = vmul.f32 %v2290, 1.442695
    %v2297 = vpow.pop %v2296
    %v2298 = vmul.f32 %v2291, 1.442695
    %v2299 = vpow.pop %v2298
    %v2300 = vmul.f32 %v2293, %v2069
    %v2301 = vmul.f32 %v2295, %v2070
    %v2302 = vmul.f32 %v2297, %v2071
    %v2303 = vmul.f32 %v2299, %v2072
    %v2304 = vsel %vm814, %v2300, 0.0
    %2305 = vadd.xlane.f32.xlu0 %v2304
    %v2306 = vpop.xlane.xlu0 %2305
    %v2307 = vsel %vm814, %v2301, 0.0
    %2308 = vadd.xlane.f32.xlu0 %v2307
    %v2309 = vpop.xlane.xlu0 %2308
    %v2310 = vsel %vm814, %v2302, 0.0
    %2311 = vadd.xlane.f32.xlu0 %v2310
    %v2312 = vpop.xlane.xlu0 %2311
    %v2313 = vsel %vm814, %v2303, 0.0
    %2314 = vadd.xlane.f32.xlu0 %v2313
    %v2315 = vpop.xlane.xlu0 %2314
    %vm2316 = vcmp.gt.f32.partialorder %v2306, 0.0
    %vm2317 = vcmp.gt.f32.partialorder %v2309, 0.0
    %vm2318 = vcmp.gt.f32.partialorder %v2312, 0.0
    %vm2319 = vcmp.gt.f32.partialorder %v2315, 0.0
    %v2320 = vsel %vm2316, %v2306, 1.0
    %v2321 = vsel %vm2317, %v2309, 1.0
    %v2322 = vsel %vm2318, %v2312, 1.0
    %v2323 = vsel %vm2319, %v2315, 1.0
    %v2324 = vrcp.pop %v2320
    %v2325 = vmul.f32 %v2300, %v2324
    %v2326 = vrcp.pop %v2321
    %v2327 = vmul.f32 %v2301, %v2326
    %v2328 = vrcp.pop %v2322
    %v2329 = vmul.f32 %v2302, %v2328
    %v2330 = vrcp.pop %v2323
    %v2331 = vmul.f32 %v2303, %v2330
    %s2332 = scalar_lea.vmem [#allocation6], 1248
    %v2333 = vld [vmem:[%s2332] sm:$0xff]
    %v2334 = vld [vmem:[%s2332 + $0x8] sm:$0xff]
    %v2335 = vld [vmem:[%s2332 + $0x10] sm:$0xff]
    %v2336 = vld [vmem:[%s2332 + $0x18] sm:$0xff]
    %v2337 = vld [vmem:[%s2332 + $0x20] sm:$0xff]
    %v2338 = vld [vmem:[%s2332 + $0x28] sm:$0xff]
    %v2339 = vld [vmem:[%s2332 + $0x30] sm:$0xff]
    %v2340 = vld [vmem:[%s2332 + $0x38] sm:$0xff]
    %v2341 = vld [vmem:[%s2332 + $0x40] sm:$0xff]
    %v2342 = vld [vmem:[%s2332 + $0x48] sm:$0xff]
    %v2343 = vld [vmem:[%s2332 + $0x50] sm:$0xff]
    %v2344 = vld [vmem:[%s2332 + $0x58] sm:$0xff]
    %2345 = vmatprep.subr.mxu0 0.0
    %2346 = vmatpush1.msra.mxu0 %v2333
    %2347 = vmatprep.subr.mxu0 0.0
    %2348 = vmatpush1.msra.mxu0 %v2334
    %2349 = vmatprep.subr.mxu0 0.0
    %2350 = vmatpush1.msra.mxu0 %v2335
    %2351 = vmatprep.subr.mxu0 0.0
    %2352 = vmatpush1.msra.mxu0 %v2336
    %2353 = vmatprep.subr.mxu0 0.0
    %2354 = vmatpush1.msra.mxu0 %v2337
    %2355 = vmatprep.subr.mxu0 0.0
    %2356 = vmatpush1.msra.mxu0 %v2338
    %2357 = vmatprep.subr.mxu0 0.0
    %2358 = vmatpush1.msra.mxu0 %v2339
    %2359 = vmatprep.subr.mxu0 0.0
    %2360 = vmatpush1.msra.mxu0 %v2340
    %2361 = vmatprep.subr.mxu0 0.0
    %2362 = vmatpush1.msra.mxu0 %v2341
    %2363 = vmatprep.subr.mxu0 0.0
    %2364 = vmatpush1.msra.mxu0 %v2342
    %2365 = vmatprep.subr.mxu0 0.0
    %2366 = vmatpush1.msra.mxu0 %v2343
    %2367 = vmatprep.subr.mxu0 0.0
    %2368 = vmatpush1.msra.mxu0 %v2344
    %2369 = vmatprep.subr.mxu0 0.0
    %2370 = vmatpush1.msra.mxu0 0.0
    %2371 = vmatprep.subr.mxu0 0.0
    %2372 = vmatpush1.msra.mxu0 0.0
    %2373 = vmatprep.subr.mxu0 0.0
    %2374 = vmatpush1.msra.mxu0 0.0
    %2375 = vmatprep.subr.mxu0 0.0
    %2376 = vmatpush1.msra.mxu0 0.0
    %2377 = vmatprep.subr.mxu0 0.0
    %2378 = vmatpush1.msra.mxu0 0.0
    %2379 = vmatprep.subr.mxu0 0.0
    %2380 = vmatpush1.msra.mxu0 0.0
    %2381 = vmatprep.subr.mxu0 0.0
    %2382 = vmatpush1.msra.mxu0 0.0
    %2383 = vmatprep.subr.mxu0 0.0
    %2384 = vmatpush1.msra.mxu0 0.0
    %2385 = vmatprep.subr.mxu0 0.0
    %2386 = vmatpush1.msra.mxu0 0.0
    %2387 = vmatprep.subr.mxu0 0.0
    %2388 = vmatpush1.msra.mxu0 0.0
    %2389 = vmatprep.subr.mxu0 0.0
    %2390 = vmatpush1.msra.mxu0 0.0
    %2391 = vmatprep.subr.mxu0 0.0
    %2392 = vmatpush1.msra.mxu0 0.0
    %2393 = vmatprep.subr.mxu0 0.0
    %2394 = vmatpush1.msra.mxu0 0.0
    %2395 = vmatprep.subr.mxu0 0.0
    %2396 = vmatpush1.msra.mxu0 0.0
    %2397 = vmatprep.subr.mxu0 0.0
    %2398 = vmatpush1.msra.mxu0 0.0
    %2399 = vmatprep.subr.mxu0 0.0
    %2400 = vmatpush1.msra.mxu0 0.0
    %2401 = vmatprep.subr.mxu0 0.0
    %2402 = vmatpush1.msra.mxu0 0.0
    %2403 = vmatprep.subr.mxu0 0.0
    %2404 = vmatpush1.msra.mxu0 0.0
    %2405 = vmatprep.subr.mxu0 0.0
    %2406 = vmatpush1.msra.mxu0 0.0
    %2407 = vmatprep.subr.mxu0 0.0
    %2408 = vmatpush1.msra.mxu0 0.0
    %2409 = vmatprep.mubr.f32.mxu0 0.0
    %2410 = vmatmul.mubr.f32.gmra.mrb[0].mxu0 %v885
    %v2411 = vpop.f32.mrb[0].mxu0
    %v2412 = vadd.f32 0.0, %v2411
    %v2413 = vpop.f32.mrb[0].mxu0
    %2414 = vmatprep.mubr.f32.mxu0 0.0
    %2415 = vmatmul.mubr.f32.gmra.mrb[0].mxu0 %v888
    %v2416 = vpop.f32.mrb[0].mxu0
    %v2417 = vadd.f32 0.0, %v2416
    %v2418 = vpop.f32.mrb[0].mxu0
    %2419 = vmatprep.mubr.f32.mxu0 0.0
    %2420 = vmatmul.mubr.f32.gmra.mrb[0].mxu0 %v891
    %v2421 = vpop.f32.mrb[0].mxu0
    %v2422 = vadd.f32 0.0, %v2421
    %v2423 = vpop.f32.mrb[0].mxu0
    %2424 = vmatprep.mubr.f32.mxu0 0.0
    %2425 = vmatmul.mubr.f32.gmra.mrb[0].mxu0 %v894
    %v2426 = vpop.f32.mrb[0].mxu0
    %v2427 = vadd.f32 0.0, %v2426
    %v2428 = vpop.f32.mrb[0].mxu0
    %2429 = vdwg.mxu0
    %2430 = vmatprep.subr.mxu0 0.0
    %2431 = vmatpush1.xpose.msra.mxu0 %v2180
    %2432 = vmatprep.subr.mxu0 0.0
    %2433 = vmatpush1.xpose.msra.mxu0 %v2183
    %2434 = vmatprep.subr.mxu0 0.0
    %2435 = vmatpush1.xpose.msra.mxu0 %v2186
    %2436 = vmatprep.subr.mxu0 0.0
    %2437 = vmatpush1.xpose.msra.mxu0 %v2189
    %2438 = vmatprep.subr.mxu0 0.0
    %2439 = vmatpush1.xpose.msra.mxu0 0.0
    %2440 = vmatprep.subr.mxu0 0.0
    %2441 = vmatpush1.xpose.msra.mxu0 0.0
    %2442 = vmatprep.subr.mxu0 0.0
    %2443 = vmatpush1.xpose.msra.mxu0 0.0
    %2444 = vmatprep.subr.mxu0 0.0
    %2445 = vmatpush1.xpose.msra.mxu0 0.0
    %2446 = vmatprep.subr.mxu0 0.0
    %2447 = vmatpush1.xpose.msra.mxu0 0.0
    %2448 = vmatprep.subr.mxu0 0.0
    %2449 = vmatpush1.xpose.msra.mxu0 0.0
    %2450 = vmatprep.subr.mxu0 0.0
    %2451 = vmatpush1.xpose.msra.mxu0 0.0
    %2452 = vmatprep.subr.mxu0 0.0
    %2453 = vmatpush1.xpose.msra.mxu0 0.0
    %2454 = vmatprep.subr.mxu0 0.0
    %2455 = vmatpush1.xpose.msra.mxu0 0.0
    %2456 = vmatprep.subr.mxu0 0.0
    %2457 = vmatpush1.xpose.msra.mxu0 0.0
    %2458 = vmatprep.subr.mxu0 0.0
    %2459 = vmatpush1.xpose.msra.mxu0 0.0
    %2460 = vmatprep.subr.mxu0 0.0
    %2461 = vmatpush1.xpose.msra.mxu0 0.0
    %2462 = vmatprep.subr.mxu0 0.0
    %2463 = vmatpush1.xpose.msra.mxu0 0.0
    %2464 = vmatprep.subr.mxu0 0.0
    %2465 = vmatpush1.xpose.msra.mxu0 0.0
    %2466 = vmatprep.subr.mxu0 0.0
    %2467 = vmatpush1.xpose.msra.mxu0 0.0
    %2468 = vmatprep.subr.mxu0 0.0
    %2469 = vmatpush1.xpose.msra.mxu0 0.0
    %2470 = vmatprep.subr.mxu0 0.0
    %2471 = vmatpush1.xpose.msra.mxu0 0.0
    %2472 = vmatprep.subr.mxu0 0.0
    %2473 = vmatpush1.xpose.msra.mxu0 0.0
    %2474 = vmatprep.subr.mxu0 0.0
    %2475 = vmatpush1.xpose.msra.mxu0 0.0
    %2476 = vmatprep.subr.mxu0 0.0
    %2477 = vmatpush1.xpose.msra.mxu0 0.0
    %2478 = vmatprep.subr.mxu0 0.0
    %2479 = vmatpush1.xpose.msra.mxu0 0.0
    %2480 = vmatprep.subr.mxu0 0.0
    %2481 = vmatpush1.xpose.msra.mxu0 0.0
    %2482 = vmatprep.subr.mxu0 0.0
    %2483 = vmatpush1.xpose.msra.mxu0 0.0
    %2484 = vmatprep.subr.mxu0 0.0
    %2485 = vmatpush1.xpose.msra.mxu0 0.0
    %2486 = vmatprep.subr.mxu0 0.0
    %2487 = vmatpush1.xpose.msra.mxu0 0.0
    %2488 = vmatprep.subr.mxu0 0.0
    %2489 = vmatpush1.xpose.msra.mxu0 0.0
    %2490 = vmatprep.subr.mxu0 0.0
    %2491 = vmatpush1.xpose.msra.mxu0 0.0
    %2492 = vmatprep.subr.mxu0 0.0
    %2493 = vmatpush1.xpose.msra.mxu0 0.0
    %2494 = vmatprep.mubr.f32.mxu0 0.0
    %2495 = vmatmul.mubr.f32.gmra.mrb[0].mxu0 %v982
    %v2496 = vpop.f32.mrb[0].mxu0
    %v2497 = vadd.f32 %v2077, %v2496
    %v2498 = vpop.f32.mrb[0].mxu0
    %2499 = vmatprep.mubr.f32.mxu0 0.0
    %2500 = vmatmul.mubr.f32.gmra.mrb[0].mxu0 %v985
    %v2501 = vpop.f32.mrb[0].mxu0
    %v2502 = vadd.f32 %v2078, %v2501
    %v2503 = vpop.f32.mrb[0].mxu0
    %2504 = vmatprep.mubr.f32.mxu0 0.0
    %2505 = vmatmul.mubr.f32.gmra.mrb[0].mxu0 %v988
    %v2506 = vpop.f32.mrb[0].mxu0
    %v2507 = vadd.f32 %v2079, %v2506
    %v2508 = vpop.f32.mrb[0].mxu0
    %2509 = vmatprep.mubr.f32.mxu0 0.0
    %2510 = vmatmul.mubr.f32.gmra.mrb[0].mxu0 %v991
    %v2511 = vpop.f32.mrb[0].mxu0
    %v2512 = vadd.f32 %v2080, %v2511
    %v2513 = vpop.f32.mrb[0].mxu0
    %2514 = vdwg.mxu0
    %v2515 = vsel %vm814, %v2497, -inf
    %2516 = vmax.xlane.f32.xlu0 %v2515
    %v2517 = vpop.xlane.xlu0 %2516
    %v2518 = vsel %vm814, %v2502, -inf
    %2519 = vmax.xlane.f32.xlu0 %v2518
    %v2520 = vpop.xlane.xlu0 %2519
    %v2521 = vsel %vm814, %v2507, -inf
    %2522 = vmax.xlane.f32.xlu0 %v2521
    %v2523 = vpop.xlane.xlu0 %2522
    %v2524 = vsel %vm814, %v2512, -inf
    %2525 = vmax.xlane.f32.xlu0 %v2524
    %v2526 = vpop.xlane.xlu0 %2525
    %v2527 = vsub.f32 %v2497, %v2517
    %v2528 = vsub.f32 %v2502, %v2520
    %v2529 = vsub.f32 %v2507, %v2523
    %v2530 = vsub.f32 %v2512, %v2526
    %v2531 = vmul.f32 %v2527, 1.442695
    %v2532 = vpow.pop %v2531
    %v2533 = vmul.f32 %v2528, 1.442695
    %v2534 = vpow.pop %v2533
    %v2535 = vmul.f32 %v2529, 1.442695
    %v2536 = vpow.pop %v2535
    %v2537 = vmul.f32 %v2530, 1.442695
    %v2538 = vpow.pop %v2537
    %v2539 = vmul.f32 %v2532, %v2069
    %v2540 = vmul.f32 %v2534, %v2070
    %v2541 = vmul.f32 %v2536, %v2071
    %v2542 = vmul.f32 %v2538, %v2072
    %v2543 = vsel %vm814, %v2539, 0.0
    %2544 = vadd.xlane.f32.xlu0 %v2543
    %v2545 = vpop.xlane.xlu0 %2544
    %v2546 = vsel %vm814, %v2540, 0.0
    %2547 = vadd.xlane.f32.xlu0 %v2546
    %v2548 = vpop.xlane.xlu0 %2547
    %v2549 = vsel %vm814, %v2541, 0.0
    %2550 = vadd.xlane.f32.xlu0 %v2549
    %v2551 = vpop.xlane.xlu0 %2550
    %v2552 = vsel %vm814, %v2542, 0.0
    %2553 = vadd.xlane.f32.xlu0 %v2552
    %v2554 = vpop.xlane.xlu0 %2553
    %vm2555 = vcmp.gt.f32.partialorder %v2545, 0.0
    %vm2556 = vcmp.gt.f32.partialorder %v2548, 0.0
    %vm2557 = vcmp.gt.f32.partialorder %v2551, 0.0
    %vm2558 = vcmp.gt.f32.partialorder %v2554, 0.0
    %v2559 = vsel %vm2555, %v2545, 1.0
    %v2560 = vsel %vm2556, %v2548, 1.0
    %v2561 = vsel %vm2557, %v2551, 1.0
    %v2562 = vsel %vm2558, %v2554, 1.0
    %v2563 = vrcp.pop %v2559
    %v2564 = vmul.f32 %v2539, %v2563
    %v2565 = vrcp.pop %v2560
    %v2566 = vmul.f32 %v2540, %v2565
    %v2567 = vrcp.pop %v2561
    %v2568 = vmul.f32 %v2541, %v2567
    %v2569 = vrcp.pop %v2562
    %v2570 = vmul.f32 %v2542, %v2569
    %s2571 = scalar_lea.vmem [#allocation6], 1344
    %v2572 = vld [vmem:[%s2571] sm:$0xff]
    %v2573 = vld [vmem:[%s2571 + $0x8] sm:$0xff]
    %v2574 = vld [vmem:[%s2571 + $0x10] sm:$0xff]
    %v2575 = vld [vmem:[%s2571 + $0x18] sm:$0xff]
    %v2576 = vld [vmem:[%s2571 + $0x20] sm:$0xff]
    %v2577 = vld [vmem:[%s2571 + $0x28] sm:$0xff]
    %v2578 = vld [vmem:[%s2571 + $0x30] sm:$0xff]
    %v2579 = vld [vmem:[%s2571 + $0x38] sm:$0xff]
    %v2580 = vld [vmem:[%s2571 + $0x40] sm:$0xff]
    %v2581 = vld [vmem:[%s2571 + $0x48] sm:$0xff]
    %v2582 = vld [vmem:[%s2571 + $0x50] sm:$0xff]
    %v2583 = vld [vmem:[%s2571 + $0x58] sm:$0xff]
    %2584 = vmatprep.subr.mxu0 0.0
    %2585 = vmatpush1.msra.mxu0 %v2572
    %2586 = vmatprep.subr.mxu0 0.0
    %2587 = vmatpush1.msra.mxu0 %v2573
    %2588 = vmatprep.subr.mxu0 0.0
    %2589 = vmatpush1.msra.mxu0 %v2574
    %2590 = vmatprep.subr.mxu0 0.0
    %2591 = vmatpush1.msra.mxu0 %v2575
    %2592 = vmatprep.subr.mxu0 0.0
    %2593 = vmatpush1.msra.mxu0 %v2576
    %2594 = vmatprep.subr.mxu0 0.0
    %2595 = vmatpush1.msra.mxu0 %v2577
    %2596 = vmatprep.subr.mxu0 0.0
    %2597 = vmatpush1.msra.mxu0 %v2578
    %2598 = vmatprep.subr.mxu0 0.0
    %2599 = vmatpush1.msra.mxu0 %v2579
    %2600 = vmatprep.subr.mxu0 0.0
    %2601 = vmatpush1.msra.mxu0 %v2580
    %2602 = vmatprep.subr.mxu0 0.0
    %2603 = vmatpush1.msra.mxu0 %v2581
    %2604 = vmatprep.subr.mxu0 0.0
    %2605 = vmatpush1.msra.mxu0 %v2582
    %2606 = vmatprep.subr.mxu0 0.0
    %2607 = vmatpush1.msra.mxu0 %v2583
    %2608 = vmatprep.subr.mxu0 0.0
    %2609 = vmatpush1.msra.mxu0 0.0
    %2610 = vmatprep.subr.mxu0 0.0
    %2611 = vmatpush1.msra.mxu0 0.0
    %2612 = vmatprep.subr.mxu0 0.0
    %2613 = vmatpush1.msra.mxu0 0.0
    %2614 = vmatprep.subr.mxu0 0.0
    %2615 = vmatpush1.msra.mxu0 0.0
    %2616 = vmatprep.subr.mxu0 0.0
    %2617 = vmatpush1.msra.mxu0 0.0
    %2618 = vmatprep.subr.mxu0 0.0
    %2619 = vmatpush1.msra.mxu0 0.0
    %2620 = vmatprep.subr.mxu0 0.0
    %2621 = vmatpush1.msra.mxu0 0.0
    %2622 = vmatprep.subr.mxu0 0.0
    %2623 = vmatpush1.msra.mxu0 0.0
    %2624 = vmatprep.subr.mxu0 0.0
    %2625 = vmatpush1.msra.mxu0 0.0
    %2626 = vmatprep.subr.mxu0 0.0
    %2627 = vmatpush1.msra.mxu0 0.0
    %2628 = vmatprep.subr.mxu0 0.0
    %2629 = vmatpush1.msra.mxu0 0.0
    %2630 = vmatprep.subr.mxu0 0.0
    %2631 = vmatpush1.msra.mxu0 0.0
    %2632 = vmatprep.subr.mxu0 0.0
    %2633 = vmatpush1.msra.mxu0 0.0
    %2634 = vmatprep.subr.mxu0 0.0
    %2635 = vmatpush1.msra.mxu0 0.0
    %2636 = vmatprep.subr.mxu0 0.0
    %2637 = vmatpush1.msra.mxu0 0.0
    %2638 = vmatprep.subr.mxu0 0.0
    %2639 = vmatpush1.msra.mxu0 0.0
    %2640 = vmatprep.subr.mxu0 0.0
    %2641 = vmatpush1.msra.mxu0 0.0
    %2642 = vmatprep.subr.mxu0 0.0
    %2643 = vmatpush1.msra.mxu0 0.0
    %2644 = vmatprep.subr.mxu0 0.0
    %2645 = vmatpush1.msra.mxu0 0.0
    %2646 = vmatprep.subr.mxu0 0.0
    %2647 = vmatpush1.msra.mxu0 0.0
    %2648 = vmatprep.mubr.f32.mxu0 0.0
    %2649 = vmatmul.mubr.f32.gmra.mrb[0].mxu0 %v885
    %v2650 = vpop.f32.mrb[0].mxu0
    %v2651 = vadd.f32 0.0, %v2650
    %v2652 = vpop.f32.mrb[0].mxu0
    %2653 = vmatprep.mubr.f32.mxu0 0.0
    %2654 = vmatmul.mubr.f32.gmra.mrb[0].mxu0 %v888
    %v2655 = vpop.f32.mrb[0].mxu0
    %v2656 = vadd.f32 0.0, %v2655
    %v2657 = vpop.f32.mrb[0].mxu0
    %2658 = vmatprep.mubr.f32.mxu0 0.0
    %2659 = vmatmul.mubr.f32.gmra.mrb[0].mxu0 %v891
    %v2660 = vpop.f32.mrb[0].mxu0
    %v2661 = vadd.f32 0.0, %v2660
    %v2662 = vpop.f32.mrb[0].mxu0
    %2663 = vmatprep.mubr.f32.mxu0 0.0
    %2664 = vmatmul.mubr.f32.gmra.mrb[0].mxu0 %v894
    %v2665 = vpop.f32.mrb[0].mxu0
    %v2666 = vadd.f32 0.0, %v2665
    %v2667 = vpop.f32.mrb[0].mxu0
    %2668 = vdwg.mxu0
    %2673 = vrot.lane.b32.xlu0 %v2564, 32
    %v2674 = vpop.permute.xlu0 %2673
    %2675 = vrot.lane.b32.xlu0 %v2566, 32
    %v2676 = vpop.permute.xlu0 %2675
    %2677 = vrot.lane.b32.xlu0 %v2568, 32
    %v2678 = vpop.permute.xlu0 %2677
    %2679 = vrot.lane.b32.xlu0 %v2570, 32
    %v2680 = vpop.permute.xlu0 %2679
    %v2685 = vsel %vm814, %v2325, %v2674
    %v2686 = vsel %vm814, %v2327, %v2676
    %v2687 = vsel %vm814, %v2329, %v2678
    %v2688 = vsel %vm814, %v2331, %v2680
    %v2690 = vsel %vm1873, %v2685, 0
    %v2693 = vsel %vm1873, %v2686, 0
    %v2696 = vsel %vm1873, %v2687, 0
    %v2699 = vsel %vm1873, %v2688, 0
    %2701 = vmatprep.subr.mxu0 0.0
    %2702 = vmatpush1.msra.mxu0 %v2412
    %2703 = vmatprep.subr.mxu0 0.0
    %2704 = vmatpush1.msra.mxu0 %v2417
    %2705 = vmatprep.subr.mxu0 0.0
    %2706 = vmatpush1.msra.mxu0 %v2422
    %2707 = vmatprep.subr.mxu0 0.0
    %2708 = vmatpush1.msra.mxu0 %v2427
    %2709 = vmatprep.subr.mxu0 0.0
    %2710 = vmatpush1.msra.mxu0 %v2651
    %2711 = vmatprep.subr.mxu0 0.0
    %2712 = vmatpush1.msra.mxu0 %v2656
    %2713 = vmatprep.subr.mxu0 0.0
    %2714 = vmatpush1.msra.mxu0 %v2661
    %2715 = vmatprep.subr.mxu0 0.0
    %2716 = vmatpush1.msra.mxu0 %v2666
    %2717 = vmatprep.subr.mxu0 0.0
    %2718 = vmatpush1.msra.mxu0 0.0
    %2719 = vmatprep.subr.mxu0 0.0
    %2720 = vmatpush1.msra.mxu0 0.0
    %2721 = vmatprep.subr.mxu0 0.0
    %2722 = vmatpush1.msra.mxu0 0.0
    %2723 = vmatprep.subr.mxu0 0.0
    %2724 = vmatpush1.msra.mxu0 0.0
    %2725 = vmatprep.subr.mxu0 0.0
    %2726 = vmatpush1.msra.mxu0 0.0
    %2727 = vmatprep.subr.mxu0 0.0
    %2728 = vmatpush1.msra.mxu0 0.0
    %2729 = vmatprep.subr.mxu0 0.0
    %2730 = vmatpush1.msra.mxu0 0.0
    %2731 = vmatprep.subr.mxu0 0.0
    %2732 = vmatpush1.msra.mxu0 0.0
    %2733 = vmatprep.subr.mxu0 0.0
    %2734 = vmatpush1.msra.mxu0 0.0
    %2735 = vmatprep.subr.mxu0 0.0
    %2736 = vmatpush1.msra.mxu0 0.0
    %2737 = vmatprep.subr.mxu0 0.0
    %2738 = vmatpush1.msra.mxu0 0.0
    %2739 = vmatprep.subr.mxu0 0.0
    %2740 = vmatpush1.msra.mxu0 0.0
    %2741 = vmatprep.subr.mxu0 0.0
    %2742 = vmatpush1.msra.mxu0 0.0
    %2743 = vmatprep.subr.mxu0 0.0
    %2744 = vmatpush1.msra.mxu0 0.0
    %2745 = vmatprep.subr.mxu0 0.0
    %2746 = vmatpush1.msra.mxu0 0.0
    %2747 = vmatprep.subr.mxu0 0.0
    %2748 = vmatpush1.msra.mxu0 0.0
    %2749 = vmatprep.subr.mxu0 0.0
    %2750 = vmatpush1.msra.mxu0 0.0
    %2751 = vmatprep.subr.mxu0 0.0
    %2752 = vmatpush1.msra.mxu0 0.0
    %2753 = vmatprep.subr.mxu0 0.0
    %2754 = vmatpush1.msra.mxu0 0.0
    %2755 = vmatprep.subr.mxu0 0.0
    %2756 = vmatpush1.msra.mxu0 0.0
    %2757 = vmatprep.subr.mxu0 0.0
    %2758 = vmatpush1.msra.mxu0 0.0
    %2759 = vmatprep.subr.mxu0 0.0
    %2760 = vmatpush1.msra.mxu0 0.0
    %2761 = vmatprep.subr.mxu0 0.0
    %2762 = vmatpush1.msra.mxu0 0.0
    %2763 = vmatprep.subr.mxu0 0.0
    %2764 = vmatpush1.msra.mxu0 0.0
    %2765 = vmatprep.mubr.f32.mxu0 0.0
    %2766 = vmatmul.mubr.f32.gmra.mrb[0].mxu0 %v2690
    %v2767 = vpop.f32.mrb[0].mxu0
    %v2768 = vadd.f32 0.0, %v2767
    %v2769 = vpop.f32.mrb[0].mxu0
    %2770 = vmatprep.mubr.f32.mxu0 0.0
    %2771 = vmatmul.mubr.f32.gmra.mrb[0].mxu0 %v2693
    %v2772 = vpop.f32.mrb[0].mxu0
    %v2773 = vadd.f32 0.0, %v2772
    %v2774 = vpop.f32.mrb[0].mxu0
    %2775 = vmatprep.mubr.f32.mxu0 0.0
    %2776 = vmatmul.mubr.f32.gmra.mrb[0].mxu0 %v2696
    %v2777 = vpop.f32.mrb[0].mxu0
    %v2778 = vadd.f32 0.0, %v2777
    %v2779 = vpop.f32.mrb[0].mxu0
    %2780 = vmatprep.mubr.f32.mxu0 0.0
    %2781 = vmatmul.mubr.f32.gmra.mrb[0].mxu0 %v2699
    %v2782 = vpop.f32.mrb[0].mxu0
    %v2783 = vadd.f32 0.0, %v2782
    %v2784 = vpop.f32.mrb[0].mxu0
    %2785 = vdwg.mxu0
    %v2786 = vadd.f32 %v2050, %v2768
    %v2787 = vadd.f32 %v2055, %v2773
    %v2788 = vadd.f32 %v2060, %v2778
    %v2789 = vadd.f32 %v2065, %v2783
    %s2790 = scalar_lea.vmem [#allocation4], 96
    %v2791 = vld [vmem:[%s2790] sm:$0xff]
    %v2792 = vld [vmem:[%s2790 + $0x8] sm:$0xff]
    %v2793 = vld [vmem:[%s2790 + $0x10] sm:$0xff]
    %v2794 = vld [vmem:[%s2790 + $0x18] sm:$0xff]
    %v2795 = vsub.f32 %v2791, 1.0
    %v2796 = vsub.f32 %v2792, 1.0
    %v2797 = vsub.f32 %v2793, 1.0
    %v2798 = vsub.f32 %v2794, 1.0
    %v2799 = vmul.f32 %v2795, 1e+30
    %v2800 = vmul.f32 %v2796, 1e+30
    %v2801 = vmul.f32 %v2797, 1e+30
    %v2802 = vmul.f32 %v2798, 1e+30
    %s2803 = scalar_lea.vmem [#allocation6], 768
    %v2804 = vld [vmem:[%s2803] sm:$0xff]
    %v2805 = vld [vmem:[%s2803 + $0x8] sm:$0xff]
    %v2806 = vld [vmem:[%s2803 + $0x10] sm:$0xff]
    %v2807 = vld [vmem:[%s2803 + $0x18] sm:$0xff]
    %v2808 = vld [vmem:[%s2803 + $0x20] sm:$0xff]
    %v2809 = vld [vmem:[%s2803 + $0x28] sm:$0xff]
    %v2810 = vld [vmem:[%s2803 + $0x30] sm:$0xff]
    %v2811 = vld [vmem:[%s2803 + $0x38] sm:$0xff]
    %v2812 = vld [vmem:[%s2803 + $0x40] sm:$0xff]
    %v2813 = vld [vmem:[%s2803 + $0x48] sm:$0xff]
    %v2814 = vld [vmem:[%s2803 + $0x50] sm:$0xff]
    %v2815 = vld [vmem:[%s2803 + $0x58] sm:$0xff]
    %2816 = vmatprep.subr.mxu0 0.0
    %2817 = vmatpush1.msra.mxu0 %v2804
    %2818 = vmatprep.subr.mxu0 0.0
    %2819 = vmatpush1.msra.mxu0 %v2805
    %2820 = vmatprep.subr.mxu0 0.0
    %2821 = vmatpush1.msra.mxu0 %v2806
    %2822 = vmatprep.subr.mxu0 0.0
    %2823 = vmatpush1.msra.mxu0 %v2807
    %2824 = vmatprep.subr.mxu0 0.0
    %2825 = vmatpush1.msra.mxu0 %v2808
    %2826 = vmatprep.subr.mxu0 0.0
    %2827 = vmatpush1.msra.mxu0 %v2809
    %2828 = vmatprep.subr.mxu0 0.0
    %2829 = vmatpush1.msra.mxu0 %v2810
    %2830 = vmatprep.subr.mxu0 0.0
    %2831 = vmatpush1.msra.mxu0 %v2811
    %2832 = vmatprep.subr.mxu0 0.0
    %2833 = vmatpush1.msra.mxu0 %v2812
    %2834 = vmatprep.subr.mxu0 0.0
    %2835 = vmatpush1.msra.mxu0 %v2813
    %2836 = vmatprep.subr.mxu0 0.0
    %2837 = vmatpush1.msra.mxu0 %v2814
    %2838 = vmatprep.subr.mxu0 0.0
    %2839 = vmatpush1.msra.mxu0 %v2815
    %2840 = vmatprep.subr.mxu0 0.0
    %2841 = vmatpush1.msra.mxu0 0.0
    %2842 = vmatprep.subr.mxu0 0.0
    %2843 = vmatpush1.msra.mxu0 0.0
    %2844 = vmatprep.subr.mxu0 0.0
    %2845 = vmatpush1.msra.mxu0 0.0
    %2846 = vmatprep.subr.mxu0 0.0
    %2847 = vmatpush1.msra.mxu0 0.0
    %2848 = vmatprep.subr.mxu0 0.0
    %2849 = vmatpush1.msra.mxu0 0.0
    %2850 = vmatprep.subr.mxu0 0.0
    %2851 = vmatpush1.msra.mxu0 0.0
    %2852 = vmatprep.subr.mxu0 0.0
    %2853 = vmatpush1.msra.mxu0 0.0
    %2854 = vmatprep.subr.mxu0 0.0
    %2855 = vmatpush1.msra.mxu0 0.0
    %2856 = vmatprep.subr.mxu0 0.0
    %2857 = vmatpush1.msra.mxu0 0.0
    %2858 = vmatprep.subr.mxu0 0.0
    %2859 = vmatpush1.msra.mxu0 0.0
    %2860 = vmatprep.subr.mxu0 0.0
    %2861 = vmatpush1.msra.mxu0 0.0
    %2862 = vmatprep.subr.mxu0 0.0
    %2863 = vmatpush1.msra.mxu0 0.0
    %2864 = vmatprep.subr.mxu0 0.0
    %2865 = vmatpush1.msra.mxu0 0.0
    %2866 = vmatprep.subr.mxu0 0.0
    %2867 = vmatpush1.msra.mxu0 0.0
    %2868 = vmatprep.subr.mxu0 0.0
    %2869 = vmatpush1.msra.mxu0 0.0
    %2870 = vmatprep.subr.mxu0 0.0
    %2871 = vmatpush1.msra.mxu0 0.0
    %2872 = vmatprep.subr.mxu0 0.0
    %2873 = vmatpush1.msra.mxu0 0.0
    %2874 = vmatprep.subr.mxu0 0.0
    %2875 = vmatpush1.msra.mxu0 0.0
    %2876 = vmatprep.subr.mxu0 0.0
    %2877 = vmatpush1.msra.mxu0 0.0
    %2878 = vmatprep.subr.mxu0 0.0
    %2879 = vmatpush1.msra.mxu0 0.0
    %2880 = vmatprep.mubr.f32.mxu0 0.0
    %2881 = vmatmul.mubr.f32.gmra.mrb[0].mxu0 %v609
    %v2882 = vpop.f32.mrb[0].mxu0
    %v2883 = vadd.f32 0.0, %v2882
    %v2884 = vpop.f32.mrb[0].mxu0
    %2885 = vmatprep.mubr.f32.mxu0 0.0
    %2886 = vmatmul.mubr.f32.gmra.mrb[0].mxu0 %v612
    %v2887 = vpop.f32.mrb[0].mxu0
    %v2888 = vadd.f32 0.0, %v2887
    %v2889 = vpop.f32.mrb[0].mxu0
    %2890 = vmatprep.mubr.f32.mxu0 0.0
    %2891 = vmatmul.mubr.f32.gmra.mrb[0].mxu0 %v615
    %v2892 = vpop.f32.mrb[0].mxu0
    %v2893 = vadd.f32 0.0, %v2892
    %v2894 = vpop.f32.mrb[0].mxu0
    %2895 = vmatprep.mubr.f32.mxu0 0.0
    %2896 = vmatmul.mubr.f32.gmra.mrb[0].mxu0 %v618
    %v2897 = vpop.f32.mrb[0].mxu0
    %v2898 = vadd.f32 0.0, %v2897
    %v2899 = vpop.f32.mrb[0].mxu0
    %2900 = vdwg.mxu0
    %v2902 = vsel %vm143, %v2883, 0
    %v2905 = vsel %vm143, %v2888, 0
    %v2908 = vsel %vm143, %v2893, 0
    %v2911 = vsel %vm143, %v2898, 0
    %2913 = vmatprep.subr.mxu0 0.0
    %2914 = vmatpush1.xpose.msra.mxu0 %v2902
    %2915 = vmatprep.subr.mxu0 0.0
    %2916 = vmatpush1.xpose.msra.mxu0 %v2905
    %2917 = vmatprep.subr.mxu0 0.0
    %2918 = vmatpush1.xpose.msra.mxu0 %v2908
    %2919 = vmatprep.subr.mxu0 0.0
    %2920 = vmatpush1.xpose.msra.mxu0 %v2911
    %2921 = vmatprep.subr.mxu0 0.0
    %2922 = vmatpush1.xpose.msra.mxu0 0.0
    %2923 = vmatprep.subr.mxu0 0.0
    %2924 = vmatpush1.xpose.msra.mxu0 0.0
    %2925 = vmatprep.subr.mxu0 0.0
    %2926 = vmatpush1.xpose.msra.mxu0 0.0
    %2927 = vmatprep.subr.mxu0 0.0
    %2928 = vmatpush1.xpose.msra.mxu0 0.0
    %2929 = vmatprep.subr.mxu0 0.0
    %2930 = vmatpush1.xpose.msra.mxu0 0.0
    %2931 = vmatprep.subr.mxu0 0.0
    %2932 = vmatpush1.xpose.msra.mxu0 0.0
    %2933 = vmatprep.subr.mxu0 0.0
    %2934 = vmatpush1.xpose.msra.mxu0 0.0
    %2935 = vmatprep.subr.mxu0 0.0
    %2936 = vmatpush1.xpose.msra.mxu0 0.0
    %2937 = vmatprep.subr.mxu0 0.0
    %2938 = vmatpush1.xpose.msra.mxu0 0.0
    %2939 = vmatprep.subr.mxu0 0.0
    %2940 = vmatpush1.xpose.msra.mxu0 0.0
    %2941 = vmatprep.subr.mxu0 0.0
    %2942 = vmatpush1.xpose.msra.mxu0 0.0
    %2943 = vmatprep.subr.mxu0 0.0
    %2944 = vmatpush1.xpose.msra.mxu0 0.0
    %2945 = vmatprep.subr.mxu0 0.0
    %2946 = vmatpush1.xpose.msra.mxu0 0.0
    %2947 = vmatprep.subr.mxu0 0.0
    %2948 = vmatpush1.xpose.msra.mxu0 0.0
    %2949 = vmatprep.subr.mxu0 0.0
    %2950 = vmatpush1.xpose.msra.mxu0 0.0
    %2951 = vmatprep.subr.mxu0 0.0
    %2952 = vmatpush1.xpose.msra.mxu0 0.0
    %2953 = vmatprep.subr.mxu0 0.0
    %2954 = vmatpush1.xpose.msra.mxu0 0.0
    %2955 = vmatprep.subr.mxu0 0.0
    %2956 = vmatpush1.xpose.msra.mxu0 0.0
    %2957 = vmatprep.subr.mxu0 0.0
    %2958 = vmatpush1.xpose.msra.mxu0 0.0
    %2959 = vmatprep.subr.mxu0 0.0
    %2960 = vmatpush1.xpose.msra.mxu0 0.0
    %2961 = vmatprep.subr.mxu0 0.0
    %2962 = vmatpush1.xpose.msra.mxu0 0.0
    %2963 = vmatprep.subr.mxu0 0.0
    %2964 = vmatpush1.xpose.msra.mxu0 0.0
    %2965 = vmatprep.subr.mxu0 0.0
    %2966 = vmatpush1.xpose.msra.mxu0 0.0
    %2967 = vmatprep.subr.mxu0 0.0
    %2968 = vmatpush1.xpose.msra.mxu0 0.0
    %2969 = vmatprep.subr.mxu0 0.0
    %2970 = vmatpush1.xpose.msra.mxu0 0.0
    %2971 = vmatprep.subr.mxu0 0.0
    %2972 = vmatpush1.xpose.msra.mxu0 0.0
    %2973 = vmatprep.subr.mxu0 0.0
    %2974 = vmatpush1.xpose.msra.mxu0 0.0
    %2975 = vmatprep.subr.mxu0 0.0
    %2976 = vmatpush1.xpose.msra.mxu0 0.0
    %2977 = vmatprep.mubr.f32.mxu0 0.0
    %2978 = vmatmul.mubr.f32.gmra.mrb[0].mxu0 %v706
    %v2979 = vpop.f32.mrb[0].mxu0
    %v2980 = vadd.f32 %v2799, %v2979
    %v2981 = vpop.f32.mrb[0].mxu0
    %2982 = vmatprep.mubr.f32.mxu0 0.0
    %2983 = vmatmul.mubr.f32.gmra.mrb[0].mxu0 %v709
    %v2984 = vpop.f32.mrb[0].mxu0
    %v2985 = vadd.f32 %v2800, %v2984
    %v2986 = vpop.f32.mrb[0].mxu0
    %2987 = vmatprep.mubr.f32.mxu0 0.0
    %2988 = vmatmul.mubr.f32.gmra.mrb[0].mxu0 %v712
    %v2989 = vpop.f32.mrb[0].mxu0
    %v2990 = vadd.f32 %v2801, %v2989
    %v2991 = vpop.f32.mrb[0].mxu0
    %2992 = vmatprep.mubr.f32.mxu0 0.0
    %2993 = vmatmul.mubr.f32.gmra.mrb[0].mxu0 %v715
    %v2994 = vpop.f32.mrb[0].mxu0
    %v2995 = vadd.f32 %v2802, %v2994
    %v2996 = vpop.f32.mrb[0].mxu0
    %2997 = vdwg.mxu0
    %v2998 = vsel %vm814, %v2980, -inf
    %2999 = vmax.xlane.f32.xlu0 %v2998
    %v3000 = vpop.xlane.xlu0 %2999
    %v3001 = vsel %vm814, %v2985, -inf
    %3002 = vmax.xlane.f32.xlu0 %v3001
    %v3003 = vpop.xlane.xlu0 %3002
    %v3004 = vsel %vm814, %v2990, -inf
    %3005 = vmax.xlane.f32.xlu0 %v3004
    %v3006 = vpop.xlane.xlu0 %3005
    %v3007 = vsel %vm814, %v2995, -inf
    %3008 = vmax.xlane.f32.xlu0 %v3007
    %v3009 = vpop.xlane.xlu0 %3008
    %v3010 = vsub.f32 %v2980, %v3000
    %v3011 = vsub.f32 %v2985, %v3003
    %v3012 = vsub.f32 %v2990, %v3006
    %v3013 = vsub.f32 %v2995, %v3009
    %v3014 = vmul.f32 %v3010, 1.442695
    %v3015 = vpow.pop %v3014
    %v3016 = vmul.f32 %v3011, 1.442695
    %v3017 = vpow.pop %v3016
    %v3018 = vmul.f32 %v3012, 1.442695
    %v3019 = vpow.pop %v3018
    %v3020 = vmul.f32 %v3013, 1.442695
    %v3021 = vpow.pop %v3020
    %v3022 = vmul.f32 %v3015, %v2791
    %v3023 = vmul.f32 %v3017, %v2792
    %v3024 = vmul.f32 %v3019, %v2793
    %v3025 = vmul.f32 %v3021, %v2794
    %v3026 = vsel %vm814, %v3022, 0.0
    %3027 = vadd.xlane.f32.xlu0 %v3026
    %v3028 = vpop.xlane.xlu0 %3027
    %v3029 = vsel %vm814, %v3023, 0.0
    %3030 = vadd.xlane.f32.xlu0 %v3029
    %v3031 = vpop.xlane.xlu0 %3030
    %v3032 = vsel %vm814, %v3024, 0.0
    %3033 = vadd.xlane.f32.xlu0 %v3032
    %v3034 = vpop.xlane.xlu0 %3033
    %v3035 = vsel %vm814, %v3025, 0.0
    %3036 = vadd.xlane.f32.xlu0 %v3035
    %v3037 = vpop.xlane.xlu0 %3036
    %vm3038 = vcmp.gt.f32.partialorder %v3028, 0.0
    %vm3039 = vcmp.gt.f32.partialorder %v3031, 0.0
    %vm3040 = vcmp.gt.f32.partialorder %v3034, 0.0
    %vm3041 = vcmp.gt.f32.partialorder %v3037, 0.0
    %v3042 = vsel %vm3038, %v3028, 1.0
    %v3043 = vsel %vm3039, %v3031, 1.0
    %v3044 = vsel %vm3040, %v3034, 1.0
    %v3045 = vsel %vm3041, %v3037, 1.0
    %v3046 = vrcp.pop %v3042
    %v3047 = vmul.f32 %v3022, %v3046
    %v3048 = vrcp.pop %v3043
    %v3049 = vmul.f32 %v3023, %v3048
    %v3050 = vrcp.pop %v3044
    %v3051 = vmul.f32 %v3024, %v3050
    %v3052 = vrcp.pop %v3045
    %v3053 = vmul.f32 %v3025, %v3052
    %s3054 = scalar_lea.vmem [#allocation6], 1440
    %v3055 = vld [vmem:[%s3054] sm:$0xff]
    %v3056 = vld [vmem:[%s3054 + $0x8] sm:$0xff]
    %v3057 = vld [vmem:[%s3054 + $0x10] sm:$0xff]
    %v3058 = vld [vmem:[%s3054 + $0x18] sm:$0xff]
    %v3059 = vld [vmem:[%s3054 + $0x20] sm:$0xff]
    %v3060 = vld [vmem:[%s3054 + $0x28] sm:$0xff]
    %v3061 = vld [vmem:[%s3054 + $0x30] sm:$0xff]
    %v3062 = vld [vmem:[%s3054 + $0x38] sm:$0xff]
    %v3063 = vld [vmem:[%s3054 + $0x40] sm:$0xff]
    %v3064 = vld [vmem:[%s3054 + $0x48] sm:$0xff]
    %v3065 = vld [vmem:[%s3054 + $0x50] sm:$0xff]
    %v3066 = vld [vmem:[%s3054 + $0x58] sm:$0xff]
    %3067 = vmatprep.subr.mxu0 0.0
    %3068 = vmatpush1.msra.mxu0 %v3055
    %3069 = vmatprep.subr.mxu0 0.0
    %3070 = vmatpush1.msra.mxu0 %v3056
    %3071 = vmatprep.subr.mxu0 0.0
    %3072 = vmatpush1.msra.mxu0 %v3057
    %3073 = vmatprep.subr.mxu0 0.0
    %3074 = vmatpush1.msra.mxu0 %v3058
    %3075 = vmatprep.subr.mxu0 0.0
    %3076 = vmatpush1.msra.mxu0 %v3059
    %3077 = vmatprep.subr.mxu0 0.0
    %3078 = vmatpush1.msra.mxu0 %v3060
    %3079 = vmatprep.subr.mxu0 0.0
    %3080 = vmatpush1.msra.mxu0 %v3061
    %3081 = vmatprep.subr.mxu0 0.0
    %3082 = vmatpush1.msra.mxu0 %v3062
    %3083 = vmatprep.subr.mxu0 0.0
    %3084 = vmatpush1.msra.mxu0 %v3063
    %3085 = vmatprep.subr.mxu0 0.0
    %3086 = vmatpush1.msra.mxu0 %v3064
    %3087 = vmatprep.subr.mxu0 0.0
    %3088 = vmatpush1.msra.mxu0 %v3065
    %3089 = vmatprep.subr.mxu0 0.0
    %3090 = vmatpush1.msra.mxu0 %v3066
    %3091 = vmatprep.subr.mxu0 0.0
    %3092 = vmatpush1.msra.mxu0 0.0
    %3093 = vmatprep.subr.mxu0 0.0
    %3094 = vmatpush1.msra.mxu0 0.0
    %3095 = vmatprep.subr.mxu0 0.0
    %3096 = vmatpush1.msra.mxu0 0.0
    %3097 = vmatprep.subr.mxu0 0.0
    %3098 = vmatpush1.msra.mxu0 0.0
    %3099 = vmatprep.subr.mxu0 0.0
    %3100 = vmatpush1.msra.mxu0 0.0
    %3101 = vmatprep.subr.mxu0 0.0
    %3102 = vmatpush1.msra.mxu0 0.0
    %3103 = vmatprep.subr.mxu0 0.0
    %3104 = vmatpush1.msra.mxu0 0.0
    %3105 = vmatprep.subr.mxu0 0.0
    %3106 = vmatpush1.msra.mxu0 0.0
    %3107 = vmatprep.subr.mxu0 0.0
    %3108 = vmatpush1.msra.mxu0 0.0
    %3109 = vmatprep.subr.mxu0 0.0
    %3110 = vmatpush1.msra.mxu0 0.0
    %3111 = vmatprep.subr.mxu0 0.0
    %3112 = vmatpush1.msra.mxu0 0.0
    %3113 = vmatprep.subr.mxu0 0.0
    %3114 = vmatpush1.msra.mxu0 0.0
    %3115 = vmatprep.subr.mxu0 0.0
    %3116 = vmatpush1.msra.mxu0 0.0
    %3117 = vmatprep.subr.mxu0 0.0
    %3118 = vmatpush1.msra.mxu0 0.0
    %3119 = vmatprep.subr.mxu0 0.0
    %3120 = vmatpush1.msra.mxu0 0.0
    %3121 = vmatprep.subr.mxu0 0.0
    %3122 = vmatpush1.msra.mxu0 0.0
    %3123 = vmatprep.subr.mxu0 0.0
    %3124 = vmatpush1.msra.mxu0 0.0
    %3125 = vmatprep.subr.mxu0 0.0
    %3126 = vmatpush1.msra.mxu0 0.0
    %3127 = vmatprep.subr.mxu0 0.0
    %3128 = vmatpush1.msra.mxu0 0.0
    %3129 = vmatprep.subr.mxu0 0.0
    %3130 = vmatpush1.msra.mxu0 0.0
    %3131 = vmatprep.mubr.f32.mxu0 0.0
    %3132 = vmatmul.mubr.f32.gmra.mrb[0].mxu0 %v885
    %v3133 = vpop.f32.mrb[0].mxu0
    %v3134 = vadd.f32 0.0, %v3133
    %v3135 = vpop.f32.mrb[0].mxu0
    %3136 = vmatprep.mubr.f32.mxu0 0.0
    %3137 = vmatmul.mubr.f32.gmra.mrb[0].mxu0 %v888
    %v3138 = vpop.f32.mrb[0].mxu0
    %v3139 = vadd.f32 0.0, %v3138
    %v3140 = vpop.f32.mrb[0].mxu0
    %3141 = vmatprep.mubr.f32.mxu0 0.0
    %3142 = vmatmul.mubr.f32.gmra.mrb[0].mxu0 %v891
    %v3143 = vpop.f32.mrb[0].mxu0
    %v3144 = vadd.f32 0.0, %v3143
    %v3145 = vpop.f32.mrb[0].mxu0
    %3146 = vmatprep.mubr.f32.mxu0 0.0
    %3147 = vmatmul.mubr.f32.gmra.mrb[0].mxu0 %v894
    %v3148 = vpop.f32.mrb[0].mxu0
    %v3149 = vadd.f32 0.0, %v3148
    %v3150 = vpop.f32.mrb[0].mxu0
    %3151 = vdwg.mxu0
    %3152 = vmatprep.subr.mxu0 0.0
    %3153 = vmatpush1.xpose.msra.mxu0 %v2902
    %3154 = vmatprep.subr.mxu0 0.0
    %3155 = vmatpush1.xpose.msra.mxu0 %v2905
    %3156 = vmatprep.subr.mxu0 0.0
    %3157 = vmatpush1.xpose.msra.mxu0 %v2908
    %3158 = vmatprep.subr.mxu0 0.0
    %3159 = vmatpush1.xpose.msra.mxu0 %v2911
    %3160 = vmatprep.subr.mxu0 0.0
    %3161 = vmatpush1.xpose.msra.mxu0 0.0
    %3162 = vmatprep.subr.mxu0 0.0
    %3163 = vmatpush1.xpose.msra.mxu0 0.0
    %3164 = vmatprep.subr.mxu0 0.0
    %3165 = vmatpush1.xpose.msra.mxu0 0.0
    %3166 = vmatprep.subr.mxu0 0.0
    %3167 = vmatpush1.xpose.msra.mxu0 0.0
    %3168 = vmatprep.subr.mxu0 0.0
    %3169 = vmatpush1.xpose.msra.mxu0 0.0
    %3170 = vmatprep.subr.mxu0 0.0
    %3171 = vmatpush1.xpose.msra.mxu0 0.0
    %3172 = vmatprep.subr.mxu0 0.0
    %3173 = vmatpush1.xpose.msra.mxu0 0.0
    %3174 = vmatprep.subr.mxu0 0.0
    %3175 = vmatpush1.xpose.msra.mxu0 0.0
    %3176 = vmatprep.subr.mxu0 0.0
    %3177 = vmatpush1.xpose.msra.mxu0 0.0
    %3178 = vmatprep.subr.mxu0 0.0
    %3179 = vmatpush1.xpose.msra.mxu0 0.0
    %3180 = vmatprep.subr.mxu0 0.0
    %3181 = vmatpush1.xpose.msra.mxu0 0.0
    %3182 = vmatprep.subr.mxu0 0.0
    %3183 = vmatpush1.xpose.msra.mxu0 0.0
    %3184 = vmatprep.subr.mxu0 0.0
    %3185 = vmatpush1.xpose.msra.mxu0 0.0
    %3186 = vmatprep.subr.mxu0 0.0
    %3187 = vmatpush1.xpose.msra.mxu0 0.0
    %3188 = vmatprep.subr.mxu0 0.0
    %3189 = vmatpush1.xpose.msra.mxu0 0.0
    %3190 = vmatprep.subr.mxu0 0.0
    %3191 = vmatpush1.xpose.msra.mxu0 0.0
    %3192 = vmatprep.subr.mxu0 0.0
    %3193 = vmatpush1.xpose.msra.mxu0 0.0
    %3194 = vmatprep.subr.mxu0 0.0
    %3195 = vmatpush1.xpose.msra.mxu0 0.0
    %3196 = vmatprep.subr.mxu0 0.0
    %3197 = vmatpush1.xpose.msra.mxu0 0.0
    %3198 = vmatprep.subr.mxu0 0.0
    %3199 = vmatpush1.xpose.msra.mxu0 0.0
    %3200 = vmatprep.subr.mxu0 0.0
    %3201 = vmatpush1.xpose.msra.mxu0 0.0
    %3202 = vmatprep.subr.mxu0 0.0
    %3203 = vmatpush1.xpose.msra.mxu0 0.0
    %3204 = vmatprep.subr.mxu0 0.0
    %3205 = vmatpush1.xpose.msra.mxu0 0.0
    %3206 = vmatprep.subr.mxu0 0.0
    %3207 = vmatpush1.xpose.msra.mxu0 0.0
    %3208 = vmatprep.subr.mxu0 0.0
    %3209 = vmatpush1.xpose.msra.mxu0 0.0
    %3210 = vmatprep.subr.mxu0 0.0
    %3211 = vmatpush1.xpose.msra.mxu0 0.0
    %3212 = vmatprep.subr.mxu0 0.0
    %3213 = vmatpush1.xpose.msra.mxu0 0.0
    %3214 = vmatprep.subr.mxu0 0.0
    %3215 = vmatpush1.xpose.msra.mxu0 0.0
    %3216 = vmatprep.mubr.f32.mxu0 0.0
    %3217 = vmatmul.mubr.f32.gmra.mrb[0].mxu0 %v982
    %v3218 = vpop.f32.mrb[0].mxu0
    %v3219 = vadd.f32 %v2799, %v3218
    %v3220 = vpop.f32.mrb[0].mxu0
    %3221 = vmatprep.mubr.f32.mxu0 0.0
    %3222 = vmatmul.mubr.f32.gmra.mrb[0].mxu0 %v985
    %v3223 = vpop.f32.mrb[0].mxu0
    %v3224 = vadd.f32 %v2800, %v3223
    %v3225 = vpop.f32.mrb[0].mxu0
    %3226 = vmatprep.mubr.f32.mxu0 0.0
    %3227 = vmatmul.mubr.f32.gmra.mrb[0].mxu0 %v988
    %v3228 = vpop.f32.mrb[0].mxu0
    %v3229 = vadd.f32 %v2801, %v3228
    %v3230 = vpop.f32.mrb[0].mxu0
    %3231 = vmatprep.mubr.f32.mxu0 0.0
    %3232 = vmatmul.mubr.f32.gmra.mrb[0].mxu0 %v991
    %v3233 = vpop.f32.mrb[0].mxu0
    %v3234 = vadd.f32 %v2802, %v3233
    %v3235 = vpop.f32.mrb[0].mxu0
    %3236 = vdwg.mxu0
    %v3237 = vsel %vm814, %v3219, -inf
    %3238 = vmax.xlane.f32.xlu0 %v3237
    %v3239 = vpop.xlane.xlu0 %3238
    %v3240 = vsel %vm814, %v3224, -inf
    %3241 = vmax.xlane.f32.xlu0 %v3240
    %v3242 = vpop.xlane.xlu0 %3241
    %v3243 = vsel %vm814, %v3229, -inf
    %3244 = vmax.xlane.f32.xlu0 %v3243
    %v3245 = vpop.xlane.xlu0 %3244
    %v3246 = vsel %vm814, %v3234, -inf
    %3247 = vmax.xlane.f32.xlu0 %v3246
    %v3248 = vpop.xlane.xlu0 %3247
    %v3249 = vsub.f32 %v3219, %v3239
    %v3250 = vsub.f32 %v3224, %v3242
    %v3251 = vsub.f32 %v3229, %v3245
    %v3252 = vsub.f32 %v3234, %v3248
    %v3253 = vmul.f32 %v3249, 1.442695
    %v3254 = vpow.pop %v3253
    %v3255 = vmul.f32 %v3250, 1.442695
    %v3256 = vpow.pop %v3255
    %v3257 = vmul.f32 %v3251, 1.442695
    %v3258 = vpow.pop %v3257
    %v3259 = vmul.f32 %v3252, 1.442695
    %v3260 = vpow.pop %v3259
    %v3261 = vmul.f32 %v3254, %v2791
    %v3262 = vmul.f32 %v3256, %v2792
    %v3263 = vmul.f32 %v3258, %v2793
    %v3264 = vmul.f32 %v3260, %v2794
    %v3265 = vsel %vm814, %v3261, 0.0
    %3266 = vadd.xlane.f32.xlu0 %v3265
    %v3267 = vpop.xlane.xlu0 %3266
    %v3268 = vsel %vm814, %v3262, 0.0
    %3269 = vadd.xlane.f32.xlu0 %v3268
    %v3270 = vpop.xlane.xlu0 %3269
    %v3271 = vsel %vm814, %v3263, 0.0
    %3272 = vadd.xlane.f32.xlu0 %v3271
    %v3273 = vpop.xlane.xlu0 %3272
    %v3274 = vsel %vm814, %v3264, 0.0
    %3275 = vadd.xlane.f32.xlu0 %v3274
    %v3276 = vpop.xlane.xlu0 %3275
    %vm3277 = vcmp.gt.f32.partialorder %v3267, 0.0
    %vm3278 = vcmp.gt.f32.partialorder %v3270, 0.0
    %vm3279 = vcmp.gt.f32.partialorder %v3273, 0.0
    %vm3280 = vcmp.gt.f32.partialorder %v3276, 0.0
    %v3281 = vsel %vm3277, %v3267, 1.0
    %v3282 = vsel %vm3278, %v3270, 1.0
    %v3283 = vsel %vm3279, %v3273, 1.0
    %v3284 = vsel %vm3280, %v3276, 1.0
    %v3285 = vrcp.pop %v3281
    %v3286 = vmul.f32 %v3261, %v3285
    %v3287 = vrcp.pop %v3282
    %v3288 = vmul.f32 %v3262, %v3287
    %v3289 = vrcp.pop %v3283
    %v3290 = vmul.f32 %v3263, %v3289
    %v3291 = vrcp.pop %v3284
    %v3292 = vmul.f32 %v3264, %v3291
    %s3293 = scalar_lea.vmem [#allocation6], 1536
    %v3294 = vld [vmem:[%s3293] sm:$0xff]
    %v3295 = vld [vmem:[%s3293 + $0x8] sm:$0xff]
    %v3296 = vld [vmem:[%s3293 + $0x10] sm:$0xff]
    %v3297 = vld [vmem:[%s3293 + $0x18] sm:$0xff]
    %v3298 = vld [vmem:[%s3293 + $0x20] sm:$0xff]
    %v3299 = vld [vmem:[%s3293 + $0x28] sm:$0xff]
    %v3300 = vld [vmem:[%s3293 + $0x30] sm:$0xff]
    %v3301 = vld [vmem:[%s3293 + $0x38] sm:$0xff]
    %v3302 = vld [vmem:[%s3293 + $0x40] sm:$0xff]
    %v3303 = vld [vmem:[%s3293 + $0x48] sm:$0xff]
    %v3304 = vld [vmem:[%s3293 + $0x50] sm:$0xff]
    %v3305 = vld [vmem:[%s3293 + $0x58] sm:$0xff]
    %3306 = vmatprep.subr.mxu0 0.0
    %3307 = vmatpush1.msra.mxu0 %v3294
    %3308 = vmatprep.subr.mxu0 0.0
    %3309 = vmatpush1.msra.mxu0 %v3295
    %3310 = vmatprep.subr.mxu0 0.0
    %3311 = vmatpush1.msra.mxu0 %v3296
    %3312 = vmatprep.subr.mxu0 0.0
    %3313 = vmatpush1.msra.mxu0 %v3297
    %3314 = vmatprep.subr.mxu0 0.0
    %3315 = vmatpush1.msra.mxu0 %v3298
    %3316 = vmatprep.subr.mxu0 0.0
    %3317 = vmatpush1.msra.mxu0 %v3299
    %3318 = vmatprep.subr.mxu0 0.0
    %3319 = vmatpush1.msra.mxu0 %v3300
    %3320 = vmatprep.subr.mxu0 0.0
    %3321 = vmatpush1.msra.mxu0 %v3301
    %3322 = vmatprep.subr.mxu0 0.0
    %3323 = vmatpush1.msra.mxu0 %v3302
    %3324 = vmatprep.subr.mxu0 0.0
    %3325 = vmatpush1.msra.mxu0 %v3303
    %3326 = vmatprep.subr.mxu0 0.0
    %3327 = vmatpush1.msra.mxu0 %v3304
    %3328 = vmatprep.subr.mxu0 0.0
    %3329 = vmatpush1.msra.mxu0 %v3305
    %3330 = vmatprep.subr.mxu0 0.0
    %3331 = vmatpush1.msra.mxu0 0.0
    %3332 = vmatprep.subr.mxu0 0.0
    %3333 = vmatpush1.msra.mxu0 0.0
    %3334 = vmatprep.subr.mxu0 0.0
    %3335 = vmatpush1.msra.mxu0 0.0
    %3336 = vmatprep.subr.mxu0 0.0
    %3337 = vmatpush1.msra.mxu0 0.0
    %3338 = vmatprep.subr.mxu0 0.0
    %3339 = vmatpush1.msra.mxu0 0.0
    %3340 = vmatprep.subr.mxu0 0.0
    %3341 = vmatpush1.msra.mxu0 0.0
    %3342 = vmatprep.subr.mxu0 0.0
    %3343 = vmatpush1.msra.mxu0 0.0
    %3344 = vmatprep.subr.mxu0 0.0
    %3345 = vmatpush1.msra.mxu0 0.0
    %3346 = vmatprep.subr.mxu0 0.0
    %3347 = vmatpush1.msra.mxu0 0.0
    %3348 = vmatprep.subr.mxu0 0.0
    %3349 = vmatpush1.msra.mxu0 0.0
    %3350 = vmatprep.subr.mxu0 0.0
    %3351 = vmatpush1.msra.mxu0 0.0
    %3352 = vmatprep.subr.mxu0 0.0
    %3353 = vmatpush1.msra.mxu0 0.0
    %3354 = vmatprep.subr.mxu0 0.0
    %3355 = vmatpush1.msra.mxu0 0.0
    %3356 = vmatprep.subr.mxu0 0.0
    %3357 = vmatpush1.msra.mxu0 0.0
    %3358 = vmatprep.subr.mxu0 0.0
    %3359 = vmatpush1.msra.mxu0 0.0
    %3360 = vmatprep.subr.mxu0 0.0
    %3361 = vmatpush1.msra.mxu0 0.0
    %3362 = vmatprep.subr.mxu0 0.0
    %3363 = vmatpush1.msra.mxu0 0.0
    %3364 = vmatprep.subr.mxu0 0.0
    %3365 = vmatpush1.msra.mxu0 0.0
    %3366 = vmatprep.subr.mxu0 0.0
    %3367 = vmatpush1.msra.mxu0 0.0
    %3368 = vmatprep.subr.mxu0 0.0
    %3369 = vmatpush1.msra.mxu0 0.0
    %3370 = vmatprep.mubr.f32.mxu0 0.0
    %3371 = vmatmul.mubr.f32.gmra.mrb[0].mxu0 %v885
    %v3372 = vpop.f32.mrb[0].mxu0
    %v3373 = vadd.f32 0.0, %v3372
    %v3374 = vpop.f32.mrb[0].mxu0
    %3375 = vmatprep.mubr.f32.mxu0 0.0
    %3376 = vmatmul.mubr.f32.gmra.mrb[0].mxu0 %v888
    %v3377 = vpop.f32.mrb[0].mxu0
    %v3378 = vadd.f32 0.0, %v3377
    %v3379 = vpop.f32.mrb[0].mxu0
    %3380 = vmatprep.mubr.f32.mxu0 0.0
    %3381 = vmatmul.mubr.f32.gmra.mrb[0].mxu0 %v891
    %v3382 = vpop.f32.mrb[0].mxu0
    %v3383 = vadd.f32 0.0, %v3382
    %v3384 = vpop.f32.mrb[0].mxu0
    %3385 = vmatprep.mubr.f32.mxu0 0.0
    %3386 = vmatmul.mubr.f32.gmra.mrb[0].mxu0 %v894
    %v3387 = vpop.f32.mrb[0].mxu0
    %v3388 = vadd.f32 0.0, %v3387
    %v3389 = vpop.f32.mrb[0].mxu0
    %3390 = vdwg.mxu0
    %3395 = vrot.lane.b32.xlu0 %v3286, 32
    %v3396 = vpop.permute.xlu0 %3395
    %3397 = vrot.lane.b32.xlu0 %v3288, 32
    %v3398 = vpop.permute.xlu0 %3397
    %3399 = vrot.lane.b32.xlu0 %v3290, 32
    %v3400 = vpop.permute.xlu0 %3399
    %3401 = vrot.lane.b32.xlu0 %v3292, 32
    %v3402 = vpop.permute.xlu0 %3401
    %v3407 = vsel %vm814, %v3047, %v3396
    %v3408 = vsel %vm814, %v3049, %v3398
    %v3409 = vsel %vm814, %v3051, %v3400
    %v3410 = vsel %vm814, %v3053, %v3402
    %v3412 = vsel %vm1873, %v3407, 0
    %v3415 = vsel %vm1873, %v3408, 0
    %v3418 = vsel %vm1873, %v3409, 0
    %v3421 = vsel %vm1873, %v3410, 0
    %3423 = vmatprep.subr.mxu0 0.0
    %3424 = vmatpush1.msra.mxu0 %v3134
    %3425 = vmatprep.subr.mxu0 0.0
    %3426 = vmatpush1.msra.mxu0 %v3139
    %3427 = vmatprep.subr.mxu0 0.0
    %3428 = vmatpush1.msra.mxu0 %v3144
    %3429 = vmatprep.subr.mxu0 0.0
    %3430 = vmatpush1.msra.mxu0 %v3149
    %3431 = vmatprep.subr.mxu0 0.0
    %3432 = vmatpush1.msra.mxu0 %v3373
    %3433 = vmatprep.subr.mxu0 0.0
    %3434 = vmatpush1.msra.mxu0 %v3378
    %3435 = vmatprep.subr.mxu0 0.0
    %3436 = vmatpush1.msra.mxu0 %v3383
    %3437 = vmatprep.subr.mxu0 0.0
    %3438 = vmatpush1.msra.mxu0 %v3388
    %3439 = vmatprep.subr.mxu0 0.0
    %3440 = vmatpush1.msra.mxu0 0.0
    %3441 = vmatprep.subr.mxu0 0.0
    %3442 = vmatpush1.msra.mxu0 0.0
    %3443 = vmatprep.subr.mxu0 0.0
    %3444 = vmatpush1.msra.mxu0 0.0
    %3445 = vmatprep.subr.mxu0 0.0
    %3446 = vmatpush1.msra.mxu0 0.0
    %3447 = vmatprep.subr.mxu0 0.0
    %3448 = vmatpush1.msra.mxu0 0.0
    %3449 = vmatprep.subr.mxu0 0.0
    %3450 = vmatpush1.msra.mxu0 0.0
    %3451 = vmatprep.subr.mxu0 0.0
    %3452 = vmatpush1.msra.mxu0 0.0
    %3453 = vmatprep.subr.mxu0 0.0
    %3454 = vmatpush1.msra.mxu0 0.0
    %3455 = vmatprep.subr.mxu0 0.0
    %3456 = vmatpush1.msra.mxu0 0.0
    %3457 = vmatprep.subr.mxu0 0.0
    %3458 = vmatpush1.msra.mxu0 0.0
    %3459 = vmatprep.subr.mxu0 0.0
    %3460 = vmatpush1.msra.mxu0 0.0
    %3461 = vmatprep.subr.mxu0 0.0
    %3462 = vmatpush1.msra.mxu0 0.0
    %3463 = vmatprep.subr.mxu0 0.0
    %3464 = vmatpush1.msra.mxu0 0.0
    %3465 = vmatprep.subr.mxu0 0.0
    %3466 = vmatpush1.msra.mxu0 0.0
    %3467 = vmatprep.subr.mxu0 0.0
    %3468 = vmatpush1.msra.mxu0 0.0
    %3469 = vmatprep.subr.mxu0 0.0
    %3470 = vmatpush1.msra.mxu0 0.0
    %3471 = vmatprep.subr.mxu0 0.0
    %3472 = vmatpush1.msra.mxu0 0.0
    %3473 = vmatprep.subr.mxu0 0.0
    %3474 = vmatpush1.msra.mxu0 0.0
    %3475 = vmatprep.subr.mxu0 0.0
    %3476 = vmatpush1.msra.mxu0 0.0
    %3477 = vmatprep.subr.mxu0 0.0
    %3478 = vmatpush1.msra.mxu0 0.0
    %3479 = vmatprep.subr.mxu0 0.0
    %3480 = vmatpush1.msra.mxu0 0.0
    %3481 = vmatprep.subr.mxu0 0.0
    %3482 = vmatpush1.msra.mxu0 0.0
    %3483 = vmatprep.subr.mxu0 0.0
    %3484 = vmatpush1.msra.mxu0 0.0
    %3485 = vmatprep.subr.mxu0 0.0
    %3486 = vmatpush1.msra.mxu0 0.0
    %3487 = vmatprep.mubr.f32.mxu0 0.0
    %3488 = vmatmul.mubr.f32.gmra.mrb[0].mxu0 %v3412
    %v3489 = vpop.f32.mrb[0].mxu0
    %v3490 = vadd.f32 0.0, %v3489
    %v3491 = vpop.f32.mrb[0].mxu0
    %3492 = vmatprep.mubr.f32.mxu0 0.0
    %3493 = vmatmul.mubr.f32.gmra.mrb[0].mxu0 %v3415
    %v3494 = vpop.f32.mrb[0].mxu0
    %v3495 = vadd.f32 0.0, %v3494
    %v3496 = vpop.f32.mrb[0].mxu0
    %3497 = vmatprep.mubr.f32.mxu0 0.0
    %3498 = vmatmul.mubr.f32.gmra.mrb[0].mxu0 %v3418
    %v3499 = vpop.f32.mrb[0].mxu0
    %v3500 = vadd.f32 0.0, %v3499
    %v3501 = vpop.f32.mrb[0].mxu0
    %3502 = vmatprep.mubr.f32.mxu0 0.0
    %3503 = vmatmul.mubr.f32.gmra.mrb[0].mxu0 %v3421
    %v3504 = vpop.f32.mrb[0].mxu0
    %v3505 = vadd.f32 0.0, %v3504
    %v3506 = vpop.f32.mrb[0].mxu0
    %3507 = vdwg.mxu0
    %v3508 = vadd.f32 %v2786, %v3490
    %v3509 = vadd.f32 %v2787, %v3495
    %v3510 = vadd.f32 %v2788, %v3500
    %v3511 = vadd.f32 %v2789, %v3505
    %v3512 = vmul.f32 %v3508, 0.5
    %v3513 = vmul.f32 %v3509, 0.5
    %v3514 = vmul.f32 %v3510, 0.5
    %v3515 = vmul.f32 %v3511, 0.5
    %v3516 = vmul.f32 %v3508, 0.70710677
    %v3517 = vmul.f32 %v3509, 0.70710677
    %v3518 = vmul.f32 %v3510, 0.70710677
    %v3519 = vmul.f32 %v3511, 0.70710677
    %v3520 = vand.u32 2147483647, %v3516
    %v3521 = vand.u32 2147483647, %v3517
    %v3522 = vand.u32 2147483647, %v3518
    %v3523 = vand.u32 2147483647, %v3519
    %v3524 = vmul.f32 %v3520, 0.3275911
    %v3525 = vmul.f32 %v3521, 0.3275911
    %v3526 = vmul.f32 %v3522, 0.3275911
    %v3527 = vmul.f32 %v3523, 0.3275911
    %v3528 = vadd.f32 %v3524, 1.0
    %v3529 = vadd.f32 %v3525, 1.0
    %v3530 = vadd.f32 %v3526, 1.0
    %v3531 = vadd.f32 %v3527, 1.0
    %v3532 = vrcp.pop %v3528
    %v3533 = vmul.f32 1.0, %v3532
    %v3534 = vrcp.pop %v3529
    %v3535 = vmul.f32 1.0, %v3534
    %v3536 = vrcp.pop %v3530
    %v3537 = vmul.f32 1.0, %v3536
    %v3538 = vrcp.pop %v3531
    %v3539 = vmul.f32 1.0, %v3538
    %v3540 = vmul.f32 %v3533, 1.0614054
    %v3541 = vmul.f32 %v3535, 1.0614054
    %v3542 = vmul.f32 %v3537, 1.0614054
    %v3543 = vmul.f32 %v3539, 1.0614054
    %v3544 = vadd.f32 %v3540, -1.4531521
    %v3545 = vadd.f32 %v3541, -1.4531521
    %v3546 = vadd.f32 %v3542, -1.4531521
    %v3547 = vadd.f32 %v3543, -1.4531521
    %v3548 = vmul.f32 %v3544, %v3533
    %v3549 = vmul.f32 %v3545, %v3535
    %v3550 = vmul.f32 %v3546, %v3537
    %v3551 = vmul.f32 %v3547, %v3539
    %v3552 = vadd.f32 %v3548, 1.4214138
    %v3553 = vadd.f32 %v3549, 1.4214138
    %v3554 = vadd.f32 %v3550, 1.4214138
    %v3555 = vadd.f32 %v3551, 1.4214138
    %v3556 = vmul.f32 %v3552, %v3533
    %v3557 = vmul.f32 %v3553, %v3535
    %v3558 = vmul.f32 %v3554, %v3537
    %v3559 = vmul.f32 %v3555, %v3539
    %v3560 = vadd.f32 %v3556, -0.28449672
    %v3561 = vadd.f32 %v3557, -0.28449672
    %v3562 = vadd.f32 %v3558, -0.28449672
    %v3563 = vadd.f32 %v3559, -0.28449672
    %v3564 = vmul.f32 %v3560, %v3533
    %v3565 = vmul.f32 %v3561, %v3535
    %v3566 = vmul.f32 %v3562, %v3537
    %v3567 = vmul.f32 %v3563, %v3539
    %v3568 = vadd.f32 %v3564, 0.2548296
    %v3569 = vadd.f32 %v3565, 0.2548296
    %v3570 = vadd.f32 %v3566, 0.2548296
    %v3571 = vadd.f32 %v3567, 0.2548296
    %v3572 = vmul.f32 %v3568, %v3533
    %v3573 = vmul.f32 %v3569, %v3535
    %v3574 = vmul.f32 %v3570, %v3537
    %v3575 = vmul.f32 %v3571, %v3539
    %v3576 = vmul.f32 %v3520, %v3520
    %v3577 = vmul.f32 %v3521, %v3521
    %v3578 = vmul.f32 %v3522, %v3522
    %v3579 = vmul.f32 %v3523, %v3523
    %v3580 = vsub.f32 0.0, %v3576
    %v3581 = vsub.f32 0.0, %v3577
    %v3582 = vsub.f32 0.0, %v3578
    %v3583 = vsub.f32 0.0, %v3579
    %v3584 = vmul.f32 %v3580, 1.442695
    %v3585 = vpow.pop %v3584
    %v3586 = vmul.f32 %v3581, 1.442695
    %v3587 = vpow.pop %v3586
    %v3588 = vmul.f32 %v3582, 1.442695
    %v3589 = vpow.pop %v3588
    %v3590 = vmul.f32 %v3583, 1.442695
    %v3591 = vpow.pop %v3590
    %v3592 = vmul.f32 %v3572, %v3585
    %v3593 = vmul.f32 %v3573, %v3587
    %v3594 = vmul.f32 %v3574, %v3589
    %v3595 = vmul.f32 %v3575, %v3591
    %v3596 = vsub.f32 1.0, %v3592
    %v3597 = vsub.f32 1.0, %v3593
    %v3598 = vsub.f32 1.0, %v3594
    %v3599 = vsub.f32 1.0, %v3595
    %vm3600 = vcmp.ge.f32.partialorder %v3516, 0.0
    %vm3601 = vcmp.ge.f32.partialorder %v3517, 0.0
    %vm3602 = vcmp.ge.f32.partialorder %v3518, 0.0
    %vm3603 = vcmp.ge.f32.partialorder %v3519, 0.0
    %v3604 = vsub.f32 0.0, %v3596
    %v3605 = vsub.f32 0.0, %v3597
    %v3606 = vsub.f32 0.0, %v3598
    %v3607 = vsub.f32 0.0, %v3599
    %v3608 = vsel %vm3600, %v3596, %v3604
    %v3609 = vsel %vm3601, %v3597, %v3605
    %v3610 = vsel %vm3602, %v3598, %v3606
    %v3611 = vsel %vm3603, %v3599, %v3607
    %v3612 = vadd.f32 %v3608, 1.0
    %v3613 = vadd.f32 %v3609, 1.0
    %v3614 = vadd.f32 %v3610, 1.0
    %v3615 = vadd.f32 %v3611, 1.0
    %v3616 = vmul.f32 %v3512, %v3612
    %v3617 = vmul.f32 %v3513, %v3613
    %v3618 = vmul.f32 %v3514, %v3614
    %v3619 = vmul.f32 %v3515, %v3615
    %s3620 = scalar_lea.vmem [#allocation6], 384
    %v3621 = vld [vmem:[%s3620] sm:$0xff]
    %v3622 = vld [vmem:[%s3620 + $0x8] sm:$0xff]
    %v3623 = vld [vmem:[%s3620 + $0x10] sm:$0xff]
    %v3624 = vld [vmem:[%s3620 + $0x18] sm:$0xff]
    %v3625 = vld [vmem:[%s3620 + $0x20] sm:$0xff]
    %v3626 = vld [vmem:[%s3620 + $0x28] sm:$0xff]
    %v3627 = vld [vmem:[%s3620 + $0x30] sm:$0xff]
    %v3628 = vld [vmem:[%s3620 + $0x38] sm:$0xff]
    %v3629 = vld [vmem:[%s3620 + $0x40] sm:$0xff]
    %v3630 = vld [vmem:[%s3620 + $0x48] sm:$0xff]
    %v3631 = vld [vmem:[%s3620 + $0x50] sm:$0xff]
    %v3632 = vld [vmem:[%s3620 + $0x58] sm:$0xff]
    %s3633 = scalar_lea.vmem [#allocation7], 4
    %v3634 = vld [vmem:[%s3633] sm:$0x1]
    %v3636 = vlaneseq
    %v3637 = vshrl.u32 %v3636, 7
    %v3638 = vsub.s32 0, %v3637
    %v3639 = vrot.slane %v3634, %v3638
    %v3642 = vsel %vm143, %v3616, 0
    %v3645 = vsel %vm143, %v3617, 0
    %v3648 = vsel %vm143, %v3618, 0
    %v3651 = vsel %vm143, %v3619, 0
    %3653 = vmatprep.subr.mxu0 0.0
    %3654 = vmatpush1.msra.mxu0 %v3621
    %3655 = vmatprep.subr.mxu0 0.0
    %3656 = vmatpush1.msra.mxu0 %v3622
    %3657 = vmatprep.subr.mxu0 0.0
    %3658 = vmatpush1.msra.mxu0 %v3623
    %3659 = vmatprep.subr.mxu0 0.0
    %3660 = vmatpush1.msra.mxu0 %v3624
    %3661 = vmatprep.subr.mxu0 0.0
    %3662 = vmatpush1.msra.mxu0 %v3625
    %3663 = vmatprep.subr.mxu0 0.0
    %3664 = vmatpush1.msra.mxu0 %v3626
    %3665 = vmatprep.subr.mxu0 0.0
    %3666 = vmatpush1.msra.mxu0 %v3627
    %3667 = vmatprep.subr.mxu0 0.0
    %3668 = vmatpush1.msra.mxu0 %v3628
    %3669 = vmatprep.subr.mxu0 0.0
    %3670 = vmatpush1.msra.mxu0 %v3629
    %3671 = vmatprep.subr.mxu0 0.0
    %3672 = vmatpush1.msra.mxu0 %v3630
    %3673 = vmatprep.subr.mxu0 0.0
    %3674 = vmatpush1.msra.mxu0 %v3631
    %3675 = vmatprep.subr.mxu0 0.0
    %3676 = vmatpush1.msra.mxu0 %v3632
    %3677 = vmatprep.subr.mxu0 0.0
    %3678 = vmatpush1.msra.mxu0 0.0
    %3679 = vmatprep.subr.mxu0 0.0
    %3680 = vmatpush1.msra.mxu0 0.0
    %3681 = vmatprep.subr.mxu0 0.0
    %3682 = vmatpush1.msra.mxu0 0.0
    %3683 = vmatprep.subr.mxu0 0.0
    %3684 = vmatpush1.msra.mxu0 0.0
    %3685 = vmatprep.subr.mxu0 0.0
    %3686 = vmatpush1.msra.mxu0 0.0
    %3687 = vmatprep.subr.mxu0 0.0
    %3688 = vmatpush1.msra.mxu0 0.0
    %3689 = vmatprep.subr.mxu0 0.0
    %3690 = vmatpush1.msra.mxu0 0.0
    %3691 = vmatprep.subr.mxu0 0.0
    %3692 = vmatpush1.msra.mxu0 0.0
    %3693 = vmatprep.subr.mxu0 0.0
    %3694 = vmatpush1.msra.mxu0 0.0
    %3695 = vmatprep.subr.mxu0 0.0
    %3696 = vmatpush1.msra.mxu0 0.0
    %3697 = vmatprep.subr.mxu0 0.0
    %3698 = vmatpush1.msra.mxu0 0.0
    %3699 = vmatprep.subr.mxu0 0.0
    %3700 = vmatpush1.msra.mxu0 0.0
    %3701 = vmatprep.subr.mxu0 0.0
    %3702 = vmatpush1.msra.mxu0 0.0
    %3703 = vmatprep.subr.mxu0 0.0
    %3704 = vmatpush1.msra.mxu0 0.0
    %3705 = vmatprep.subr.mxu0 0.0
    %3706 = vmatpush1.msra.mxu0 0.0
    %3707 = vmatprep.subr.mxu0 0.0
    %3708 = vmatpush1.msra.mxu0 0.0
    %3709 = vmatprep.subr.mxu0 0.0
    %3710 = vmatpush1.msra.mxu0 0.0
    %3711 = vmatprep.subr.mxu0 0.0
    %3712 = vmatpush1.msra.mxu0 0.0
    %3713 = vmatprep.subr.mxu0 0.0
    %3714 = vmatpush1.msra.mxu0 0.0
    %3715 = vmatprep.subr.mxu0 0.0
    %3716 = vmatpush1.msra.mxu0 0.0
    %3717 = vmatprep.mubr.f32.mxu0 0.0
    %3718 = vmatmul.mubr.f32.gmra.mrb[0].mxu0 %v3642
    %v3719 = vpop.f32.mrb[0].mxu0
    %v3720 = vadd.f32 %v3639, %v3719
    %v3721 = vpop.f32.mrb[0].mxu0
    %3722 = vmatprep.mubr.f32.mxu0 0.0
    %3723 = vmatmul.mubr.f32.gmra.mrb[0].mxu0 %v3645
    %v3724 = vpop.f32.mrb[0].mxu0
    %v3725 = vadd.f32 %v3639, %v3724
    %v3726 = vpop.f32.mrb[0].mxu0
    %3727 = vmatprep.mubr.f32.mxu0 0.0
    %3728 = vmatmul.mubr.f32.gmra.mrb[0].mxu0 %v3648
    %v3729 = vpop.f32.mrb[0].mxu0
    %v3730 = vadd.f32 %v3639, %v3729
    %v3731 = vpop.f32.mrb[0].mxu0
    %3732 = vmatprep.mubr.f32.mxu0 0.0
    %3733 = vmatmul.mubr.f32.gmra.mrb[0].mxu0 %v3651
    %v3734 = vpop.f32.mrb[0].mxu0
    %v3735 = vadd.f32 %v3639, %v3734
    %v3736 = vpop.f32.mrb[0].mxu0
    %3737 = vdwg.mxu0
    %s3738 = scalar_lea.vmem [#allocation7], 5
    %v3739 = vld [vmem:[%s3738] sm:$0x1]
    %v3741 = vlaneseq
    %v3742 = vshrl.u32 %v3741, 7
    %v3743 = vsub.s32 0, %v3742
    %v3744 = vrot.slane %v3739, %v3743
    %v3746 = vmul.f32 %v241, %v3744
    %v3747 = vmul.f32 %v242, %v3744
    %v3748 = vmul.f32 %v243, %v3744
    %v3749 = vmul.f32 %v244, %v3744
    %v3750 = vadd.f32 %v3720, %v3746
    %v3751 = vadd.f32 %v3725, %v3747
    %v3752 = vadd.f32 %v3730, %v3748
    %v3753 = vadd.f32 %v3735, %v3749
    %s3754 = scalar_lea.vmem [#allocation6], 1632
    %v3755 = vld [vmem:[%s3754] sm:$0xff]
    %v3756 = vld [vmem:[%s3754 + $0x8] sm:$0xff]
    %v3757 = vld [vmem:[%s3754 + $0x10] sm:$0xff]
    %v3758 = vld [vmem:[%s3754 + $0x18] sm:$0xff]
    %v3759 = vld [vmem:[%s3754 + $0x20] sm:$0xff]
    %v3760 = vld [vmem:[%s3754 + $0x28] sm:$0xff]
    %v3761 = vld [vmem:[%s3754 + $0x30] sm:$0xff]
    %v3762 = vld [vmem:[%s3754 + $0x38] sm:$0xff]
    %v3763 = vld [vmem:[%s3754 + $0x40] sm:$0xff]
    %v3764 = vld [vmem:[%s3754 + $0x48] sm:$0xff]
    %v3765 = vld [vmem:[%s3754 + $0x50] sm:$0xff]
    %v3766 = vld [vmem:[%s3754 + $0x58] sm:$0xff]
    %s3767 = scalar_lea.vmem [#allocation7], 6
    %v3768 = vld [vmem:[%s3767] sm:$0x1]
    %v3770 = vlaneseq
    %v3771 = vshrl.u32 %v3770, 7
    %v3772 = vsub.s32 0, %v3771
    %v3773 = vrot.slane %v3768, %v3772
    %v3776 = vsel %vm143, %v3750, 0
    %v3779 = vsel %vm143, %v3751, 0
    %v3782 = vsel %vm143, %v3752, 0
    %v3785 = vsel %vm143, %v3753, 0
    %3787 = vmatprep.subr.mxu0 0.0
    %3788 = vmatpush1.msra.mxu0 %v3755
    %3789 = vmatprep.subr.mxu0 0.0
    %3790 = vmatpush1.msra.mxu0 %v3756
    %3791 = vmatprep.subr.mxu0 0.0
    %3792 = vmatpush1.msra.mxu0 %v3757
    %3793 = vmatprep.subr.mxu0 0.0
    %3794 = vmatpush1.msra.mxu0 %v3758
    %3795 = vmatprep.subr.mxu0 0.0
    %3796 = vmatpush1.msra.mxu0 %v3759
    %3797 = vmatprep.subr.mxu0 0.0
    %3798 = vmatpush1.msra.mxu0 %v3760
    %3799 = vmatprep.subr.mxu0 0.0
    %3800 = vmatpush1.msra.mxu0 %v3761
    %3801 = vmatprep.subr.mxu0 0.0
    %3802 = vmatpush1.msra.mxu0 %v3762
    %3803 = vmatprep.subr.mxu0 0.0
    %3804 = vmatpush1.msra.mxu0 %v3763
    %3805 = vmatprep.subr.mxu0 0.0
    %3806 = vmatpush1.msra.mxu0 %v3764
    %3807 = vmatprep.subr.mxu0 0.0
    %3808 = vmatpush1.msra.mxu0 %v3765
    %3809 = vmatprep.subr.mxu0 0.0
    %3810 = vmatpush1.msra.mxu0 %v3766
    %3811 = vmatprep.subr.mxu0 0.0
    %3812 = vmatpush1.msra.mxu0 0.0
    %3813 = vmatprep.subr.mxu0 0.0
    %3814 = vmatpush1.msra.mxu0 0.0
    %3815 = vmatprep.subr.mxu0 0.0
    %3816 = vmatpush1.msra.mxu0 0.0
    %3817 = vmatprep.subr.mxu0 0.0
    %3818 = vmatpush1.msra.mxu0 0.0
    %3819 = vmatprep.subr.mxu0 0.0
    %3820 = vmatpush1.msra.mxu0 0.0
    %3821 = vmatprep.subr.mxu0 0.0
    %3822 = vmatpush1.msra.mxu0 0.0
    %3823 = vmatprep.subr.mxu0 0.0
    %3824 = vmatpush1.msra.mxu0 0.0
    %3825 = vmatprep.subr.mxu0 0.0
    %3826 = vmatpush1.msra.mxu0 0.0
    %3827 = vmatprep.subr.mxu0 0.0
    %3828 = vmatpush1.msra.mxu0 0.0
    %3829 = vmatprep.subr.mxu0 0.0
    %3830 = vmatpush1.msra.mxu0 0.0
    %3831 = vmatprep.subr.mxu0 0.0
    %3832 = vmatpush1.msra.mxu0 0.0
    %3833 = vmatprep.subr.mxu0 0.0
    %3834 = vmatpush1.msra.mxu0 0.0
    %3835 = vmatprep.subr.mxu0 0.0
    %3836 = vmatpush1.msra.mxu0 0.0
    %3837 = vmatprep.subr.mxu0 0.0
    %3838 = vmatpush1.msra.mxu0 0.0
    %3839 = vmatprep.subr.mxu0 0.0
    %3840 = vmatpush1.msra.mxu0 0.0
    %3841 = vmatprep.subr.mxu0 0.0
    %3842 = vmatpush1.msra.mxu0 0.0
    %3843 = vmatprep.subr.mxu0 0.0
    %3844 = vmatpush1.msra.mxu0 0.0
    %3845 = vmatprep.subr.mxu0 0.0
    %3846 = vmatpush1.msra.mxu0 0.0
    %3847 = vmatprep.subr.mxu0 0.0
    %3848 = vmatpush1.msra.mxu0 0.0
    %3849 = vmatprep.subr.mxu0 0.0
    %3850 = vmatpush1.msra.mxu0 0.0
    %3851 = vmatprep.mubr.f32.mxu0 0.0
    %3852 = vmatmul.mubr.f32.gmra.mrb[0].mxu0 %v3776
    %v3853 = vpop.f32.mrb[0].mxu0
    %v3854 = vadd.f32 %v3773, %v3853
    %v3855 = vpop.f32.mrb[0].mxu0
    %3856 = vmatprep.mubr.f32.mxu0 0.0
    %3857 = vmatmul.mubr.f32.gmra.mrb[0].mxu0 %v3779
    %v3858 = vpop.f32.mrb[0].mxu0
    %v3859 = vadd.f32 %v3773, %v3858
    %v3860 = vpop.f32.mrb[0].mxu0
    %3861 = vmatprep.mubr.f32.mxu0 0.0
    %3862 = vmatmul.mubr.f32.gmra.mrb[0].mxu0 %v3782
    %v3863 = vpop.f32.mrb[0].mxu0
    %v3864 = vadd.f32 %v3773, %v3863
    %v3865 = vpop.f32.mrb[0].mxu0
    %3866 = vmatprep.mubr.f32.mxu0 0.0
    %3867 = vmatmul.mubr.f32.gmra.mrb[0].mxu0 %v3785
    %v3868 = vpop.f32.mrb[0].mxu0
    %v3869 = vadd.f32 %v3773, %v3868
    %v3870 = vpop.f32.mrb[0].mxu0
    %3871 = vdwg.mxu0
    %s3872 = scalar_lea.vmem [#allocation6], 1728
    %v3873 = vld [vmem:[%s3872] sm:$0xff]
    %v3874 = vld [vmem:[%s3872 + $0x8] sm:$0xff]
    %v3875 = vld [vmem:[%s3872 + $0x10] sm:$0xff]
    %v3876 = vld [vmem:[%s3872 + $0x18] sm:$0xff]
    %v3877 = vld [vmem:[%s3872 + $0x20] sm:$0xff]
    %v3878 = vld [vmem:[%s3872 + $0x28] sm:$0xff]
    %v3879 = vld [vmem:[%s3872 + $0x30] sm:$0xff]
    %v3880 = vld [vmem:[%s3872 + $0x38] sm:$0xff]
    %v3881 = vld [vmem:[%s3872 + $0x40] sm:$0xff]
    %v3882 = vld [vmem:[%s3872 + $0x48] sm:$0xff]
    %v3883 = vld [vmem:[%s3872 + $0x50] sm:$0xff]
    %v3884 = vld [vmem:[%s3872 + $0x58] sm:$0xff]
    %s3885 = scalar_lea.vmem [#allocation7], 7
    %v3886 = vld [vmem:[%s3885] sm:$0x1]
    %v3888 = vlaneseq
    %v3889 = vshrl.u32 %v3888, 7
    %v3890 = vsub.s32 0, %v3889
    %v3891 = vrot.slane %v3886, %v3890
    %3893 = vmatprep.subr.mxu0 0.0
    %3894 = vmatpush1.msra.mxu0 %v3873
    %3895 = vmatprep.subr.mxu0 0.0
    %3896 = vmatpush1.msra.mxu0 %v3874
    %3897 = vmatprep.subr.mxu0 0.0
    %3898 = vmatpush1.msra.mxu0 %v3875
    %3899 = vmatprep.subr.mxu0 0.0
    %3900 = vmatpush1.msra.mxu0 %v3876
    %3901 = vmatprep.subr.mxu0 0.0
    %3902 = vmatpush1.msra.mxu0 %v3877
    %3903 = vmatprep.subr.mxu0 0.0
    %3904 = vmatpush1.msra.mxu0 %v3878
    %3905 = vmatprep.subr.mxu0 0.0
    %3906 = vmatpush1.msra.mxu0 %v3879
    %3907 = vmatprep.subr.mxu0 0.0
    %3908 = vmatpush1.msra.mxu0 %v3880
    %3909 = vmatprep.subr.mxu0 0.0
    %3910 = vmatpush1.msra.mxu0 %v3881
    %3911 = vmatprep.subr.mxu0 0.0
    %3912 = vmatpush1.msra.mxu0 %v3882
    %3913 = vmatprep.subr.mxu0 0.0
    %3914 = vmatpush1.msra.mxu0 %v3883
    %3915 = vmatprep.subr.mxu0 0.0
    %3916 = vmatpush1.msra.mxu0 %v3884
    %3917 = vmatprep.subr.mxu0 0.0
    %3918 = vmatpush1.msra.mxu0 0.0
    %3919 = vmatprep.subr.mxu0 0.0
    %3920 = vmatpush1.msra.mxu0 0.0
    %3921 = vmatprep.subr.mxu0 0.0
    %3922 = vmatpush1.msra.mxu0 0.0
    %3923 = vmatprep.subr.mxu0 0.0
    %3924 = vmatpush1.msra.mxu0 0.0
    %3925 = vmatprep.subr.mxu0 0.0
    %3926 = vmatpush1.msra.mxu0 0.0
    %3927 = vmatprep.subr.mxu0 0.0
    %3928 = vmatpush1.msra.mxu0 0.0
    %3929 = vmatprep.subr.mxu0 0.0
    %3930 = vmatpush1.msra.mxu0 0.0
    %3931 = vmatprep.subr.mxu0 0.0
    %3932 = vmatpush1.msra.mxu0 0.0
    %3933 = vmatprep.subr.mxu0 0.0
    %3934 = vmatpush1.msra.mxu0 0.0
    %3935 = vmatprep.subr.mxu0 0.0
    %3936 = vmatpush1.msra.mxu0 0.0
    %3937 = vmatprep.subr.mxu0 0.0
    %3938 = vmatpush1.msra.mxu0 0.0
    %3939 = vmatprep.subr.mxu0 0.0
    %3940 = vmatpush1.msra.mxu0 0.0
    %3941 = vmatprep.subr.mxu0 0.0
    %3942 = vmatpush1.msra.mxu0 0.0
    %3943 = vmatprep.subr.mxu0 0.0
    %3944 = vmatpush1.msra.mxu0 0.0
    %3945 = vmatprep.subr.mxu0 0.0
    %3946 = vmatpush1.msra.mxu0 0.0
    %3947 = vmatprep.subr.mxu0 0.0
    %3948 = vmatpush1.msra.mxu0 0.0
    %3949 = vmatprep.subr.mxu0 0.0
    %3950 = vmatpush1.msra.mxu0 0.0
    %3951 = vmatprep.subr.mxu0 0.0
    %3952 = vmatpush1.msra.mxu0 0.0
    %3953 = vmatprep.subr.mxu0 0.0
    %3954 = vmatpush1.msra.mxu0 0.0
    %3955 = vmatprep.subr.mxu0 0.0
    %3956 = vmatpush1.msra.mxu0 0.0
    %3957 = vmatprep.mubr.f32.mxu0 0.0
    %3958 = vmatmul.mubr.f32.gmra.mrb[0].mxu0 %v3776
    %v3959 = vpop.f32.mrb[0].mxu0
    %v3960 = vadd.f32 %v3891, %v3959
    %v3961 = vpop.f32.mrb[0].mxu0
    %3962 = vmatprep.mubr.f32.mxu0 0.0
    %3963 = vmatmul.mubr.f32.gmra.mrb[0].mxu0 %v3779
    %v3964 = vpop.f32.mrb[0].mxu0
    %v3965 = vadd.f32 %v3891, %v3964
    %v3966 = vpop.f32.mrb[0].mxu0
    %3967 = vmatprep.mubr.f32.mxu0 0.0
    %3968 = vmatmul.mubr.f32.gmra.mrb[0].mxu0 %v3782
    %v3969 = vpop.f32.mrb[0].mxu0
    %v3970 = vadd.f32 %v3891, %v3969
    %v3971 = vpop.f32.mrb[0].mxu0
    %3972 = vmatprep.mubr.f32.mxu0 0.0
    %3973 = vmatmul.mubr.f32.gmra.mrb[0].mxu0 %v3785
    %v3974 = vpop.f32.mrb[0].mxu0
    %v3975 = vadd.f32 %v3891, %v3974
    %v3976 = vpop.f32.mrb[0].mxu0
    %3977 = vdwg.mxu0
    %s3978 = scalar_lea.vmem [#allocation6], 1824
    %v3979 = vld [vmem:[%s3978] sm:$0xff]
    %v3980 = vld [vmem:[%s3978 + $0x8] sm:$0xff]
    %v3981 = vld [vmem:[%s3978 + $0x10] sm:$0xff]
    %v3982 = vld [vmem:[%s3978 + $0x18] sm:$0xff]
    %v3983 = vld [vmem:[%s3978 + $0x20] sm:$0xff]
    %v3984 = vld [vmem:[%s3978 + $0x28] sm:$0xff]
    %v3985 = vld [vmem:[%s3978 + $0x30] sm:$0xff]
    %v3986 = vld [vmem:[%s3978 + $0x38] sm:$0xff]
    %v3987 = vld [vmem:[%s3978 + $0x40] sm:$0xff]
    %v3988 = vld [vmem:[%s3978 + $0x48] sm:$0xff]
    %v3989 = vld [vmem:[%s3978 + $0x50] sm:$0xff]
    %v3990 = vld [vmem:[%s3978 + $0x58] sm:$0xff]
    %s3991 = scalar_lea.vmem [#allocation7], 8
    %v3992 = vld [vmem:[%s3991] sm:$0x1]
    %v3994 = vlaneseq
    %v3995 = vshrl.u32 %v3994, 7
    %v3996 = vsub.s32 0, %v3995
    %v3997 = vrot.slane %v3992, %v3996
    %3999 = vmatprep.subr.mxu0 0.0
    %4000 = vmatpush1.msra.mxu0 %v3979
    %4001 = vmatprep.subr.mxu0 0.0
    %4002 = vmatpush1.msra.mxu0 %v3980
    %4003 = vmatprep.subr.mxu0 0.0
    %4004 = vmatpush1.msra.mxu0 %v3981
    %4005 = vmatprep.subr.mxu0 0.0
    %4006 = vmatpush1.msra.mxu0 %v3982
    %4007 = vmatprep.subr.mxu0 0.0
    %4008 = vmatpush1.msra.mxu0 %v3983
    %4009 = vmatprep.subr.mxu0 0.0
    %4010 = vmatpush1.msra.mxu0 %v3984
    %4011 = vmatprep.subr.mxu0 0.0
    %4012 = vmatpush1.msra.mxu0 %v3985
    %4013 = vmatprep.subr.mxu0 0.0
    %4014 = vmatpush1.msra.mxu0 %v3986
    %4015 = vmatprep.subr.mxu0 0.0
    %4016 = vmatpush1.msra.mxu0 %v3987
    %4017 = vmatprep.subr.mxu0 0.0
    %4018 = vmatpush1.msra.mxu0 %v3988
    %4019 = vmatprep.subr.mxu0 0.0
    %4020 = vmatpush1.msra.mxu0 %v3989
    %4021 = vmatprep.subr.mxu0 0.0
    %4022 = vmatpush1.msra.mxu0 %v3990
    %4023 = vmatprep.subr.mxu0 0.0
    %4024 = vmatpush1.msra.mxu0 0.0
    %4025 = vmatprep.subr.mxu0 0.0
    %4026 = vmatpush1.msra.mxu0 0.0
    %4027 = vmatprep.subr.mxu0 0.0
    %4028 = vmatpush1.msra.mxu0 0.0
    %4029 = vmatprep.subr.mxu0 0.0
    %4030 = vmatpush1.msra.mxu0 0.0
    %4031 = vmatprep.subr.mxu0 0.0
    %4032 = vmatpush1.msra.mxu0 0.0
    %4033 = vmatprep.subr.mxu0 0.0
    %4034 = vmatpush1.msra.mxu0 0.0
    %4035 = vmatprep.subr.mxu0 0.0
    %4036 = vmatpush1.msra.mxu0 0.0
    %4037 = vmatprep.subr.mxu0 0.0
    %4038 = vmatpush1.msra.mxu0 0.0
    %4039 = vmatprep.subr.mxu0 0.0
    %4040 = vmatpush1.msra.mxu0 0.0
    %4041 = vmatprep.subr.mxu0 0.0
    %4042 = vmatpush1.msra.mxu0 0.0
    %4043 = vmatprep.subr.mxu0 0.0
    %4044 = vmatpush1.msra.mxu0 0.0
    %4045 = vmatprep.subr.mxu0 0.0
    %4046 = vmatpush1.msra.mxu0 0.0
    %4047 = vmatprep.subr.mxu0 0.0
    %4048 = vmatpush1.msra.mxu0 0.0
    %4049 = vmatprep.subr.mxu0 0.0
    %4050 = vmatpush1.msra.mxu0 0.0
    %4051 = vmatprep.subr.mxu0 0.0
    %4052 = vmatpush1.msra.mxu0 0.0
    %4053 = vmatprep.subr.mxu0 0.0
    %4054 = vmatpush1.msra.mxu0 0.0
    %4055 = vmatprep.subr.mxu0 0.0
    %4056 = vmatpush1.msra.mxu0 0.0
    %4057 = vmatprep.subr.mxu0 0.0
    %4058 = vmatpush1.msra.mxu0 0.0
    %4059 = vmatprep.subr.mxu0 0.0
    %4060 = vmatpush1.msra.mxu0 0.0
    %4061 = vmatprep.subr.mxu0 0.0
    %4062 = vmatpush1.msra.mxu0 0.0
    %4063 = vmatprep.mubr.f32.mxu0 0.0
    %4064 = vmatmul.mubr.f32.gmra.mrb[0].mxu0 %v3776
    %v4065 = vpop.f32.mrb[0].mxu0
    %v4066 = vadd.f32 %v3997, %v4065
    %v4067 = vpop.f32.mrb[0].mxu0
    %4068 = vmatprep.mubr.f32.mxu0 0.0
    %4069 = vmatmul.mubr.f32.gmra.mrb[0].mxu0 %v3779
    %v4070 = vpop.f32.mrb[0].mxu0
    %v4071 = vadd.f32 %v3997, %v4070
    %v4072 = vpop.f32.mrb[0].mxu0
    %4073 = vmatprep.mubr.f32.mxu0 0.0
    %4074 = vmatmul.mubr.f32.gmra.mrb[0].mxu0 %v3782
    %v4075 = vpop.f32.mrb[0].mxu0
    %v4076 = vadd.f32 %v3997, %v4075
    %v4077 = vpop.f32.mrb[0].mxu0
    %4078 = vmatprep.mubr.f32.mxu0 0.0
    %4079 = vmatmul.mubr.f32.gmra.mrb[0].mxu0 %v3785
    %v4080 = vpop.f32.mrb[0].mxu0
    %v4081 = vadd.f32 %v3997, %v4080
    %v4082 = vpop.f32.mrb[0].mxu0
    %4083 = vdwg.mxu0
    %v4084 = vmul.f32 %v3960, %v118
    %v4085 = vmul.f32 %v3965, %v118
    %v4086 = vmul.f32 %v3970, %v118
    %v4087 = vmul.f32 %v3975, %v118
    %v4088 = vmul.f32 %v3960, %v119
    %v4089 = vmul.f32 %v3965, %v119
    %v4090 = vmul.f32 %v3970, %v119
    %v4091 = vmul.f32 %v3975, %v119
    %s4092 = scalar_lea.vmem [#allocation6], 2016
    %v4093 = vld [vmem:[%s4092] sm:$0xff]
    %v4094 = vld [vmem:[%s4092 + $0x8] sm:$0xff]
    %v4095 = vld [vmem:[%s4092 + $0x10] sm:$0xff]
    %v4096 = vld [vmem:[%s4092 + $0x18] sm:$0xff]
    %v4097 = vld [vmem:[%s4092 + $0x20] sm:$0xff]
    %v4098 = vld [vmem:[%s4092 + $0x28] sm:$0xff]
    %v4099 = vld [vmem:[%s4092 + $0x30] sm:$0xff]
    %v4100 = vld [vmem:[%s4092 + $0x38] sm:$0xff]
    %v4101 = vld [vmem:[%s4092 + $0x40] sm:$0xff]
    %v4102 = vld [vmem:[%s4092 + $0x48] sm:$0xff]
    %v4103 = vld [vmem:[%s4092 + $0x50] sm:$0xff]
    %v4104 = vld [vmem:[%s4092 + $0x58] sm:$0xff]
    %v4106 = vsel %vm143, %v3854, 0
    %v4109 = vsel %vm143, %v3859, 0
    %v4112 = vsel %vm143, %v3864, 0
    %v4115 = vsel %vm143, %v3869, 0
    %4117 = vmatprep.subr.mxu0 0.0
    %4118 = vmatpush1.msra.mxu0 %v4093
    %4119 = vmatprep.subr.mxu0 0.0
    %4120 = vmatpush1.msra.mxu0 %v4094
    %4121 = vmatprep.subr.mxu0 0.0
    %4122 = vmatpush1.msra.mxu0 %v4095
    %4123 = vmatprep.subr.mxu0 0.0
    %4124 = vmatpush1.msra.mxu0 %v4096
    %4125 = vmatprep.subr.mxu0 0.0
    %4126 = vmatpush1.msra.mxu0 %v4097
    %4127 = vmatprep.subr.mxu0 0.0
    %4128 = vmatpush1.msra.mxu0 %v4098
    %4129 = vmatprep.subr.mxu0 0.0
    %4130 = vmatpush1.msra.mxu0 %v4099
    %4131 = vmatprep.subr.mxu0 0.0
    %4132 = vmatpush1.msra.mxu0 %v4100
    %4133 = vmatprep.subr.mxu0 0.0
    %4134 = vmatpush1.msra.mxu0 %v4101
    %4135 = vmatprep.subr.mxu0 0.0
    %4136 = vmatpush1.msra.mxu0 %v4102
    %4137 = vmatprep.subr.mxu0 0.0
    %4138 = vmatpush1.msra.mxu0 %v4103
    %4139 = vmatprep.subr.mxu0 0.0
    %4140 = vmatpush1.msra.mxu0 %v4104
    %4141 = vmatprep.subr.mxu0 0.0
    %4142 = vmatpush1.msra.mxu0 0.0
    %4143 = vmatprep.subr.mxu0 0.0
    %4144 = vmatpush1.msra.mxu0 0.0
    %4145 = vmatprep.subr.mxu0 0.0
    %4146 = vmatpush1.msra.mxu0 0.0
    %4147 = vmatprep.subr.mxu0 0.0
    %4148 = vmatpush1.msra.mxu0 0.0
    %4149 = vmatprep.subr.mxu0 0.0
    %4150 = vmatpush1.msra.mxu0 0.0
    %4151 = vmatprep.subr.mxu0 0.0
    %4152 = vmatpush1.msra.mxu0 0.0
    %4153 = vmatprep.subr.mxu0 0.0
    %4154 = vmatpush1.msra.mxu0 0.0
    %4155 = vmatprep.subr.mxu0 0.0
    %4156 = vmatpush1.msra.mxu0 0.0
    %4157 = vmatprep.subr.mxu0 0.0
    %4158 = vmatpush1.msra.mxu0 0.0
    %4159 = vmatprep.subr.mxu0 0.0
    %4160 = vmatpush1.msra.mxu0 0.0
    %4161 = vmatprep.subr.mxu0 0.0
    %4162 = vmatpush1.msra.mxu0 0.0
    %4163 = vmatprep.subr.mxu0 0.0
    %4164 = vmatpush1.msra.mxu0 0.0
    %4165 = vmatprep.subr.mxu0 0.0
    %4166 = vmatpush1.msra.mxu0 0.0
    %4167 = vmatprep.subr.mxu0 0.0
    %4168 = vmatpush1.msra.mxu0 0.0
    %4169 = vmatprep.subr.mxu0 0.0
    %4170 = vmatpush1.msra.mxu0 0.0
    %4171 = vmatprep.subr.mxu0 0.0
    %4172 = vmatpush1.msra.mxu0 0.0
    %4173 = vmatprep.subr.mxu0 0.0
    %4174 = vmatpush1.msra.mxu0 0.0
    %4175 = vmatprep.subr.mxu0 0.0
    %4176 = vmatpush1.msra.mxu0 0.0
    %4177 = vmatprep.subr.mxu0 0.0
    %4178 = vmatpush1.msra.mxu0 0.0
    %4179 = vmatprep.subr.mxu0 0.0
    %4180 = vmatpush1.msra.mxu0 0.0
    %4181 = vmatprep.mubr.f32.mxu0 0.0
    %4182 = vmatmul.mubr.f32.gmra.mrb[0].mxu0 %v4106
    %v4183 = vpop.f32.mrb[0].mxu0
    %v4184 = vadd.f32 0.0, %v4183
    %v4185 = vpop.f32.mrb[0].mxu0
    %4186 = vmatprep.mubr.f32.mxu0 0.0
    %4187 = vmatmul.mubr.f32.gmra.mrb[0].mxu0 %v4109
    %v4188 = vpop.f32.mrb[0].mxu0
    %v4189 = vadd.f32 0.0, %v4188
    %v4190 = vpop.f32.mrb[0].mxu0
    %4191 = vmatprep.mubr.f32.mxu0 0.0
    %4192 = vmatmul.mubr.f32.gmra.mrb[0].mxu0 %v4112
    %v4193 = vpop.f32.mrb[0].mxu0
    %v4194 = vadd.f32 0.0, %v4193
    %v4195 = vpop.f32.mrb[0].mxu0
    %4196 = vmatprep.mubr.f32.mxu0 0.0
    %4197 = vmatmul.mubr.f32.gmra.mrb[0].mxu0 %v4115
    %v4198 = vpop.f32.mrb[0].mxu0
    %v4199 = vadd.f32 0.0, %v4198
    %v4200 = vpop.f32.mrb[0].mxu0
    %4201 = vdwg.mxu0
    %v4203 = vsel %vm143, %v4084, 0
    %v4206 = vsel %vm143, %v4085, 0
    %v4209 = vsel %vm143, %v4086, 0
    %v4212 = vsel %vm143, %v4087, 0
    %v4215 = vsel %vm143, %v4184, 0
    %v4218 = vsel %vm143, %v4189, 0
    %v4221 = vsel %vm143, %v4194, 0
    %v4224 = vsel %vm143, %v4199, 0
    %4226 = vmatprep.subr.mxu0 0.0
    %4227 = vmatpush1.xpose.msra.mxu0 %v4215
    %4228 = vmatprep.subr.mxu0 0.0
    %4229 = vmatpush1.xpose.msra.mxu0 %v4218
    %4230 = vmatprep.subr.mxu0 0.0
    %4231 = vmatpush1.xpose.msra.mxu0 %v4221
    %4232 = vmatprep.subr.mxu0 0.0
    %4233 = vmatpush1.xpose.msra.mxu0 %v4224
    %4234 = vmatprep.subr.mxu0 0.0
    %4235 = vmatpush1.xpose.msra.mxu0 0.0
    %4236 = vmatprep.subr.mxu0 0.0
    %4237 = vmatpush1.xpose.msra.mxu0 0.0
    %4238 = vmatprep.subr.mxu0 0.0
    %4239 = vmatpush1.xpose.msra.mxu0 0.0
    %4240 = vmatprep.subr.mxu0 0.0
    %4241 = vmatpush1.xpose.msra.mxu0 0.0
    %4242 = vmatprep.subr.mxu0 0.0
    %4243 = vmatpush1.xpose.msra.mxu0 0.0
    %4244 = vmatprep.subr.mxu0 0.0
    %4245 = vmatpush1.xpose.msra.mxu0 0.0
    %4246 = vmatprep.subr.mxu0 0.0
    %4247 = vmatpush1.xpose.msra.mxu0 0.0
    %4248 = vmatprep.subr.mxu0 0.0
    %4249 = vmatpush1.xpose.msra.mxu0 0.0
    %4250 = vmatprep.subr.mxu0 0.0
    %4251 = vmatpush1.xpose.msra.mxu0 0.0
    %4252 = vmatprep.subr.mxu0 0.0
    %4253 = vmatpush1.xpose.msra.mxu0 0.0
    %4254 = vmatprep.subr.mxu0 0.0
    %4255 = vmatpush1.xpose.msra.mxu0 0.0
    %4256 = vmatprep.subr.mxu0 0.0
    %4257 = vmatpush1.xpose.msra.mxu0 0.0
    %4258 = vmatprep.subr.mxu0 0.0
    %4259 = vmatpush1.xpose.msra.mxu0 0.0
    %4260 = vmatprep.subr.mxu0 0.0
    %4261 = vmatpush1.xpose.msra.mxu0 0.0
    %4262 = vmatprep.subr.mxu0 0.0
    %4263 = vmatpush1.xpose.msra.mxu0 0.0
    %4264 = vmatprep.subr.mxu0 0.0
    %4265 = vmatpush1.xpose.msra.mxu0 0.0
    %4266 = vmatprep.subr.mxu0 0.0
    %4267 = vmatpush1.xpose.msra.mxu0 0.0
    %4268 = vmatprep.subr.mxu0 0.0
    %4269 = vmatpush1.xpose.msra.mxu0 0.0
    %4270 = vmatprep.subr.mxu0 0.0
    %4271 = vmatpush1.xpose.msra.mxu0 0.0
    %4272 = vmatprep.subr.mxu0 0.0
    %4273 = vmatpush1.xpose.msra.mxu0 0.0
    %4274 = vmatprep.subr.mxu0 0.0
    %4275 = vmatpush1.xpose.msra.mxu0 0.0
    %4276 = vmatprep.subr.mxu0 0.0
    %4277 = vmatpush1.xpose.msra.mxu0 0.0
    %4278 = vmatprep.subr.mxu0 0.0
    %4279 = vmatpush1.xpose.msra.mxu0 0.0
    %4280 = vmatprep.subr.mxu0 0.0
    %4281 = vmatpush1.xpose.msra.mxu0 0.0
    %4282 = vmatprep.subr.mxu0 0.0
    %4283 = vmatpush1.xpose.msra.mxu0 0.0
    %4284 = vmatprep.subr.mxu0 0.0
    %4285 = vmatpush1.xpose.msra.mxu0 0.0
    %4286 = vmatprep.subr.mxu0 0.0
    %4287 = vmatpush1.xpose.msra.mxu0 0.0
    %4288 = vmatprep.subr.mxu0 0.0
    %4289 = vmatpush1.xpose.msra.mxu0 0.0
    %4290 = vmatprep.mubr.f32.mxu0 0.0
    %4291 = vmatmul.mubr.f32.gmra.mrb[0].mxu0 %v4203
    %v4292 = vpop.f32.mrb[0].mxu0
    %v4293 = vadd.f32 %v591, %v4292
    %v4294 = vpop.f32.mrb[0].mxu0
    %4295 = vmatprep.mubr.f32.mxu0 0.0
    %4296 = vmatmul.mubr.f32.gmra.mrb[0].mxu0 %v4206
    %v4297 = vpop.f32.mrb[0].mxu0
    %v4298 = vadd.f32 %v592, %v4297
    %v4299 = vpop.f32.mrb[0].mxu0
    %4300 = vmatprep.mubr.f32.mxu0 0.0
    %4301 = vmatmul.mubr.f32.gmra.mrb[0].mxu0 %v4209
    %v4302 = vpop.f32.mrb[0].mxu0
    %v4303 = vadd.f32 %v593, %v4302
    %v4304 = vpop.f32.mrb[0].mxu0
    %4305 = vmatprep.mubr.f32.mxu0 0.0
    %4306 = vmatmul.mubr.f32.gmra.mrb[0].mxu0 %v4212
    %v4307 = vpop.f32.mrb[0].mxu0
    %v4308 = vadd.f32 %v594, %v4307
    %v4309 = vpop.f32.mrb[0].mxu0
    %4310 = vdwg.mxu0
    %v4311 = vsel %vm814, %v4293, -inf
    %4312 = vmax.xlane.f32.xlu0 %v4311
    %v4313 = vpop.xlane.xlu0 %4312
    %v4314 = vsel %vm814, %v4298, -inf
    %4315 = vmax.xlane.f32.xlu0 %v4314
    %v4316 = vpop.xlane.xlu0 %4315
    %v4317 = vsel %vm814, %v4303, -inf
    %4318 = vmax.xlane.f32.xlu0 %v4317
    %v4319 = vpop.xlane.xlu0 %4318
    %v4320 = vsel %vm814, %v4308, -inf
    %4321 = vmax.xlane.f32.xlu0 %v4320
    %v4322 = vpop.xlane.xlu0 %4321
    %v4323 = vsub.f32 %v4293, %v4313
    %v4324 = vsub.f32 %v4298, %v4316
    %v4325 = vsub.f32 %v4303, %v4319
    %v4326 = vsub.f32 %v4308, %v4322
    %v4327 = vmul.f32 %v4323, 1.442695
    %v4328 = vpow.pop %v4327
    %v4329 = vmul.f32 %v4324, 1.442695
    %v4330 = vpow.pop %v4329
    %v4331 = vmul.f32 %v4325, 1.442695
    %v4332 = vpow.pop %v4331
    %v4333 = vmul.f32 %v4326, 1.442695
    %v4334 = vpow.pop %v4333
    %v4335 = vmul.f32 %v4328, %v583
    %v4336 = vmul.f32 %v4330, %v584
    %v4337 = vmul.f32 %v4332, %v585
    %v4338 = vmul.f32 %v4334, %v586
    %v4339 = vsel %vm814, %v4335, 0.0
    %4340 = vadd.xlane.f32.xlu0 %v4339
    %v4341 = vpop.xlane.xlu0 %4340
    %v4342 = vsel %vm814, %v4336, 0.0
    %4343 = vadd.xlane.f32.xlu0 %v4342
    %v4344 = vpop.xlane.xlu0 %4343
    %v4345 = vsel %vm814, %v4337, 0.0
    %4346 = vadd.xlane.f32.xlu0 %v4345
    %v4347 = vpop.xlane.xlu0 %4346
    %v4348 = vsel %vm814, %v4338, 0.0
    %4349 = vadd.xlane.f32.xlu0 %v4348
    %v4350 = vpop.xlane.xlu0 %4349
    %vm4351 = vcmp.gt.f32.partialorder %v4341, 0.0
    %vm4352 = vcmp.gt.f32.partialorder %v4344, 0.0
    %vm4353 = vcmp.gt.f32.partialorder %v4347, 0.0
    %vm4354 = vcmp.gt.f32.partialorder %v4350, 0.0
    %v4355 = vsel %vm4351, %v4341, 1.0
    %v4356 = vsel %vm4352, %v4344, 1.0
    %v4357 = vsel %vm4353, %v4347, 1.0
    %v4358 = vsel %vm4354, %v4350, 1.0
    %v4359 = vrcp.pop %v4355
    %v4360 = vmul.f32 %v4335, %v4359
    %v4361 = vrcp.pop %v4356
    %v4362 = vmul.f32 %v4336, %v4361
    %v4363 = vrcp.pop %v4357
    %v4364 = vmul.f32 %v4337, %v4363
    %v4365 = vrcp.pop %v4358
    %v4366 = vmul.f32 %v4338, %v4365
    %s4367 = scalar_lea.vmem [#allocation6], 2400
    %v4368 = vld [vmem:[%s4367] sm:$0xff]
    %v4369 = vld [vmem:[%s4367 + $0x8] sm:$0xff]
    %v4370 = vld [vmem:[%s4367 + $0x10] sm:$0xff]
    %v4371 = vld [vmem:[%s4367 + $0x18] sm:$0xff]
    %v4372 = vld [vmem:[%s4367 + $0x20] sm:$0xff]
    %v4373 = vld [vmem:[%s4367 + $0x28] sm:$0xff]
    %v4374 = vld [vmem:[%s4367 + $0x30] sm:$0xff]
    %v4375 = vld [vmem:[%s4367 + $0x38] sm:$0xff]
    %v4376 = vld [vmem:[%s4367 + $0x40] sm:$0xff]
    %v4377 = vld [vmem:[%s4367 + $0x48] sm:$0xff]
    %v4378 = vld [vmem:[%s4367 + $0x50] sm:$0xff]
    %v4379 = vld [vmem:[%s4367 + $0x58] sm:$0xff]
    %v4381 = vsel %vm143, %v4066, 0
    %v4384 = vsel %vm143, %v4071, 0
    %v4387 = vsel %vm143, %v4076, 0
    %v4390 = vsel %vm143, %v4081, 0
    %4392 = vmatprep.subr.mxu0 0.0
    %4393 = vmatpush1.msra.mxu0 %v4368
    %4394 = vmatprep.subr.mxu0 0.0
    %4395 = vmatpush1.msra.mxu0 %v4369
    %4396 = vmatprep.subr.mxu0 0.0
    %4397 = vmatpush1.msra.mxu0 %v4370
    %4398 = vmatprep.subr.mxu0 0.0
    %4399 = vmatpush1.msra.mxu0 %v4371
    %4400 = vmatprep.subr.mxu0 0.0
    %4401 = vmatpush1.msra.mxu0 %v4372
    %4402 = vmatprep.subr.mxu0 0.0
    %4403 = vmatpush1.msra.mxu0 %v4373
    %4404 = vmatprep.subr.mxu0 0.0
    %4405 = vmatpush1.msra.mxu0 %v4374
    %4406 = vmatprep.subr.mxu0 0.0
    %4407 = vmatpush1.msra.mxu0 %v4375
    %4408 = vmatprep.subr.mxu0 0.0
    %4409 = vmatpush1.msra.mxu0 %v4376
    %4410 = vmatprep.subr.mxu0 0.0
    %4411 = vmatpush1.msra.mxu0 %v4377
    %4412 = vmatprep.subr.mxu0 0.0
    %4413 = vmatpush1.msra.mxu0 %v4378
    %4414 = vmatprep.subr.mxu0 0.0
    %4415 = vmatpush1.msra.mxu0 %v4379
    %4416 = vmatprep.subr.mxu0 0.0
    %4417 = vmatpush1.msra.mxu0 0.0
    %4418 = vmatprep.subr.mxu0 0.0
    %4419 = vmatpush1.msra.mxu0 0.0
    %4420 = vmatprep.subr.mxu0 0.0
    %4421 = vmatpush1.msra.mxu0 0.0
    %4422 = vmatprep.subr.mxu0 0.0
    %4423 = vmatpush1.msra.mxu0 0.0
    %4424 = vmatprep.subr.mxu0 0.0
    %4425 = vmatpush1.msra.mxu0 0.0
    %4426 = vmatprep.subr.mxu0 0.0
    %4427 = vmatpush1.msra.mxu0 0.0
    %4428 = vmatprep.subr.mxu0 0.0
    %4429 = vmatpush1.msra.mxu0 0.0
    %4430 = vmatprep.subr.mxu0 0.0
    %4431 = vmatpush1.msra.mxu0 0.0
    %4432 = vmatprep.subr.mxu0 0.0
    %4433 = vmatpush1.msra.mxu0 0.0
    %4434 = vmatprep.subr.mxu0 0.0
    %4435 = vmatpush1.msra.mxu0 0.0
    %4436 = vmatprep.subr.mxu0 0.0
    %4437 = vmatpush1.msra.mxu0 0.0
    %4438 = vmatprep.subr.mxu0 0.0
    %4439 = vmatpush1.msra.mxu0 0.0
    %4440 = vmatprep.subr.mxu0 0.0
    %4441 = vmatpush1.msra.mxu0 0.0
    %4442 = vmatprep.subr.mxu0 0.0
    %4443 = vmatpush1.msra.mxu0 0.0
    %4444 = vmatprep.subr.mxu0 0.0
    %4445 = vmatpush1.msra.mxu0 0.0
    %4446 = vmatprep.subr.mxu0 0.0
    %4447 = vmatpush1.msra.mxu0 0.0
    %4448 = vmatprep.subr.mxu0 0.0
    %4449 = vmatpush1.msra.mxu0 0.0
    %4450 = vmatprep.subr.mxu0 0.0
    %4451 = vmatpush1.msra.mxu0 0.0
    %4452 = vmatprep.subr.mxu0 0.0
    %4453 = vmatpush1.msra.mxu0 0.0
    %4454 = vmatprep.subr.mxu0 0.0
    %4455 = vmatpush1.msra.mxu0 0.0
    %4456 = vmatprep.mubr.f32.mxu0 0.0
    %4457 = vmatmul.mubr.f32.gmra.mrb[0].mxu0 %v4381
    %v4458 = vpop.f32.mrb[0].mxu0
    %v4459 = vadd.f32 0.0, %v4458
    %v4460 = vpop.f32.mrb[0].mxu0
    %4461 = vmatprep.mubr.f32.mxu0 0.0
    %4462 = vmatmul.mubr.f32.gmra.mrb[0].mxu0 %v4384
    %v4463 = vpop.f32.mrb[0].mxu0
    %v4464 = vadd.f32 0.0, %v4463
    %v4465 = vpop.f32.mrb[0].mxu0
    %4466 = vmatprep.mubr.f32.mxu0 0.0
    %4467 = vmatmul.mubr.f32.gmra.mrb[0].mxu0 %v4387
    %v4468 = vpop.f32.mrb[0].mxu0
    %v4469 = vadd.f32 0.0, %v4468
    %v4470 = vpop.f32.mrb[0].mxu0
    %4471 = vmatprep.mubr.f32.mxu0 0.0
    %4472 = vmatmul.mubr.f32.gmra.mrb[0].mxu0 %v4390
    %v4473 = vpop.f32.mrb[0].mxu0
    %v4474 = vadd.f32 0.0, %v4473
    %v4475 = vpop.f32.mrb[0].mxu0
    %4476 = vdwg.mxu0
    %v4478 = vsel %vm143, %v4088, 0
    %v4481 = vsel %vm143, %v4089, 0
    %v4484 = vsel %vm143, %v4090, 0
    %v4487 = vsel %vm143, %v4091, 0
    %4489 = vmatprep.subr.mxu0 0.0
    %4490 = vmatpush1.xpose.msra.mxu0 %v4215
    %4491 = vmatprep.subr.mxu0 0.0
    %4492 = vmatpush1.xpose.msra.mxu0 %v4218
    %4493 = vmatprep.subr.mxu0 0.0
    %4494 = vmatpush1.xpose.msra.mxu0 %v4221
    %4495 = vmatprep.subr.mxu0 0.0
    %4496 = vmatpush1.xpose.msra.mxu0 %v4224
    %4497 = vmatprep.subr.mxu0 0.0
    %4498 = vmatpush1.xpose.msra.mxu0 0.0
    %4499 = vmatprep.subr.mxu0 0.0
    %4500 = vmatpush1.xpose.msra.mxu0 0.0
    %4501 = vmatprep.subr.mxu0 0.0
    %4502 = vmatpush1.xpose.msra.mxu0 0.0
    %4503 = vmatprep.subr.mxu0 0.0
    %4504 = vmatpush1.xpose.msra.mxu0 0.0
    %4505 = vmatprep.subr.mxu0 0.0
    %4506 = vmatpush1.xpose.msra.mxu0 0.0
    %4507 = vmatprep.subr.mxu0 0.0
    %4508 = vmatpush1.xpose.msra.mxu0 0.0
    %4509 = vmatprep.subr.mxu0 0.0
    %4510 = vmatpush1.xpose.msra.mxu0 0.0
    %4511 = vmatprep.subr.mxu0 0.0
    %4512 = vmatpush1.xpose.msra.mxu0 0.0
    %4513 = vmatprep.subr.mxu0 0.0
    %4514 = vmatpush1.xpose.msra.mxu0 0.0
    %4515 = vmatprep.subr.mxu0 0.0
    %4516 = vmatpush1.xpose.msra.mxu0 0.0
    %4517 = vmatprep.subr.mxu0 0.0
    %4518 = vmatpush1.xpose.msra.mxu0 0.0
    %4519 = vmatprep.subr.mxu0 0.0
    %4520 = vmatpush1.xpose.msra.mxu0 0.0
    %4521 = vmatprep.subr.mxu0 0.0
    %4522 = vmatpush1.xpose.msra.mxu0 0.0
    %4523 = vmatprep.subr.mxu0 0.0
    %4524 = vmatpush1.xpose.msra.mxu0 0.0
    %4525 = vmatprep.subr.mxu0 0.0
    %4526 = vmatpush1.xpose.msra.mxu0 0.0
    %4527 = vmatprep.subr.mxu0 0.0
    %4528 = vmatpush1.xpose.msra.mxu0 0.0
    %4529 = vmatprep.subr.mxu0 0.0
    %4530 = vmatpush1.xpose.msra.mxu0 0.0
    %4531 = vmatprep.subr.mxu0 0.0
    %4532 = vmatpush1.xpose.msra.mxu0 0.0
    %4533 = vmatprep.subr.mxu0 0.0
    %4534 = vmatpush1.xpose.msra.mxu0 0.0
    %4535 = vmatprep.subr.mxu0 0.0
    %4536 = vmatpush1.xpose.msra.mxu0 0.0
    %4537 = vmatprep.subr.mxu0 0.0
    %4538 = vmatpush1.xpose.msra.mxu0 0.0
    %4539 = vmatprep.subr.mxu0 0.0
    %4540 = vmatpush1.xpose.msra.mxu0 0.0
    %4541 = vmatprep.subr.mxu0 0.0
    %4542 = vmatpush1.xpose.msra.mxu0 0.0
    %4543 = vmatprep.subr.mxu0 0.0
    %4544 = vmatpush1.xpose.msra.mxu0 0.0
    %4545 = vmatprep.subr.mxu0 0.0
    %4546 = vmatpush1.xpose.msra.mxu0 0.0
    %4547 = vmatprep.subr.mxu0 0.0
    %4548 = vmatpush1.xpose.msra.mxu0 0.0
    %4549 = vmatprep.subr.mxu0 0.0
    %4550 = vmatpush1.xpose.msra.mxu0 0.0
    %4551 = vmatprep.subr.mxu0 0.0
    %4552 = vmatpush1.xpose.msra.mxu0 0.0
    %4553 = vmatprep.mubr.f32.mxu0 0.0
    %4554 = vmatmul.mubr.f32.gmra.mrb[0].mxu0 %v4478
    %v4555 = vpop.f32.mrb[0].mxu0
    %v4556 = vadd.f32 %v591, %v4555
    %v4557 = vpop.f32.mrb[0].mxu0
    %4558 = vmatprep.mubr.f32.mxu0 0.0
    %4559 = vmatmul.mubr.f32.gmra.mrb[0].mxu0 %v4481
    %v4560 = vpop.f32.mrb[0].mxu0
    %v4561 = vadd.f32 %v592, %v4560
    %v4562 = vpop.f32.mrb[0].mxu0
    %4563 = vmatprep.mubr.f32.mxu0 0.0
    %4564 = vmatmul.mubr.f32.gmra.mrb[0].mxu0 %v4484
    %v4565 = vpop.f32.mrb[0].mxu0
    %v4566 = vadd.f32 %v593, %v4565
    %v4567 = vpop.f32.mrb[0].mxu0
    %4568 = vmatprep.mubr.f32.mxu0 0.0
    %4569 = vmatmul.mubr.f32.gmra.mrb[0].mxu0 %v4487
    %v4570 = vpop.f32.mrb[0].mxu0
    %v4571 = vadd.f32 %v594, %v4570
    %v4572 = vpop.f32.mrb[0].mxu0
    %4573 = vdwg.mxu0
    %v4574 = vsel %vm814, %v4556, -inf
    %4575 = vmax.xlane.f32.xlu0 %v4574
    %v4576 = vpop.xlane.xlu0 %4575
    %v4577 = vsel %vm814, %v4561, -inf
    %4578 = vmax.xlane.f32.xlu0 %v4577
    %v4579 = vpop.xlane.xlu0 %4578
    %v4580 = vsel %vm814, %v4566, -inf
    %4581 = vmax.xlane.f32.xlu0 %v4580
    %v4582 = vpop.xlane.xlu0 %4581
    %v4583 = vsel %vm814, %v4571, -inf
    %4584 = vmax.xlane.f32.xlu0 %v4583
    %v4585 = vpop.xlane.xlu0 %4584
    %v4586 = vsub.f32 %v4556, %v4576
    %v4587 = vsub.f32 %v4561, %v4579
    %v4588 = vsub.f32 %v4566, %v4582
    %v4589 = vsub.f32 %v4571, %v4585
    %v4590 = vmul.f32 %v4586, 1.442695
    %v4591 = vpow.pop %v4590
    %v4592 = vmul.f32 %v4587, 1.442695
    %v4593 = vpow.pop %v4592
    %v4594 = vmul.f32 %v4588, 1.442695
    %v4595 = vpow.pop %v4594
    %v4596 = vmul.f32 %v4589, 1.442695
    %v4597 = vpow.pop %v4596
    %v4598 = vmul.f32 %v4591, %v583
    %v4599 = vmul.f32 %v4593, %v584
    %v4600 = vmul.f32 %v4595, %v585
    %v4601 = vmul.f32 %v4597, %v586
    %v4602 = vsel %vm814, %v4598, 0.0
    %4603 = vadd.xlane.f32.xlu0 %v4602
    %v4604 = vpop.xlane.xlu0 %4603
    %v4605 = vsel %vm814, %v4599, 0.0
    %4606 = vadd.xlane.f32.xlu0 %v4605
    %v4607 = vpop.xlane.xlu0 %4606
    %v4608 = vsel %vm814, %v4600, 0.0
    %4609 = vadd.xlane.f32.xlu0 %v4608
    %v4610 = vpop.xlane.xlu0 %4609
    %v4611 = vsel %vm814, %v4601, 0.0
    %4612 = vadd.xlane.f32.xlu0 %v4611
    %v4613 = vpop.xlane.xlu0 %4612
    %vm4614 = vcmp.gt.f32.partialorder %v4604, 0.0
    %vm4615 = vcmp.gt.f32.partialorder %v4607, 0.0
    %vm4616 = vcmp.gt.f32.partialorder %v4610, 0.0
    %vm4617 = vcmp.gt.f32.partialorder %v4613, 0.0
    %v4618 = vsel %vm4614, %v4604, 1.0
    %v4619 = vsel %vm4615, %v4607, 1.0
    %v4620 = vsel %vm4616, %v4610, 1.0
    %v4621 = vsel %vm4617, %v4613, 1.0
    %v4622 = vrcp.pop %v4618
    %v4623 = vmul.f32 %v4598, %v4622
    %v4624 = vrcp.pop %v4619
    %v4625 = vmul.f32 %v4599, %v4624
    %v4626 = vrcp.pop %v4620
    %v4627 = vmul.f32 %v4600, %v4626
    %v4628 = vrcp.pop %v4621
    %v4629 = vmul.f32 %v4601, %v4628
    %s4630 = scalar_lea.vmem [#allocation6], 2496
    %v4631 = vld [vmem:[%s4630] sm:$0xff]
    %v4632 = vld [vmem:[%s4630 + $0x8] sm:$0xff]
    %v4633 = vld [vmem:[%s4630 + $0x10] sm:$0xff]
    %v4634 = vld [vmem:[%s4630 + $0x18] sm:$0xff]
    %v4635 = vld [vmem:[%s4630 + $0x20] sm:$0xff]
    %v4636 = vld [vmem:[%s4630 + $0x28] sm:$0xff]
    %v4637 = vld [vmem:[%s4630 + $0x30] sm:$0xff]
    %v4638 = vld [vmem:[%s4630 + $0x38] sm:$0xff]
    %v4639 = vld [vmem:[%s4630 + $0x40] sm:$0xff]
    %v4640 = vld [vmem:[%s4630 + $0x48] sm:$0xff]
    %v4641 = vld [vmem:[%s4630 + $0x50] sm:$0xff]
    %v4642 = vld [vmem:[%s4630 + $0x58] sm:$0xff]
    %4643 = vmatprep.subr.mxu0 0.0
    %4644 = vmatpush1.msra.mxu0 %v4631
    %4645 = vmatprep.subr.mxu0 0.0
    %4646 = vmatpush1.msra.mxu0 %v4632
    %4647 = vmatprep.subr.mxu0 0.0
    %4648 = vmatpush1.msra.mxu0 %v4633
    %4649 = vmatprep.subr.mxu0 0.0
    %4650 = vmatpush1.msra.mxu0 %v4634
    %4651 = vmatprep.subr.mxu0 0.0
    %4652 = vmatpush1.msra.mxu0 %v4635
    %4653 = vmatprep.subr.mxu0 0.0
    %4654 = vmatpush1.msra.mxu0 %v4636
    %4655 = vmatprep.subr.mxu0 0.0
    %4656 = vmatpush1.msra.mxu0 %v4637
    %4657 = vmatprep.subr.mxu0 0.0
    %4658 = vmatpush1.msra.mxu0 %v4638
    %4659 = vmatprep.subr.mxu0 0.0
    %4660 = vmatpush1.msra.mxu0 %v4639
    %4661 = vmatprep.subr.mxu0 0.0
    %4662 = vmatpush1.msra.mxu0 %v4640
    %4663 = vmatprep.subr.mxu0 0.0
    %4664 = vmatpush1.msra.mxu0 %v4641
    %4665 = vmatprep.subr.mxu0 0.0
    %4666 = vmatpush1.msra.mxu0 %v4642
    %4667 = vmatprep.subr.mxu0 0.0
    %4668 = vmatpush1.msra.mxu0 0.0
    %4669 = vmatprep.subr.mxu0 0.0
    %4670 = vmatpush1.msra.mxu0 0.0
    %4671 = vmatprep.subr.mxu0 0.0
    %4672 = vmatpush1.msra.mxu0 0.0
    %4673 = vmatprep.subr.mxu0 0.0
    %4674 = vmatpush1.msra.mxu0 0.0
    %4675 = vmatprep.subr.mxu0 0.0
    %4676 = vmatpush1.msra.mxu0 0.0
    %4677 = vmatprep.subr.mxu0 0.0
    %4678 = vmatpush1.msra.mxu0 0.0
    %4679 = vmatprep.subr.mxu0 0.0
    %4680 = vmatpush1.msra.mxu0 0.0
    %4681 = vmatprep.subr.mxu0 0.0
    %4682 = vmatpush1.msra.mxu0 0.0
    %4683 = vmatprep.subr.mxu0 0.0
    %4684 = vmatpush1.msra.mxu0 0.0
    %4685 = vmatprep.subr.mxu0 0.0
    %4686 = vmatpush1.msra.mxu0 0.0
    %4687 = vmatprep.subr.mxu0 0.0
    %4688 = vmatpush1.msra.mxu0 0.0
    %4689 = vmatprep.subr.mxu0 0.0
    %4690 = vmatpush1.msra.mxu0 0.0
    %4691 = vmatprep.subr.mxu0 0.0
    %4692 = vmatpush1.msra.mxu0 0.0
    %4693 = vmatprep.subr.mxu0 0.0
    %4694 = vmatpush1.msra.mxu0 0.0
    %4695 = vmatprep.subr.mxu0 0.0
    %4696 = vmatpush1.msra.mxu0 0.0
    %4697 = vmatprep.subr.mxu0 0.0
    %4698 = vmatpush1.msra.mxu0 0.0
    %4699 = vmatprep.subr.mxu0 0.0
    %4700 = vmatpush1.msra.mxu0 0.0
    %4701 = vmatprep.subr.mxu0 0.0
    %4702 = vmatpush1.msra.mxu0 0.0
    %4703 = vmatprep.subr.mxu0 0.0
    %4704 = vmatpush1.msra.mxu0 0.0
    %4705 = vmatprep.subr.mxu0 0.0
    %4706 = vmatpush1.msra.mxu0 0.0
    %4707 = vmatprep.mubr.f32.mxu0 0.0
    %4708 = vmatmul.mubr.f32.gmra.mrb[0].mxu0 %v4381
    %v4709 = vpop.f32.mrb[0].mxu0
    %v4710 = vadd.f32 0.0, %v4709
    %v4711 = vpop.f32.mrb[0].mxu0
    %4712 = vmatprep.mubr.f32.mxu0 0.0
    %4713 = vmatmul.mubr.f32.gmra.mrb[0].mxu0 %v4384
    %v4714 = vpop.f32.mrb[0].mxu0
    %v4715 = vadd.f32 0.0, %v4714
    %v4716 = vpop.f32.mrb[0].mxu0
    %4717 = vmatprep.mubr.f32.mxu0 0.0
    %4718 = vmatmul.mubr.f32.gmra.mrb[0].mxu0 %v4387
    %v4719 = vpop.f32.mrb[0].mxu0
    %v4720 = vadd.f32 0.0, %v4719
    %v4721 = vpop.f32.mrb[0].mxu0
    %4722 = vmatprep.mubr.f32.mxu0 0.0
    %4723 = vmatmul.mubr.f32.gmra.mrb[0].mxu0 %v4390
    %v4724 = vpop.f32.mrb[0].mxu0
    %v4725 = vadd.f32 0.0, %v4724
    %v4726 = vpop.f32.mrb[0].mxu0
    %4727 = vdwg.mxu0
    %4732 = vrot.lane.b32.xlu0 %v4623, 32
    %v4733 = vpop.permute.xlu0 %4732
    %4734 = vrot.lane.b32.xlu0 %v4625, 32
    %v4735 = vpop.permute.xlu0 %4734
    %4736 = vrot.lane.b32.xlu0 %v4627, 32
    %v4737 = vpop.permute.xlu0 %4736
    %4738 = vrot.lane.b32.xlu0 %v4629, 32
    %v4739 = vpop.permute.xlu0 %4738
    %v4744 = vsel %vm814, %v4360, %v4733
    %v4745 = vsel %vm814, %v4362, %v4735
    %v4746 = vsel %vm814, %v4364, %v4737
    %v4747 = vsel %vm814, %v4366, %v4739
    %s4748 = scalar_lea.vmem [#allocation6], 2112
    %v4749 = vld [vmem:[%s4748] sm:$0xff]
    %v4750 = vld [vmem:[%s4748 + $0x8] sm:$0xff]
    %v4751 = vld [vmem:[%s4748 + $0x10] sm:$0xff]
    %v4752 = vld [vmem:[%s4748 + $0x18] sm:$0xff]
    %v4753 = vld [vmem:[%s4748 + $0x20] sm:$0xff]
    %v4754 = vld [vmem:[%s4748 + $0x28] sm:$0xff]
    %v4755 = vld [vmem:[%s4748 + $0x30] sm:$0xff]
    %v4756 = vld [vmem:[%s4748 + $0x38] sm:$0xff]
    %v4757 = vld [vmem:[%s4748 + $0x40] sm:$0xff]
    %v4758 = vld [vmem:[%s4748 + $0x48] sm:$0xff]
    %v4759 = vld [vmem:[%s4748 + $0x50] sm:$0xff]
    %v4760 = vld [vmem:[%s4748 + $0x58] sm:$0xff]
    %4761 = vmatprep.subr.mxu0 0.0
    %4762 = vmatpush1.msra.mxu0 %v4749
    %4763 = vmatprep.subr.mxu0 0.0
    %4764 = vmatpush1.msra.mxu0 %v4750
    %4765 = vmatprep.subr.mxu0 0.0
    %4766 = vmatpush1.msra.mxu0 %v4751
    %4767 = vmatprep.subr.mxu0 0.0
    %4768 = vmatpush1.msra.mxu0 %v4752
    %4769 = vmatprep.subr.mxu0 0.0
    %4770 = vmatpush1.msra.mxu0 %v4753
    %4771 = vmatprep.subr.mxu0 0.0
    %4772 = vmatpush1.msra.mxu0 %v4754
    %4773 = vmatprep.subr.mxu0 0.0
    %4774 = vmatpush1.msra.mxu0 %v4755
    %4775 = vmatprep.subr.mxu0 0.0
    %4776 = vmatpush1.msra.mxu0 %v4756
    %4777 = vmatprep.subr.mxu0 0.0
    %4778 = vmatpush1.msra.mxu0 %v4757
    %4779 = vmatprep.subr.mxu0 0.0
    %4780 = vmatpush1.msra.mxu0 %v4758
    %4781 = vmatprep.subr.mxu0 0.0
    %4782 = vmatpush1.msra.mxu0 %v4759
    %4783 = vmatprep.subr.mxu0 0.0
    %4784 = vmatpush1.msra.mxu0 %v4760
    %4785 = vmatprep.subr.mxu0 0.0
    %4786 = vmatpush1.msra.mxu0 0.0
    %4787 = vmatprep.subr.mxu0 0.0
    %4788 = vmatpush1.msra.mxu0 0.0
    %4789 = vmatprep.subr.mxu0 0.0
    %4790 = vmatpush1.msra.mxu0 0.0
    %4791 = vmatprep.subr.mxu0 0.0
    %4792 = vmatpush1.msra.mxu0 0.0
    %4793 = vmatprep.subr.mxu0 0.0
    %4794 = vmatpush1.msra.mxu0 0.0
    %4795 = vmatprep.subr.mxu0 0.0
    %4796 = vmatpush1.msra.mxu0 0.0
    %4797 = vmatprep.subr.mxu0 0.0
    %4798 = vmatpush1.msra.mxu0 0.0
    %4799 = vmatprep.subr.mxu0 0.0
    %4800 = vmatpush1.msra.mxu0 0.0
    %4801 = vmatprep.subr.mxu0 0.0
    %4802 = vmatpush1.msra.mxu0 0.0
    %4803 = vmatprep.subr.mxu0 0.0
    %4804 = vmatpush1.msra.mxu0 0.0
    %4805 = vmatprep.subr.mxu0 0.0
    %4806 = vmatpush1.msra.mxu0 0.0
    %4807 = vmatprep.subr.mxu0 0.0
    %4808 = vmatpush1.msra.mxu0 0.0
    %4809 = vmatprep.subr.mxu0 0.0
    %4810 = vmatpush1.msra.mxu0 0.0
    %4811 = vmatprep.subr.mxu0 0.0
    %4812 = vmatpush1.msra.mxu0 0.0
    %4813 = vmatprep.subr.mxu0 0.0
    %4814 = vmatpush1.msra.mxu0 0.0
    %4815 = vmatprep.subr.mxu0 0.0
    %4816 = vmatpush1.msra.mxu0 0.0
    %4817 = vmatprep.subr.mxu0 0.0
    %4818 = vmatpush1.msra.mxu0 0.0
    %4819 = vmatprep.subr.mxu0 0.0
    %4820 = vmatpush1.msra.mxu0 0.0
    %4821 = vmatprep.subr.mxu0 0.0
    %4822 = vmatpush1.msra.mxu0 0.0
    %4823 = vmatprep.subr.mxu0 0.0
    %4824 = vmatpush1.msra.mxu0 0.0
    %4825 = vmatprep.mubr.f32.mxu0 0.0
    %4826 = vmatmul.mubr.f32.gmra.mrb[0].mxu0 %v4106
    %v4827 = vpop.f32.mrb[0].mxu0
    %v4828 = vadd.f32 0.0, %v4827
    %v4829 = vpop.f32.mrb[0].mxu0
    %4830 = vmatprep.mubr.f32.mxu0 0.0
    %4831 = vmatmul.mubr.f32.gmra.mrb[0].mxu0 %v4109
    %v4832 = vpop.f32.mrb[0].mxu0
    %v4833 = vadd.f32 0.0, %v4832
    %v4834 = vpop.f32.mrb[0].mxu0
    %4835 = vmatprep.mubr.f32.mxu0 0.0
    %4836 = vmatmul.mubr.f32.gmra.mrb[0].mxu0 %v4112
    %v4837 = vpop.f32.mrb[0].mxu0
    %v4838 = vadd.f32 0.0, %v4837
    %v4839 = vpop.f32.mrb[0].mxu0
    %4840 = vmatprep.mubr.f32.mxu0 0.0
    %4841 = vmatmul.mubr.f32.gmra.mrb[0].mxu0 %v4115
    %v4842 = vpop.f32.mrb[0].mxu0
    %v4843 = vadd.f32 0.0, %v4842
    %v4844 = vpop.f32.mrb[0].mxu0
    %4845 = vdwg.mxu0
    %v4847 = vsel %vm143, %v4828, 0
    %v4850 = vsel %vm143, %v4833, 0
    %v4853 = vsel %vm143, %v4838, 0
    %v4856 = vsel %vm143, %v4843, 0
    %4858 = vmatprep.subr.mxu0 0.0
    %4859 = vmatpush1.xpose.msra.mxu0 %v4847
    %4860 = vmatprep.subr.mxu0 0.0
    %4861 = vmatpush1.xpose.msra.mxu0 %v4850
    %4862 = vmatprep.subr.mxu0 0.0
    %4863 = vmatpush1.xpose.msra.mxu0 %v4853
    %4864 = vmatprep.subr.mxu0 0.0
    %4865 = vmatpush1.xpose.msra.mxu0 %v4856
    %4866 = vmatprep.subr.mxu0 0.0
    %4867 = vmatpush1.xpose.msra.mxu0 0.0
    %4868 = vmatprep.subr.mxu0 0.0
    %4869 = vmatpush1.xpose.msra.mxu0 0.0
    %4870 = vmatprep.subr.mxu0 0.0
    %4871 = vmatpush1.xpose.msra.mxu0 0.0
    %4872 = vmatprep.subr.mxu0 0.0
    %4873 = vmatpush1.xpose.msra.mxu0 0.0
    %4874 = vmatprep.subr.mxu0 0.0
    %4875 = vmatpush1.xpose.msra.mxu0 0.0
    %4876 = vmatprep.subr.mxu0 0.0
    %4877 = vmatpush1.xpose.msra.mxu0 0.0
    %4878 = vmatprep.subr.mxu0 0.0
    %4879 = vmatpush1.xpose.msra.mxu0 0.0
    %4880 = vmatprep.subr.mxu0 0.0
    %4881 = vmatpush1.xpose.msra.mxu0 0.0
    %4882 = vmatprep.subr.mxu0 0.0
    %4883 = vmatpush1.xpose.msra.mxu0 0.0
    %4884 = vmatprep.subr.mxu0 0.0
    %4885 = vmatpush1.xpose.msra.mxu0 0.0
    %4886 = vmatprep.subr.mxu0 0.0
    %4887 = vmatpush1.xpose.msra.mxu0 0.0
    %4888 = vmatprep.subr.mxu0 0.0
    %4889 = vmatpush1.xpose.msra.mxu0 0.0
    %4890 = vmatprep.subr.mxu0 0.0
    %4891 = vmatpush1.xpose.msra.mxu0 0.0
    %4892 = vmatprep.subr.mxu0 0.0
    %4893 = vmatpush1.xpose.msra.mxu0 0.0
    %4894 = vmatprep.subr.mxu0 0.0
    %4895 = vmatpush1.xpose.msra.mxu0 0.0
    %4896 = vmatprep.subr.mxu0 0.0
    %4897 = vmatpush1.xpose.msra.mxu0 0.0
    %4898 = vmatprep.subr.mxu0 0.0
    %4899 = vmatpush1.xpose.msra.mxu0 0.0
    %4900 = vmatprep.subr.mxu0 0.0
    %4901 = vmatpush1.xpose.msra.mxu0 0.0
    %4902 = vmatprep.subr.mxu0 0.0
    %4903 = vmatpush1.xpose.msra.mxu0 0.0
    %4904 = vmatprep.subr.mxu0 0.0
    %4905 = vmatpush1.xpose.msra.mxu0 0.0
    %4906 = vmatprep.subr.mxu0 0.0
    %4907 = vmatpush1.xpose.msra.mxu0 0.0
    %4908 = vmatprep.subr.mxu0 0.0
    %4909 = vmatpush1.xpose.msra.mxu0 0.0
    %4910 = vmatprep.subr.mxu0 0.0
    %4911 = vmatpush1.xpose.msra.mxu0 0.0
    %4912 = vmatprep.subr.mxu0 0.0
    %4913 = vmatpush1.xpose.msra.mxu0 0.0
    %4914 = vmatprep.subr.mxu0 0.0
    %4915 = vmatpush1.xpose.msra.mxu0 0.0
    %4916 = vmatprep.subr.mxu0 0.0
    %4917 = vmatpush1.xpose.msra.mxu0 0.0
    %4918 = vmatprep.subr.mxu0 0.0
    %4919 = vmatpush1.xpose.msra.mxu0 0.0
    %4920 = vmatprep.subr.mxu0 0.0
    %4921 = vmatpush1.xpose.msra.mxu0 0.0
    %4922 = vmatprep.mubr.f32.mxu0 0.0
    %4923 = vmatmul.mubr.f32.gmra.mrb[0].mxu0 %v4203
    %v4924 = vpop.f32.mrb[0].mxu0
    %v4925 = vadd.f32 %v1261, %v4924
    %v4926 = vpop.f32.mrb[0].mxu0
    %4927 = vmatprep.mubr.f32.mxu0 0.0
    %4928 = vmatmul.mubr.f32.gmra.mrb[0].mxu0 %v4206
    %v4929 = vpop.f32.mrb[0].mxu0
    %v4930 = vadd.f32 %v1262, %v4929
    %v4931 = vpop.f32.mrb[0].mxu0
    %4932 = vmatprep.mubr.f32.mxu0 0.0
    %4933 = vmatmul.mubr.f32.gmra.mrb[0].mxu0 %v4209
    %v4934 = vpop.f32.mrb[0].mxu0
    %v4935 = vadd.f32 %v1263, %v4934
    %v4936 = vpop.f32.mrb[0].mxu0
    %4937 = vmatprep.mubr.f32.mxu0 0.0
    %4938 = vmatmul.mubr.f32.gmra.mrb[0].mxu0 %v4212
    %v4939 = vpop.f32.mrb[0].mxu0
    %v4940 = vadd.f32 %v1264, %v4939
    %v4941 = vpop.f32.mrb[0].mxu0
    %4942 = vdwg.mxu0
    %v4943 = vsel %vm814, %v4925, -inf
    %4944 = vmax.xlane.f32.xlu0 %v4943
    %v4945 = vpop.xlane.xlu0 %4944
    %v4946 = vsel %vm814, %v4930, -inf
    %4947 = vmax.xlane.f32.xlu0 %v4946
    %v4948 = vpop.xlane.xlu0 %4947
    %v4949 = vsel %vm814, %v4935, -inf
    %4950 = vmax.xlane.f32.xlu0 %v4949
    %v4951 = vpop.xlane.xlu0 %4950
    %v4952 = vsel %vm814, %v4940, -inf
    %4953 = vmax.xlane.f32.xlu0 %v4952
    %v4954 = vpop.xlane.xlu0 %4953
    %v4955 = vsub.f32 %v4925, %v4945
    %v4956 = vsub.f32 %v4930, %v4948
    %v4957 = vsub.f32 %v4935, %v4951
    %v4958 = vsub.f32 %v4940, %v4954
    %v4959 = vmul.f32 %v4955, 1.442695
    %v4960 = vpow.pop %v4959
    %v4961 = vmul.f32 %v4956, 1.442695
    %v4962 = vpow.pop %v4961
    %v4963 = vmul.f32 %v4957, 1.442695
    %v4964 = vpow.pop %v4963
    %v4965 = vmul.f32 %v4958, 1.442695
    %v4966 = vpow.pop %v4965
    %v4967 = vmul.f32 %v4960, %v1253
    %v4968 = vmul.f32 %v4962, %v1254
    %v4969 = vmul.f32 %v4964, %v1255
    %v4970 = vmul.f32 %v4966, %v1256
    %v4971 = vsel %vm814, %v4967, 0.0
    %4972 = vadd.xlane.f32.xlu0 %v4971
    %v4973 = vpop.xlane.xlu0 %4972
    %v4974 = vsel %vm814, %v4968, 0.0
    %4975 = vadd.xlane.f32.xlu0 %v4974
    %v4976 = vpop.xlane.xlu0 %4975
    %v4977 = vsel %vm814, %v4969, 0.0
    %4978 = vadd.xlane.f32.xlu0 %v4977
    %v4979 = vpop.xlane.xlu0 %4978
    %v4980 = vsel %vm814, %v4970, 0.0
    %4981 = vadd.xlane.f32.xlu0 %v4980
    %v4982 = vpop.xlane.xlu0 %4981
    %vm4983 = vcmp.gt.f32.partialorder %v4973, 0.0
    %vm4984 = vcmp.gt.f32.partialorder %v4976, 0.0
    %vm4985 = vcmp.gt.f32.partialorder %v4979, 0.0
    %vm4986 = vcmp.gt.f32.partialorder %v4982, 0.0
    %v4987 = vsel %vm4983, %v4973, 1.0
    %v4988 = vsel %vm4984, %v4976, 1.0
    %v4989 = vsel %vm4985, %v4979, 1.0
    %v4990 = vsel %vm4986, %v4982, 1.0
    %v4991 = vrcp.pop %v4987
    %v4992 = vmul.f32 %v4967, %v4991
    %v4993 = vrcp.pop %v4988
    %v4994 = vmul.f32 %v4968, %v4993
    %v4995 = vrcp.pop %v4989
    %v4996 = vmul.f32 %v4969, %v4995
    %v4997 = vrcp.pop %v4990
    %v4998 = vmul.f32 %v4970, %v4997
    %s4999 = scalar_lea.vmem [#allocation6], 2592
    %v5000 = vld [vmem:[%s4999] sm:$0xff]
    %v5001 = vld [vmem:[%s4999 + $0x8] sm:$0xff]
    %v5002 = vld [vmem:[%s4999 + $0x10] sm:$0xff]
    %v5003 = vld [vmem:[%s4999 + $0x18] sm:$0xff]
    %v5004 = vld [vmem:[%s4999 + $0x20] sm:$0xff]
    %v5005 = vld [vmem:[%s4999 + $0x28] sm:$0xff]
    %v5006 = vld [vmem:[%s4999 + $0x30] sm:$0xff]
    %v5007 = vld [vmem:[%s4999 + $0x38] sm:$0xff]
    %v5008 = vld [vmem:[%s4999 + $0x40] sm:$0xff]
    %v5009 = vld [vmem:[%s4999 + $0x48] sm:$0xff]
    %v5010 = vld [vmem:[%s4999 + $0x50] sm:$0xff]
    %v5011 = vld [vmem:[%s4999 + $0x58] sm:$0xff]
    %5012 = vmatprep.subr.mxu0 0.0
    %5013 = vmatpush1.msra.mxu0 %v5000
    %5014 = vmatprep.subr.mxu0 0.0
    %5015 = vmatpush1.msra.mxu0 %v5001
    %5016 = vmatprep.subr.mxu0 0.0
    %5017 = vmatpush1.msra.mxu0 %v5002
    %5018 = vmatprep.subr.mxu0 0.0
    %5019 = vmatpush1.msra.mxu0 %v5003
    %5020 = vmatprep.subr.mxu0 0.0
    %5021 = vmatpush1.msra.mxu0 %v5004
    %5022 = vmatprep.subr.mxu0 0.0
    %5023 = vmatpush1.msra.mxu0 %v5005
    %5024 = vmatprep.subr.mxu0 0.0
    %5025 = vmatpush1.msra.mxu0 %v5006
    %5026 = vmatprep.subr.mxu0 0.0
    %5027 = vmatpush1.msra.mxu0 %v5007
    %5028 = vmatprep.subr.mxu0 0.0
    %5029 = vmatpush1.msra.mxu0 %v5008
    %5030 = vmatprep.subr.mxu0 0.0
    %5031 = vmatpush1.msra.mxu0 %v5009
    %5032 = vmatprep.subr.mxu0 0.0
    %5033 = vmatpush1.msra.mxu0 %v5010
    %5034 = vmatprep.subr.mxu0 0.0
    %5035 = vmatpush1.msra.mxu0 %v5011
    %5036 = vmatprep.subr.mxu0 0.0
    %5037 = vmatpush1.msra.mxu0 0.0
    %5038 = vmatprep.subr.mxu0 0.0
    %5039 = vmatpush1.msra.mxu0 0.0
    %5040 = vmatprep.subr.mxu0 0.0
    %5041 = vmatpush1.msra.mxu0 0.0
    %5042 = vmatprep.subr.mxu0 0.0
    %5043 = vmatpush1.msra.mxu0 0.0
    %5044 = vmatprep.subr.mxu0 0.0
    %5045 = vmatpush1.msra.mxu0 0.0
    %5046 = vmatprep.subr.mxu0 0.0
    %5047 = vmatpush1.msra.mxu0 0.0
    %5048 = vmatprep.subr.mxu0 0.0
    %5049 = vmatpush1.msra.mxu0 0.0
    %5050 = vmatprep.subr.mxu0 0.0
    %5051 = vmatpush1.msra.mxu0 0.0
    %5052 = vmatprep.subr.mxu0 0.0
    %5053 = vmatpush1.msra.mxu0 0.0
    %5054 = vmatprep.subr.mxu0 0.0
    %5055 = vmatpush1.msra.mxu0 0.0
    %5056 = vmatprep.subr.mxu0 0.0
    %5057 = vmatpush1.msra.mxu0 0.0
    %5058 = vmatprep.subr.mxu0 0.0
    %5059 = vmatpush1.msra.mxu0 0.0
    %5060 = vmatprep.subr.mxu0 0.0
    %5061 = vmatpush1.msra.mxu0 0.0
    %5062 = vmatprep.subr.mxu0 0.0
    %5063 = vmatpush1.msra.mxu0 0.0
    %5064 = vmatprep.subr.mxu0 0.0
    %5065 = vmatpush1.msra.mxu0 0.0
    %5066 = vmatprep.subr.mxu0 0.0
    %5067 = vmatpush1.msra.mxu0 0.0
    %5068 = vmatprep.subr.mxu0 0.0
    %5069 = vmatpush1.msra.mxu0 0.0
    %5070 = vmatprep.subr.mxu0 0.0
    %5071 = vmatpush1.msra.mxu0 0.0
    %5072 = vmatprep.subr.mxu0 0.0
    %5073 = vmatpush1.msra.mxu0 0.0
    %5074 = vmatprep.subr.mxu0 0.0
    %5075 = vmatpush1.msra.mxu0 0.0
    %5076 = vmatprep.mubr.f32.mxu0 0.0
    %5077 = vmatmul.mubr.f32.gmra.mrb[0].mxu0 %v4381
    %v5078 = vpop.f32.mrb[0].mxu0
    %v5079 = vadd.f32 0.0, %v5078
    %v5080 = vpop.f32.mrb[0].mxu0
    %5081 = vmatprep.mubr.f32.mxu0 0.0
    %5082 = vmatmul.mubr.f32.gmra.mrb[0].mxu0 %v4384
    %v5083 = vpop.f32.mrb[0].mxu0
    %v5084 = vadd.f32 0.0, %v5083
    %v5085 = vpop.f32.mrb[0].mxu0
    %5086 = vmatprep.mubr.f32.mxu0 0.0
    %5087 = vmatmul.mubr.f32.gmra.mrb[0].mxu0 %v4387
    %v5088 = vpop.f32.mrb[0].mxu0
    %v5089 = vadd.f32 0.0, %v5088
    %v5090 = vpop.f32.mrb[0].mxu0
    %5091 = vmatprep.mubr.f32.mxu0 0.0
    %5092 = vmatmul.mubr.f32.gmra.mrb[0].mxu0 %v4390
    %v5093 = vpop.f32.mrb[0].mxu0
    %v5094 = vadd.f32 0.0, %v5093
    %v5095 = vpop.f32.mrb[0].mxu0
    %5096 = vdwg.mxu0
    %5097 = vmatprep.subr.mxu0 0.0
    %5098 = vmatpush1.xpose.msra.mxu0 %v4847
    %5099 = vmatprep.subr.mxu0 0.0
    %5100 = vmatpush1.xpose.msra.mxu0 %v4850
    %5101 = vmatprep.subr.mxu0 0.0
    %5102 = vmatpush1.xpose.msra.mxu0 %v4853
    %5103 = vmatprep.subr.mxu0 0.0
    %5104 = vmatpush1.xpose.msra.mxu0 %v4856
    %5105 = vmatprep.subr.mxu0 0.0
    %5106 = vmatpush1.xpose.msra.mxu0 0.0
    %5107 = vmatprep.subr.mxu0 0.0
    %5108 = vmatpush1.xpose.msra.mxu0 0.0
    %5109 = vmatprep.subr.mxu0 0.0
    %5110 = vmatpush1.xpose.msra.mxu0 0.0
    %5111 = vmatprep.subr.mxu0 0.0
    %5112 = vmatpush1.xpose.msra.mxu0 0.0
    %5113 = vmatprep.subr.mxu0 0.0
    %5114 = vmatpush1.xpose.msra.mxu0 0.0
    %5115 = vmatprep.subr.mxu0 0.0
    %5116 = vmatpush1.xpose.msra.mxu0 0.0
    %5117 = vmatprep.subr.mxu0 0.0
    %5118 = vmatpush1.xpose.msra.mxu0 0.0
    %5119 = vmatprep.subr.mxu0 0.0
    %5120 = vmatpush1.xpose.msra.mxu0 0.0
    %5121 = vmatprep.subr.mxu0 0.0
    %5122 = vmatpush1.xpose.msra.mxu0 0.0
    %5123 = vmatprep.subr.mxu0 0.0
    %5124 = vmatpush1.xpose.msra.mxu0 0.0
    %5125 = vmatprep.subr.mxu0 0.0
    %5126 = vmatpush1.xpose.msra.mxu0 0.0
    %5127 = vmatprep.subr.mxu0 0.0
    %5128 = vmatpush1.xpose.msra.mxu0 0.0
    %5129 = vmatprep.subr.mxu0 0.0
    %5130 = vmatpush1.xpose.msra.mxu0 0.0
    %5131 = vmatprep.subr.mxu0 0.0
    %5132 = vmatpush1.xpose.msra.mxu0 0.0
    %5133 = vmatprep.subr.mxu0 0.0
    %5134 = vmatpush1.xpose.msra.mxu0 0.0
    %5135 = vmatprep.subr.mxu0 0.0
    %5136 = vmatpush1.xpose.msra.mxu0 0.0
    %5137 = vmatprep.subr.mxu0 0.0
    %5138 = vmatpush1.xpose.msra.mxu0 0.0
    %5139 = vmatprep.subr.mxu0 0.0
    %5140 = vmatpush1.xpose.msra.mxu0 0.0
    %5141 = vmatprep.subr.mxu0 0.0
    %5142 = vmatpush1.xpose.msra.mxu0 0.0
    %5143 = vmatprep.subr.mxu0 0.0
    %5144 = vmatpush1.xpose.msra.mxu0 0.0
    %5145 = vmatprep.subr.mxu0 0.0
    %5146 = vmatpush1.xpose.msra.mxu0 0.0
    %5147 = vmatprep.subr.mxu0 0.0
    %5148 = vmatpush1.xpose.msra.mxu0 0.0
    %5149 = vmatprep.subr.mxu0 0.0
    %5150 = vmatpush1.xpose.msra.mxu0 0.0
    %5151 = vmatprep.subr.mxu0 0.0
    %5152 = vmatpush1.xpose.msra.mxu0 0.0
    %5153 = vmatprep.subr.mxu0 0.0
    %5154 = vmatpush1.xpose.msra.mxu0 0.0
    %5155 = vmatprep.subr.mxu0 0.0
    %5156 = vmatpush1.xpose.msra.mxu0 0.0
    %5157 = vmatprep.subr.mxu0 0.0
    %5158 = vmatpush1.xpose.msra.mxu0 0.0
    %5159 = vmatprep.subr.mxu0 0.0
    %5160 = vmatpush1.xpose.msra.mxu0 0.0
    %5161 = vmatprep.mubr.f32.mxu0 0.0
    %5162 = vmatmul.mubr.f32.gmra.mrb[0].mxu0 %v4478
    %v5163 = vpop.f32.mrb[0].mxu0
    %v5164 = vadd.f32 %v1261, %v5163
    %v5165 = vpop.f32.mrb[0].mxu0
    %5166 = vmatprep.mubr.f32.mxu0 0.0
    %5167 = vmatmul.mubr.f32.gmra.mrb[0].mxu0 %v4481
    %v5168 = vpop.f32.mrb[0].mxu0
    %v5169 = vadd.f32 %v1262, %v5168
    %v5170 = vpop.f32.mrb[0].mxu0
    %5171 = vmatprep.mubr.f32.mxu0 0.0
    %5172 = vmatmul.mubr.f32.gmra.mrb[0].mxu0 %v4484
    %v5173 = vpop.f32.mrb[0].mxu0
    %v5174 = vadd.f32 %v1263, %v5173
    %v5175 = vpop.f32.mrb[0].mxu0
    %5176 = vmatprep.mubr.f32.mxu0 0.0
    %5177 = vmatmul.mubr.f32.gmra.mrb[0].mxu0 %v4487
    %v5178 = vpop.f32.mrb[0].mxu0
    %v5179 = vadd.f32 %v1264, %v5178
    %v5180 = vpop.f32.mrb[0].mxu0
    %5181 = vdwg.mxu0
    %v5182 = vsel %vm814, %v5164, -inf
    %5183 = vmax.xlane.f32.xlu0 %v5182
    %v5184 = vpop.xlane.xlu0 %5183
    %v5185 = vsel %vm814, %v5169, -inf
    %5186 = vmax.xlane.f32.xlu0 %v5185
    %v5187 = vpop.xlane.xlu0 %5186
    %v5188 = vsel %vm814, %v5174, -inf
    %5189 = vmax.xlane.f32.xlu0 %v5188
    %v5190 = vpop.xlane.xlu0 %5189
    %v5191 = vsel %vm814, %v5179, -inf
    %5192 = vmax.xlane.f32.xlu0 %v5191
    %v5193 = vpop.xlane.xlu0 %5192
    %v5194 = vsub.f32 %v5164, %v5184
    %v5195 = vsub.f32 %v5169, %v5187
    %v5196 = vsub.f32 %v5174, %v5190
    %v5197 = vsub.f32 %v5179, %v5193
    %v5198 = vmul.f32 %v5194, 1.442695
    %v5199 = vpow.pop %v5198
    %v5200 = vmul.f32 %v5195, 1.442695
    %v5201 = vpow.pop %v5200
    %v5202 = vmul.f32 %v5196, 1.442695
    %v5203 = vpow.pop %v5202
    %v5204 = vmul.f32 %v5197, 1.442695
    %v5205 = vpow.pop %v5204
    %v5206 = vmul.f32 %v5199, %v1253
    %v5207 = vmul.f32 %v5201, %v1254
    %v5208 = vmul.f32 %v5203, %v1255
    %v5209 = vmul.f32 %v5205, %v1256
    %v5210 = vsel %vm814, %v5206, 0.0
    %5211 = vadd.xlane.f32.xlu0 %v5210
    %v5212 = vpop.xlane.xlu0 %5211
    %v5213 = vsel %vm814, %v5207, 0.0
    %5214 = vadd.xlane.f32.xlu0 %v5213
    %v5215 = vpop.xlane.xlu0 %5214
    %v5216 = vsel %vm814, %v5208, 0.0
    %5217 = vadd.xlane.f32.xlu0 %v5216
    %v5218 = vpop.xlane.xlu0 %5217
    %v5219 = vsel %vm814, %v5209, 0.0
    %5220 = vadd.xlane.f32.xlu0 %v5219
    %v5221 = vpop.xlane.xlu0 %5220
    %vm5222 = vcmp.gt.f32.partialorder %v5212, 0.0
    %vm5223 = vcmp.gt.f32.partialorder %v5215, 0.0
    %vm5224 = vcmp.gt.f32.partialorder %v5218, 0.0
    %vm5225 = vcmp.gt.f32.partialorder %v5221, 0.0
    %v5226 = vsel %vm5222, %v5212, 1.0
    %v5227 = vsel %vm5223, %v5215, 1.0
    %v5228 = vsel %vm5224, %v5218, 1.0
    %v5229 = vsel %vm5225, %v5221, 1.0
    %v5230 = vrcp.pop %v5226
    %v5231 = vmul.f32 %v5206, %v5230
    %v5232 = vrcp.pop %v5227
    %v5233 = vmul.f32 %v5207, %v5232
    %v5234 = vrcp.pop %v5228
    %v5235 = vmul.f32 %v5208, %v5234
    %v5236 = vrcp.pop %v5229
    %v5237 = vmul.f32 %v5209, %v5236
    %s5238 = scalar_lea.vmem [#allocation6], 2688
    %v5239 = vld [vmem:[%s5238] sm:$0xff]
    %v5240 = vld [vmem:[%s5238 + $0x8] sm:$0xff]
    %v5241 = vld [vmem:[%s5238 + $0x10] sm:$0xff]
    %v5242 = vld [vmem:[%s5238 + $0x18] sm:$0xff]
    %v5243 = vld [vmem:[%s5238 + $0x20] sm:$0xff]
    %v5244 = vld [vmem:[%s5238 + $0x28] sm:$0xff]
    %v5245 = vld [vmem:[%s5238 + $0x30] sm:$0xff]
    %v5246 = vld [vmem:[%s5238 + $0x38] sm:$0xff]
    %v5247 = vld [vmem:[%s5238 + $0x40] sm:$0xff]
    %v5248 = vld [vmem:[%s5238 + $0x48] sm:$0xff]
    %v5249 = vld [vmem:[%s5238 + $0x50] sm:$0xff]
    %v5250 = vld [vmem:[%s5238 + $0x58] sm:$0xff]
    %5251 = vmatprep.subr.mxu0 0.0
    %5252 = vmatpush1.msra.mxu0 %v5239
    %5253 = vmatprep.subr.mxu0 0.0
    %5254 = vmatpush1.msra.mxu0 %v5240
    %5255 = vmatprep.subr.mxu0 0.0
    %5256 = vmatpush1.msra.mxu0 %v5241
    %5257 = vmatprep.subr.mxu0 0.0
    %5258 = vmatpush1.msra.mxu0 %v5242
    %5259 = vmatprep.subr.mxu0 0.0
    %5260 = vmatpush1.msra.mxu0 %v5243
    %5261 = vmatprep.subr.mxu0 0.0
    %5262 = vmatpush1.msra.mxu0 %v5244
    %5263 = vmatprep.subr.mxu0 0.0
    %5264 = vmatpush1.msra.mxu0 %v5245
    %5265 = vmatprep.subr.mxu0 0.0
    %5266 = vmatpush1.msra.mxu0 %v5246
    %5267 = vmatprep.subr.mxu0 0.0
    %5268 = vmatpush1.msra.mxu0 %v5247
    %5269 = vmatprep.subr.mxu0 0.0
    %5270 = vmatpush1.msra.mxu0 %v5248
    %5271 = vmatprep.subr.mxu0 0.0
    %5272 = vmatpush1.msra.mxu0 %v5249
    %5273 = vmatprep.subr.mxu0 0.0
    %5274 = vmatpush1.msra.mxu0 %v5250
    %5275 = vmatprep.subr.mxu0 0.0
    %5276 = vmatpush1.msra.mxu0 0.0
    %5277 = vmatprep.subr.mxu0 0.0
    %5278 = vmatpush1.msra.mxu0 0.0
    %5279 = vmatprep.subr.mxu0 0.0
    %5280 = vmatpush1.msra.mxu0 0.0
    %5281 = vmatprep.subr.mxu0 0.0
    %5282 = vmatpush1.msra.mxu0 0.0
    %5283 = vmatprep.subr.mxu0 0.0
    %5284 = vmatpush1.msra.mxu0 0.0
    %5285 = vmatprep.subr.mxu0 0.0
    %5286 = vmatpush1.msra.mxu0 0.0
    %5287 = vmatprep.subr.mxu0 0.0
    %5288 = vmatpush1.msra.mxu0 0.0
    %5289 = vmatprep.subr.mxu0 0.0
    %5290 = vmatpush1.msra.mxu0 0.0
    %5291 = vmatprep.subr.mxu0 0.0
    %5292 = vmatpush1.msra.mxu0 0.0
    %5293 = vmatprep.subr.mxu0 0.0
    %5294 = vmatpush1.msra.mxu0 0.0
    %5295 = vmatprep.subr.mxu0 0.0
    %5296 = vmatpush1.msra.mxu0 0.0
    %5297 = vmatprep.subr.mxu0 0.0
    %5298 = vmatpush1.msra.mxu0 0.0
    %5299 = vmatprep.subr.mxu0 0.0
    %5300 = vmatpush1.msra.mxu0 0.0
    %5301 = vmatprep.subr.mxu0 0.0
    %5302 = vmatpush1.msra.mxu0 0.0
    %5303 = vmatprep.subr.mxu0 0.0
    %5304 = vmatpush1.msra.mxu0 0.0
    %5305 = vmatprep.subr.mxu0 0.0
    %5306 = vmatpush1.msra.mxu0 0.0
    %5307 = vmatprep.subr.mxu0 0.0
    %5308 = vmatpush1.msra.mxu0 0.0
    %5309 = vmatprep.subr.mxu0 0.0
    %5310 = vmatpush1.msra.mxu0 0.0
    %5311 = vmatprep.subr.mxu0 0.0
    %5312 = vmatpush1.msra.mxu0 0.0
    %5313 = vmatprep.subr.mxu0 0.0
    %5314 = vmatpush1.msra.mxu0 0.0
    %5315 = vmatprep.mubr.f32.mxu0 0.0
    %5316 = vmatmul.mubr.f32.gmra.mrb[0].mxu0 %v4381
    %v5317 = vpop.f32.mrb[0].mxu0
    %v5318 = vadd.f32 0.0, %v5317
    %v5319 = vpop.f32.mrb[0].mxu0
    %5320 = vmatprep.mubr.f32.mxu0 0.0
    %5321 = vmatmul.mubr.f32.gmra.mrb[0].mxu0 %v4384
    %v5322 = vpop.f32.mrb[0].mxu0
    %v5323 = vadd.f32 0.0, %v5322
    %v5324 = vpop.f32.mrb[0].mxu0
    %5325 = vmatprep.mubr.f32.mxu0 0.0
    %5326 = vmatmul.mubr.f32.gmra.mrb[0].mxu0 %v4387
    %v5327 = vpop.f32.mrb[0].mxu0
    %v5328 = vadd.f32 0.0, %v5327
    %v5329 = vpop.f32.mrb[0].mxu0
    %5330 = vmatprep.mubr.f32.mxu0 0.0
    %5331 = vmatmul.mubr.f32.gmra.mrb[0].mxu0 %v4390
    %v5332 = vpop.f32.mrb[0].mxu0
    %v5333 = vadd.f32 0.0, %v5332
    %v5334 = vpop.f32.mrb[0].mxu0
    %5335 = vdwg.mxu0
    %5340 = vrot.lane.b32.xlu0 %v5231, 32
    %v5341 = vpop.permute.xlu0 %5340
    %5342 = vrot.lane.b32.xlu0 %v5233, 32
    %v5343 = vpop.permute.xlu0 %5342
    %5344 = vrot.lane.b32.xlu0 %v5235, 32
    %v5345 = vpop.permute.xlu0 %5344
    %5346 = vrot.lane.b32.xlu0 %v5237, 32
    %v5347 = vpop.permute.xlu0 %5346
    %v5352 = vsel %vm814, %v4992, %v5341
    %v5353 = vsel %vm814, %v4994, %v5343
    %v5354 = vsel %vm814, %v4996, %v5345
    %v5355 = vsel %vm814, %v4998, %v5347
    %v5357 = vsel %vm1873, %v5352, 0
    %v5360 = vsel %vm1873, %v5353, 0
    %v5363 = vsel %vm1873, %v5354, 0
    %v5366 = vsel %vm1873, %v5355, 0
    %5368 = vmatprep.subr.mxu0 0.0
    %5369 = vmatpush1.msra.mxu0 %v5079
    %5370 = vmatprep.subr.mxu0 0.0
    %5371 = vmatpush1.msra.mxu0 %v5084
    %5372 = vmatprep.subr.mxu0 0.0
    %5373 = vmatpush1.msra.mxu0 %v5089
    %5374 = vmatprep.subr.mxu0 0.0
    %5375 = vmatpush1.msra.mxu0 %v5094
    %5376 = vmatprep.subr.mxu0 0.0
    %5377 = vmatpush1.msra.mxu0 %v5318
    %5378 = vmatprep.subr.mxu0 0.0
    %5379 = vmatpush1.msra.mxu0 %v5323
    %5380 = vmatprep.subr.mxu0 0.0
    %5381 = vmatpush1.msra.mxu0 %v5328
    %5382 = vmatprep.subr.mxu0 0.0
    %5383 = vmatpush1.msra.mxu0 %v5333
    %5384 = vmatprep.subr.mxu0 0.0
    %5385 = vmatpush1.msra.mxu0 0.0
    %5386 = vmatprep.subr.mxu0 0.0
    %5387 = vmatpush1.msra.mxu0 0.0
    %5388 = vmatprep.subr.mxu0 0.0
    %5389 = vmatpush1.msra.mxu0 0.0
    %5390 = vmatprep.subr.mxu0 0.0
    %5391 = vmatpush1.msra.mxu0 0.0
    %5392 = vmatprep.subr.mxu0 0.0
    %5393 = vmatpush1.msra.mxu0 0.0
    %5394 = vmatprep.subr.mxu0 0.0
    %5395 = vmatpush1.msra.mxu0 0.0
    %5396 = vmatprep.subr.mxu0 0.0
    %5397 = vmatpush1.msra.mxu0 0.0
    %5398 = vmatprep.subr.mxu0 0.0
    %5399 = vmatpush1.msra.mxu0 0.0
    %5400 = vmatprep.subr.mxu0 0.0
    %5401 = vmatpush1.msra.mxu0 0.0
    %5402 = vmatprep.subr.mxu0 0.0
    %5403 = vmatpush1.msra.mxu0 0.0
    %5404 = vmatprep.subr.mxu0 0.0
    %5405 = vmatpush1.msra.mxu0 0.0
    %5406 = vmatprep.subr.mxu0 0.0
    %5407 = vmatpush1.msra.mxu0 0.0
    %5408 = vmatprep.subr.mxu0 0.0
    %5409 = vmatpush1.msra.mxu0 0.0
    %5410 = vmatprep.subr.mxu0 0.0
    %5411 = vmatpush1.msra.mxu0 0.0
    %5412 = vmatprep.subr.mxu0 0.0
    %5413 = vmatpush1.msra.mxu0 0.0
    %5414 = vmatprep.subr.mxu0 0.0
    %5415 = vmatpush1.msra.mxu0 0.0
    %5416 = vmatprep.subr.mxu0 0.0
    %5417 = vmatpush1.msra.mxu0 0.0
    %5418 = vmatprep.subr.mxu0 0.0
    %5419 = vmatpush1.msra.mxu0 0.0
    %5420 = vmatprep.subr.mxu0 0.0
    %5421 = vmatpush1.msra.mxu0 0.0
    %5422 = vmatprep.subr.mxu0 0.0
    %5423 = vmatpush1.msra.mxu0 0.0
    %5424 = vmatprep.subr.mxu0 0.0
    %5425 = vmatpush1.msra.mxu0 0.0
    %5426 = vmatprep.subr.mxu0 0.0
    %5427 = vmatpush1.msra.mxu0 0.0
    %5428 = vmatprep.subr.mxu0 0.0
    %5429 = vmatpush1.msra.mxu0 0.0
    %5430 = vmatprep.subr.mxu0 0.0
    %5431 = vmatpush1.msra.mxu0 0.0
    %5432 = vmatprep.mubr.f32.mxu0 0.0
    %5433 = vmatmul.mubr.f32.gmra.mrb[0].mxu0 %v5357
    %v5434 = vpop.f32.mrb[0].mxu0
    %v5435 = vadd.f32 0.0, %v5434
    %v5436 = vpop.f32.mrb[0].mxu0
    %5437 = vmatprep.mubr.f32.mxu0 0.0
    %5438 = vmatmul.mubr.f32.gmra.mrb[0].mxu0 %v5360
    %v5439 = vpop.f32.mrb[0].mxu0
    %v5440 = vadd.f32 0.0, %v5439
    %v5441 = vpop.f32.mrb[0].mxu0
    %5442 = vmatprep.mubr.f32.mxu0 0.0
    %5443 = vmatmul.mubr.f32.gmra.mrb[0].mxu0 %v5363
    %v5444 = vpop.f32.mrb[0].mxu0
    %v5445 = vadd.f32 0.0, %v5444
    %v5446 = vpop.f32.mrb[0].mxu0
    %5447 = vmatprep.mubr.f32.mxu0 0.0
    %5448 = vmatmul.mubr.f32.gmra.mrb[0].mxu0 %v5366
    %v5449 = vpop.f32.mrb[0].mxu0
    %v5450 = vadd.f32 0.0, %v5449
    %v5451 = vpop.f32.mrb[0].mxu0
    %5452 = vdwg.mxu0
    %v5454 = vsel %vm1873, %v4744, 0
    %v5457 = vsel %vm1873, %v4745, 0
    %v5460 = vsel %vm1873, %v4746, 0
    %v5463 = vsel %vm1873, %v4747, 0
    %5465 = vmatprep.subr.mxu0 0.0
    %5466 = vmatpush1.msra.mxu0 %v4459
    %5467 = vmatprep.subr.mxu0 0.0
    %5468 = vmatpush1.msra.mxu0 %v4464
    %5469 = vmatprep.subr.mxu0 0.0
    %5470 = vmatpush1.msra.mxu0 %v4469
    %5471 = vmatprep.subr.mxu0 0.0
    %5472 = vmatpush1.msra.mxu0 %v4474
    %5473 = vmatprep.subr.mxu0 0.0
    %5474 = vmatpush1.msra.mxu0 %v4710
    %5475 = vmatprep.subr.mxu0 0.0
    %5476 = vmatpush1.msra.mxu0 %v4715
    %5477 = vmatprep.subr.mxu0 0.0
    %5478 = vmatpush1.msra.mxu0 %v4720
    %5479 = vmatprep.subr.mxu0 0.0
    %5480 = vmatpush1.msra.mxu0 %v4725
    %5481 = vmatprep.subr.mxu0 0.0
    %5482 = vmatpush1.msra.mxu0 0.0
    %5483 = vmatprep.subr.mxu0 0.0
    %5484 = vmatpush1.msra.mxu0 0.0
    %5485 = vmatprep.subr.mxu0 0.0
    %5486 = vmatpush1.msra.mxu0 0.0
    %5487 = vmatprep.subr.mxu0 0.0
    %5488 = vmatpush1.msra.mxu0 0.0
    %5489 = vmatprep.subr.mxu0 0.0
    %5490 = vmatpush1.msra.mxu0 0.0
    %5491 = vmatprep.subr.mxu0 0.0
    %5492 = vmatpush1.msra.mxu0 0.0
    %5493 = vmatprep.subr.mxu0 0.0
    %5494 = vmatpush1.msra.mxu0 0.0
    %5495 = vmatprep.subr.mxu0 0.0
    %5496 = vmatpush1.msra.mxu0 0.0
    %5497 = vmatprep.subr.mxu0 0.0
    %5498 = vmatpush1.msra.mxu0 0.0
    %5499 = vmatprep.subr.mxu0 0.0
    %5500 = vmatpush1.msra.mxu0 0.0
    %5501 = vmatprep.subr.mxu0 0.0
    %5502 = vmatpush1.msra.mxu0 0.0
    %5503 = vmatprep.subr.mxu0 0.0
    %5504 = vmatpush1.msra.mxu0 0.0
    %5505 = vmatprep.subr.mxu0 0.0
    %5506 = vmatpush1.msra.mxu0 0.0
    %5507 = vmatprep.subr.mxu0 0.0
    %5508 = vmatpush1.msra.mxu0 0.0
    %5509 = vmatprep.subr.mxu0 0.0
    %5510 = vmatpush1.msra.mxu0 0.0
    %5511 = vmatprep.subr.mxu0 0.0
    %5512 = vmatpush1.msra.mxu0 0.0
    %5513 = vmatprep.subr.mxu0 0.0
    %5514 = vmatpush1.msra.mxu0 0.0
    %5515 = vmatprep.subr.mxu0 0.0
    %5516 = vmatpush1.msra.mxu0 0.0
    %5517 = vmatprep.subr.mxu0 0.0
    %5518 = vmatpush1.msra.mxu0 0.0
    %5519 = vmatprep.subr.mxu0 0.0
    %5520 = vmatpush1.msra.mxu0 0.0
    %5521 = vmatprep.subr.mxu0 0.0
    %5522 = vmatpush1.msra.mxu0 0.0
    %5523 = vmatprep.subr.mxu0 0.0
    %5524 = vmatpush1.msra.mxu0 0.0
    %5525 = vmatprep.subr.mxu0 0.0
    %5526 = vmatpush1.msra.mxu0 0.0
    %5527 = vmatprep.subr.mxu0 0.0
    %5528 = vmatpush1.msra.mxu0 0.0
    %5529 = vmatprep.mubr.f32.mxu0 0.0
    %5530 = vmatmul.mubr.f32.gmra.mrb[0].mxu0 %v5454
    %v5531 = vpop.f32.mrb[0].mxu0
    %v5532 = vadd.f32 %v5435, %v5531
    %v5533 = vpop.f32.mrb[0].mxu0
    %5534 = vmatprep.mubr.f32.mxu0 0.0
    %5535 = vmatmul.mubr.f32.gmra.mrb[0].mxu0 %v5457
    %v5536 = vpop.f32.mrb[0].mxu0
    %v5537 = vadd.f32 %v5440, %v5536
    %v5538 = vpop.f32.mrb[0].mxu0
    %5539 = vmatprep.mubr.f32.mxu0 0.0
    %5540 = vmatmul.mubr.f32.gmra.mrb[0].mxu0 %v5460
    %v5541 = vpop.f32.mrb[0].mxu0
    %v5542 = vadd.f32 %v5445, %v5541
    %v5543 = vpop.f32.mrb[0].mxu0
    %5544 = vmatprep.mubr.f32.mxu0 0.0
    %5545 = vmatmul.mubr.f32.gmra.mrb[0].mxu0 %v5463
    %v5546 = vpop.f32.mrb[0].mxu0
    %v5547 = vadd.f32 %v5450, %v5546
    %v5548 = vpop.f32.mrb[0].mxu0
    %5549 = vdwg.mxu0
    %s5550 = scalar_lea.vmem [#allocation6], 2208
    %v5551 = vld [vmem:[%s5550] sm:$0xff]
    %v5552 = vld [vmem:[%s5550 + $0x8] sm:$0xff]
    %v5553 = vld [vmem:[%s5550 + $0x10] sm:$0xff]
    %v5554 = vld [vmem:[%s5550 + $0x18] sm:$0xff]
    %v5555 = vld [vmem:[%s5550 + $0x20] sm:$0xff]
    %v5556 = vld [vmem:[%s5550 + $0x28] sm:$0xff]
    %v5557 = vld [vmem:[%s5550 + $0x30] sm:$0xff]
    %v5558 = vld [vmem:[%s5550 + $0x38] sm:$0xff]
    %v5559 = vld [vmem:[%s5550 + $0x40] sm:$0xff]
    %v5560 = vld [vmem:[%s5550 + $0x48] sm:$0xff]
    %v5561 = vld [vmem:[%s5550 + $0x50] sm:$0xff]
    %v5562 = vld [vmem:[%s5550 + $0x58] sm:$0xff]
    %5563 = vmatprep.subr.mxu0 0.0
    %5564 = vmatpush1.msra.mxu0 %v5551
    %5565 = vmatprep.subr.mxu0 0.0
    %5566 = vmatpush1.msra.mxu0 %v5552
    %5567 = vmatprep.subr.mxu0 0.0
    %5568 = vmatpush1.msra.mxu0 %v5553
    %5569 = vmatprep.subr.mxu0 0.0
    %5570 = vmatpush1.msra.mxu0 %v5554
    %5571 = vmatprep.subr.mxu0 0.0
    %5572 = vmatpush1.msra.mxu0 %v5555
    %5573 = vmatprep.subr.mxu0 0.0
    %5574 = vmatpush1.msra.mxu0 %v5556
    %5575 = vmatprep.subr.mxu0 0.0
    %5576 = vmatpush1.msra.mxu0 %v5557
    %5577 = vmatprep.subr.mxu0 0.0
    %5578 = vmatpush1.msra.mxu0 %v5558
    %5579 = vmatprep.subr.mxu0 0.0
    %5580 = vmatpush1.msra.mxu0 %v5559
    %5581 = vmatprep.subr.mxu0 0.0
    %5582 = vmatpush1.msra.mxu0 %v5560
    %5583 = vmatprep.subr.mxu0 0.0
    %5584 = vmatpush1.msra.mxu0 %v5561
    %5585 = vmatprep.subr.mxu0 0.0
    %5586 = vmatpush1.msra.mxu0 %v5562
    %5587 = vmatprep.subr.mxu0 0.0
    %5588 = vmatpush1.msra.mxu0 0.0
    %5589 = vmatprep.subr.mxu0 0.0
    %5590 = vmatpush1.msra.mxu0 0.0
    %5591 = vmatprep.subr.mxu0 0.0
    %5592 = vmatpush1.msra.mxu0 0.0
    %5593 = vmatprep.subr.mxu0 0.0
    %5594 = vmatpush1.msra.mxu0 0.0
    %5595 = vmatprep.subr.mxu0 0.0
    %5596 = vmatpush1.msra.mxu0 0.0
    %5597 = vmatprep.subr.mxu0 0.0
    %5598 = vmatpush1.msra.mxu0 0.0
    %5599 = vmatprep.subr.mxu0 0.0
    %5600 = vmatpush1.msra.mxu0 0.0
    %5601 = vmatprep.subr.mxu0 0.0
    %5602 = vmatpush1.msra.mxu0 0.0
    %5603 = vmatprep.subr.mxu0 0.0
    %5604 = vmatpush1.msra.mxu0 0.0
    %5605 = vmatprep.subr.mxu0 0.0
    %5606 = vmatpush1.msra.mxu0 0.0
    %5607 = vmatprep.subr.mxu0 0.0
    %5608 = vmatpush1.msra.mxu0 0.0
    %5609 = vmatprep.subr.mxu0 0.0
    %5610 = vmatpush1.msra.mxu0 0.0
    %5611 = vmatprep.subr.mxu0 0.0
    %5612 = vmatpush1.msra.mxu0 0.0
    %5613 = vmatprep.subr.mxu0 0.0
    %5614 = vmatpush1.msra.mxu0 0.0
    %5615 = vmatprep.subr.mxu0 0.0
    %5616 = vmatpush1.msra.mxu0 0.0
    %5617 = vmatprep.subr.mxu0 0.0
    %5618 = vmatpush1.msra.mxu0 0.0
    %5619 = vmatprep.subr.mxu0 0.0
    %5620 = vmatpush1.msra.mxu0 0.0
    %5621 = vmatprep.subr.mxu0 0.0
    %5622 = vmatpush1.msra.mxu0 0.0
    %5623 = vmatprep.subr.mxu0 0.0
    %5624 = vmatpush1.msra.mxu0 0.0
    %5625 = vmatprep.subr.mxu0 0.0
    %5626 = vmatpush1.msra.mxu0 0.0
    %5627 = vmatprep.mubr.f32.mxu0 0.0
    %5628 = vmatmul.mubr.f32.gmra.mrb[0].mxu0 %v4106
    %v5629 = vpop.f32.mrb[0].mxu0
    %v5630 = vadd.f32 0.0, %v5629
    %v5631 = vpop.f32.mrb[0].mxu0
    %5632 = vmatprep.mubr.f32.mxu0 0.0
    %5633 = vmatmul.mubr.f32.gmra.mrb[0].mxu0 %v4109
    %v5634 = vpop.f32.mrb[0].mxu0
    %v5635 = vadd.f32 0.0, %v5634
    %v5636 = vpop.f32.mrb[0].mxu0
    %5637 = vmatprep.mubr.f32.mxu0 0.0
    %5638 = vmatmul.mubr.f32.gmra.mrb[0].mxu0 %v4112
    %v5639 = vpop.f32.mrb[0].mxu0
    %v5640 = vadd.f32 0.0, %v5639
    %v5641 = vpop.f32.mrb[0].mxu0
    %5642 = vmatprep.mubr.f32.mxu0 0.0
    %5643 = vmatmul.mubr.f32.gmra.mrb[0].mxu0 %v4115
    %v5644 = vpop.f32.mrb[0].mxu0
    %v5645 = vadd.f32 0.0, %v5644
    %v5646 = vpop.f32.mrb[0].mxu0
    %5647 = vdwg.mxu0
    %v5649 = vsel %vm143, %v5630, 0
    %v5652 = vsel %vm143, %v5635, 0
    %v5655 = vsel %vm143, %v5640, 0
    %v5658 = vsel %vm143, %v5645, 0
    %5660 = vmatprep.subr.mxu0 0.0
    %5661 = vmatpush1.xpose.msra.mxu0 %v5649
    %5662 = vmatprep.subr.mxu0 0.0
    %5663 = vmatpush1.xpose.msra.mxu0 %v5652
    %5664 = vmatprep.subr.mxu0 0.0
    %5665 = vmatpush1.xpose.msra.mxu0 %v5655
    %5666 = vmatprep.subr.mxu0 0.0
    %5667 = vmatpush1.xpose.msra.mxu0 %v5658
    %5668 = vmatprep.subr.mxu0 0.0
    %5669 = vmatpush1.xpose.msra.mxu0 0.0
    %5670 = vmatprep.subr.mxu0 0.0
    %5671 = vmatpush1.xpose.msra.mxu0 0.0
    %5672 = vmatprep.subr.mxu0 0.0
    %5673 = vmatpush1.xpose.msra.mxu0 0.0
    %5674 = vmatprep.subr.mxu0 0.0
    %5675 = vmatpush1.xpose.msra.mxu0 0.0
    %5676 = vmatprep.subr.mxu0 0.0
    %5677 = vmatpush1.xpose.msra.mxu0 0.0
    %5678 = vmatprep.subr.mxu0 0.0
    %5679 = vmatpush1.xpose.msra.mxu0 0.0
    %5680 = vmatprep.subr.mxu0 0.0
    %5681 = vmatpush1.xpose.msra.mxu0 0.0
    %5682 = vmatprep.subr.mxu0 0.0
    %5683 = vmatpush1.xpose.msra.mxu0 0.0
    %5684 = vmatprep.subr.mxu0 0.0
    %5685 = vmatpush1.xpose.msra.mxu0 0.0
    %5686 = vmatprep.subr.mxu0 0.0
    %5687 = vmatpush1.xpose.msra.mxu0 0.0
    %5688 = vmatprep.subr.mxu0 0.0
    %5689 = vmatpush1.xpose.msra.mxu0 0.0
    %5690 = vmatprep.subr.mxu0 0.0
    %5691 = vmatpush1.xpose.msra.mxu0 0.0
    %5692 = vmatprep.subr.mxu0 0.0
    %5693 = vmatpush1.xpose.msra.mxu0 0.0
    %5694 = vmatprep.subr.mxu0 0.0
    %5695 = vmatpush1.xpose.msra.mxu0 0.0
    %5696 = vmatprep.subr.mxu0 0.0
    %5697 = vmatpush1.xpose.msra.mxu0 0.0
    %5698 = vmatprep.subr.mxu0 0.0
    %5699 = vmatpush1.xpose.msra.mxu0 0.0
    %5700 = vmatprep.subr.mxu0 0.0
    %5701 = vmatpush1.xpose.msra.mxu0 0.0
    %5702 = vmatprep.subr.mxu0 0.0
    %5703 = vmatpush1.xpose.msra.mxu0 0.0
    %5704 = vmatprep.subr.mxu0 0.0
    %5705 = vmatpush1.xpose.msra.mxu0 0.0
    %5706 = vmatprep.subr.mxu0 0.0
    %5707 = vmatpush1.xpose.msra.mxu0 0.0
    %5708 = vmatprep.subr.mxu0 0.0
    %5709 = vmatpush1.xpose.msra.mxu0 0.0
    %5710 = vmatprep.subr.mxu0 0.0
    %5711 = vmatpush1.xpose.msra.mxu0 0.0
    %5712 = vmatprep.subr.mxu0 0.0
    %5713 = vmatpush1.xpose.msra.mxu0 0.0
    %5714 = vmatprep.subr.mxu0 0.0
    %5715 = vmatpush1.xpose.msra.mxu0 0.0
    %5716 = vmatprep.subr.mxu0 0.0
    %5717 = vmatpush1.xpose.msra.mxu0 0.0
    %5718 = vmatprep.subr.mxu0 0.0
    %5719 = vmatpush1.xpose.msra.mxu0 0.0
    %5720 = vmatprep.subr.mxu0 0.0
    %5721 = vmatpush1.xpose.msra.mxu0 0.0
    %5722 = vmatprep.subr.mxu0 0.0
    %5723 = vmatpush1.xpose.msra.mxu0 0.0
    %5724 = vmatprep.mubr.f32.mxu0 0.0
    %5725 = vmatmul.mubr.f32.gmra.mrb[0].mxu0 %v4203
    %v5726 = vpop.f32.mrb[0].mxu0
    %v5727 = vadd.f32 %v2077, %v5726
    %v5728 = vpop.f32.mrb[0].mxu0
    %5729 = vmatprep.mubr.f32.mxu0 0.0
    %5730 = vmatmul.mubr.f32.gmra.mrb[0].mxu0 %v4206
    %v5731 = vpop.f32.mrb[0].mxu0
    %v5732 = vadd.f32 %v2078, %v5731
    %v5733 = vpop.f32.mrb[0].mxu0
    %5734 = vmatprep.mubr.f32.mxu0 0.0
    %5735 = vmatmul.mubr.f32.gmra.mrb[0].mxu0 %v4209
    %v5736 = vpop.f32.mrb[0].mxu0
    %v5737 = vadd.f32 %v2079, %v5736
    %v5738 = vpop.f32.mrb[0].mxu0
    %5739 = vmatprep.mubr.f32.mxu0 0.0
    %5740 = vmatmul.mubr.f32.gmra.mrb[0].mxu0 %v4212
    %v5741 = vpop.f32.mrb[0].mxu0
    %v5742 = vadd.f32 %v2080, %v5741
    %v5743 = vpop.f32.mrb[0].mxu0
    %5744 = vdwg.mxu0
    %v5745 = vsel %vm814, %v5727, -inf
    %5746 = vmax.xlane.f32.xlu0 %v5745
    %v5747 = vpop.xlane.xlu0 %5746
    %v5748 = vsel %vm814, %v5732, -inf
    %5749 = vmax.xlane.f32.xlu0 %v5748
    %v5750 = vpop.xlane.xlu0 %5749
    %v5751 = vsel %vm814, %v5737, -inf
    %5752 = vmax.xlane.f32.xlu0 %v5751
    %v5753 = vpop.xlane.xlu0 %5752
    %v5754 = vsel %vm814, %v5742, -inf
    %5755 = vmax.xlane.f32.xlu0 %v5754
    %v5756 = vpop.xlane.xlu0 %5755
    %v5757 = vsub.f32 %v5727, %v5747
    %v5758 = vsub.f32 %v5732, %v5750
    %v5759 = vsub.f32 %v5737, %v5753
    %v5760 = vsub.f32 %v5742, %v5756
    %v5761 = vmul.f32 %v5757, 1.442695
    %v5762 = vpow.pop %v5761
    %v5763 = vmul.f32 %v5758, 1.442695
    %v5764 = vpow.pop %v5763
    %v5765 = vmul.f32 %v5759, 1.442695
    %v5766 = vpow.pop %v5765
    %v5767 = vmul.f32 %v5760, 1.442695
    %v5768 = vpow.pop %v5767
    %v5769 = vmul.f32 %v5762, %v2069
    %v5770 = vmul.f32 %v5764, %v2070
    %v5771 = vmul.f32 %v5766, %v2071
    %v5772 = vmul.f32 %v5768, %v2072
    %v5773 = vsel %vm814, %v5769, 0.0
    %5774 = vadd.xlane.f32.xlu0 %v5773
    %v5775 = vpop.xlane.xlu0 %5774
    %v5776 = vsel %vm814, %v5770, 0.0
    %5777 = vadd.xlane.f32.xlu0 %v5776
    %v5778 = vpop.xlane.xlu0 %5777
    %v5779 = vsel %vm814, %v5771, 0.0
    %5780 = vadd.xlane.f32.xlu0 %v5779
    %v5781 = vpop.xlane.xlu0 %5780
    %v5782 = vsel %vm814, %v5772, 0.0
    %5783 = vadd.xlane.f32.xlu0 %v5782
    %v5784 = vpop.xlane.xlu0 %5783
    %vm5785 = vcmp.gt.f32.partialorder %v5775, 0.0
    %vm5786 = vcmp.gt.f32.partialorder %v5778, 0.0
    %vm5787 = vcmp.gt.f32.partialorder %v5781, 0.0
    %vm5788 = vcmp.gt.f32.partialorder %v5784, 0.0
    %v5789 = vsel %vm5785, %v5775, 1.0
    %v5790 = vsel %vm5786, %v5778, 1.0
    %v5791 = vsel %vm5787, %v5781, 1.0
    %v5792 = vsel %vm5788, %v5784, 1.0
    %v5793 = vrcp.pop %v5789
    %v5794 = vmul.f32 %v5769, %v5793
    %v5795 = vrcp.pop %v5790
    %v5796 = vmul.f32 %v5770, %v5795
    %v5797 = vrcp.pop %v5791
    %v5798 = vmul.f32 %v5771, %v5797
    %v5799 = vrcp.pop %v5792
    %v5800 = vmul.f32 %v5772, %v5799
    %s5801 = scalar_lea.vmem [#allocation6], 2784
    %v5802 = vld [vmem:[%s5801] sm:$0xff]
    %v5803 = vld [vmem:[%s5801 + $0x8] sm:$0xff]
    %v5804 = vld [vmem:[%s5801 + $0x10] sm:$0xff]
    %v5805 = vld [vmem:[%s5801 + $0x18] sm:$0xff]
    %v5806 = vld [vmem:[%s5801 + $0x20] sm:$0xff]
    %v5807 = vld [vmem:[%s5801 + $0x28] sm:$0xff]
    %v5808 = vld [vmem:[%s5801 + $0x30] sm:$0xff]
    %v5809 = vld [vmem:[%s5801 + $0x38] sm:$0xff]
    %v5810 = vld [vmem:[%s5801 + $0x40] sm:$0xff]
    %v5811 = vld [vmem:[%s5801 + $0x48] sm:$0xff]
    %v5812 = vld [vmem:[%s5801 + $0x50] sm:$0xff]
    %v5813 = vld [vmem:[%s5801 + $0x58] sm:$0xff]
    %5814 = vmatprep.subr.mxu0 0.0
    %5815 = vmatpush1.msra.mxu0 %v5802
    %5816 = vmatprep.subr.mxu0 0.0
    %5817 = vmatpush1.msra.mxu0 %v5803
    %5818 = vmatprep.subr.mxu0 0.0
    %5819 = vmatpush1.msra.mxu0 %v5804
    %5820 = vmatprep.subr.mxu0 0.0
    %5821 = vmatpush1.msra.mxu0 %v5805
    %5822 = vmatprep.subr.mxu0 0.0
    %5823 = vmatpush1.msra.mxu0 %v5806
    %5824 = vmatprep.subr.mxu0 0.0
    %5825 = vmatpush1.msra.mxu0 %v5807
    %5826 = vmatprep.subr.mxu0 0.0
    %5827 = vmatpush1.msra.mxu0 %v5808
    %5828 = vmatprep.subr.mxu0 0.0
    %5829 = vmatpush1.msra.mxu0 %v5809
    %5830 = vmatprep.subr.mxu0 0.0
    %5831 = vmatpush1.msra.mxu0 %v5810
    %5832 = vmatprep.subr.mxu0 0.0
    %5833 = vmatpush1.msra.mxu0 %v5811
    %5834 = vmatprep.subr.mxu0 0.0
    %5835 = vmatpush1.msra.mxu0 %v5812
    %5836 = vmatprep.subr.mxu0 0.0
    %5837 = vmatpush1.msra.mxu0 %v5813
    %5838 = vmatprep.subr.mxu0 0.0
    %5839 = vmatpush1.msra.mxu0 0.0
    %5840 = vmatprep.subr.mxu0 0.0
    %5841 = vmatpush1.msra.mxu0 0.0
    %5842 = vmatprep.subr.mxu0 0.0
    %5843 = vmatpush1.msra.mxu0 0.0
    %5844 = vmatprep.subr.mxu0 0.0
    %5845 = vmatpush1.msra.mxu0 0.0
    %5846 = vmatprep.subr.mxu0 0.0
    %5847 = vmatpush1.msra.mxu0 0.0
    %5848 = vmatprep.subr.mxu0 0.0
    %5849 = vmatpush1.msra.mxu0 0.0
    %5850 = vmatprep.subr.mxu0 0.0
    %5851 = vmatpush1.msra.mxu0 0.0
    %5852 = vmatprep.subr.mxu0 0.0
    %5853 = vmatpush1.msra.mxu0 0.0
    %5854 = vmatprep.subr.mxu0 0.0
    %5855 = vmatpush1.msra.mxu0 0.0
    %5856 = vmatprep.subr.mxu0 0.0
    %5857 = vmatpush1.msra.mxu0 0.0
    %5858 = vmatprep.subr.mxu0 0.0
    %5859 = vmatpush1.msra.mxu0 0.0
    %5860 = vmatprep.subr.mxu0 0.0
    %5861 = vmatpush1.msra.mxu0 0.0
    %5862 = vmatprep.subr.mxu0 0.0
    %5863 = vmatpush1.msra.mxu0 0.0
    %5864 = vmatprep.subr.mxu0 0.0
    %5865 = vmatpush1.msra.mxu0 0.0
    %5866 = vmatprep.subr.mxu0 0.0
    %5867 = vmatpush1.msra.mxu0 0.0
    %5868 = vmatprep.subr.mxu0 0.0
    %5869 = vmatpush1.msra.mxu0 0.0
    %5870 = vmatprep.subr.mxu0 0.0
    %5871 = vmatpush1.msra.mxu0 0.0
    %5872 = vmatprep.subr.mxu0 0.0
    %5873 = vmatpush1.msra.mxu0 0.0
    %5874 = vmatprep.subr.mxu0 0.0
    %5875 = vmatpush1.msra.mxu0 0.0
    %5876 = vmatprep.subr.mxu0 0.0
    %5877 = vmatpush1.msra.mxu0 0.0
    %5878 = vmatprep.mubr.f32.mxu0 0.0
    %5879 = vmatmul.mubr.f32.gmra.mrb[0].mxu0 %v4381
    %v5880 = vpop.f32.mrb[0].mxu0
    %v5881 = vadd.f32 0.0, %v5880
    %v5882 = vpop.f32.mrb[0].mxu0
    %5883 = vmatprep.mubr.f32.mxu0 0.0
    %5884 = vmatmul.mubr.f32.gmra.mrb[0].mxu0 %v4384
    %v5885 = vpop.f32.mrb[0].mxu0
    %v5886 = vadd.f32 0.0, %v5885
    %v5887 = vpop.f32.mrb[0].mxu0
    %5888 = vmatprep.mubr.f32.mxu0 0.0
    %5889 = vmatmul.mubr.f32.gmra.mrb[0].mxu0 %v4387
    %v5890 = vpop.f32.mrb[0].mxu0
    %v5891 = vadd.f32 0.0, %v5890
    %v5892 = vpop.f32.mrb[0].mxu0
    %5893 = vmatprep.mubr.f32.mxu0 0.0
    %5894 = vmatmul.mubr.f32.gmra.mrb[0].mxu0 %v4390
    %v5895 = vpop.f32.mrb[0].mxu0
    %v5896 = vadd.f32 0.0, %v5895
    %v5897 = vpop.f32.mrb[0].mxu0
    %5898 = vdwg.mxu0
    %5899 = vmatprep.subr.mxu0 0.0
    %5900 = vmatpush1.xpose.msra.mxu0 %v5649
    %5901 = vmatprep.subr.mxu0 0.0
    %5902 = vmatpush1.xpose.msra.mxu0 %v5652
    %5903 = vmatprep.subr.mxu0 0.0
    %5904 = vmatpush1.xpose.msra.mxu0 %v5655
    %5905 = vmatprep.subr.mxu0 0.0
    %5906 = vmatpush1.xpose.msra.mxu0 %v5658
    %5907 = vmatprep.subr.mxu0 0.0
    %5908 = vmatpush1.xpose.msra.mxu0 0.0
    %5909 = vmatprep.subr.mxu0 0.0
    %5910 = vmatpush1.xpose.msra.mxu0 0.0
    %5911 = vmatprep.subr.mxu0 0.0
    %5912 = vmatpush1.xpose.msra.mxu0 0.0
    %5913 = vmatprep.subr.mxu0 0.0
    %5914 = vmatpush1.xpose.msra.mxu0 0.0
    %5915 = vmatprep.subr.mxu0 0.0
    %5916 = vmatpush1.xpose.msra.mxu0 0.0
    %5917 = vmatprep.subr.mxu0 0.0
    %5918 = vmatpush1.xpose.msra.mxu0 0.0
    %5919 = vmatprep.subr.mxu0 0.0
    %5920 = vmatpush1.xpose.msra.mxu0 0.0
    %5921 = vmatprep.subr.mxu0 0.0
    %5922 = vmatpush1.xpose.msra.mxu0 0.0
    %5923 = vmatprep.subr.mxu0 0.0
    %5924 = vmatpush1.xpose.msra.mxu0 0.0
    %5925 = vmatprep.subr.mxu0 0.0
    %5926 = vmatpush1.xpose.msra.mxu0 0.0
    %5927 = vmatprep.subr.mxu0 0.0
    %5928 = vmatpush1.xpose.msra.mxu0 0.0
    %5929 = vmatprep.subr.mxu0 0.0
    %5930 = vmatpush1.xpose.msra.mxu0 0.0
    %5931 = vmatprep.subr.mxu0 0.0
    %5932 = vmatpush1.xpose.msra.mxu0 0.0
    %5933 = vmatprep.subr.mxu0 0.0
    %5934 = vmatpush1.xpose.msra.mxu0 0.0
    %5935 = vmatprep.subr.mxu0 0.0
    %5936 = vmatpush1.xpose.msra.mxu0 0.0
    %5937 = vmatprep.subr.mxu0 0.0
    %5938 = vmatpush1.xpose.msra.mxu0 0.0
    %5939 = vmatprep.subr.mxu0 0.0
    %5940 = vmatpush1.xpose.msra.mxu0 0.0
    %5941 = vmatprep.subr.mxu0 0.0
    %5942 = vmatpush1.xpose.msra.mxu0 0.0
    %5943 = vmatprep.subr.mxu0 0.0
    %5944 = vmatpush1.xpose.msra.mxu0 0.0
    %5945 = vmatprep.subr.mxu0 0.0
    %5946 = vmatpush1.xpose.msra.mxu0 0.0
    %5947 = vmatprep.subr.mxu0 0.0
    %5948 = vmatpush1.xpose.msra.mxu0 0.0
    %5949 = vmatprep.subr.mxu0 0.0
    %5950 = vmatpush1.xpose.msra.mxu0 0.0
    %5951 = vmatprep.subr.mxu0 0.0
    %5952 = vmatpush1.xpose.msra.mxu0 0.0
    %5953 = vmatprep.subr.mxu0 0.0
    %5954 = vmatpush1.xpose.msra.mxu0 0.0
    %5955 = vmatprep.subr.mxu0 0.0
    %5956 = vmatpush1.xpose.msra.mxu0 0.0
    %5957 = vmatprep.subr.mxu0 0.0
    %5958 = vmatpush1.xpose.msra.mxu0 0.0
    %5959 = vmatprep.subr.mxu0 0.0
    %5960 = vmatpush1.xpose.msra.mxu0 0.0
    %5961 = vmatprep.subr.mxu0 0.0
    %5962 = vmatpush1.xpose.msra.mxu0 0.0
    %5963 = vmatprep.mubr.f32.mxu0 0.0
    %5964 = vmatmul.mubr.f32.gmra.mrb[0].mxu0 %v4478
    %v5965 = vpop.f32.mrb[0].mxu0
    %v5966 = vadd.f32 %v2077, %v5965
    %v5967 = vpop.f32.mrb[0].mxu0
    %5968 = vmatprep.mubr.f32.mxu0 0.0
    %5969 = vmatmul.mubr.f32.gmra.mrb[0].mxu0 %v4481
    %v5970 = vpop.f32.mrb[0].mxu0
    %v5971 = vadd.f32 %v2078, %v5970
    %v5972 = vpop.f32.mrb[0].mxu0
    %5973 = vmatprep.mubr.f32.mxu0 0.0
    %5974 = vmatmul.mubr.f32.gmra.mrb[0].mxu0 %v4484
    %v5975 = vpop.f32.mrb[0].mxu0
    %v5976 = vadd.f32 %v2079, %v5975
    %v5977 = vpop.f32.mrb[0].mxu0
    %5978 = vmatprep.mubr.f32.mxu0 0.0
    %5979 = vmatmul.mubr.f32.gmra.mrb[0].mxu0 %v4487
    %v5980 = vpop.f32.mrb[0].mxu0
    %v5981 = vadd.f32 %v2080, %v5980
    %v5982 = vpop.f32.mrb[0].mxu0
    %5983 = vdwg.mxu0
    %v5984 = vsel %vm814, %v5966, -inf
    %5985 = vmax.xlane.f32.xlu0 %v5984
    %v5986 = vpop.xlane.xlu0 %5985
    %v5987 = vsel %vm814, %v5971, -inf
    %5988 = vmax.xlane.f32.xlu0 %v5987
    %v5989 = vpop.xlane.xlu0 %5988
    %v5990 = vsel %vm814, %v5976, -inf
    %5991 = vmax.xlane.f32.xlu0 %v5990
    %v5992 = vpop.xlane.xlu0 %5991
    %v5993 = vsel %vm814, %v5981, -inf
    %5994 = vmax.xlane.f32.xlu0 %v5993
    %v5995 = vpop.xlane.xlu0 %5994
    %v5996 = vsub.f32 %v5966, %v5986
    %v5997 = vsub.f32 %v5971, %v5989
    %v5998 = vsub.f32 %v5976, %v5992
    %v5999 = vsub.f32 %v5981, %v5995
    %v6000 = vmul.f32 %v5996, 1.442695
    %v6001 = vpow.pop %v6000
    %v6002 = vmul.f32 %v5997, 1.442695
    %v6003 = vpow.pop %v6002
    %v6004 = vmul.f32 %v5998, 1.442695
    %v6005 = vpow.pop %v6004
    %v6006 = vmul.f32 %v5999, 1.442695
    %v6007 = vpow.pop %v6006
    %v6008 = vmul.f32 %v6001, %v2069
    %v6009 = vmul.f32 %v6003, %v2070
    %v6010 = vmul.f32 %v6005, %v2071
    %v6011 = vmul.f32 %v6007, %v2072
    %v6012 = vsel %vm814, %v6008, 0.0
    %6013 = vadd.xlane.f32.xlu0 %v6012
    %v6014 = vpop.xlane.xlu0 %6013
    %v6015 = vsel %vm814, %v6009, 0.0
    %6016 = vadd.xlane.f32.xlu0 %v6015
    %v6017 = vpop.xlane.xlu0 %6016
    %v6018 = vsel %vm814, %v6010, 0.0
    %6019 = vadd.xlane.f32.xlu0 %v6018
    %v6020 = vpop.xlane.xlu0 %6019
    %v6021 = vsel %vm814, %v6011, 0.0
    %6022 = vadd.xlane.f32.xlu0 %v6021
    %v6023 = vpop.xlane.xlu0 %6022
    %vm6024 = vcmp.gt.f32.partialorder %v6014, 0.0
    %vm6025 = vcmp.gt.f32.partialorder %v6017, 0.0
    %vm6026 = vcmp.gt.f32.partialorder %v6020, 0.0
    %vm6027 = vcmp.gt.f32.partialorder %v6023, 0.0
    %v6028 = vsel %vm6024, %v6014, 1.0
    %v6029 = vsel %vm6025, %v6017, 1.0
    %v6030 = vsel %vm6026, %v6020, 1.0
    %v6031 = vsel %vm6027, %v6023, 1.0
    %v6032 = vrcp.pop %v6028
    %v6033 = vmul.f32 %v6008, %v6032
    %v6034 = vrcp.pop %v6029
    %v6035 = vmul.f32 %v6009, %v6034
    %v6036 = vrcp.pop %v6030
    %v6037 = vmul.f32 %v6010, %v6036
    %v6038 = vrcp.pop %v6031
    %v6039 = vmul.f32 %v6011, %v6038
    %s6040 = scalar_lea.vmem [#allocation6], 2880
    %v6041 = vld [vmem:[%s6040] sm:$0xff]
    %v6042 = vld [vmem:[%s6040 + $0x8] sm:$0xff]
    %v6043 = vld [vmem:[%s6040 + $0x10] sm:$0xff]
    %v6044 = vld [vmem:[%s6040 + $0x18] sm:$0xff]
    %v6045 = vld [vmem:[%s6040 + $0x20] sm:$0xff]
    %v6046 = vld [vmem:[%s6040 + $0x28] sm:$0xff]
    %v6047 = vld [vmem:[%s6040 + $0x30] sm:$0xff]
    %v6048 = vld [vmem:[%s6040 + $0x38] sm:$0xff]
    %v6049 = vld [vmem:[%s6040 + $0x40] sm:$0xff]
    %v6050 = vld [vmem:[%s6040 + $0x48] sm:$0xff]
    %v6051 = vld [vmem:[%s6040 + $0x50] sm:$0xff]
    %v6052 = vld [vmem:[%s6040 + $0x58] sm:$0xff]
    %6053 = vmatprep.subr.mxu0 0.0
    %6054 = vmatpush1.msra.mxu0 %v6041
    %6055 = vmatprep.subr.mxu0 0.0
    %6056 = vmatpush1.msra.mxu0 %v6042
    %6057 = vmatprep.subr.mxu0 0.0
    %6058 = vmatpush1.msra.mxu0 %v6043
    %6059 = vmatprep.subr.mxu0 0.0
    %6060 = vmatpush1.msra.mxu0 %v6044
    %6061 = vmatprep.subr.mxu0 0.0
    %6062 = vmatpush1.msra.mxu0 %v6045
    %6063 = vmatprep.subr.mxu0 0.0
    %6064 = vmatpush1.msra.mxu0 %v6046
    %6065 = vmatprep.subr.mxu0 0.0
    %6066 = vmatpush1.msra.mxu0 %v6047
    %6067 = vmatprep.subr.mxu0 0.0
    %6068 = vmatpush1.msra.mxu0 %v6048
    %6069 = vmatprep.subr.mxu0 0.0
    %6070 = vmatpush1.msra.mxu0 %v6049
    %6071 = vmatprep.subr.mxu0 0.0
    %6072 = vmatpush1.msra.mxu0 %v6050
    %6073 = vmatprep.subr.mxu0 0.0
    %6074 = vmatpush1.msra.mxu0 %v6051
    %6075 = vmatprep.subr.mxu0 0.0
    %6076 = vmatpush1.msra.mxu0 %v6052
    %6077 = vmatprep.subr.mxu0 0.0
    %6078 = vmatpush1.msra.mxu0 0.0
    %6079 = vmatprep.subr.mxu0 0.0
    %6080 = vmatpush1.msra.mxu0 0.0
    %6081 = vmatprep.subr.mxu0 0.0
    %6082 = vmatpush1.msra.mxu0 0.0
    %6083 = vmatprep.subr.mxu0 0.0
    %6084 = vmatpush1.msra.mxu0 0.0
    %6085 = vmatprep.subr.mxu0 0.0
    %6086 = vmatpush1.msra.mxu0 0.0
    %6087 = vmatprep.subr.mxu0 0.0
    %6088 = vmatpush1.msra.mxu0 0.0
    %6089 = vmatprep.subr.mxu0 0.0
    %6090 = vmatpush1.msra.mxu0 0.0
    %6091 = vmatprep.subr.mxu0 0.0
    %6092 = vmatpush1.msra.mxu0 0.0
    %6093 = vmatprep.subr.mxu0 0.0
    %6094 = vmatpush1.msra.mxu0 0.0
    %6095 = vmatprep.subr.mxu0 0.0
    %6096 = vmatpush1.msra.mxu0 0.0
    %6097 = vmatprep.subr.mxu0 0.0
    %6098 = vmatpush1.msra.mxu0 0.0
    %6099 = vmatprep.subr.mxu0 0.0
    %6100 = vmatpush1.msra.mxu0 0.0
    %6101 = vmatprep.subr.mxu0 0.0
    %6102 = vmatpush1.msra.mxu0 0.0
    %6103 = vmatprep.subr.mxu0 0.0
    %6104 = vmatpush1.msra.mxu0 0.0
    %6105 = vmatprep.subr.mxu0 0.0
    %6106 = vmatpush1.msra.mxu0 0.0
    %6107 = vmatprep.subr.mxu0 0.0
    %6108 = vmatpush1.msra.mxu0 0.0
    %6109 = vmatprep.subr.mxu0 0.0
    %6110 = vmatpush1.msra.mxu0 0.0
    %6111 = vmatprep.subr.mxu0 0.0
    %6112 = vmatpush1.msra.mxu0 0.0
    %6113 = vmatprep.subr.mxu0 0.0
    %6114 = vmatpush1.msra.mxu0 0.0
    %6115 = vmatprep.subr.mxu0 0.0
    %6116 = vmatpush1.msra.mxu0 0.0
    %6117 = vmatprep.mubr.f32.mxu0 0.0
    %6118 = vmatmul.mubr.f32.gmra.mrb[0].mxu0 %v4381
    %v6119 = vpop.f32.mrb[0].mxu0
    %v6120 = vadd.f32 0.0, %v6119
    %v6121 = vpop.f32.mrb[0].mxu0
    %6122 = vmatprep.mubr.f32.mxu0 0.0
    %6123 = vmatmul.mubr.f32.gmra.mrb[0].mxu0 %v4384
    %v6124 = vpop.f32.mrb[0].mxu0
    %v6125 = vadd.f32 0.0, %v6124
    %v6126 = vpop.f32.mrb[0].mxu0
    %6127 = vmatprep.mubr.f32.mxu0 0.0
    %6128 = vmatmul.mubr.f32.gmra.mrb[0].mxu0 %v4387
    %v6129 = vpop.f32.mrb[0].mxu0
    %v6130 = vadd.f32 0.0, %v6129
    %v6131 = vpop.f32.mrb[0].mxu0
    %6132 = vmatprep.mubr.f32.mxu0 0.0
    %6133 = vmatmul.mubr.f32.gmra.mrb[0].mxu0 %v4390
    %v6134 = vpop.f32.mrb[0].mxu0
    %v6135 = vadd.f32 0.0, %v6134
    %v6136 = vpop.f32.mrb[0].mxu0
    %6137 = vdwg.mxu0
    %6142 = vrot.lane.b32.xlu0 %v6033, 32
    %v6143 = vpop.permute.xlu0 %6142
    %6144 = vrot.lane.b32.xlu0 %v6035, 32
    %v6145 = vpop.permute.xlu0 %6144
    %6146 = vrot.lane.b32.xlu0 %v6037, 32
    %v6147 = vpop.permute.xlu0 %6146
    %6148 = vrot.lane.b32.xlu0 %v6039, 32
    %v6149 = vpop.permute.xlu0 %6148
    %v6154 = vsel %vm814, %v5794, %v6143
    %v6155 = vsel %vm814, %v5796, %v6145
    %v6156 = vsel %vm814, %v5798, %v6147
    %v6157 = vsel %vm814, %v5800, %v6149
    %v6159 = vsel %vm1873, %v6154, 0
    %v6162 = vsel %vm1873, %v6155, 0
    %v6165 = vsel %vm1873, %v6156, 0
    %v6168 = vsel %vm1873, %v6157, 0
    %6170 = vmatprep.subr.mxu0 0.0
    %6171 = vmatpush1.msra.mxu0 %v5881
    %6172 = vmatprep.subr.mxu0 0.0
    %6173 = vmatpush1.msra.mxu0 %v5886
    %6174 = vmatprep.subr.mxu0 0.0
    %6175 = vmatpush1.msra.mxu0 %v5891
    %6176 = vmatprep.subr.mxu0 0.0
    %6177 = vmatpush1.msra.mxu0 %v5896
    %6178 = vmatprep.subr.mxu0 0.0
    %6179 = vmatpush1.msra.mxu0 %v6120
    %6180 = vmatprep.subr.mxu0 0.0
    %6181 = vmatpush1.msra.mxu0 %v6125
    %6182 = vmatprep.subr.mxu0 0.0
    %6183 = vmatpush1.msra.mxu0 %v6130
    %6184 = vmatprep.subr.mxu0 0.0
    %6185 = vmatpush1.msra.mxu0 %v6135
    %6186 = vmatprep.subr.mxu0 0.0
    %6187 = vmatpush1.msra.mxu0 0.0
    %6188 = vmatprep.subr.mxu0 0.0
    %6189 = vmatpush1.msra.mxu0 0.0
    %6190 = vmatprep.subr.mxu0 0.0
    %6191 = vmatpush1.msra.mxu0 0.0
    %6192 = vmatprep.subr.mxu0 0.0
    %6193 = vmatpush1.msra.mxu0 0.0
    %6194 = vmatprep.subr.mxu0 0.0
    %6195 = vmatpush1.msra.mxu0 0.0
    %6196 = vmatprep.subr.mxu0 0.0
    %6197 = vmatpush1.msra.mxu0 0.0
    %6198 = vmatprep.subr.mxu0 0.0
    %6199 = vmatpush1.msra.mxu0 0.0
    %6200 = vmatprep.subr.mxu0 0.0
    %6201 = vmatpush1.msra.mxu0 0.0
    %6202 = vmatprep.subr.mxu0 0.0
    %6203 = vmatpush1.msra.mxu0 0.0
    %6204 = vmatprep.subr.mxu0 0.0
    %6205 = vmatpush1.msra.mxu0 0.0
    %6206 = vmatprep.subr.mxu0 0.0
    %6207 = vmatpush1.msra.mxu0 0.0
    %6208 = vmatprep.subr.mxu0 0.0
    %6209 = vmatpush1.msra.mxu0 0.0
    %6210 = vmatprep.subr.mxu0 0.0
    %6211 = vmatpush1.msra.mxu0 0.0
    %6212 = vmatprep.subr.mxu0 0.0
    %6213 = vmatpush1.msra.mxu0 0.0
    %6214 = vmatprep.subr.mxu0 0.0
    %6215 = vmatpush1.msra.mxu0 0.0
    %6216 = vmatprep.subr.mxu0 0.0
    %6217 = vmatpush1.msra.mxu0 0.0
    %6218 = vmatprep.subr.mxu0 0.0
    %6219 = vmatpush1.msra.mxu0 0.0
    %6220 = vmatprep.subr.mxu0 0.0
    %6221 = vmatpush1.msra.mxu0 0.0
    %6222 = vmatprep.subr.mxu0 0.0
    %6223 = vmatpush1.msra.mxu0 0.0
    %6224 = vmatprep.subr.mxu0 0.0
    %6225 = vmatpush1.msra.mxu0 0.0
    %6226 = vmatprep.subr.mxu0 0.0
    %6227 = vmatpush1.msra.mxu0 0.0
    %6228 = vmatprep.subr.mxu0 0.0
    %6229 = vmatpush1.msra.mxu0 0.0
    %6230 = vmatprep.subr.mxu0 0.0
    %6231 = vmatpush1.msra.mxu0 0.0
    %6232 = vmatprep.subr.mxu0 0.0
    %6233 = vmatpush1.msra.mxu0 0.0
    %6234 = vmatprep.mubr.f32.mxu0 0.0
    %6235 = vmatmul.mubr.f32.gmra.mrb[0].mxu0 %v6159
    %v6236 = vpop.f32.mrb[0].mxu0
    %v6237 = vadd.f32 0.0, %v6236
    %v6238 = vpop.f32.mrb[0].mxu0
    %6239 = vmatprep.mubr.f32.mxu0 0.0
    %6240 = vmatmul.mubr.f32.gmra.mrb[0].mxu0 %v6162
    %v6241 = vpop.f32.mrb[0].mxu0
    %v6242 = vadd.f32 0.0, %v6241
    %v6243 = vpop.f32.mrb[0].mxu0
    %6244 = vmatprep.mubr.f32.mxu0 0.0
    %6245 = vmatmul.mubr.f32.gmra.mrb[0].mxu0 %v6165
    %v6246 = vpop.f32.mrb[0].mxu0
    %v6247 = vadd.f32 0.0, %v6246
    %v6248 = vpop.f32.mrb[0].mxu0
    %6249 = vmatprep.mubr.f32.mxu0 0.0
    %6250 = vmatmul.mubr.f32.gmra.mrb[0].mxu0 %v6168
    %v6251 = vpop.f32.mrb[0].mxu0
    %v6252 = vadd.f32 0.0, %v6251
    %v6253 = vpop.f32.mrb[0].mxu0
    %6254 = vdwg.mxu0
    %v6255 = vadd.f32 %v5532, %v6237
    %v6256 = vadd.f32 %v5537, %v6242
    %v6257 = vadd.f32 %v5542, %v6247
    %v6258 = vadd.f32 %v5547, %v6252
    %s6259 = scalar_lea.vmem [#allocation6], 2304
    %v6260 = vld [vmem:[%s6259] sm:$0xff]
    %v6261 = vld [vmem:[%s6259 + $0x8] sm:$0xff]
    %v6262 = vld [vmem:[%s6259 + $0x10] sm:$0xff]
    %v6263 = vld [vmem:[%s6259 + $0x18] sm:$0xff]
    %v6264 = vld [vmem:[%s6259 + $0x20] sm:$0xff]
    %v6265 = vld [vmem:[%s6259 + $0x28] sm:$0xff]
    %v6266 = vld [vmem:[%s6259 + $0x30] sm:$0xff]
    %v6267 = vld [vmem:[%s6259 + $0x38] sm:$0xff]
    %v6268 = vld [vmem:[%s6259 + $0x40] sm:$0xff]
    %v6269 = vld [vmem:[%s6259 + $0x48] sm:$0xff]
    %v6270 = vld [vmem:[%s6259 + $0x50] sm:$0xff]
    %v6271 = vld [vmem:[%s6259 + $0x58] sm:$0xff]
    %6272 = vmatprep.subr.mxu0 0.0
    %6273 = vmatpush1.msra.mxu0 %v6260
    %6274 = vmatprep.subr.mxu0 0.0
    %6275 = vmatpush1.msra.mxu0 %v6261
    %6276 = vmatprep.subr.mxu0 0.0
    %6277 = vmatpush1.msra.mxu0 %v6262
    %6278 = vmatprep.subr.mxu0 0.0
    %6279 = vmatpush1.msra.mxu0 %v6263
    %6280 = vmatprep.subr.mxu0 0.0
    %6281 = vmatpush1.msra.mxu0 %v6264
    %6282 = vmatprep.subr.mxu0 0.0
    %6283 = vmatpush1.msra.mxu0 %v6265
    %6284 = vmatprep.subr.mxu0 0.0
    %6285 = vmatpush1.msra.mxu0 %v6266
    %6286 = vmatprep.subr.mxu0 0.0
    %6287 = vmatpush1.msra.mxu0 %v6267
    %6288 = vmatprep.subr.mxu0 0.0
    %6289 = vmatpush1.msra.mxu0 %v6268
    %6290 = vmatprep.subr.mxu0 0.0
    %6291 = vmatpush1.msra.mxu0 %v6269
    %6292 = vmatprep.subr.mxu0 0.0
    %6293 = vmatpush1.msra.mxu0 %v6270
    %6294 = vmatprep.subr.mxu0 0.0
    %6295 = vmatpush1.msra.mxu0 %v6271
    %6296 = vmatprep.subr.mxu0 0.0
    %6297 = vmatpush1.msra.mxu0 0.0
    %6298 = vmatprep.subr.mxu0 0.0
    %6299 = vmatpush1.msra.mxu0 0.0
    %6300 = vmatprep.subr.mxu0 0.0
    %6301 = vmatpush1.msra.mxu0 0.0
    %6302 = vmatprep.subr.mxu0 0.0
    %6303 = vmatpush1.msra.mxu0 0.0
    %6304 = vmatprep.subr.mxu0 0.0
    %6305 = vmatpush1.msra.mxu0 0.0
    %6306 = vmatprep.subr.mxu0 0.0
    %6307 = vmatpush1.msra.mxu0 0.0
    %6308 = vmatprep.subr.mxu0 0.0
    %6309 = vmatpush1.msra.mxu0 0.0
    %6310 = vmatprep.subr.mxu0 0.0
    %6311 = vmatpush1.msra.mxu0 0.0
    %6312 = vmatprep.subr.mxu0 0.0
    %6313 = vmatpush1.msra.mxu0 0.0
    %6314 = vmatprep.subr.mxu0 0.0
    %6315 = vmatpush1.msra.mxu0 0.0
    %6316 = vmatprep.subr.mxu0 0.0
    %6317 = vmatpush1.msra.mxu0 0.0
    %6318 = vmatprep.subr.mxu0 0.0
    %6319 = vmatpush1.msra.mxu0 0.0
    %6320 = vmatprep.subr.mxu0 0.0
    %6321 = vmatpush1.msra.mxu0 0.0
    %6322 = vmatprep.subr.mxu0 0.0
    %6323 = vmatpush1.msra.mxu0 0.0
    %6324 = vmatprep.subr.mxu0 0.0
    %6325 = vmatpush1.msra.mxu0 0.0
    %6326 = vmatprep.subr.mxu0 0.0
    %6327 = vmatpush1.msra.mxu0 0.0
    %6328 = vmatprep.subr.mxu0 0.0
    %6329 = vmatpush1.msra.mxu0 0.0
    %6330 = vmatprep.subr.mxu0 0.0
    %6331 = vmatpush1.msra.mxu0 0.0
    %6332 = vmatprep.subr.mxu0 0.0
    %6333 = vmatpush1.msra.mxu0 0.0
    %6334 = vmatprep.subr.mxu0 0.0
    %6335 = vmatpush1.msra.mxu0 0.0
    %6336 = vmatprep.mubr.f32.mxu0 0.0
    %6337 = vmatmul.mubr.f32.gmra.mrb[0].mxu0 %v4106
    %v6338 = vpop.f32.mrb[0].mxu0
    %v6339 = vadd.f32 0.0, %v6338
    %v6340 = vpop.f32.mrb[0].mxu0
    %6341 = vmatprep.mubr.f32.mxu0 0.0
    %6342 = vmatmul.mubr.f32.gmra.mrb[0].mxu0 %v4109
    %v6343 = vpop.f32.mrb[0].mxu0
    %v6344 = vadd.f32 0.0, %v6343
    %v6345 = vpop.f32.mrb[0].mxu0
    %6346 = vmatprep.mubr.f32.mxu0 0.0
    %6347 = vmatmul.mubr.f32.gmra.mrb[0].mxu0 %v4112
    %v6348 = vpop.f32.mrb[0].mxu0
    %v6349 = vadd.f32 0.0, %v6348
    %v6350 = vpop.f32.mrb[0].mxu0
    %6351 = vmatprep.mubr.f32.mxu0 0.0
    %6352 = vmatmul.mubr.f32.gmra.mrb[0].mxu0 %v4115
    %v6353 = vpop.f32.mrb[0].mxu0
    %v6354 = vadd.f32 0.0, %v6353
    %v6355 = vpop.f32.mrb[0].mxu0
    %6356 = vdwg.mxu0
    %v6358 = vsel %vm143, %v6339, 0
    %v6361 = vsel %vm143, %v6344, 0
    %v6364 = vsel %vm143, %v6349, 0
    %v6367 = vsel %vm143, %v6354, 0
    %6369 = vmatprep.subr.mxu0 0.0
    %6370 = vmatpush1.xpose.msra.mxu0 %v6358
    %6371 = vmatprep.subr.mxu0 0.0
    %6372 = vmatpush1.xpose.msra.mxu0 %v6361
    %6373 = vmatprep.subr.mxu0 0.0
    %6374 = vmatpush1.xpose.msra.mxu0 %v6364
    %6375 = vmatprep.subr.mxu0 0.0
    %6376 = vmatpush1.xpose.msra.mxu0 %v6367
    %6377 = vmatprep.subr.mxu0 0.0
    %6378 = vmatpush1.xpose.msra.mxu0 0.0
    %6379 = vmatprep.subr.mxu0 0.0
    %6380 = vmatpush1.xpose.msra.mxu0 0.0
    %6381 = vmatprep.subr.mxu0 0.0
    %6382 = vmatpush1.xpose.msra.mxu0 0.0
    %6383 = vmatprep.subr.mxu0 0.0
    %6384 = vmatpush1.xpose.msra.mxu0 0.0
    %6385 = vmatprep.subr.mxu0 0.0
    %6386 = vmatpush1.xpose.msra.mxu0 0.0
    %6387 = vmatprep.subr.mxu0 0.0
    %6388 = vmatpush1.xpose.msra.mxu0 0.0
    %6389 = vmatprep.subr.mxu0 0.0
    %6390 = vmatpush1.xpose.msra.mxu0 0.0
    %6391 = vmatprep.subr.mxu0 0.0
    %6392 = vmatpush1.xpose.msra.mxu0 0.0
    %6393 = vmatprep.subr.mxu0 0.0
    %6394 = vmatpush1.xpose.msra.mxu0 0.0
    %6395 = vmatprep.subr.mxu0 0.0
    %6396 = vmatpush1.xpose.msra.mxu0 0.0
    %6397 = vmatprep.subr.mxu0 0.0
    %6398 = vmatpush1.xpose.msra.mxu0 0.0
    %6399 = vmatprep.subr.mxu0 0.0
    %6400 = vmatpush1.xpose.msra.mxu0 0.0
    %6401 = vmatprep.subr.mxu0 0.0
    %6402 = vmatpush1.xpose.msra.mxu0 0.0
    %6403 = vmatprep.subr.mxu0 0.0
    %6404 = vmatpush1.xpose.msra.mxu0 0.0
    %6405 = vmatprep.subr.mxu0 0.0
    %6406 = vmatpush1.xpose.msra.mxu0 0.0
    %6407 = vmatprep.subr.mxu0 0.0
    %6408 = vmatpush1.xpose.msra.mxu0 0.0
    %6409 = vmatprep.subr.mxu0 0.0
    %6410 = vmatpush1.xpose.msra.mxu0 0.0
    %6411 = vmatprep.subr.mxu0 0.0
    %6412 = vmatpush1.xpose.msra.mxu0 0.0
    %6413 = vmatprep.subr.mxu0 0.0
    %6414 = vmatpush1.xpose.msra.mxu0 0.0
    %6415 = vmatprep.subr.mxu0 0.0
    %6416 = vmatpush1.xpose.msra.mxu0 0.0
    %6417 = vmatprep.subr.mxu0 0.0
    %6418 = vmatpush1.xpose.msra.mxu0 0.0
    %6419 = vmatprep.subr.mxu0 0.0
    %6420 = vmatpush1.xpose.msra.mxu0 0.0
    %6421 = vmatprep.subr.mxu0 0.0
    %6422 = vmatpush1.xpose.msra.mxu0 0.0
    %6423 = vmatprep.subr.mxu0 0.0
    %6424 = vmatpush1.xpose.msra.mxu0 0.0
    %6425 = vmatprep.subr.mxu0 0.0
    %6426 = vmatpush1.xpose.msra.mxu0 0.0
    %6427 = vmatprep.subr.mxu0 0.0
    %6428 = vmatpush1.xpose.msra.mxu0 0.0
    %6429 = vmatprep.subr.mxu0 0.0
    %6430 = vmatpush1.xpose.msra.mxu0 0.0
    %6431 = vmatprep.subr.mxu0 0.0
    %6432 = vmatpush1.xpose.msra.mxu0 0.0
    %6433 = vmatprep.mubr.f32.mxu0 0.0
    %6434 = vmatmul.mubr.f32.gmra.mrb[0].mxu0 %v4203
    %v6435 = vpop.f32.mrb[0].mxu0
    %v6436 = vadd.f32 %v2799, %v6435
    %v6437 = vpop.f32.mrb[0].mxu0
    %6438 = vmatprep.mubr.f32.mxu0 0.0
    %6439 = vmatmul.mubr.f32.gmra.mrb[0].mxu0 %v4206
    %v6440 = vpop.f32.mrb[0].mxu0
    %v6441 = vadd.f32 %v2800, %v6440
    %v6442 = vpop.f32.mrb[0].mxu0
    %6443 = vmatprep.mubr.f32.mxu0 0.0
    %6444 = vmatmul.mubr.f32.gmra.mrb[0].mxu0 %v4209
    %v6445 = vpop.f32.mrb[0].mxu0
    %v6446 = vadd.f32 %v2801, %v6445
    %v6447 = vpop.f32.mrb[0].mxu0
    %6448 = vmatprep.mubr.f32.mxu0 0.0
    %6449 = vmatmul.mubr.f32.gmra.mrb[0].mxu0 %v4212
    %v6450 = vpop.f32.mrb[0].mxu0
    %v6451 = vadd.f32 %v2802, %v6450
    %v6452 = vpop.f32.mrb[0].mxu0
    %6453 = vdwg.mxu0
    %v6454 = vsel %vm814, %v6436, -inf
    %6455 = vmax.xlane.f32.xlu0 %v6454
    %v6456 = vpop.xlane.xlu0 %6455
    %v6457 = vsel %vm814, %v6441, -inf
    %6458 = vmax.xlane.f32.xlu0 %v6457
    %v6459 = vpop.xlane.xlu0 %6458
    %v6460 = vsel %vm814, %v6446, -inf
    %6461 = vmax.xlane.f32.xlu0 %v6460
    %v6462 = vpop.xlane.xlu0 %6461
    %v6463 = vsel %vm814, %v6451, -inf
    %6464 = vmax.xlane.f32.xlu0 %v6463
    %v6465 = vpop.xlane.xlu0 %6464
    %v6466 = vsub.f32 %v6436, %v6456
    %v6467 = vsub.f32 %v6441, %v6459
    %v6468 = vsub.f32 %v6446, %v6462
    %v6469 = vsub.f32 %v6451, %v6465
    %v6470 = vmul.f32 %v6466, 1.442695
    %v6471 = vpow.pop %v6470
    %v6472 = vmul.f32 %v6467, 1.442695
    %v6473 = vpow.pop %v6472
    %v6474 = vmul.f32 %v6468, 1.442695
    %v6475 = vpow.pop %v6474
    %v6476 = vmul.f32 %v6469, 1.442695
    %v6477 = vpow.pop %v6476
    %v6478 = vmul.f32 %v6471, %v2791
    %v6479 = vmul.f32 %v6473, %v2792
    %v6480 = vmul.f32 %v6475, %v2793
    %v6481 = vmul.f32 %v6477, %v2794
    %v6482 = vsel %vm814, %v6478, 0.0
    %6483 = vadd.xlane.f32.xlu0 %v6482
    %v6484 = vpop.xlane.xlu0 %6483
    %v6485 = vsel %vm814, %v6479, 0.0
    %6486 = vadd.xlane.f32.xlu0 %v6485
    %v6487 = vpop.xlane.xlu0 %6486
    %v6488 = vsel %vm814, %v6480, 0.0
    %6489 = vadd.xlane.f32.xlu0 %v6488
    %v6490 = vpop.xlane.xlu0 %6489
    %v6491 = vsel %vm814, %v6481, 0.0
    %6492 = vadd.xlane.f32.xlu0 %v6491
    %v6493 = vpop.xlane.xlu0 %6492
    %vm6494 = vcmp.gt.f32.partialorder %v6484, 0.0
    %vm6495 = vcmp.gt.f32.partialorder %v6487, 0.0
    %vm6496 = vcmp.gt.f32.partialorder %v6490, 0.0
    %vm6497 = vcmp.gt.f32.partialorder %v6493, 0.0
    %v6498 = vsel %vm6494, %v6484, 1.0
    %v6499 = vsel %vm6495, %v6487, 1.0
    %v6500 = vsel %vm6496, %v6490, 1.0
    %v6501 = vsel %vm6497, %v6493, 1.0
    %v6502 = vrcp.pop %v6498
    %v6503 = vmul.f32 %v6478, %v6502
    %v6504 = vrcp.pop %v6499
    %v6505 = vmul.f32 %v6479, %v6504
    %v6506 = vrcp.pop %v6500
    %v6507 = vmul.f32 %v6480, %v6506
    %v6508 = vrcp.pop %v6501
    %v6509 = vmul.f32 %v6481, %v6508
    %s6510 = scalar_lea.vmem [#allocation6], 2976
    %v6511 = vld [vmem:[%s6510] sm:$0xff]
    %v6512 = vld [vmem:[%s6510 + $0x8] sm:$0xff]
    %v6513 = vld [vmem:[%s6510 + $0x10] sm:$0xff]
    %v6514 = vld [vmem:[%s6510 + $0x18] sm:$0xff]
    %v6515 = vld [vmem:[%s6510 + $0x20] sm:$0xff]
    %v6516 = vld [vmem:[%s6510 + $0x28] sm:$0xff]
    %v6517 = vld [vmem:[%s6510 + $0x30] sm:$0xff]
    %v6518 = vld [vmem:[%s6510 + $0x38] sm:$0xff]
    %v6519 = vld [vmem:[%s6510 + $0x40] sm:$0xff]
    %v6520 = vld [vmem:[%s6510 + $0x48] sm:$0xff]
    %v6521 = vld [vmem:[%s6510 + $0x50] sm:$0xff]
    %v6522 = vld [vmem:[%s6510 + $0x58] sm:$0xff]
    %6523 = vmatprep.subr.mxu0 0.0
    %6524 = vmatpush1.msra.mxu0 %v6511
    %6525 = vmatprep.subr.mxu0 0.0
    %6526 = vmatpush1.msra.mxu0 %v6512
    %6527 = vmatprep.subr.mxu0 0.0
    %6528 = vmatpush1.msra.mxu0 %v6513
    %6529 = vmatprep.subr.mxu0 0.0
    %6530 = vmatpush1.msra.mxu0 %v6514
    %6531 = vmatprep.subr.mxu0 0.0
    %6532 = vmatpush1.msra.mxu0 %v6515
    %6533 = vmatprep.subr.mxu0 0.0
    %6534 = vmatpush1.msra.mxu0 %v6516
    %6535 = vmatprep.subr.mxu0 0.0
    %6536 = vmatpush1.msra.mxu0 %v6517
    %6537 = vmatprep.subr.mxu0 0.0
    %6538 = vmatpush1.msra.mxu0 %v6518
    %6539 = vmatprep.subr.mxu0 0.0
    %6540 = vmatpush1.msra.mxu0 %v6519
    %6541 = vmatprep.subr.mxu0 0.0
    %6542 = vmatpush1.msra.mxu0 %v6520
    %6543 = vmatprep.subr.mxu0 0.0
    %6544 = vmatpush1.msra.mxu0 %v6521
    %6545 = vmatprep.subr.mxu0 0.0
    %6546 = vmatpush1.msra.mxu0 %v6522
    %6547 = vmatprep.subr.mxu0 0.0
    %6548 = vmatpush1.msra.mxu0 0.0
    %6549 = vmatprep.subr.mxu0 0.0
    %6550 = vmatpush1.msra.mxu0 0.0
    %6551 = vmatprep.subr.mxu0 0.0
    %6552 = vmatpush1.msra.mxu0 0.0
    %6553 = vmatprep.subr.mxu0 0.0
    %6554 = vmatpush1.msra.mxu0 0.0
    %6555 = vmatprep.subr.mxu0 0.0
    %6556 = vmatpush1.msra.mxu0 0.0
    %6557 = vmatprep.subr.mxu0 0.0
    %6558 = vmatpush1.msra.mxu0 0.0
    %6559 = vmatprep.subr.mxu0 0.0
    %6560 = vmatpush1.msra.mxu0 0.0
    %6561 = vmatprep.subr.mxu0 0.0
    %6562 = vmatpush1.msra.mxu0 0.0
    %6563 = vmatprep.subr.mxu0 0.0
    %6564 = vmatpush1.msra.mxu0 0.0
    %6565 = vmatprep.subr.mxu0 0.0
    %6566 = vmatpush1.msra.mxu0 0.0
    %6567 = vmatprep.subr.mxu0 0.0
    %6568 = vmatpush1.msra.mxu0 0.0
    %6569 = vmatprep.subr.mxu0 0.0
    %6570 = vmatpush1.msra.mxu0 0.0
    %6571 = vmatprep.subr.mxu0 0.0
    %6572 = vmatpush1.msra.mxu0 0.0
    %6573 = vmatprep.subr.mxu0 0.0
    %6574 = vmatpush1.msra.mxu0 0.0
    %6575 = vmatprep.subr.mxu0 0.0
    %6576 = vmatpush1.msra.mxu0 0.0
    %6577 = vmatprep.subr.mxu0 0.0
    %6578 = vmatpush1.msra.mxu0 0.0
    %6579 = vmatprep.subr.mxu0 0.0
    %6580 = vmatpush1.msra.mxu0 0.0
    %6581 = vmatprep.subr.mxu0 0.0
    %6582 = vmatpush1.msra.mxu0 0.0
    %6583 = vmatprep.subr.mxu0 0.0
    %6584 = vmatpush1.msra.mxu0 0.0
    %6585 = vmatprep.subr.mxu0 0.0
    %6586 = vmatpush1.msra.mxu0 0.0
    %6587 = vmatprep.mubr.f32.mxu0 0.0
    %6588 = vmatmul.mubr.f32.gmra.mrb[0].mxu0 %v4381
    %v6589 = vpop.f32.mrb[0].mxu0
    %v6590 = vadd.f32 0.0, %v6589
    %v6591 = vpop.f32.mrb[0].mxu0
    %6592 = vmatprep.mubr.f32.mxu0 0.0
    %6593 = vmatmul.mubr.f32.gmra.mrb[0].mxu0 %v4384
    %v6594 = vpop.f32.mrb[0].mxu0
    %v6595 = vadd.f32 0.0, %v6594
    %v6596 = vpop.f32.mrb[0].mxu0
    %6597 = vmatprep.mubr.f32.mxu0 0.0
    %6598 = vmatmul.mubr.f32.gmra.mrb[0].mxu0 %v4387
    %v6599 = vpop.f32.mrb[0].mxu0
    %v6600 = vadd.f32 0.0, %v6599
    %v6601 = vpop.f32.mrb[0].mxu0
    %6602 = vmatprep.mubr.f32.mxu0 0.0
    %6603 = vmatmul.mubr.f32.gmra.mrb[0].mxu0 %v4390
    %v6604 = vpop.f32.mrb[0].mxu0
    %v6605 = vadd.f32 0.0, %v6604
    %v6606 = vpop.f32.mrb[0].mxu0
    %6607 = vdwg.mxu0
    %6608 = vmatprep.subr.mxu0 0.0
    %6609 = vmatpush1.xpose.msra.mxu0 %v6358
    %6610 = vmatprep.subr.mxu0 0.0
    %6611 = vmatpush1.xpose.msra.mxu0 %v6361
    %6612 = vmatprep.subr.mxu0 0.0
    %6613 = vmatpush1.xpose.msra.mxu0 %v6364
    %6614 = vmatprep.subr.mxu0 0.0
    %6615 = vmatpush1.xpose.msra.mxu0 %v6367
    %6616 = vmatprep.subr.mxu0 0.0
    %6617 = vmatpush1.xpose.msra.mxu0 0.0
    %6618 = vmatprep.subr.mxu0 0.0
    %6619 = vmatpush1.xpose.msra.mxu0 0.0
    %6620 = vmatprep.subr.mxu0 0.0
    %6621 = vmatpush1.xpose.msra.mxu0 0.0
    %6622 = vmatprep.subr.mxu0 0.0
    %6623 = vmatpush1.xpose.msra.mxu0 0.0
    %6624 = vmatprep.subr.mxu0 0.0
    %6625 = vmatpush1.xpose.msra.mxu0 0.0
    %6626 = vmatprep.subr.mxu0 0.0
    %6627 = vmatpush1.xpose.msra.mxu0 0.0
    %6628 = vmatprep.subr.mxu0 0.0
    %6629 = vmatpush1.xpose.msra.mxu0 0.0
    %6630 = vmatprep.subr.mxu0 0.0
    %6631 = vmatpush1.xpose.msra.mxu0 0.0
    %6632 = vmatprep.subr.mxu0 0.0
    %6633 = vmatpush1.xpose.msra.mxu0 0.0
    %6634 = vmatprep.subr.mxu0 0.0
    %6635 = vmatpush1.xpose.msra.mxu0 0.0
    %6636 = vmatprep.subr.mxu0 0.0
    %6637 = vmatpush1.xpose.msra.mxu0 0.0
    %6638 = vmatprep.subr.mxu0 0.0
    %6639 = vmatpush1.xpose.msra.mxu0 0.0
    %6640 = vmatprep.subr.mxu0 0.0
    %6641 = vmatpush1.xpose.msra.mxu0 0.0
    %6642 = vmatprep.subr.mxu0 0.0
    %6643 = vmatpush1.xpose.msra.mxu0 0.0
    %6644 = vmatprep.subr.mxu0 0.0
    %6645 = vmatpush1.xpose.msra.mxu0 0.0
    %6646 = vmatprep.subr.mxu0 0.0
    %6647 = vmatpush1.xpose.msra.mxu0 0.0
    %6648 = vmatprep.subr.mxu0 0.0
    %6649 = vmatpush1.xpose.msra.mxu0 0.0
    %6650 = vmatprep.subr.mxu0 0.0
    %6651 = vmatpush1.xpose.msra.mxu0 0.0
    %6652 = vmatprep.subr.mxu0 0.0
    %6653 = vmatpush1.xpose.msra.mxu0 0.0
    %6654 = vmatprep.subr.mxu0 0.0
    %6655 = vmatpush1.xpose.msra.mxu0 0.0
    %6656 = vmatprep.subr.mxu0 0.0
    %6657 = vmatpush1.xpose.msra.mxu0 0.0
    %6658 = vmatprep.subr.mxu0 0.0
    %6659 = vmatpush1.xpose.msra.mxu0 0.0
    %6660 = vmatprep.subr.mxu0 0.0
    %6661 = vmatpush1.xpose.msra.mxu0 0.0
    %6662 = vmatprep.subr.mxu0 0.0
    %6663 = vmatpush1.xpose.msra.mxu0 0.0
    %6664 = vmatprep.subr.mxu0 0.0
    %6665 = vmatpush1.xpose.msra.mxu0 0.0
    %6666 = vmatprep.subr.mxu0 0.0
    %6667 = vmatpush1.xpose.msra.mxu0 0.0
    %6668 = vmatprep.subr.mxu0 0.0
    %6669 = vmatpush1.xpose.msra.mxu0 0.0
    %6670 = vmatprep.subr.mxu0 0.0
    %6671 = vmatpush1.xpose.msra.mxu0 0.0
    %6672 = vmatprep.mubr.f32.mxu0 0.0
    %6673 = vmatmul.mubr.f32.gmra.mrb[0].mxu0 %v4478
    %v6674 = vpop.f32.mrb[0].mxu0
    %v6675 = vadd.f32 %v2799, %v6674
    %v6676 = vpop.f32.mrb[0].mxu0
    %6677 = vmatprep.mubr.f32.mxu0 0.0
    %6678 = vmatmul.mubr.f32.gmra.mrb[0].mxu0 %v4481
    %v6679 = vpop.f32.mrb[0].mxu0
    %v6680 = vadd.f32 %v2800, %v6679
    %v6681 = vpop.f32.mrb[0].mxu0
    %6682 = vmatprep.mubr.f32.mxu0 0.0
    %6683 = vmatmul.mubr.f32.gmra.mrb[0].mxu0 %v4484
    %v6684 = vpop.f32.mrb[0].mxu0
    %v6685 = vadd.f32 %v2801, %v6684
    %v6686 = vpop.f32.mrb[0].mxu0
    %6687 = vmatprep.mubr.f32.mxu0 0.0
    %6688 = vmatmul.mubr.f32.gmra.mrb[0].mxu0 %v4487
    %v6689 = vpop.f32.mrb[0].mxu0
    %v6690 = vadd.f32 %v2802, %v6689
    %v6691 = vpop.f32.mrb[0].mxu0
    %6692 = vdwg.mxu0
    %v6693 = vsel %vm814, %v6675, -inf
    %6694 = vmax.xlane.f32.xlu0 %v6693
    %v6695 = vpop.xlane.xlu0 %6694
    %v6696 = vsel %vm814, %v6680, -inf
    %6697 = vmax.xlane.f32.xlu0 %v6696
    %v6698 = vpop.xlane.xlu0 %6697
    %v6699 = vsel %vm814, %v6685, -inf
    %6700 = vmax.xlane.f32.xlu0 %v6699
    %v6701 = vpop.xlane.xlu0 %6700
    %v6702 = vsel %vm814, %v6690, -inf
    %6703 = vmax.xlane.f32.xlu0 %v6702
    %v6704 = vpop.xlane.xlu0 %6703
    %v6705 = vsub.f32 %v6675, %v6695
    %v6706 = vsub.f32 %v6680, %v6698
    %v6707 = vsub.f32 %v6685, %v6701
    %v6708 = vsub.f32 %v6690, %v6704
    %v6709 = vmul.f32 %v6705, 1.442695
    %v6710 = vpow.pop %v6709
    %v6711 = vmul.f32 %v6706, 1.442695
    %v6712 = vpow.pop %v6711
    %v6713 = vmul.f32 %v6707, 1.442695
    %v6714 = vpow.pop %v6713
    %v6715 = vmul.f32 %v6708, 1.442695
    %v6716 = vpow.pop %v6715
    %v6717 = vmul.f32 %v6710, %v2791
    %v6718 = vmul.f32 %v6712, %v2792
    %v6719 = vmul.f32 %v6714, %v2793
    %v6720 = vmul.f32 %v6716, %v2794
    %v6721 = vsel %vm814, %v6717, 0.0
    %6722 = vadd.xlane.f32.xlu0 %v6721
    %v6723 = vpop.xlane.xlu0 %6722
    %v6724 = vsel %vm814, %v6718, 0.0
    %6725 = vadd.xlane.f32.xlu0 %v6724
    %v6726 = vpop.xlane.xlu0 %6725
    %v6727 = vsel %vm814, %v6719, 0.0
    %6728 = vadd.xlane.f32.xlu0 %v6727
    %v6729 = vpop.xlane.xlu0 %6728
    %v6730 = vsel %vm814, %v6720, 0.0
    %6731 = vadd.xlane.f32.xlu0 %v6730
    %v6732 = vpop.xlane.xlu0 %6731
    %vm6733 = vcmp.gt.f32.partialorder %v6723, 0.0
    %vm6734 = vcmp.gt.f32.partialorder %v6726, 0.0
    %vm6735 = vcmp.gt.f32.partialorder %v6729, 0.0
    %vm6736 = vcmp.gt.f32.partialorder %v6732, 0.0
    %v6737 = vsel %vm6733, %v6723, 1.0
    %v6738 = vsel %vm6734, %v6726, 1.0
    %v6739 = vsel %vm6735, %v6729, 1.0
    %v6740 = vsel %vm6736, %v6732, 1.0
    %v6741 = vrcp.pop %v6737
    %v6742 = vmul.f32 %v6717, %v6741
    %v6743 = vrcp.pop %v6738
    %v6744 = vmul.f32 %v6718, %v6743
    %v6745 = vrcp.pop %v6739
    %v6746 = vmul.f32 %v6719, %v6745
    %v6747 = vrcp.pop %v6740
    %v6748 = vmul.f32 %v6720, %v6747
    %s6749 = scalar_lea.vmem [#allocation6], 3072
    %v6750 = vld [vmem:[%s6749] sm:$0xff]
    %v6751 = vld [vmem:[%s6749 + $0x8] sm:$0xff]
    %v6752 = vld [vmem:[%s6749 + $0x10] sm:$0xff]
    %v6753 = vld [vmem:[%s6749 + $0x18] sm:$0xff]
    %v6754 = vld [vmem:[%s6749 + $0x20] sm:$0xff]
    %v6755 = vld [vmem:[%s6749 + $0x28] sm:$0xff]
    %v6756 = vld [vmem:[%s6749 + $0x30] sm:$0xff]
    %v6757 = vld [vmem:[%s6749 + $0x38] sm:$0xff]
    %v6758 = vld [vmem:[%s6749 + $0x40] sm:$0xff]
    %v6759 = vld [vmem:[%s6749 + $0x48] sm:$0xff]
    %v6760 = vld [vmem:[%s6749 + $0x50] sm:$0xff]
    %v6761 = vld [vmem:[%s6749 + $0x58] sm:$0xff]
    %6762 = vmatprep.subr.mxu0 0.0
    %6763 = vmatpush1.msra.mxu0 %v6750
    %6764 = vmatprep.subr.mxu0 0.0
    %6765 = vmatpush1.msra.mxu0 %v6751
    %6766 = vmatprep.subr.mxu0 0.0
    %6767 = vmatpush1.msra.mxu0 %v6752
    %6768 = vmatprep.subr.mxu0 0.0
    %6769 = vmatpush1.msra.mxu0 %v6753
    %6770 = vmatprep.subr.mxu0 0.0
    %6771 = vmatpush1.msra.mxu0 %v6754
    %6772 = vmatprep.subr.mxu0 0.0
    %6773 = vmatpush1.msra.mxu0 %v6755
    %6774 = vmatprep.subr.mxu0 0.0
    %6775 = vmatpush1.msra.mxu0 %v6756
    %6776 = vmatprep.subr.mxu0 0.0
    %6777 = vmatpush1.msra.mxu0 %v6757
    %6778 = vmatprep.subr.mxu0 0.0
    %6779 = vmatpush1.msra.mxu0 %v6758
    %6780 = vmatprep.subr.mxu0 0.0
    %6781 = vmatpush1.msra.mxu0 %v6759
    %6782 = vmatprep.subr.mxu0 0.0
    %6783 = vmatpush1.msra.mxu0 %v6760
    %6784 = vmatprep.subr.mxu0 0.0
    %6785 = vmatpush1.msra.mxu0 %v6761
    %6786 = vmatprep.subr.mxu0 0.0
    %6787 = vmatpush1.msra.mxu0 0.0
    %6788 = vmatprep.subr.mxu0 0.0
    %6789 = vmatpush1.msra.mxu0 0.0
    %6790 = vmatprep.subr.mxu0 0.0
    %6791 = vmatpush1.msra.mxu0 0.0
    %6792 = vmatprep.subr.mxu0 0.0
    %6793 = vmatpush1.msra.mxu0 0.0
    %6794 = vmatprep.subr.mxu0 0.0
    %6795 = vmatpush1.msra.mxu0 0.0
    %6796 = vmatprep.subr.mxu0 0.0
    %6797 = vmatpush1.msra.mxu0 0.0
    %6798 = vmatprep.subr.mxu0 0.0
    %6799 = vmatpush1.msra.mxu0 0.0
    %6800 = vmatprep.subr.mxu0 0.0
    %6801 = vmatpush1.msra.mxu0 0.0
    %6802 = vmatprep.subr.mxu0 0.0
    %6803 = vmatpush1.msra.mxu0 0.0
    %6804 = vmatprep.subr.mxu0 0.0
    %6805 = vmatpush1.msra.mxu0 0.0
    %6806 = vmatprep.subr.mxu0 0.0
    %6807 = vmatpush1.msra.mxu0 0.0
    %6808 = vmatprep.subr.mxu0 0.0
    %6809 = vmatpush1.msra.mxu0 0.0
    %6810 = vmatprep.subr.mxu0 0.0
    %6811 = vmatpush1.msra.mxu0 0.0
    %6812 = vmatprep.subr.mxu0 0.0
    %6813 = vmatpush1.msra.mxu0 0.0
    %6814 = vmatprep.subr.mxu0 0.0
    %6815 = vmatpush1.msra.mxu0 0.0
    %6816 = vmatprep.subr.mxu0 0.0
    %6817 = vmatpush1.msra.mxu0 0.0
    %6818 = vmatprep.subr.mxu0 0.0
    %6819 = vmatpush1.msra.mxu0 0.0
    %6820 = vmatprep.subr.mxu0 0.0
    %6821 = vmatpush1.msra.mxu0 0.0
    %6822 = vmatprep.subr.mxu0 0.0
    %6823 = vmatpush1.msra.mxu0 0.0
    %6824 = vmatprep.subr.mxu0 0.0
    %6825 = vmatpush1.msra.mxu0 0.0
    %6826 = vmatprep.mubr.f32.mxu0 0.0
    %6827 = vmatmul.mubr.f32.gmra.mrb[0].mxu0 %v4381
    %v6828 = vpop.f32.mrb[0].mxu0
    %v6829 = vadd.f32 0.0, %v6828
    %v6830 = vpop.f32.mrb[0].mxu0
    %6831 = vmatprep.mubr.f32.mxu0 0.0
    %6832 = vmatmul.mubr.f32.gmra.mrb[0].mxu0 %v4384
    %v6833 = vpop.f32.mrb[0].mxu0
    %v6834 = vadd.f32 0.0, %v6833
    %v6835 = vpop.f32.mrb[0].mxu0
    %6836 = vmatprep.mubr.f32.mxu0 0.0
    %6837 = vmatmul.mubr.f32.gmra.mrb[0].mxu0 %v4387
    %v6838 = vpop.f32.mrb[0].mxu0
    %v6839 = vadd.f32 0.0, %v6838
    %v6840 = vpop.f32.mrb[0].mxu0
    %6841 = vmatprep.mubr.f32.mxu0 0.0
    %6842 = vmatmul.mubr.f32.gmra.mrb[0].mxu0 %v4390
    %v6843 = vpop.f32.mrb[0].mxu0
    %v6844 = vadd.f32 0.0, %v6843
    %v6845 = vpop.f32.mrb[0].mxu0
    %6846 = vdwg.mxu0
    %6851 = vrot.lane.b32.xlu0 %v6742, 32
    %v6852 = vpop.permute.xlu0 %6851
    %6853 = vrot.lane.b32.xlu0 %v6744, 32
    %v6854 = vpop.permute.xlu0 %6853
    %6855 = vrot.lane.b32.xlu0 %v6746, 32
    %v6856 = vpop.permute.xlu0 %6855
    %6857 = vrot.lane.b32.xlu0 %v6748, 32
    %v6858 = vpop.permute.xlu0 %6857
    %v6863 = vsel %vm814, %v6503, %v6852
    %v6864 = vsel %vm814, %v6505, %v6854
    %v6865 = vsel %vm814, %v6507, %v6856
    %v6866 = vsel %vm814, %v6509, %v6858
    %v6868 = vsel %vm1873, %v6863, 0
    %v6871 = vsel %vm1873, %v6864, 0
    %v6874 = vsel %vm1873, %v6865, 0
    %v6877 = vsel %vm1873, %v6866, 0
    %6879 = vmatprep.subr.mxu0 0.0
    %6880 = vmatpush1.msra.mxu0 %v6590
    %6881 = vmatprep.subr.mxu0 0.0
    %6882 = vmatpush1.msra.mxu0 %v6595
    %6883 = vmatprep.subr.mxu0 0.0
    %6884 = vmatpush1.msra.mxu0 %v6600
    %6885 = vmatprep.subr.mxu0 0.0
    %6886 = vmatpush1.msra.mxu0 %v6605
    %6887 = vmatprep.subr.mxu0 0.0
    %6888 = vmatpush1.msra.mxu0 %v6829
    %6889 = vmatprep.subr.mxu0 0.0
    %6890 = vmatpush1.msra.mxu0 %v6834
    %6891 = vmatprep.subr.mxu0 0.0
    %6892 = vmatpush1.msra.mxu0 %v6839
    %6893 = vmatprep.subr.mxu0 0.0
    %6894 = vmatpush1.msra.mxu0 %v6844
    %6895 = vmatprep.subr.mxu0 0.0
    %6896 = vmatpush1.msra.mxu0 0.0
    %6897 = vmatprep.subr.mxu0 0.0
    %6898 = vmatpush1.msra.mxu0 0.0
    %6899 = vmatprep.subr.mxu0 0.0
    %6900 = vmatpush1.msra.mxu0 0.0
    %6901 = vmatprep.subr.mxu0 0.0
    %6902 = vmatpush1.msra.mxu0 0.0
    %6903 = vmatprep.subr.mxu0 0.0
    %6904 = vmatpush1.msra.mxu0 0.0
    %6905 = vmatprep.subr.mxu0 0.0
    %6906 = vmatpush1.msra.mxu0 0.0
    %6907 = vmatprep.subr.mxu0 0.0
    %6908 = vmatpush1.msra.mxu0 0.0
    %6909 = vmatprep.subr.mxu0 0.0
    %6910 = vmatpush1.msra.mxu0 0.0
    %6911 = vmatprep.subr.mxu0 0.0
    %6912 = vmatpush1.msra.mxu0 0.0
    %6913 = vmatprep.subr.mxu0 0.0
    %6914 = vmatpush1.msra.mxu0 0.0
    %6915 = vmatprep.subr.mxu0 0.0
    %6916 = vmatpush1.msra.mxu0 0.0
    %6917 = vmatprep.subr.mxu0 0.0
    %6918 = vmatpush1.msra.mxu0 0.0
    %6919 = vmatprep.subr.mxu0 0.0
    %6920 = vmatpush1.msra.mxu0 0.0
    %6921 = vmatprep.subr.mxu0 0.0
    %6922 = vmatpush1.msra.mxu0 0.0
    %6923 = vmatprep.subr.mxu0 0.0
    %6924 = vmatpush1.msra.mxu0 0.0
    %6925 = vmatprep.subr.mxu0 0.0
    %6926 = vmatpush1.msra.mxu0 0.0
    %6927 = vmatprep.subr.mxu0 0.0
    %6928 = vmatpush1.msra.mxu0 0.0
    %6929 = vmatprep.subr.mxu0 0.0
    %6930 = vmatpush1.msra.mxu0 0.0
    %6931 = vmatprep.subr.mxu0 0.0
    %6932 = vmatpush1.msra.mxu0 0.0
    %6933 = vmatprep.subr.mxu0 0.0
    %6934 = vmatpush1.msra.mxu0 0.0
    %6935 = vmatprep.subr.mxu0 0.0
    %6936 = vmatpush1.msra.mxu0 0.0
    %6937 = vmatprep.subr.mxu0 0.0
    %6938 = vmatpush1.msra.mxu0 0.0
    %6939 = vmatprep.subr.mxu0 0.0
    %6940 = vmatpush1.msra.mxu0 0.0
    %6941 = vmatprep.subr.mxu0 0.0
    %6942 = vmatpush1.msra.mxu0 0.0
    %6943 = vmatprep.mubr.f32.mxu0 0.0
    %6944 = vmatmul.mubr.f32.gmra.mrb[0].mxu0 %v6868
    %v6945 = vpop.f32.mrb[0].mxu0
    %v6946 = vadd.f32 0.0, %v6945
    %v6947 = vpop.f32.mrb[0].mxu0
    %6948 = vmatprep.mubr.f32.mxu0 0.0
    %6949 = vmatmul.mubr.f32.gmra.mrb[0].mxu0 %v6871
    %v6950 = vpop.f32.mrb[0].mxu0
    %v6951 = vadd.f32 0.0, %v6950
    %v6952 = vpop.f32.mrb[0].mxu0
    %6953 = vmatprep.mubr.f32.mxu0 0.0
    %6954 = vmatmul.mubr.f32.gmra.mrb[0].mxu0 %v6874
    %v6955 = vpop.f32.mrb[0].mxu0
    %v6956 = vadd.f32 0.0, %v6955
    %v6957 = vpop.f32.mrb[0].mxu0
    %6958 = vmatprep.mubr.f32.mxu0 0.0
    %6959 = vmatmul.mubr.f32.gmra.mrb[0].mxu0 %v6877
    %v6960 = vpop.f32.mrb[0].mxu0
    %v6961 = vadd.f32 0.0, %v6960
    %v6962 = vpop.f32.mrb[0].mxu0
    %6963 = vdwg.mxu0
    %v6964 = vadd.f32 %v6255, %v6946
    %v6965 = vadd.f32 %v6256, %v6951
    %v6966 = vadd.f32 %v6257, %v6956
    %v6967 = vadd.f32 %v6258, %v6961
    %v6968 = vmul.f32 %v6964, 0.5
    %v6969 = vmul.f32 %v6965, 0.5
    %v6970 = vmul.f32 %v6966, 0.5
    %v6971 = vmul.f32 %v6967, 0.5
    %v6972 = vmul.f32 %v6964, 0.70710677
    %v6973 = vmul.f32 %v6965, 0.70710677
    %v6974 = vmul.f32 %v6966, 0.70710677
    %v6975 = vmul.f32 %v6967, 0.70710677
    %v6976 = vand.u32 2147483647, %v6972
    %v6977 = vand.u32 2147483647, %v6973
    %v6978 = vand.u32 2147483647, %v6974
    %v6979 = vand.u32 2147483647, %v6975
    %v6980 = vmul.f32 %v6976, 0.3275911
    %v6981 = vmul.f32 %v6977, 0.3275911
    %v6982 = vmul.f32 %v6978, 0.3275911
    %v6983 = vmul.f32 %v6979, 0.3275911
    %v6984 = vadd.f32 %v6980, 1.0
    %v6985 = vadd.f32 %v6981, 1.0
    %v6986 = vadd.f32 %v6982, 1.0
    %v6987 = vadd.f32 %v6983, 1.0
    %v6988 = vrcp.pop %v6984
    %v6989 = vmul.f32 1.0, %v6988
    %v6990 = vrcp.pop %v6985
    %v6991 = vmul.f32 1.0, %v6990
    %v6992 = vrcp.pop %v6986
    %v6993 = vmul.f32 1.0, %v6992
    %v6994 = vrcp.pop %v6987
    %v6995 = vmul.f32 1.0, %v6994
    %v6996 = vmul.f32 %v6989, 1.0614054
    %v6997 = vmul.f32 %v6991, 1.0614054
    %v6998 = vmul.f32 %v6993, 1.0614054
    %v6999 = vmul.f32 %v6995, 1.0614054
    %v7000 = vadd.f32 %v6996, -1.4531521
    %v7001 = vadd.f32 %v6997, -1.4531521
    %v7002 = vadd.f32 %v6998, -1.4531521
    %v7003 = vadd.f32 %v6999, -1.4531521
    %v7004 = vmul.f32 %v7000, %v6989
    %v7005 = vmul.f32 %v7001, %v6991
    %v7006 = vmul.f32 %v7002, %v6993
    %v7007 = vmul.f32 %v7003, %v6995
    %v7008 = vadd.f32 %v7004, 1.4214138
    %v7009 = vadd.f32 %v7005, 1.4214138
    %v7010 = vadd.f32 %v7006, 1.4214138
    %v7011 = vadd.f32 %v7007, 1.4214138
    %v7012 = vmul.f32 %v7008, %v6989
    %v7013 = vmul.f32 %v7009, %v6991
    %v7014 = vmul.f32 %v7010, %v6993
    %v7015 = vmul.f32 %v7011, %v6995
    %v7016 = vadd.f32 %v7012, -0.28449672
    %v7017 = vadd.f32 %v7013, -0.28449672
    %v7018 = vadd.f32 %v7014, -0.28449672
    %v7019 = vadd.f32 %v7015, -0.28449672
    %v7020 = vmul.f32 %v7016, %v6989
    %v7021 = vmul.f32 %v7017, %v6991
    %v7022 = vmul.f32 %v7018, %v6993
    %v7023 = vmul.f32 %v7019, %v6995
    %v7024 = vadd.f32 %v7020, 0.2548296
    %v7025 = vadd.f32 %v7021, 0.2548296
    %v7026 = vadd.f32 %v7022, 0.2548296
    %v7027 = vadd.f32 %v7023, 0.2548296
    %v7028 = vmul.f32 %v7024, %v6989
    %v7029 = vmul.f32 %v7025, %v6991
    %v7030 = vmul.f32 %v7026, %v6993
    %v7031 = vmul.f32 %v7027, %v6995
    %v7032 = vmul.f32 %v6976, %v6976
    %v7033 = vmul.f32 %v6977, %v6977
    %v7034 = vmul.f32 %v6978, %v6978
    %v7035 = vmul.f32 %v6979, %v6979
    %v7036 = vsub.f32 0.0, %v7032
    %v7037 = vsub.f32 0.0, %v7033
    %v7038 = vsub.f32 0.0, %v7034
    %v7039 = vsub.f32 0.0, %v7035
    %v7040 = vmul.f32 %v7036, 1.442695
    %v7041 = vpow.pop %v7040
    %v7042 = vmul.f32 %v7037, 1.442695
    %v7043 = vpow.pop %v7042
    %v7044 = vmul.f32 %v7038, 1.442695
    %v7045 = vpow.pop %v7044
    %v7046 = vmul.f32 %v7039, 1.442695
    %v7047 = vpow.pop %v7046
    %v7048 = vmul.f32 %v7028, %v7041
    %v7049 = vmul.f32 %v7029, %v7043
    %v7050 = vmul.f32 %v7030, %v7045
    %v7051 = vmul.f32 %v7031, %v7047
    %v7052 = vsub.f32 1.0, %v7048
    %v7053 = vsub.f32 1.0, %v7049
    %v7054 = vsub.f32 1.0, %v7050
    %v7055 = vsub.f32 1.0, %v7051
    %vm7056 = vcmp.ge.f32.partialorder %v6972, 0.0
    %vm7057 = vcmp.ge.f32.partialorder %v6973, 0.0
    %vm7058 = vcmp.ge.f32.partialorder %v6974, 0.0
    %vm7059 = vcmp.ge.f32.partialorder %v6975, 0.0
    %v7060 = vsub.f32 0.0, %v7052
    %v7061 = vsub.f32 0.0, %v7053
    %v7062 = vsub.f32 0.0, %v7054
    %v7063 = vsub.f32 0.0, %v7055
    %v7064 = vsel %vm7056, %v7052, %v7060
    %v7065 = vsel %vm7057, %v7053, %v7061
    %v7066 = vsel %vm7058, %v7054, %v7062
    %v7067 = vsel %vm7059, %v7055, %v7063
    %v7068 = vadd.f32 %v7064, 1.0
    %v7069 = vadd.f32 %v7065, 1.0
    %v7070 = vadd.f32 %v7066, 1.0
    %v7071 = vadd.f32 %v7067, 1.0
    %v7072 = vmul.f32 %v6968, %v7068
    %v7073 = vmul.f32 %v6969, %v7069
    %v7074 = vmul.f32 %v6970, %v7070
    %v7075 = vmul.f32 %v6971, %v7071
    %s7076 = scalar_lea.vmem [#allocation6], 1920
    %v7077 = vld [vmem:[%s7076] sm:$0xff]
    %v7078 = vld [vmem:[%s7076 + $0x8] sm:$0xff]
    %v7079 = vld [vmem:[%s7076 + $0x10] sm:$0xff]
    %v7080 = vld [vmem:[%s7076 + $0x18] sm:$0xff]
    %v7081 = vld [vmem:[%s7076 + $0x20] sm:$0xff]
    %v7082 = vld [vmem:[%s7076 + $0x28] sm:$0xff]
    %v7083 = vld [vmem:[%s7076 + $0x30] sm:$0xff]
    %v7084 = vld [vmem:[%s7076 + $0x38] sm:$0xff]
    %v7085 = vld [vmem:[%s7076 + $0x40] sm:$0xff]
    %v7086 = vld [vmem:[%s7076 + $0x48] sm:$0xff]
    %v7087 = vld [vmem:[%s7076 + $0x50] sm:$0xff]
    %v7088 = vld [vmem:[%s7076 + $0x58] sm:$0xff]
    %s7089 = scalar_lea.vmem [#allocation7], 9
    %v7090 = vld [vmem:[%s7089] sm:$0x1]
    %v7092 = vlaneseq
    %v7093 = vshrl.u32 %v7092, 7
    %v7094 = vsub.s32 0, %v7093
    %v7095 = vrot.slane %v7090, %v7094
    %v7098 = vsel %vm143, %v7072, 0
    %v7101 = vsel %vm143, %v7073, 0
    %v7104 = vsel %vm143, %v7074, 0
    %v7107 = vsel %vm143, %v7075, 0
    %7109 = vmatprep.subr.mxu0 0.0
    %7110 = vmatpush1.msra.mxu0 %v7077
    %7111 = vmatprep.subr.mxu0 0.0
    %7112 = vmatpush1.msra.mxu0 %v7078
    %7113 = vmatprep.subr.mxu0 0.0
    %7114 = vmatpush1.msra.mxu0 %v7079
    %7115 = vmatprep.subr.mxu0 0.0
    %7116 = vmatpush1.msra.mxu0 %v7080
    %7117 = vmatprep.subr.mxu0 0.0
    %7118 = vmatpush1.msra.mxu0 %v7081
    %7119 = vmatprep.subr.mxu0 0.0
    %7120 = vmatpush1.msra.mxu0 %v7082
    %7121 = vmatprep.subr.mxu0 0.0
    %7122 = vmatpush1.msra.mxu0 %v7083
    %7123 = vmatprep.subr.mxu0 0.0
    %7124 = vmatpush1.msra.mxu0 %v7084
    %7125 = vmatprep.subr.mxu0 0.0
    %7126 = vmatpush1.msra.mxu0 %v7085
    %7127 = vmatprep.subr.mxu0 0.0
    %7128 = vmatpush1.msra.mxu0 %v7086
    %7129 = vmatprep.subr.mxu0 0.0
    %7130 = vmatpush1.msra.mxu0 %v7087
    %7131 = vmatprep.subr.mxu0 0.0
    %7132 = vmatpush1.msra.mxu0 %v7088
    %7133 = vmatprep.subr.mxu0 0.0
    %7134 = vmatpush1.msra.mxu0 0.0
    %7135 = vmatprep.subr.mxu0 0.0
    %7136 = vmatpush1.msra.mxu0 0.0
    %7137 = vmatprep.subr.mxu0 0.0
    %7138 = vmatpush1.msra.mxu0 0.0
    %7139 = vmatprep.subr.mxu0 0.0
    %7140 = vmatpush1.msra.mxu0 0.0
    %7141 = vmatprep.subr.mxu0 0.0
    %7142 = vmatpush1.msra.mxu0 0.0
    %7143 = vmatprep.subr.mxu0 0.0
    %7144 = vmatpush1.msra.mxu0 0.0
    %7145 = vmatprep.subr.mxu0 0.0
    %7146 = vmatpush1.msra.mxu0 0.0
    %7147 = vmatprep.subr.mxu0 0.0
    %7148 = vmatpush1.msra.mxu0 0.0
    %7149 = vmatprep.subr.mxu0 0.0
    %7150 = vmatpush1.msra.mxu0 0.0
    %7151 = vmatprep.subr.mxu0 0.0
    %7152 = vmatpush1.msra.mxu0 0.0
    %7153 = vmatprep.subr.mxu0 0.0
    %7154 = vmatpush1.msra.mxu0 0.0
    %7155 = vmatprep.subr.mxu0 0.0
    %7156 = vmatpush1.msra.mxu0 0.0
    %7157 = vmatprep.subr.mxu0 0.0
    %7158 = vmatpush1.msra.mxu0 0.0
    %7159 = vmatprep.subr.mxu0 0.0
    %7160 = vmatpush1.msra.mxu0 0.0
    %7161 = vmatprep.subr.mxu0 0.0
    %7162 = vmatpush1.msra.mxu0 0.0
    %7163 = vmatprep.subr.mxu0 0.0
    %7164 = vmatpush1.msra.mxu0 0.0
    %7165 = vmatprep.subr.mxu0 0.0
    %7166 = vmatpush1.msra.mxu0 0.0
    %7167 = vmatprep.subr.mxu0 0.0
    %7168 = vmatpush1.msra.mxu0 0.0
    %7169 = vmatprep.subr.mxu0 0.0
    %7170 = vmatpush1.msra.mxu0 0.0
    %7171 = vmatprep.subr.mxu0 0.0
    %7172 = vmatpush1.msra.mxu0 0.0
    %7173 = vmatprep.mubr.f32.mxu0 0.0
    %7174 = vmatmul.mubr.f32.gmra.mrb[0].mxu0 %v7098
    %v7175 = vpop.f32.mrb[0].mxu0
    %v7176 = vadd.f32 %v7095, %v7175
    %v7177 = vpop.f32.mrb[0].mxu0
    %7178 = vmatprep.mubr.f32.mxu0 0.0
    %7179 = vmatmul.mubr.f32.gmra.mrb[0].mxu0 %v7101
    %v7180 = vpop.f32.mrb[0].mxu0
    %v7181 = vadd.f32 %v7095, %v7180
    %v7182 = vpop.f32.mrb[0].mxu0
    %7183 = vmatprep.mubr.f32.mxu0 0.0
    %7184 = vmatmul.mubr.f32.gmra.mrb[0].mxu0 %v7104
    %v7185 = vpop.f32.mrb[0].mxu0
    %v7186 = vadd.f32 %v7095, %v7185
    %v7187 = vpop.f32.mrb[0].mxu0
    %7188 = vmatprep.mubr.f32.mxu0 0.0
    %7189 = vmatmul.mubr.f32.gmra.mrb[0].mxu0 %v7107
    %v7190 = vpop.f32.mrb[0].mxu0
    %v7191 = vadd.f32 %v7095, %v7190
    %v7192 = vpop.f32.mrb[0].mxu0
    %7193 = vdwg.mxu0
    %s7194 = scalar_lea.vmem [#allocation7], 10
    %v7195 = vld [vmem:[%s7194] sm:$0x1]
    %v7197 = vlaneseq
    %v7198 = vshrl.u32 %v7197, 7
    %v7199 = vsub.s32 0, %v7198
    %v7200 = vrot.slane %v7195, %v7199
    %v7202 = vmul.f32 %v3750, %v7200
    %v7203 = vmul.f32 %v3751, %v7200
    %v7204 = vmul.f32 %v3752, %v7200
    %v7205 = vmul.f32 %v3753, %v7200
    %v7206 = vadd.f32 %v7176, %v7202
    %v7207 = vadd.f32 %v7181, %v7203
    %v7208 = vadd.f32 %v7186, %v7204
    %v7209 = vadd.f32 %v7191, %v7205
    %v7210 = vld [vmem:[#allocation9] sm:$0xff]
    %v7211 = vld [vmem:[#allocation9 + $0x8] sm:$0xff]
    %v7212 = vld [vmem:[#allocation9 + $0x10] sm:$0xff]
    %v7213 = vld [vmem:[#allocation9 + $0x18] sm:$0xff]
    %v7214 = vld [vmem:[#allocation9 + $0x20] sm:$0xff]
    %v7215 = vld [vmem:[#allocation9 + $0x28] sm:$0xff]
    %v7216 = vld [vmem:[#allocation9 + $0x30] sm:$0xff]
    %v7217 = vld [vmem:[#allocation9 + $0x38] sm:$0xff]
    %v7218 = vld [vmem:[#allocation9 + $0x40] sm:$0xff]
    %v7219 = vld [vmem:[#allocation9 + $0x48] sm:$0xff]
    %v7220 = vld [vmem:[#allocation9 + $0x50] sm:$0xff]
    %v7221 = vld [vmem:[#allocation9 + $0x58] sm:$0xff]
    %v7222 = vld [vmem:[#allocation10] sm:$0x1]
    %v7224 = vlaneseq
    %v7225 = vshrl.u32 %v7224, 7
    %v7226 = vsub.s32 0, %v7225
    %v7227 = vrot.slane %v7222, %v7226
    %v7230 = vsel %vm143, %v7206, 0
    %v7233 = vsel %vm143, %v7207, 0
    %v7236 = vsel %vm143, %v7208, 0
    %v7239 = vsel %vm143, %v7209, 0
    %7241 = vmatprep.subr.mxu0 0.0
    %7242 = vmatpush1.msra.mxu0 %v7210
    %7243 = vmatprep.subr.mxu0 0.0
    %7244 = vmatpush1.msra.mxu0 %v7211
    %7245 = vmatprep.subr.mxu0 0.0
    %7246 = vmatpush1.msra.mxu0 %v7212
    %7247 = vmatprep.subr.mxu0 0.0
    %7248 = vmatpush1.msra.mxu0 %v7213
    %7249 = vmatprep.subr.mxu0 0.0
    %7250 = vmatpush1.msra.mxu0 %v7214
    %7251 = vmatprep.subr.mxu0 0.0
    %7252 = vmatpush1.msra.mxu0 %v7215
    %7253 = vmatprep.subr.mxu0 0.0
    %7254 = vmatpush1.msra.mxu0 %v7216
    %7255 = vmatprep.subr.mxu0 0.0
    %7256 = vmatpush1.msra.mxu0 %v7217
    %7257 = vmatprep.subr.mxu0 0.0
    %7258 = vmatpush1.msra.mxu0 %v7218
    %7259 = vmatprep.subr.mxu0 0.0
    %7260 = vmatpush1.msra.mxu0 %v7219
    %7261 = vmatprep.subr.mxu0 0.0
    %7262 = vmatpush1.msra.mxu0 %v7220
    %7263 = vmatprep.subr.mxu0 0.0
    %7264 = vmatpush1.msra.mxu0 %v7221
    %7265 = vmatprep.subr.mxu0 0.0
    %7266 = vmatpush1.msra.mxu0 0.0
    %7267 = vmatprep.subr.mxu0 0.0
    %7268 = vmatpush1.msra.mxu0 0.0
    %7269 = vmatprep.subr.mxu0 0.0
    %7270 = vmatpush1.msra.mxu0 0.0
    %7271 = vmatprep.subr.mxu0 0.0
    %7272 = vmatpush1.msra.mxu0 0.0
    %7273 = vmatprep.subr.mxu0 0.0
    %7274 = vmatpush1.msra.mxu0 0.0
    %7275 = vmatprep.subr.mxu0 0.0
    %7276 = vmatpush1.msra.mxu0 0.0
    %7277 = vmatprep.subr.mxu0 0.0
    %7278 = vmatpush1.msra.mxu0 0.0
    %7279 = vmatprep.subr.mxu0 0.0
    %7280 = vmatpush1.msra.mxu0 0.0
    %7281 = vmatprep.subr.mxu0 0.0
    %7282 = vmatpush1.msra.mxu0 0.0
    %7283 = vmatprep.subr.mxu0 0.0
    %7284 = vmatpush1.msra.mxu0 0.0
    %7285 = vmatprep.subr.mxu0 0.0
    %7286 = vmatpush1.msra.mxu0 0.0
    %7287 = vmatprep.subr.mxu0 0.0
    %7288 = vmatpush1.msra.mxu0 0.0
    %7289 = vmatprep.subr.mxu0 0.0
    %7290 = vmatpush1.msra.mxu0 0.0
    %7291 = vmatprep.subr.mxu0 0.0
    %7292 = vmatpush1.msra.mxu0 0.0
    %7293 = vmatprep.subr.mxu0 0.0
    %7294 = vmatpush1.msra.mxu0 0.0
    %7295 = vmatprep.subr.mxu0 0.0
    %7296 = vmatpush1.msra.mxu0 0.0
    %7297 = vmatprep.subr.mxu0 0.0
    %7298 = vmatpush1.msra.mxu0 0.0
    %7299 = vmatprep.subr.mxu0 0.0
    %7300 = vmatpush1.msra.mxu0 0.0
    %7301 = vmatprep.subr.mxu0 0.0
    %7302 = vmatpush1.msra.mxu0 0.0
    %7303 = vmatprep.subr.mxu0 0.0
    %7304 = vmatpush1.msra.mxu0 0.0
    %7305 = vmatprep.mubr.f32.mxu0 0.0
    %7306 = vmatmul.mubr.f32.gmra.mrb[0].mxu0 %v7230
    %v7307 = vpop.f32.mrb[0].mxu0
    %v7308 = vadd.f32 %v7227, %v7307
    %v7309 = vpop.f32.mrb[0].mxu0
    %7310 = vmatprep.mubr.f32.mxu0 0.0
    %7311 = vmatmul.mubr.f32.gmra.mrb[0].mxu0 %v7233
    %v7312 = vpop.f32.mrb[0].mxu0
    %v7313 = vadd.f32 %v7227, %v7312
    %v7314 = vpop.f32.mrb[0].mxu0
    %7315 = vmatprep.mubr.f32.mxu0 0.0
    %7316 = vmatmul.mubr.f32.gmra.mrb[0].mxu0 %v7236
    %v7317 = vpop.f32.mrb[0].mxu0
    %v7318 = vadd.f32 %v7227, %v7317
    %v7319 = vpop.f32.mrb[0].mxu0
    %7320 = vmatprep.mubr.f32.mxu0 0.0
    %7321 = vmatmul.mubr.f32.gmra.mrb[0].mxu0 %v7239
    %v7322 = vpop.f32.mrb[0].mxu0
    %v7323 = vadd.f32 %v7227, %v7322
    %v7324 = vpop.f32.mrb[0].mxu0
    %7325 = vdwg.mxu0
    %7326 = vst [vmem:[%s6] sm:$0xff] %v7308
    %7327 = vst [vmem:[%s6 + $0x8] sm:$0xff] %v7313
    %7328 = vst [vmem:[%s6 + $0x10] sm:$0xff] %v7318
    %7329 = vst [vmem:[%s6 + $0x18] sm:$0xff] %v7323
    // Predicated region
    $region50: #{hgt_forward.1} parent=1 // pred_check
      _
    $region51: #{hgt_forward.1} parent=1 // pred_check_branch
      %7331 = sbr.rel (0) target = $region53
    $region52: #{hgt_forward.1} parent=1 // pred_region
      _
    $region53: #{hgt_forward.1} parent=1 // pred_fallthru
      _
    // Predicated region
    $region54: #{hgt_forward.1} parent=1 // pred_check
      _
    $region55: #{hgt_forward.1} parent=1 // pred_check_branch
      %7333 = sbr.rel (0) target = $region57
    $region56: #{hgt_forward.1} parent=1 // pred_region
      _
    $region57: #{hgt_forward.1} parent=1 // pred_fallthru
      _
    %7334 = vsyncpa [#allocation3], 1
    %7335 = vsyncpa [#allocation5], 1
    %7336 = vsyncpa [#allocation8], 1
    %7337 = vsyncpa [#allocation11], 1

</llo_original>
